<compile_context>
chip_gen: v6e
topology: v6e:2x2x1
jax: 0.10.0
libtpu: 0.0.40
codegen_flags: <defaults>
</compile_context>

<pallas_src>
import functools
import math

import jax
import jax.numpy as jnp
from jax.experimental import pallas as pl
from jax.experimental.pallas import tpu as pltpu


# ------------------------------ in-kernel helpers ------------------------------

def _layernorm(y, g, b):
    """LayerNorm over the last dim, eps=1e-5 (matches nn.LayerNorm), f32 math."""
    mean = jnp.mean(y, axis=-1, keepdims=True)
    c = y - mean
    var = jnp.mean(c * c, axis=-1, keepdims=True)
    return c * jax.lax.rsqrt(var + 1e-5) * g + b


def _sdpa_proj(q, k, v, out_w, out_b, *, nhead):
    """Multi-head scaled-dot-product attention + output projection.

    q: (Sq, H) f32 (already scaled by 1/sqrt(hd)); k, v: (Sk, H) f32.
    out_w: (H, H) bf16 (Din, Dout); out_b: (1, H) f32.  Returns (Sq, H) f32.
    Head loop is fully unrolled; only static lane/sublane slices are used.
    Softmax math stays in f32; MXU operands are cast to out_w.dtype.
    """
    Sq, H = q.shape
    hd = H // nhead
    dt = out_w.dtype
    acc = jnp.zeros((Sq, H), jnp.float32)
    for h in range(nhead):
        sl = slice(h * hd, (h + 1) * hd)
        qh = q[:, sl].astype(dt)
        kh = k[:, sl].astype(dt)
        vh = v[:, sl].astype(dt)
        s = jnp.einsum("qd,kd->qk", qh, kh, preferred_element_type=jnp.float32)
        m = jnp.max(s, axis=-1, keepdims=True)
        p = jnp.exp(s - m)
        p = p * pl.reciprocal(jnp.sum(p, axis=-1, keepdims=True), approx=True)
        oh = jnp.einsum("qk,kd->qd", p.astype(dt), vh,
                        preferred_element_type=jnp.float32)
        # Per-head sublane slice of out_w; accumulating here avoids any
        # lane-concatenate of the (Sq, hd) head outputs.
        acc = acc + jnp.dot(oh.astype(dt), out_w[sl, :],
                            preferred_element_type=jnp.float32)
    return acc + out_b


def _self_attention(x, in_w, in_b, out_w, out_b, *, nhead):
    """Self-attention: one fused (S,H)x(H,3H) QKV projection."""
    H = x.shape[-1]
    hd = H // nhead
    qkv = jnp.dot(x.astype(in_w.dtype), in_w,
                  preferred_element_type=jnp.float32) + in_b          # (S, 3H) f32
    q = qkv[:, :H] * (1.0 / math.sqrt(hd))
    return _sdpa_proj(q, qkv[:, H:2 * H], qkv[:, 2 * H:], out_w, out_b, nhead=nhead)


def _cross_attention(xq, mem, q_w, q_b, kv_w, kv_b, out_w, out_b, *, nhead):
    """Cross-attention: Q from decoder state, fused K|V from encoder memory."""
    H = xq.shape[-1]
    hd = H // nhead
    q = (jnp.dot(xq.astype(q_w.dtype), q_w,
                 preferred_element_type=jnp.float32) + q_b) * (1.0 / math.sqrt(hd))
    kv = jnp.dot(mem.astype(kv_w.dtype), kv_w,
                 preferred_element_type=jnp.float32) + kv_b            # (S, 2H) f32
    return _sdpa_proj(q, kv[:, :H], kv[:, H:], out_w, out_b, nhead=nhead)


def _ffn(y, w1, b1, w2, b2):
    h = jnp.dot(y.astype(w1.dtype), w1, preferred_element_type=jnp.float32) + b1
    h = jnp.maximum(h, 0.0)                                            # ReLU, f32
    return jnp.dot(h.astype(w2.dtype), w2, preferred_element_type=jnp.float32) + b2


# ------------------------------- the fused kernel -------------------------------

_ENC_KEYS = ("in_w", "in_b", "out_w", "out_b",
             "ln1_g", "ln1_b", "ln2_g", "ln2_b",
             "lin1_w", "lin1_b", "lin2_w", "lin2_b")                     # 12
_DEC_KEYS = ("sa_in_w", "sa_in_b", "sa_out_w", "sa_out_b",
             "ca_q_w", "ca_q_b", "ca_kv_w", "ca_kv_b", "ca_out_w", "ca_out_b",
             "ln1_g", "ln1_b", "ln2_g", "ln2_b", "ln3_g", "ln3_b",
             "lin1_w", "lin1_b", "lin2_w", "lin2_b")                     # 20


def _fused_forward_kernel(x_ref, emb_w_ref, emb_b_ref, *refs, nhead, num_layers):
    """Whole TransformerModel forward for ONE batch element (grid axis = batch)."""
    (enc_in_w, enc_in_b, enc_out_w, enc_out_b,
     enc_ln1_g, enc_ln1_b, enc_ln2_g, enc_ln2_b,
     enc_lin1_w, enc_lin1_b, enc_lin2_w, enc_lin2_b) = refs[0:12]
    (sa_in_w, sa_in_b, sa_out_w, sa_out_b,
     ca_q_w, ca_q_b, ca_kv_w, ca_kv_b, ca_out_w, ca_out_b,
     dln1_g, dln1_b, dln2_g, dln2_b, dln3_g, dln3_b,
     dlin1_w, dlin1_b, dlin2_w, dlin2_b) = refs[12:32]
    fc_w_ref, fc_b_ref = refs[32], refs[33]
    o_ref = refs[34]

    S = x_ref.shape[1]

    # Embedding: nn.Linear(1, H) == broadcast multiply-add (contraction dim = 1).
    x = x_ref[0]                                     # (S, 1) f32
    emb = x * emb_w_ref[...] + emb_b_ref[...]        # (S, H) f32

    # ----- encoder stack (post-norm, ReLU FFN; statically unrolled) -----
    h = emb
    for l in range(num_layers):
        sa = _self_attention(h, enc_in_w[l], enc_in_b[l],
                             enc_out_w[l], enc_out_b[l], nhead=nhead)
        y = _layernorm(h + sa, enc_ln1_g[l], enc_ln1_b[l])
        ff = _ffn(y, enc_lin1_w[l], enc_lin1_b[l], enc_lin2_w[l], enc_lin2_b[l])
        h = _layernorm(y + ff, enc_ln2_g[l], enc_ln2_b[l])
    memory = h

    # ----- decoder stack (self-attn -> cross-attn -> FFN; statically unrolled) -----
    d = emb
    for l in range(num_layers):
        sa = _self_attention(d, sa_in_w[l], sa_in_b[l],
                             sa_out_w[l], sa_out_b[l], nhead=nhead)
        y1 = _layernorm(d + sa, dln1_g[l], dln1_b[l])
        ca = _cross_attention(y1, memory, ca_q_w[l], ca_q_b[l],
                              ca_kv_w[l], ca_kv_b[l],
                              ca_out_w[l], ca_out_b[l], nhead=nhead)
        y2 = _layernorm(y1 + ca, dln2_g[l], dln2_b[l])
        ff = _ffn(y2, dlin1_w[l], dlin1_b[l], dlin2_w[l], dlin2_b[l])
        d = _layernorm(y2 + ff, dln3_g[l], dln3_b[l])

    # ----- fc applied only to the last sequence position (static sublane slice) -----
    last = d[S - 1:S, :]                                             # (1, H) f32
    o_ref[0] = (jnp.dot(last.astype(fc_w_ref.dtype), fc_w_ref[...],
                        preferred_element_type=jnp.float32) + fc_b_ref[...])


# ------------------------------------ wrapper ------------------------------------

def _full_spec(a):
    """Whole-array block, same block for every grid step (weights)."""
    zeros = (0,) * a.ndim
    return pl.BlockSpec(a.shape, lambda b, zeros=zeros: zeros)


def transformer_model(x, params, nhead):
    """x: (B, S) float32 -> (B, output_size). One fused pallas_call, grid over B."""
    B, S = x.shape
    out_size = params["fc_w"].shape[-1]
    num_layers = params["enc"]["in_w"].shape[0]

    enc_args = [params["enc"][k] for k in _ENC_KEYS]
    dec_args = [params["dec"][k] for k in _DEC_KEYS]
    weight_args = [params["emb_w"], params["emb_b"], *enc_args, *dec_args,
                   params["fc_w"], params["fc_b"]]

    in_specs = [pl.BlockSpec((1, S, 1), lambda b: (b, 0, 0))]
    in_specs += [_full_spec(w) for w in weight_args]

    out = pl.pallas_call(
        functools.partial(_fused_forward_kernel, nhead=nhead, num_layers=num_layers),
        grid=(B,),
        out_shape=jax.ShapeDtypeStruct((B, 1, out_size), jnp.float32),
        in_specs=in_specs,
        out_specs=pl.BlockSpec((1, 1, out_size), lambda b: (b, 0, 0)),
        compiler_params=pltpu.CompilerParams(
            dimension_semantics=("parallel",)),     # v7x: one batch element per TC
    )(x.reshape(B, S, 1), *weight_args)
    return out.reshape(B, out_size)


# ---------------------------------- parameters ----------------------------------

def init_params(key, hidden, num_layers, input_size, output_size,
                mxu_dtype=jnp.bfloat16):
    """Initialize in torch layouts, then convert ONCE to kernel-ready layouts:
    matmul weights (Din, Dout) in bf16, biases/LN params (1, D) in f32,
    per-layer tensors stacked along a leading layer axis."""
    H = hidden
    counter = [0]

    def nk():
        counter[0] += 1
        return jax.random.fold_in(key, counter[0])

    def rnd(shape, scale=0.05):
        return (scale * jax.random.normal(nk(), shape)).astype(jnp.float32)

    def ln():
        return jnp.ones((1, H), jnp.float32), jnp.zeros((1, H), jnp.float32)

    def enc_layer():
        in_w = rnd((3 * H, H)); in_b = rnd((3 * H,))       # torch in_proj: [Wq;Wk;Wv]
        out_w = rnd((H, H)); out_b = rnd((H,))
        w1 = rnd((H, H)); b1 = rnd((H,))                    # dim_feedforward == hidden
        w2 = rnd((H, H)); b2 = rnd((H,))
        g1, bb1 = ln(); g2, bb2 = ln()
        return dict(in_w=in_w.T.astype(mxu_dtype), in_b=in_b.reshape(1, 3 * H),
                    out_w=out_w.T.astype(mxu_dtype), out_b=out_b.reshape(1, H),
                    ln1_g=g1, ln1_b=bb1, ln2_g=g2, ln2_b=bb2,
                    lin1_w=w1.T.astype(mxu_dtype), lin1_b=b1.reshape(1, H),
                    lin2_w=w2.T.astype(mxu_dtype), lin2_b=b2.reshape(1, H))

    def dec_layer():
        sa_in_w = rnd((3 * H, H)); sa_in_b = rnd((3 * H,))
        sa_out_w = rnd((H, H)); sa_out_b = rnd((H,))
        ca_in_w = rnd((3 * H, H)); ca_in_b = rnd((3 * H,))
        ca_out_w = rnd((H, H)); ca_out_b = rnd((H,))
        w1 = rnd((H, H)); b1 = rnd((H,))
        w2 = rnd((H, H)); b2 = rnd((H,))
        g1, bb1 = ln(); g2, bb2 = ln(); g3, bb3 = ln()
        ca_in_wT = ca_in_w.T                                 # (H, 3H): [Wq | Wk | Wv]
        return dict(
            sa_in_w=sa_in_w.T.astype(mxu_dtype), sa_in_b=sa_in_b.reshape(1, 3 * H),
            sa_out_w=sa_out_w.T.astype(mxu_dtype), sa_out_b=sa_out_b.reshape(1, H),
            ca_q_w=ca_in_wT[:, :H].astype(mxu_dtype),
            ca_q_b=ca_in_b[:H].reshape(1, H),
            ca_kv_w=ca_in_wT[:, H:].astype(mxu_dtype),
            ca_kv_b=ca_in_b[H:].reshape(1, 2 * H),
            ca_out_w=ca_out_w.T.astype(mxu_dtype), ca_out_b=ca_out_b.reshape(1, H),
            ln1_g=g1, ln1_b=bb1, ln2_g=g2, ln2_b=bb2, ln3_g=g3, ln3_b=bb3,
            lin1_w=w1.T.astype(mxu_dtype), lin1_b=b1.reshape(1, H),
            lin2_w=w2.T.astype(mxu_dtype), lin2_b=b2.reshape(1, H))

    enc_list = [enc_layer() for _ in range(num_layers)]
    dec_list = [dec_layer() for _ in range(num_layers)]
    enc = {k: jnp.stack([lp[k] for lp in enc_list]) for k in _ENC_KEYS}
    dec = {k: jnp.stack([lp[k] for lp in dec_list]) for k in _DEC_KEYS}

    emb_w = rnd((hidden, input_size))                        # torch Linear(1, hidden)
    emb_b = rnd((hidden,))
    fc_w = rnd((output_size, hidden))                        # torch Linear(hidden, 1)
    fc_b = rnd((output_size,))

    return dict(emb_w=emb_w.reshape(1, hidden),              # input_size == 1
                emb_b=emb_b.reshape(1, hidden),
                enc=enc, dec=dec,
                fc_w=fc_w.T.astype(mxu_dtype),               # (H, output_size)
                fc_b=fc_b.reshape(1, output_size))


# -------------------------------------- main --------------------------------------

if __name__ == "__main__":
    # Small instantiation of TransformerModel(input_size=1, output_size=1,
    # hidden_size=128, num_layers=2, num_heads=4); input x: (batch=2, seq=8).
    input_size, output_size = 1, 1
    hidden_size, num_layers, num_heads = 128, 2, 4
    B, S = 2, 8

    key = jax.random.PRNGKey(0)
    params = init_params(key, hidden_size, num_layers, input_size, output_size)
    x = jax.random.normal(jax.random.fold_in(key, 12345), (B, S), dtype=jnp.float32)

    fwd = jax.jit(functools.partial(transformer_model, nhead=num_heads))
    out = jax.block_until_ready(fwd(x, params))

    assert out.shape == (B, output_size), out.shape
    assert bool(jnp.all(jnp.isfinite(out)))
    print("KERNEL_OK")
</pallas_src>

<mosaic_0001>
module attributes {stable_mosaic.version = 11 : i64} {
  func.func @_fused_forward_kernel(%arg0: i32, %arg1: memref<1x8x1xf32, #tpu.memory_space<vmem>>, %arg2: memref<1x128xf32, #tpu.memory_space<vmem>>, %arg3: memref<1x128xf32, #tpu.memory_space<vmem>>, %arg4: memref<2x128x384xbf16, #tpu.memory_space<vmem>>, %arg5: memref<2x1x384xf32, #tpu.memory_space<vmem>>, %arg6: memref<2x128x128xbf16, #tpu.memory_space<vmem>>, %arg7: memref<2x1x128xf32, #tpu.memory_space<vmem>>, %arg8: memref<2x1x128xf32, #tpu.memory_space<vmem>>, %arg9: memref<2x1x128xf32, #tpu.memory_space<vmem>>, %arg10: memref<2x1x128xf32, #tpu.memory_space<vmem>>, %arg11: memref<2x1x128xf32, #tpu.memory_space<vmem>>, %arg12: memref<2x128x128xbf16, #tpu.memory_space<vmem>>, %arg13: memref<2x1x128xf32, #tpu.memory_space<vmem>>, %arg14: memref<2x128x128xbf16, #tpu.memory_space<vmem>>, %arg15: memref<2x1x128xf32, #tpu.memory_space<vmem>>, %arg16: memref<2x128x384xbf16, #tpu.memory_space<vmem>>, %arg17: memref<2x1x384xf32, #tpu.memory_space<vmem>>, %arg18: memref<2x128x128xbf16, #tpu.memory_space<vmem>>, %arg19: memref<2x1x128xf32, #tpu.memory_space<vmem>>, %arg20: memref<2x128x128xbf16, #tpu.memory_space<vmem>>, %arg21: memref<2x1x128xf32, #tpu.memory_space<vmem>>, %arg22: memref<2x128x256xbf16, #tpu.memory_space<vmem>>, %arg23: memref<2x1x256xf32, #tpu.memory_space<vmem>>, %arg24: memref<2x128x128xbf16, #tpu.memory_space<vmem>>, %arg25: memref<2x1x128xf32, #tpu.memory_space<vmem>>, %arg26: memref<2x1x128xf32, #tpu.memory_space<vmem>>, %arg27: memref<2x1x128xf32, #tpu.memory_space<vmem>>, %arg28: memref<2x1x128xf32, #tpu.memory_space<vmem>>, %arg29: memref<2x1x128xf32, #tpu.memory_space<vmem>>, %arg30: memref<2x1x128xf32, #tpu.memory_space<vmem>>, %arg31: memref<2x1x128xf32, #tpu.memory_space<vmem>>, %arg32: memref<2x128x128xbf16, #tpu.memory_space<vmem>>, %arg33: memref<2x1x128xf32, #tpu.memory_space<vmem>>, %arg34: memref<2x128x128xbf16, #tpu.memory_space<vmem>>, %arg35: memref<2x1x128xf32, #tpu.memory_space<vmem>>, %arg36: memref<128x1xbf16, #tpu.memory_space<vmem>>, %arg37: memref<1x1xf32, #tpu.memory_space<vmem>>, %arg38: memref<1x1x1xf32, #tpu.memory_space<vmem>>) attributes {dimension_semantics = [#tpu.dimension_semantics<parallel>], iteration_bounds = array<i64: 2>, scalar_prefetch = 0 : i64, scratch_operands = 0 : i64, tpu.core_type = #tpu.core_type<tc>, window_params = [{transform_indices = @transform_0, window_bounds = array<i64: 1, 8, 1>}, {pipeline_mode = #tpu.pipeline_mode<synchronous>, transform_indices = @transform_1, window_bounds = array<i64: 1, 128>}, {pipeline_mode = #tpu.pipeline_mode<synchronous>, transform_indices = @transform_2, window_bounds = array<i64: 1, 128>}, {pipeline_mode = #tpu.pipeline_mode<synchronous>, transform_indices = @transform_3, window_bounds = array<i64: 2, 128, 384>}, {pipeline_mode = #tpu.pipeline_mode<synchronous>, transform_indices = @transform_4, window_bounds = array<i64: 2, 1, 384>}, {pipeline_mode = #tpu.pipeline_mode<synchronous>, transform_indices = @transform_5, window_bounds = array<i64: 2, 128, 128>}, {pipeline_mode = #tpu.pipeline_mode<synchronous>, transform_indices = @transform_6, window_bounds = array<i64: 2, 1, 128>}, {pipeline_mode = #tpu.pipeline_mode<synchronous>, transform_indices = @transform_7, window_bounds = array<i64: 2, 1, 128>}, {pipeline_mode = #tpu.pipeline_mode<synchronous>, transform_indices = @transform_8, window_bounds = array<i64: 2, 1, 128>}, {pipeline_mode = #tpu.pipeline_mode<synchronous>, transform_indices = @transform_9, window_bounds = array<i64: 2, 1, 128>}, {pipeline_mode = #tpu.pipeline_mode<synchronous>, transform_indices = @transform_10, window_bounds = array<i64: 2, 1, 128>}, {pipeline_mode = #tpu.pipeline_mode<synchronous>, transform_indices = @transform_11, window_bounds = array<i64: 2, 128, 128>}, {pipeline_mode = #tpu.pipeline_mode<synchronous>, transform_indices = @transform_12, window_bounds = array<i64: 2, 1, 128>}, {pipeline_mode = #tpu.pipeline_mode<synchronous>, transform_indices = @transform_13, window_bounds = array<i64: 2, 128, 128>}, {pipeline_mode = #tpu.pipeline_mode<synchronous>, transform_indices = @transform_14, window_bounds = array<i64: 2, 1, 128>}, {pipeline_mode = #tpu.pipeline_mode<synchronous>, transform_indices = @transform_15, window_bounds = array<i64: 2, 128, 384>}, {pipeline_mode = #tpu.pipeline_mode<synchronous>, transform_indices = @transform_16, window_bounds = array<i64: 2, 1, 384>}, {pipeline_mode = #tpu.pipeline_mode<synchronous>, transform_indices = @transform_17, window_bounds = array<i64: 2, 128, 128>}, {pipeline_mode = #tpu.pipeline_mode<synchronous>, transform_indices = @transform_18, window_bounds = array<i64: 2, 1, 128>}, {pipeline_mode = #tpu.pipeline_mode<synchronous>, transform_indices = @transform_19, window_bounds = array<i64: 2, 128, 128>}, {pipeline_mode = #tpu.pipeline_mode<synchronous>, transform_indices = @transform_20, window_bounds = array<i64: 2, 1, 128>}, {pipeline_mode = #tpu.pipeline_mode<synchronous>, transform_indices = @transform_21, window_bounds = array<i64: 2, 128, 256>}, {pipeline_mode = #tpu.pipeline_mode<synchronous>, transform_indices = @transform_22, window_bounds = array<i64: 2, 1, 256>}, {pipeline_mode = #tpu.pipeline_mode<synchronous>, transform_indices = @transform_23, window_bounds = array<i64: 2, 128, 128>}, {pipeline_mode = #tpu.pipeline_mode<synchronous>, transform_indices = @transform_24, window_bounds = array<i64: 2, 1, 128>}, {pipeline_mode = #tpu.pipeline_mode<synchronous>, transform_indices = @transform_25, window_bounds = array<i64: 2, 1, 128>}, {pipeline_mode = #tpu.pipeline_mode<synchronous>, transform_indices = @transform_26, window_bounds = array<i64: 2, 1, 128>}, {pipeline_mode = #tpu.pipeline_mode<synchronous>, transform_indices = @transform_27, window_bounds = array<i64: 2, 1, 128>}, {pipeline_mode = #tpu.pipeline_mode<synchronous>, transform_indices = @transform_28, window_bounds = array<i64: 2, 1, 128>}, {pipeline_mode = #tpu.pipeline_mode<synchronous>, transform_indices = @transform_29, window_bounds = array<i64: 2, 1, 128>}, {pipeline_mode = #tpu.pipeline_mode<synchronous>, transform_indices = @transform_30, window_bounds = array<i64: 2, 1, 128>}, {pipeline_mode = #tpu.pipeline_mode<synchronous>, transform_indices = @transform_31, window_bounds = array<i64: 2, 128, 128>}, {pipeline_mode = #tpu.pipeline_mode<synchronous>, transform_indices = @transform_32, window_bounds = array<i64: 2, 1, 128>}, {pipeline_mode = #tpu.pipeline_mode<synchronous>, transform_indices = @transform_33, window_bounds = array<i64: 2, 128, 128>}, {pipeline_mode = #tpu.pipeline_mode<synchronous>, transform_indices = @transform_34, window_bounds = array<i64: 2, 1, 128>}, {pipeline_mode = #tpu.pipeline_mode<synchronous>, transform_indices = @transform_35, window_bounds = array<i64: 128, 1>}, {pipeline_mode = #tpu.pipeline_mode<synchronous>, transform_indices = @transform_36, window_bounds = array<i64: 1, 1>}, {transform_indices = @transform_37, window_bounds = array<i64: 1, 1, 1>}]} {
    %c0 = arith.constant 0 : index
    %c0_0 = arith.constant 0 : index
    %c0_1 = arith.constant 0 : index
    %0 = vector.load %arg1[%c0, %c0_0, %c0_1] : memref<1x8x1xf32, #tpu.memory_space<vmem>>, vector<1x8x1xf32>
    %1 = vector.shape_cast %0 : vector<1x8x1xf32> to vector<8x1xf32>
    %c0_2 = arith.constant 0 : index
    %c0_3 = arith.constant 0 : index
    %2 = vector.load %arg2[%c0_2, %c0_3] : memref<1x128xf32, #tpu.memory_space<vmem>>, vector<1x128xf32>
    %3 = vector.broadcast %1 : vector<8x1xf32> to vector<8x128xf32>
    %4 = vector.broadcast %2 : vector<1x128xf32> to vector<8x128xf32>
    %5 = arith.mulf %3, %4 : vector<8x128xf32>
    %c0_4 = arith.constant 0 : index
    %c0_5 = arith.constant 0 : index
    %6 = vector.load %arg3[%c0_4, %c0_5] : memref<1x128xf32, #tpu.memory_space<vmem>>, vector<1x128xf32>
    %7 = vector.broadcast %6 : vector<1x128xf32> to vector<8x128xf32>
    %8 = arith.addf %5, %7 : vector<8x128xf32>
    %c0_6 = arith.constant 0 : index
    %c0_7 = arith.constant 0 : index
    %c0_8 = arith.constant 0 : index
    %9 = vector.load %arg4[%c0_6, %c0_7, %c0_8] : memref<2x128x384xbf16, #tpu.memory_space<vmem>>, vector<1x128x384xbf16>
    %10 = vector.shape_cast %9 : vector<1x128x384xbf16> to vector<128x384xbf16>
    %c0_9 = arith.constant 0 : index
    %c0_10 = arith.constant 0 : index
    %c0_11 = arith.constant 0 : index
    %11 = vector.load %arg5[%c0_9, %c0_10, %c0_11] : memref<2x1x384xf32, #tpu.memory_space<vmem>>, vector<1x1x384xf32>
    %12 = vector.shape_cast %11 : vector<1x1x384xf32> to vector<1x384xf32>
    %c0_12 = arith.constant 0 : index
    %c0_13 = arith.constant 0 : index
    %c0_14 = arith.constant 0 : index
    %13 = vector.load %arg6[%c0_12, %c0_13, %c0_14] : memref<2x128x128xbf16, #tpu.memory_space<vmem>>, vector<1x128x128xbf16>
    %14 = vector.shape_cast %13 : vector<1x128x128xbf16> to vector<128x128xbf16>
    %c0_15 = arith.constant 0 : index
    %c0_16 = arith.constant 0 : index
    %c0_17 = arith.constant 0 : index
    %15 = vector.load %arg7[%c0_15, %c0_16, %c0_17] : memref<2x1x128xf32, #tpu.memory_space<vmem>>, vector<1x1x128xf32>
    %16 = vector.shape_cast %15 : vector<1x1x128xf32> to vector<1x128xf32>
    %17 = arith.truncf %8 : vector<8x128xf32> to vector<8x128xbf16>
    %cst = arith.constant dense<0.000000e+00> : vector<8x384xf32>
    %18 = tpu.matmul %17, %10, %cst {dimension_numbers = #tpu.dot_dimension_numbers<[1], [0], [0], [1], [0, 0, 1, 1], [], []>} : vector<8x128xbf16>, vector<128x384xbf16>, vector<8x384xf32> -> vector<8x384xf32>
    %19 = vector.broadcast %12 : vector<1x384xf32> to vector<8x384xf32>
    %20 = arith.addf %18, %19 : vector<8x384xf32>
    %21 = vector.extract_strided_slice %20 {offsets = [0, 0], sizes = [8, 128], strides = [1, 1]} : vector<8x384xf32> to vector<8x128xf32>
    %cst_18 = arith.constant 0.176776692 : f32
    %22 = vector.broadcast %cst_18 : f32 to vector<8x128xf32>
    %23 = arith.mulf %21, %22 : vector<8x128xf32>
    %24 = vector.extract_strided_slice %20 {offsets = [0, 128], sizes = [8, 128], strides = [1, 1]} : vector<8x384xf32> to vector<8x128xf32>
    %25 = vector.extract_strided_slice %20 {offsets = [0, 256], sizes = [8, 128], strides = [1, 1]} : vector<8x384xf32> to vector<8x128xf32>
    %cst_19 = arith.constant 0.000000e+00 : f32
    %26 = vector.broadcast %cst_19 : f32 to vector<8x128xf32>
    %27 = vector.extract_strided_slice %23 {offsets = [0, 0], sizes = [8, 32], strides = [1, 1]} : vector<8x128xf32> to vector<8x32xf32>
    %28 = arith.truncf %27 : vector<8x32xf32> to vector<8x32xbf16>
    %29 = vector.extract_strided_slice %24 {offsets = [0, 0], sizes = [8, 32], strides = [1, 1]} : vector<8x128xf32> to vector<8x32xf32>
    %30 = arith.truncf %29 : vector<8x32xf32> to vector<8x32xbf16>
    %31 = vector.extract_strided_slice %25 {offsets = [0, 0], sizes = [8, 32], strides = [1, 1]} : vector<8x128xf32> to vector<8x32xf32>
    %32 = arith.truncf %31 : vector<8x32xf32> to vector<8x32xbf16>
    "tpu.trace_start"() <{level = 10 : i32, message = "qd,kd->qk"}> : () -> ()
    %cst_20 = arith.constant dense<0.000000e+00> : vector<8x8xf32>
    %33 = tpu.matmul %28, %30, %cst_20 {dimension_numbers = #tpu.dot_dimension_numbers<[1], [1], [0], [0], [0, 0, 1, 0], [], []>} : vector<8x32xbf16>, vector<8x32xbf16>, vector<8x8xf32> -> vector<8x8xf32>
    "tpu.trace_stop"() : () -> ()
    %cst_21 = arith.constant dense<0xFF800000> : vector<8xf32>
    %34 = vector.multi_reduction <maximumf>, %33, %cst_21 [1] : vector<8x8xf32> to vector<8xf32>
    %35 = vector.shape_cast %34 : vector<8xf32> to vector<8x1xf32>
    %36 = vector.broadcast %35 : vector<8x1xf32> to vector<8x8xf32>
    %37 = arith.subf %33, %36 : vector<8x8xf32>
    %38 = math.exp %37 : vector<8x8xf32>
    %cst_22 = arith.constant dense<0.000000e+00> : vector<8xf32>
    %39 = vector.multi_reduction <add>, %38, %cst_22 [1] : vector<8x8xf32> to vector<8xf32>
    %40 = vector.shape_cast %39 : vector<8xf32> to vector<8x1xf32>
    %41 = tpu.reciprocal %40 {approx = true} : vector<8x1xf32> -> vector<8x1xf32>
    %42 = vector.broadcast %41 : vector<8x1xf32> to vector<8x8xf32>
    %43 = arith.mulf %38, %42 : vector<8x8xf32>
    %44 = arith.truncf %43 : vector<8x8xf32> to vector<8x8xbf16>
    "tpu.trace_start"() <{level = 10 : i32, message = "qk,kd->qd"}> : () -> ()
    %cst_23 = arith.constant dense<0.000000e+00> : vector<8x32xf32>
    %45 = tpu.matmul %44, %32, %cst_23 {dimension_numbers = #tpu.dot_dimension_numbers<[1], [0], [0], [1], [0, 0, 1, 1], [], []>} : vector<8x8xbf16>, vector<8x32xbf16>, vector<8x32xf32> -> vector<8x32xf32>
    "tpu.trace_stop"() : () -> ()
    %46 = arith.truncf %45 : vector<8x32xf32> to vector<8x32xbf16>
    %47 = vector.extract_strided_slice %14 {offsets = [0, 0], sizes = [32, 128], strides = [1, 1]} : vector<128x128xbf16> to vector<32x128xbf16>
    %cst_24 = arith.constant dense<0.000000e+00> : vector<8x128xf32>
    %48 = tpu.matmul %46, %47, %cst_24 {dimension_numbers = #tpu.dot_dimension_numbers<[1], [0], [0], [1], [0, 0, 1, 1], [], []>} : vector<8x32xbf16>, vector<32x128xbf16>, vector<8x128xf32> -> vector<8x128xf32>
    %49 = arith.addf %26, %48 : vector<8x128xf32>
    %50 = vector.extract_strided_slice %23 {offsets = [0, 32], sizes = [8, 32], strides = [1, 1]} : vector<8x128xf32> to vector<8x32xf32>
    %51 = arith.truncf %50 : vector<8x32xf32> to vector<8x32xbf16>
    %52 = vector.extract_strided_slice %24 {offsets = [0, 32], sizes = [8, 32], strides = [1, 1]} : vector<8x128xf32> to vector<8x32xf32>
    %53 = arith.truncf %52 : vector<8x32xf32> to vector<8x32xbf16>
    %54 = vector.extract_strided_slice %25 {offsets = [0, 32], sizes = [8, 32], strides = [1, 1]} : vector<8x128xf32> to vector<8x32xf32>
    %55 = arith.truncf %54 : vector<8x32xf32> to vector<8x32xbf16>
    "tpu.trace_start"() <{level = 10 : i32, message = "qd,kd->qk"}> : () -> ()
    %cst_25 = arith.constant dense<0.000000e+00> : vector<8x8xf32>
    %56 = tpu.matmul %51, %53, %cst_25 {dimension_numbers = #tpu.dot_dimension_numbers<[1], [1], [0], [0], [0, 0, 1, 0], [], []>} : vector<8x32xbf16>, vector<8x32xbf16>, vector<8x8xf32> -> vector<8x8xf32>
    "tpu.trace_stop"() : () -> ()
    %cst_26 = arith.constant dense<0xFF800000> : vector<8xf32>
    %57 = vector.multi_reduction <maximumf>, %56, %cst_26 [1] : vector<8x8xf32> to vector<8xf32>
    %58 = vector.shape_cast %57 : vector<8xf32> to vector<8x1xf32>
    %59 = vector.broadcast %58 : vector<8x1xf32> to vector<8x8xf32>
    %60 = arith.subf %56, %59 : vector<8x8xf32>
    %61 = math.exp %60 : vector<8x8xf32>
    %cst_27 = arith.constant dense<0.000000e+00> : vector<8xf32>
    %62 = vector.multi_reduction <add>, %61, %cst_27 [1] : vector<8x8xf32> to vector<8xf32>
    %63 = vector.shape_cast %62 : vector<8xf32> to vector<8x1xf32>
    %64 = tpu.reciprocal %63 {approx = true} : vector<8x1xf32> -> vector<8x1xf32>
    %65 = vector.broadcast %64 : vector<8x1xf32> to vector<8x8xf32>
    %66 = arith.mulf %61, %65 : vector<8x8xf32>
    %67 = arith.truncf %66 : vector<8x8xf32> to vector<8x8xbf16>
    "tpu.trace_start"() <{level = 10 : i32, message = "qk,kd->qd"}> : () -> ()
    %cst_28 = arith.constant dense<0.000000e+00> : vector<8x32xf32>
    %68 = tpu.matmul %67, %55, %cst_28 {dimension_numbers = #tpu.dot_dimension_numbers<[1], [0], [0], [1], [0, 0, 1, 1], [], []>} : vector<8x8xbf16>, vector<8x32xbf16>, vector<8x32xf32> -> vector<8x32xf32>
    "tpu.trace_stop"() : () -> ()
    %69 = arith.truncf %68 : vector<8x32xf32> to vector<8x32xbf16>
    %70 = vector.extract_strided_slice %14 {offsets = [32, 0], sizes = [32, 128], strides = [1, 1]} : vector<128x128xbf16> to vector<32x128xbf16>
    %cst_29 = arith.constant dense<0.000000e+00> : vector<8x128xf32>
    %71 = tpu.matmul %69, %70, %cst_29 {dimension_numbers = #tpu.dot_dimension_numbers<[1], [0], [0], [1], [0, 0, 1, 1], [], []>} : vector<8x32xbf16>, vector<32x128xbf16>, vector<8x128xf32> -> vector<8x128xf32>
    %72 = arith.addf %49, %71 : vector<8x128xf32>
    %73 = vector.extract_strided_slice %23 {offsets = [0, 64], sizes = [8, 32], strides = [1, 1]} : vector<8x128xf32> to vector<8x32xf32>
    %74 = arith.truncf %73 : vector<8x32xf32> to vector<8x32xbf16>
    %75 = vector.extract_strided_slice %24 {offsets = [0, 64], sizes = [8, 32], strides = [1, 1]} : vector<8x128xf32> to vector<8x32xf32>
    %76 = arith.truncf %75 : vector<8x32xf32> to vector<8x32xbf16>
    %77 = vector.extract_strided_slice %25 {offsets = [0, 64], sizes = [8, 32], strides = [1, 1]} : vector<8x128xf32> to vector<8x32xf32>
    %78 = arith.truncf %77 : vector<8x32xf32> to vector<8x32xbf16>
    "tpu.trace_start"() <{level = 10 : i32, message = "qd,kd->qk"}> : () -> ()
    %cst_30 = arith.constant dense<0.000000e+00> : vector<8x8xf32>
    %79 = tpu.matmul %74, %76, %cst_30 {dimension_numbers = #tpu.dot_dimension_numbers<[1], [1], [0], [0], [0, 0, 1, 0], [], []>} : vector<8x32xbf16>, vector<8x32xbf16>, vector<8x8xf32> -> vector<8x8xf32>
    "tpu.trace_stop"() : () -> ()
    %cst_31 = arith.constant dense<0xFF800000> : vector<8xf32>
    %80 = vector.multi_reduction <maximumf>, %79, %cst_31 [1] : vector<8x8xf32> to vector<8xf32>
    %81 = vector.shape_cast %80 : vector<8xf32> to vector<8x1xf32>
    %82 = vector.broadcast %81 : vector<8x1xf32> to vector<8x8xf32>
    %83 = arith.subf %79, %82 : vector<8x8xf32>
    %84 = math.exp %83 : vector<8x8xf32>
    %cst_32 = arith.constant dense<0.000000e+00> : vector<8xf32>
    %85 = vector.multi_reduction <add>, %84, %cst_32 [1] : vector<8x8xf32> to vector<8xf32>
    %86 = vector.shape_cast %85 : vector<8xf32> to vector<8x1xf32>
    %87 = tpu.reciprocal %86 {approx = true} : vector<8x1xf32> -> vector<8x1xf32>
    %88 = vector.broadcast %87 : vector<8x1xf32> to vector<8x8xf32>
    %89 = arith.mulf %84, %88 : vector<8x8xf32>
    %90 = arith.truncf %89 : vector<8x8xf32> to vector<8x8xbf16>
    "tpu.trace_start"() <{level = 10 : i32, message = "qk,kd->qd"}> : () -> ()
    %cst_33 = arith.constant dense<0.000000e+00> : vector<8x32xf32>
    %91 = tpu.matmul %90, %78, %cst_33 {dimension_numbers = #tpu.dot_dimension_numbers<[1], [0], [0], [1], [0, 0, 1, 1], [], []>} : vector<8x8xbf16>, vector<8x32xbf16>, vector<8x32xf32> -> vector<8x32xf32>
    "tpu.trace_stop"() : () -> ()
    %92 = arith.truncf %91 : vector<8x32xf32> to vector<8x32xbf16>
    %93 = vector.extract_strided_slice %14 {offsets = [64, 0], sizes = [32, 128], strides = [1, 1]} : vector<128x128xbf16> to vector<32x128xbf16>
    %cst_34 = arith.constant dense<0.000000e+00> : vector<8x128xf32>
    %94 = tpu.matmul %92, %93, %cst_34 {dimension_numbers = #tpu.dot_dimension_numbers<[1], [0], [0], [1], [0, 0, 1, 1], [], []>} : vector<8x32xbf16>, vector<32x128xbf16>, vector<8x128xf32> -> vector<8x128xf32>
    %95 = arith.addf %72, %94 : vector<8x128xf32>
    %96 = vector.extract_strided_slice %23 {offsets = [0, 96], sizes = [8, 32], strides = [1, 1]} : vector<8x128xf32> to vector<8x32xf32>
    %97 = arith.truncf %96 : vector<8x32xf32> to vector<8x32xbf16>
    %98 = vector.extract_strided_slice %24 {offsets = [0, 96], sizes = [8, 32], strides = [1, 1]} : vector<8x128xf32> to vector<8x32xf32>
    %99 = arith.truncf %98 : vector<8x32xf32> to vector<8x32xbf16>
    %100 = vector.extract_strided_slice %25 {offsets = [0, 96], sizes = [8, 32], strides = [1, 1]} : vector<8x128xf32> to vector<8x32xf32>
    %101 = arith.truncf %100 : vector<8x32xf32> to vector<8x32xbf16>
    "tpu.trace_start"() <{level = 10 : i32, message = "qd,kd->qk"}> : () -> ()
    %cst_35 = arith.constant dense<0.000000e+00> : vector<8x8xf32>
    %102 = tpu.matmul %97, %99, %cst_35 {dimension_numbers = #tpu.dot_dimension_numbers<[1], [1], [0], [0], [0, 0, 1, 0], [], []>} : vector<8x32xbf16>, vector<8x32xbf16>, vector<8x8xf32> -> vector<8x8xf32>
    "tpu.trace_stop"() : () -> ()
    %cst_36 = arith.constant dense<0xFF800000> : vector<8xf32>
    %103 = vector.multi_reduction <maximumf>, %102, %cst_36 [1] : vector<8x8xf32> to vector<8xf32>
    %104 = vector.shape_cast %103 : vector<8xf32> to vector<8x1xf32>
    %105 = vector.broadcast %104 : vector<8x1xf32> to vector<8x8xf32>
    %106 = arith.subf %102, %105 : vector<8x8xf32>
    %107 = math.exp %106 : vector<8x8xf32>
    %cst_37 = arith.constant dense<0.000000e+00> : vector<8xf32>
    %108 = vector.multi_reduction <add>, %107, %cst_37 [1] : vector<8x8xf32> to vector<8xf32>
    %109 = vector.shape_cast %108 : vector<8xf32> to vector<8x1xf32>
    %110 = tpu.reciprocal %109 {approx = true} : vector<8x1xf32> -> vector<8x1xf32>
    %111 = vector.broadcast %110 : vector<8x1xf32> to vector<8x8xf32>
    %112 = arith.mulf %107, %111 : vector<8x8xf32>
    %113 = arith.truncf %112 : vector<8x8xf32> to vector<8x8xbf16>
    "tpu.trace_start"() <{level = 10 : i32, message = "qk,kd->qd"}> : () -> ()
    %cst_38 = arith.constant dense<0.000000e+00> : vector<8x32xf32>
    %114 = tpu.matmul %113, %101, %cst_38 {dimension_numbers = #tpu.dot_dimension_numbers<[1], [0], [0], [1], [0, 0, 1, 1], [], []>} : vector<8x8xbf16>, vector<8x32xbf16>, vector<8x32xf32> -> vector<8x32xf32>
    "tpu.trace_stop"() : () -> ()
    %115 = arith.truncf %114 : vector<8x32xf32> to vector<8x32xbf16>
    %116 = vector.extract_strided_slice %14 {offsets = [96, 0], sizes = [32, 128], strides = [1, 1]} : vector<128x128xbf16> to vector<32x128xbf16>
    %cst_39 = arith.constant dense<0.000000e+00> : vector<8x128xf32>
    %117 = tpu.matmul %115, %116, %cst_39 {dimension_numbers = #tpu.dot_dimension_numbers<[1], [0], [0], [1], [0, 0, 1, 1], [], []>} : vector<8x32xbf16>, vector<32x128xbf16>, vector<8x128xf32> -> vector<8x128xf32>
    %118 = arith.addf %95, %117 : vector<8x128xf32>
    %119 = vector.broadcast %16 : vector<1x128xf32> to vector<8x128xf32>
    %120 = arith.addf %118, %119 : vector<8x128xf32>
    %121 = arith.addf %8, %120 : vector<8x128xf32>
    %c0_40 = arith.constant 0 : index
    %c0_41 = arith.constant 0 : index
    %c0_42 = arith.constant 0 : index
    %122 = vector.load %arg8[%c0_40, %c0_41, %c0_42] : memref<2x1x128xf32, #tpu.memory_space<vmem>>, vector<1x1x128xf32>
    %123 = vector.shape_cast %122 : vector<1x1x128xf32> to vector<1x128xf32>
    %c0_43 = arith.constant 0 : index
    %c0_44 = arith.constant 0 : index
    %c0_45 = arith.constant 0 : index
    %124 = vector.load %arg9[%c0_43, %c0_44, %c0_45] : memref<2x1x128xf32, #tpu.memory_space<vmem>>, vector<1x1x128xf32>
    %125 = vector.shape_cast %124 : vector<1x1x128xf32> to vector<1x128xf32>
    %cst_46 = arith.constant dense<0.000000e+00> : vector<8xf32>
    %126 = vector.multi_reduction <add>, %121, %cst_46 [1] : vector<8x128xf32> to vector<8xf32>
    %127 = vector.shape_cast %126 : vector<8xf32> to vector<8x1xf32>
    %cst_47 = arith.constant 1.280000e+02 : f32
    %128 = vector.broadcast %cst_47 : f32 to vector<8x1xf32>
    %129 = arith.divf %127, %128 : vector<8x1xf32>
    %130 = vector.broadcast %129 : vector<8x1xf32> to vector<8x128xf32>
    %131 = arith.subf %121, %130 : vector<8x128xf32>
    %132 = arith.mulf %131, %131 : vector<8x128xf32>
    %cst_48 = arith.constant dense<0.000000e+00> : vector<8xf32>
    %133 = vector.multi_reduction <add>, %132, %cst_48 [1] : vector<8x128xf32> to vector<8xf32>
    %134 = vector.shape_cast %133 : vector<8xf32> to vector<8x1xf32>
    %cst_49 = arith.constant 1.280000e+02 : f32
    %135 = vector.broadcast %cst_49 : f32 to vector<8x1xf32>
    %136 = arith.divf %134, %135 : vector<8x1xf32>
    %cst_50 = arith.constant 9.99999974E-6 : f32
    %137 = vector.broadcast %cst_50 : f32 to vector<8x1xf32>
    %138 = arith.addf %136, %137 : vector<8x1xf32>
    %139 = math.rsqrt %138 : vector<8x1xf32>
    %140 = vector.broadcast %139 : vector<8x1xf32> to vector<8x128xf32>
    %141 = arith.mulf %131, %140 : vector<8x128xf32>
    %142 = vector.broadcast %123 : vector<1x128xf32> to vector<8x128xf32>
    %143 = arith.mulf %141, %142 : vector<8x128xf32>
    %144 = vector.broadcast %125 : vector<1x128xf32> to vector<8x128xf32>
    %145 = arith.addf %143, %144 : vector<8x128xf32>
    %c0_51 = arith.constant 0 : index
    %c0_52 = arith.constant 0 : index
    %c0_53 = arith.constant 0 : index
    %146 = vector.load %arg12[%c0_51, %c0_52, %c0_53] : memref<2x128x128xbf16, #tpu.memory_space<vmem>>, vector<1x128x128xbf16>
    %147 = vector.shape_cast %146 : vector<1x128x128xbf16> to vector<128x128xbf16>
    %c0_54 = arith.constant 0 : index
    %c0_55 = arith.constant 0 : index
    %c0_56 = arith.constant 0 : index
    %148 = vector.load %arg13[%c0_54, %c0_55, %c0_56] : memref<2x1x128xf32, #tpu.memory_space<vmem>>, vector<1x1x128xf32>
    %149 = vector.shape_cast %148 : vector<1x1x128xf32> to vector<1x128xf32>
    %c0_57 = arith.constant 0 : index
    %c0_58 = arith.constant 0 : index
    %c0_59 = arith.constant 0 : index
    %150 = vector.load %arg14[%c0_57, %c0_58, %c0_59] : memref<2x128x128xbf16, #tpu.memory_space<vmem>>, vector<1x128x128xbf16>
    %151 = vector.shape_cast %150 : vector<1x128x128xbf16> to vector<128x128xbf16>
    %c0_60 = arith.constant 0 : index
    %c0_61 = arith.constant 0 : index
    %c0_62 = arith.constant 0 : index
    %152 = vector.load %arg15[%c0_60, %c0_61, %c0_62] : memref<2x1x128xf32, #tpu.memory_space<vmem>>, vector<1x1x128xf32>
    %153 = vector.shape_cast %152 : vector<1x1x128xf32> to vector<1x128xf32>
    %154 = arith.truncf %145 : vector<8x128xf32> to vector<8x128xbf16>
    %cst_63 = arith.constant dense<0.000000e+00> : vector<8x128xf32>
    %155 = tpu.matmul %154, %147, %cst_63 {dimension_numbers = #tpu.dot_dimension_numbers<[1], [0], [0], [1], [0, 0, 1, 1], [], []>} : vector<8x128xbf16>, vector<128x128xbf16>, vector<8x128xf32> -> vector<8x128xf32>
    %156 = vector.broadcast %149 : vector<1x128xf32> to vector<8x128xf32>
    %157 = arith.addf %155, %156 : vector<8x128xf32>
    %cst_64 = arith.constant 0.000000e+00 : f32
    %158 = vector.broadcast %cst_64 : f32 to vector<8x128xf32>
    %159 = arith.maximumf %157, %158 : vector<8x128xf32>
    %160 = arith.truncf %159 : vector<8x128xf32> to vector<8x128xbf16>
    %cst_65 = arith.constant dense<0.000000e+00> : vector<8x128xf32>
    %161 = tpu.matmul %160, %151, %cst_65 {dimension_numbers = #tpu.dot_dimension_numbers<[1], [0], [0], [1], [0, 0, 1, 1], [], []>} : vector<8x128xbf16>, vector<128x128xbf16>, vector<8x128xf32> -> vector<8x128xf32>
    %162 = vector.broadcast %153 : vector<1x128xf32> to vector<8x128xf32>
    %163 = arith.addf %161, %162 : vector<8x128xf32>
    %164 = arith.addf %145, %163 : vector<8x128xf32>
    %c0_66 = arith.constant 0 : index
    %c0_67 = arith.constant 0 : index
    %c0_68 = arith.constant 0 : index
    %165 = vector.load %arg10[%c0_66, %c0_67, %c0_68] : memref<2x1x128xf32, #tpu.memory_space<vmem>>, vector<1x1x128xf32>
    %166 = vector.shape_cast %165 : vector<1x1x128xf32> to vector<1x128xf32>
    %c0_69 = arith.constant 0 : index
    %c0_70 = arith.constant 0 : index
    %c0_71 = arith.constant 0 : index
    %167 = vector.load %arg11[%c0_69, %c0_70, %c0_71] : memref<2x1x128xf32, #tpu.memory_space<vmem>>, vector<1x1x128xf32>
    %168 = vector.shape_cast %167 : vector<1x1x128xf32> to vector<1x128xf32>
    %cst_72 = arith.constant dense<0.000000e+00> : vector<8xf32>
    %169 = vector.multi_reduction <add>, %164, %cst_72 [1] : vector<8x128xf32> to vector<8xf32>
    %170 = vector.shape_cast %169 : vector<8xf32> to vector<8x1xf32>
    %cst_73 = arith.constant 1.280000e+02 : f32
    %171 = vector.broadcast %cst_73 : f32 to vector<8x1xf32>
    %172 = arith.divf %170, %171 : vector<8x1xf32>
    %173 = vector.broadcast %172 : vector<8x1xf32> to vector<8x128xf32>
    %174 = arith.subf %164, %173 : vector<8x128xf32>
    %175 = arith.mulf %174, %174 : vector<8x128xf32>
    %cst_74 = arith.constant dense<0.000000e+00> : vector<8xf32>
    %176 = vector.multi_reduction <add>, %175, %cst_74 [1] : vector<8x128xf32> to vector<8xf32>
    %177 = vector.shape_cast %176 : vector<8xf32> to vector<8x1xf32>
    %cst_75 = arith.constant 1.280000e+02 : f32
    %178 = vector.broadcast %cst_75 : f32 to vector<8x1xf32>
    %179 = arith.divf %177, %178 : vector<8x1xf32>
    %cst_76 = arith.constant 9.99999974E-6 : f32
    %180 = vector.broadcast %cst_76 : f32 to vector<8x1xf32>
    %181 = arith.addf %179, %180 : vector<8x1xf32>
    %182 = math.rsqrt %181 : vector<8x1xf32>
    %183 = vector.broadcast %182 : vector<8x1xf32> to vector<8x128xf32>
    %184 = arith.mulf %174, %183 : vector<8x128xf32>
    %185 = vector.broadcast %166 : vector<1x128xf32> to vector<8x128xf32>
    %186 = arith.mulf %184, %185 : vector<8x128xf32>
    %187 = vector.broadcast %168 : vector<1x128xf32> to vector<8x128xf32>
    %188 = arith.addf %186, %187 : vector<8x128xf32>
    %c1 = arith.constant 1 : index
    %c0_77 = arith.constant 0 : index
    %c0_78 = arith.constant 0 : index
    %189 = vector.load %arg4[%c1, %c0_77, %c0_78] : memref<2x128x384xbf16, #tpu.memory_space<vmem>>, vector<1x128x384xbf16>
    %190 = vector.shape_cast %189 : vector<1x128x384xbf16> to vector<128x384xbf16>
    %c1_79 = arith.constant 1 : index
    %c0_80 = arith.constant 0 : index
    %c0_81 = arith.constant 0 : index
    %191 = vector.load %arg5[%c1_79, %c0_80, %c0_81] : memref<2x1x384xf32, #tpu.memory_space<vmem>>, vector<1x1x384xf32>
    %192 = vector.shape_cast %191 : vector<1x1x384xf32> to vector<1x384xf32>
    %c1_82 = arith.constant 1 : index
    %c0_83 = arith.constant 0 : index
    %c0_84 = arith.constant 0 : index
    %193 = vector.load %arg6[%c1_82, %c0_83, %c0_84] : memref<2x128x128xbf16, #tpu.memory_space<vmem>>, vector<1x128x128xbf16>
    %194 = vector.shape_cast %193 : vector<1x128x128xbf16> to vector<128x128xbf16>
    %c1_85 = arith.constant 1 : index
    %c0_86 = arith.constant 0 : index
    %c0_87 = arith.constant 0 : index
    %195 = vector.load %arg7[%c1_85, %c0_86, %c0_87] : memref<2x1x128xf32, #tpu.memory_space<vmem>>, vector<1x1x128xf32>
    %196 = vector.shape_cast %195 : vector<1x1x128xf32> to vector<1x128xf32>
    %197 = arith.truncf %188 : vector<8x128xf32> to vector<8x128xbf16>
    %cst_88 = arith.constant dense<0.000000e+00> : vector<8x384xf32>
    %198 = tpu.matmul %197, %190, %cst_88 {dimension_numbers = #tpu.dot_dimension_numbers<[1], [0], [0], [1], [0, 0, 1, 1], [], []>} : vector<8x128xbf16>, vector<128x384xbf16>, vector<8x384xf32> -> vector<8x384xf32>
    %199 = vector.broadcast %192 : vector<1x384xf32> to vector<8x384xf32>
    %200 = arith.addf %198, %199 : vector<8x384xf32>
    %201 = vector.extract_strided_slice %200 {offsets = [0, 0], sizes = [8, 128], strides = [1, 1]} : vector<8x384xf32> to vector<8x128xf32>
    %cst_89 = arith.constant 0.176776692 : f32
    %202 = vector.broadcast %cst_89 : f32 to vector<8x128xf32>
    %203 = arith.mulf %201, %202 : vector<8x128xf32>
    %204 = vector.extract_strided_slice %200 {offsets = [0, 128], sizes = [8, 128], strides = [1, 1]} : vector<8x384xf32> to vector<8x128xf32>
    %205 = vector.extract_strided_slice %200 {offsets = [0, 256], sizes = [8, 128], strides = [1, 1]} : vector<8x384xf32> to vector<8x128xf32>
    %cst_90 = arith.constant 0.000000e+00 : f32
    %206 = vector.broadcast %cst_90 : f32 to vector<8x128xf32>
    %207 = vector.extract_strided_slice %203 {offsets = [0, 0], sizes = [8, 32], strides = [1, 1]} : vector<8x128xf32> to vector<8x32xf32>
    %208 = arith.truncf %207 : vector<8x32xf32> to vector<8x32xbf16>
    %209 = vector.extract_strided_slice %204 {offsets = [0, 0], sizes = [8, 32], strides = [1, 1]} : vector<8x128xf32> to vector<8x32xf32>
    %210 = arith.truncf %209 : vector<8x32xf32> to vector<8x32xbf16>
    %211 = vector.extract_strided_slice %205 {offsets = [0, 0], sizes = [8, 32], strides = [1, 1]} : vector<8x128xf32> to vector<8x32xf32>
    %212 = arith.truncf %211 : vector<8x32xf32> to vector<8x32xbf16>
    "tpu.trace_start"() <{level = 10 : i32, message = "qd,kd->qk"}> : () -> ()
    %cst_91 = arith.constant dense<0.000000e+00> : vector<8x8xf32>
    %213 = tpu.matmul %208, %210, %cst_91 {dimension_numbers = #tpu.dot_dimension_numbers<[1], [1], [0], [0], [0, 0, 1, 0], [], []>} : vector<8x32xbf16>, vector<8x32xbf16>, vector<8x8xf32> -> vector<8x8xf32>
    "tpu.trace_stop"() : () -> ()
    %cst_92 = arith.constant dense<0xFF800000> : vector<8xf32>
    %214 = vector.multi_reduction <maximumf>, %213, %cst_92 [1] : vector<8x8xf32> to vector<8xf32>
    %215 = vector.shape_cast %214 : vector<8xf32> to vector<8x1xf32>
    %216 = vector.broadcast %215 : vector<8x1xf32> to vector<8x8xf32>
    %217 = arith.subf %213, %216 : vector<8x8xf32>
    %218 = math.exp %217 : vector<8x8xf32>
    %cst_93 = arith.constant dense<0.000000e+00> : vector<8xf32>
    %219 = vector.multi_reduction <add>, %218, %cst_93 [1] : vector<8x8xf32> to vector<8xf32>
    %220 = vector.shape_cast %219 : vector<8xf32> to vector<8x1xf32>
    %221 = tpu.reciprocal %220 {approx = true} : vector<8x1xf32> -> vector<8x1xf32>
    %222 = vector.broadcast %221 : vector<8x1xf32> to vector<8x8xf32>
    %223 = arith.mulf %218, %222 : vector<8x8xf32>
    %224 = arith.truncf %223 : vector<8x8xf32> to vector<8x8xbf16>
    "tpu.trace_start"() <{level = 10 : i32, message = "qk,kd->qd"}> : () -> ()
    %cst_94 = arith.constant dense<0.000000e+00> : vector<8x32xf32>
    %225 = tpu.matmul %224, %212, %cst_94 {dimension_numbers = #tpu.dot_dimension_numbers<[1], [0], [0], [1], [0, 0, 1, 1], [], []>} : vector<8x8xbf16>, vector<8x32xbf16>, vector<8x32xf32> -> vector<8x32xf32>
    "tpu.trace_stop"() : () -> ()
    %226 = arith.truncf %225 : vector<8x32xf32> to vector<8x32xbf16>
    %227 = vector.extract_strided_slice %194 {offsets = [0, 0], sizes = [32, 128], strides = [1, 1]} : vector<128x128xbf16> to vector<32x128xbf16>
    %cst_95 = arith.constant dense<0.000000e+00> : vector<8x128xf32>
    %228 = tpu.matmul %226, %227, %cst_95 {dimension_numbers = #tpu.dot_dimension_numbers<[1], [0], [0], [1], [0, 0, 1, 1], [], []>} : vector<8x32xbf16>, vector<32x128xbf16>, vector<8x128xf32> -> vector<8x128xf32>
    %229 = arith.addf %206, %228 : vector<8x128xf32>
    %230 = vector.extract_strided_slice %203 {offsets = [0, 32], sizes = [8, 32], strides = [1, 1]} : vector<8x128xf32> to vector<8x32xf32>
    %231 = arith.truncf %230 : vector<8x32xf32> to vector<8x32xbf16>
    %232 = vector.extract_strided_slice %204 {offsets = [0, 32], sizes = [8, 32], strides = [1, 1]} : vector<8x128xf32> to vector<8x32xf32>
    %233 = arith.truncf %232 : vector<8x32xf32> to vector<8x32xbf16>
    %234 = vector.extract_strided_slice %205 {offsets = [0, 32], sizes = [8, 32], strides = [1, 1]} : vector<8x128xf32> to vector<8x32xf32>
    %235 = arith.truncf %234 : vector<8x32xf32> to vector<8x32xbf16>
    "tpu.trace_start"() <{level = 10 : i32, message = "qd,kd->qk"}> : () -> ()
    %cst_96 = arith.constant dense<0.000000e+00> : vector<8x8xf32>
    %236 = tpu.matmul %231, %233, %cst_96 {dimension_numbers = #tpu.dot_dimension_numbers<[1], [1], [0], [0], [0, 0, 1, 0], [], []>} : vector<8x32xbf16>, vector<8x32xbf16>, vector<8x8xf32> -> vector<8x8xf32>
    "tpu.trace_stop"() : () -> ()
    %cst_97 = arith.constant dense<0xFF800000> : vector<8xf32>
    %237 = vector.multi_reduction <maximumf>, %236, %cst_97 [1] : vector<8x8xf32> to vector<8xf32>
    %238 = vector.shape_cast %237 : vector<8xf32> to vector<8x1xf32>
    %239 = vector.broadcast %238 : vector<8x1xf32> to vector<8x8xf32>
    %240 = arith.subf %236, %239 : vector<8x8xf32>
    %241 = math.exp %240 : vector<8x8xf32>
    %cst_98 = arith.constant dense<0.000000e+00> : vector<8xf32>
    %242 = vector.multi_reduction <add>, %241, %cst_98 [1] : vector<8x8xf32> to vector<8xf32>
    %243 = vector.shape_cast %242 : vector<8xf32> to vector<8x1xf32>
    %244 = tpu.reciprocal %243 {approx = true} : vector<8x1xf32> -> vector<8x1xf32>
    %245 = vector.broadcast %244 : vector<8x1xf32> to vector<8x8xf32>
    %246 = arith.mulf %241, %245 : vector<8x8xf32>
    %247 = arith.truncf %246 : vector<8x8xf32> to vector<8x8xbf16>
    "tpu.trace_start"() <{level = 10 : i32, message = "qk,kd->qd"}> : () -> ()
    %cst_99 = arith.constant dense<0.000000e+00> : vector<8x32xf32>
    %248 = tpu.matmul %247, %235, %cst_99 {dimension_numbers = #tpu.dot_dimension_numbers<[1], [0], [0], [1], [0, 0, 1, 1], [], []>} : vector<8x8xbf16>, vector<8x32xbf16>, vector<8x32xf32> -> vector<8x32xf32>
    "tpu.trace_stop"() : () -> ()
    %249 = arith.truncf %248 : vector<8x32xf32> to vector<8x32xbf16>
    %250 = vector.extract_strided_slice %194 {offsets = [32, 0], sizes = [32, 128], strides = [1, 1]} : vector<128x128xbf16> to vector<32x128xbf16>
    %cst_100 = arith.constant dense<0.000000e+00> : vector<8x128xf32>
    %251 = tpu.matmul %249, %250, %cst_100 {dimension_numbers = #tpu.dot_dimension_numbers<[1], [0], [0], [1], [0, 0, 1, 1], [], []>} : vector<8x32xbf16>, vector<32x128xbf16>, vector<8x128xf32> -> vector<8x128xf32>
    %252 = arith.addf %229, %251 : vector<8x128xf32>
    %253 = vector.extract_strided_slice %203 {offsets = [0, 64], sizes = [8, 32], strides = [1, 1]} : vector<8x128xf32> to vector<8x32xf32>
    %254 = arith.truncf %253 : vector<8x32xf32> to vector<8x32xbf16>
    %255 = vector.extract_strided_slice %204 {offsets = [0, 64], sizes = [8, 32], strides = [1, 1]} : vector<8x128xf32> to vector<8x32xf32>
    %256 = arith.truncf %255 : vector<8x32xf32> to vector<8x32xbf16>
    %257 = vector.extract_strided_slice %205 {offsets = [0, 64], sizes = [8, 32], strides = [1, 1]} : vector<8x128xf32> to vector<8x32xf32>
    %258 = arith.truncf %257 : vector<8x32xf32> to vector<8x32xbf16>
    "tpu.trace_start"() <{level = 10 : i32, message = "qd,kd->qk"}> : () -> ()
    %cst_101 = arith.constant dense<0.000000e+00> : vector<8x8xf32>
    %259 = tpu.matmul %254, %256, %cst_101 {dimension_numbers = #tpu.dot_dimension_numbers<[1], [1], [0], [0], [0, 0, 1, 0], [], []>} : vector<8x32xbf16>, vector<8x32xbf16>, vector<8x8xf32> -> vector<8x8xf32>
    "tpu.trace_stop"() : () -> ()
    %cst_102 = arith.constant dense<0xFF800000> : vector<8xf32>
    %260 = vector.multi_reduction <maximumf>, %259, %cst_102 [1] : vector<8x8xf32> to vector<8xf32>
    %261 = vector.shape_cast %260 : vector<8xf32> to vector<8x1xf32>
    %262 = vector.broadcast %261 : vector<8x1xf32> to vector<8x8xf32>
    %263 = arith.subf %259, %262 : vector<8x8xf32>
    %264 = math.exp %263 : vector<8x8xf32>
    %cst_103 = arith.constant dense<0.000000e+00> : vector<8xf32>
    %265 = vector.multi_reduction <add>, %264, %cst_103 [1] : vector<8x8xf32> to vector<8xf32>
    %266 = vector.shape_cast %265 : vector<8xf32> to vector<8x1xf32>
    %267 = tpu.reciprocal %266 {approx = true} : vector<8x1xf32> -> vector<8x1xf32>
    %268 = vector.broadcast %267 : vector<8x1xf32> to vector<8x8xf32>
    %269 = arith.mulf %264, %268 : vector<8x8xf32>
    %270 = arith.truncf %269 : vector<8x8xf32> to vector<8x8xbf16>
    "tpu.trace_start"() <{level = 10 : i32, message = "qk,kd->qd"}> : () -> ()
    %cst_104 = arith.constant dense<0.000000e+00> : vector<8x32xf32>
    %271 = tpu.matmul %270, %258, %cst_104 {dimension_numbers = #tpu.dot_dimension_numbers<[1], [0], [0], [1], [0, 0, 1, 1], [], []>} : vector<8x8xbf16>, vector<8x32xbf16>, vector<8x32xf32> -> vector<8x32xf32>
    "tpu.trace_stop"() : () -> ()
    %272 = arith.truncf %271 : vector<8x32xf32> to vector<8x32xbf16>
    %273 = vector.extract_strided_slice %194 {offsets = [64, 0], sizes = [32, 128], strides = [1, 1]} : vector<128x128xbf16> to vector<32x128xbf16>
    %cst_105 = arith.constant dense<0.000000e+00> : vector<8x128xf32>
    %274 = tpu.matmul %272, %273, %cst_105 {dimension_numbers = #tpu.dot_dimension_numbers<[1], [0], [0], [1], [0, 0, 1, 1], [], []>} : vector<8x32xbf16>, vector<32x128xbf16>, vector<8x128xf32> -> vector<8x128xf32>
    %275 = arith.addf %252, %274 : vector<8x128xf32>
    %276 = vector.extract_strided_slice %203 {offsets = [0, 96], sizes = [8, 32], strides = [1, 1]} : vector<8x128xf32> to vector<8x32xf32>
    %277 = arith.truncf %276 : vector<8x32xf32> to vector<8x32xbf16>
    %278 = vector.extract_strided_slice %204 {offsets = [0, 96], sizes = [8, 32], strides = [1, 1]} : vector<8x128xf32> to vector<8x32xf32>
    %279 = arith.truncf %278 : vector<8x32xf32> to vector<8x32xbf16>
    %280 = vector.extract_strided_slice %205 {offsets = [0, 96], sizes = [8, 32], strides = [1, 1]} : vector<8x128xf32> to vector<8x32xf32>
    %281 = arith.truncf %280 : vector<8x32xf32> to vector<8x32xbf16>
    "tpu.trace_start"() <{level = 10 : i32, message = "qd,kd->qk"}> : () -> ()
    %cst_106 = arith.constant dense<0.000000e+00> : vector<8x8xf32>
    %282 = tpu.matmul %277, %279, %cst_106 {dimension_numbers = #tpu.dot_dimension_numbers<[1], [1], [0], [0], [0, 0, 1, 0], [], []>} : vector<8x32xbf16>, vector<8x32xbf16>, vector<8x8xf32> -> vector<8x8xf32>
    "tpu.trace_stop"() : () -> ()
    %cst_107 = arith.constant dense<0xFF800000> : vector<8xf32>
    %283 = vector.multi_reduction <maximumf>, %282, %cst_107 [1] : vector<8x8xf32> to vector<8xf32>
    %284 = vector.shape_cast %283 : vector<8xf32> to vector<8x1xf32>
    %285 = vector.broadcast %284 : vector<8x1xf32> to vector<8x8xf32>
    %286 = arith.subf %282, %285 : vector<8x8xf32>
    %287 = math.exp %286 : vector<8x8xf32>
    %cst_108 = arith.constant dense<0.000000e+00> : vector<8xf32>
    %288 = vector.multi_reduction <add>, %287, %cst_108 [1] : vector<8x8xf32> to vector<8xf32>
    %289 = vector.shape_cast %288 : vector<8xf32> to vector<8x1xf32>
    %290 = tpu.reciprocal %289 {approx = true} : vector<8x1xf32> -> vector<8x1xf32>
    %291 = vector.broadcast %290 : vector<8x1xf32> to vector<8x8xf32>
    %292 = arith.mulf %287, %291 : vector<8x8xf32>
    %293 = arith.truncf %292 : vector<8x8xf32> to vector<8x8xbf16>
    "tpu.trace_start"() <{level = 10 : i32, message = "qk,kd->qd"}> : () -> ()
    %cst_109 = arith.constant dense<0.000000e+00> : vector<8x32xf32>
    %294 = tpu.matmul %293, %281, %cst_109 {dimension_numbers = #tpu.dot_dimension_numbers<[1], [0], [0], [1], [0, 0, 1, 1], [], []>} : vector<8x8xbf16>, vector<8x32xbf16>, vector<8x32xf32> -> vector<8x32xf32>
    "tpu.trace_stop"() : () -> ()
    %295 = arith.truncf %294 : vector<8x32xf32> to vector<8x32xbf16>
    %296 = vector.extract_strided_slice %194 {offsets = [96, 0], sizes = [32, 128], strides = [1, 1]} : vector<128x128xbf16> to vector<32x128xbf16>
    %cst_110 = arith.constant dense<0.000000e+00> : vector<8x128xf32>
    %297 = tpu.matmul %295, %296, %cst_110 {dimension_numbers = #tpu.dot_dimension_numbers<[1], [0], [0], [1], [0, 0, 1, 1], [], []>} : vector<8x32xbf16>, vector<32x128xbf16>, vector<8x128xf32> -> vector<8x128xf32>
    %298 = arith.addf %275, %297 : vector<8x128xf32>
    %299 = vector.broadcast %196 : vector<1x128xf32> to vector<8x128xf32>
    %300 = arith.addf %298, %299 : vector<8x128xf32>
    %301 = arith.addf %188, %300 : vector<8x128xf32>
    %c1_111 = arith.constant 1 : index
    %c0_112 = arith.constant 0 : index
    %c0_113 = arith.constant 0 : index
    %302 = vector.load %arg8[%c1_111, %c0_112, %c0_113] : memref<2x1x128xf32, #tpu.memory_space<vmem>>, vector<1x1x128xf32>
    %303 = vector.shape_cast %302 : vector<1x1x128xf32> to vector<1x128xf32>
    %c1_114 = arith.constant 1 : index
    %c0_115 = arith.constant 0 : index
    %c0_116 = arith.constant 0 : index
    %304 = vector.load %arg9[%c1_114, %c0_115, %c0_116] : memref<2x1x128xf32, #tpu.memory_space<vmem>>, vector<1x1x128xf32>
    %305 = vector.shape_cast %304 : vector<1x1x128xf32> to vector<1x128xf32>
    %cst_117 = arith.constant dense<0.000000e+00> : vector<8xf32>
    %306 = vector.multi_reduction <add>, %301, %cst_117 [1] : vector<8x128xf32> to vector<8xf32>
    %307 = vector.shape_cast %306 : vector<8xf32> to vector<8x1xf32>
    %cst_118 = arith.constant 1.280000e+02 : f32
    %308 = vector.broadcast %cst_118 : f32 to vector<8x1xf32>
    %309 = arith.divf %307, %308 : vector<8x1xf32>
    %310 = vector.broadcast %309 : vector<8x1xf32> to vector<8x128xf32>
    %311 = arith.subf %301, %310 : vector<8x128xf32>
    %312 = arith.mulf %311, %311 : vector<8x128xf32>
    %cst_119 = arith.constant dense<0.000000e+00> : vector<8xf32>
    %313 = vector.multi_reduction <add>, %312, %cst_119 [1] : vector<8x128xf32> to vector<8xf32>
    %314 = vector.shape_cast %313 : vector<8xf32> to vector<8x1xf32>
    %cst_120 = arith.constant 1.280000e+02 : f32
    %315 = vector.broadcast %cst_120 : f32 to vector<8x1xf32>
    %316 = arith.divf %314, %315 : vector<8x1xf32>
    %cst_121 = arith.constant 9.99999974E-6 : f32
    %317 = vector.broadcast %cst_121 : f32 to vector<8x1xf32>
    %318 = arith.addf %316, %317 : vector<8x1xf32>
    %319 = math.rsqrt %318 : vector<8x1xf32>
    %320 = vector.broadcast %319 : vector<8x1xf32> to vector<8x128xf32>
    %321 = arith.mulf %311, %320 : vector<8x128xf32>
    %322 = vector.broadcast %303 : vector<1x128xf32> to vector<8x128xf32>
    %323 = arith.mulf %321, %322 : vector<8x128xf32>
    %324 = vector.broadcast %305 : vector<1x128xf32> to vector<8x128xf32>
    %325 = arith.addf %323, %324 : vector<8x128xf32>
    %c1_122 = arith.constant 1 : index
    %c0_123 = arith.constant 0 : index
    %c0_124 = arith.constant 0 : index
    %326 = vector.load %arg12[%c1_122, %c0_123, %c0_124] : memref<2x128x128xbf16, #tpu.memory_space<vmem>>, vector<1x128x128xbf16>
    %327 = vector.shape_cast %326 : vector<1x128x128xbf16> to vector<128x128xbf16>
    %c1_125 = arith.constant 1 : index
    %c0_126 = arith.constant 0 : index
    %c0_127 = arith.constant 0 : index
    %328 = vector.load %arg13[%c1_125, %c0_126, %c0_127] : memref<2x1x128xf32, #tpu.memory_space<vmem>>, vector<1x1x128xf32>
    %329 = vector.shape_cast %328 : vector<1x1x128xf32> to vector<1x128xf32>
    %c1_128 = arith.constant 1 : index
    %c0_129 = arith.constant 0 : index
    %c0_130 = arith.constant 0 : index
    %330 = vector.load %arg14[%c1_128, %c0_129, %c0_130] : memref<2x128x128xbf16, #tpu.memory_space<vmem>>, vector<1x128x128xbf16>
    %331 = vector.shape_cast %330 : vector<1x128x128xbf16> to vector<128x128xbf16>
    %c1_131 = arith.constant 1 : index
    %c0_132 = arith.constant 0 : index
    %c0_133 = arith.constant 0 : index
    %332 = vector.load %arg15[%c1_131, %c0_132, %c0_133] : memref<2x1x128xf32, #tpu.memory_space<vmem>>, vector<1x1x128xf32>
    %333 = vector.shape_cast %332 : vector<1x1x128xf32> to vector<1x128xf32>
    %334 = arith.truncf %325 : vector<8x128xf32> to vector<8x128xbf16>
    %cst_134 = arith.constant dense<0.000000e+00> : vector<8x128xf32>
    %335 = tpu.matmul %334, %327, %cst_134 {dimension_numbers = #tpu.dot_dimension_numbers<[1], [0], [0], [1], [0, 0, 1, 1], [], []>} : vector<8x128xbf16>, vector<128x128xbf16>, vector<8x128xf32> -> vector<8x128xf32>
    %336 = vector.broadcast %329 : vector<1x128xf32> to vector<8x128xf32>
    %337 = arith.addf %335, %336 : vector<8x128xf32>
    %cst_135 = arith.constant 0.000000e+00 : f32
    %338 = vector.broadcast %cst_135 : f32 to vector<8x128xf32>
    %339 = arith.maximumf %337, %338 : vector<8x128xf32>
    %340 = arith.truncf %339 : vector<8x128xf32> to vector<8x128xbf16>
    %cst_136 = arith.constant dense<0.000000e+00> : vector<8x128xf32>
    %341 = tpu.matmul %340, %331, %cst_136 {dimension_numbers = #tpu.dot_dimension_numbers<[1], [0], [0], [1], [0, 0, 1, 1], [], []>} : vector<8x128xbf16>, vector<128x128xbf16>, vector<8x128xf32> -> vector<8x128xf32>
    %342 = vector.broadcast %333 : vector<1x128xf32> to vector<8x128xf32>
    %343 = arith.addf %341, %342 : vector<8x128xf32>
    %344 = arith.addf %325, %343 : vector<8x128xf32>
    %c1_137 = arith.constant 1 : index
    %c0_138 = arith.constant 0 : index
    %c0_139 = arith.constant 0 : index
    %345 = vector.load %arg10[%c1_137, %c0_138, %c0_139] : memref<2x1x128xf32, #tpu.memory_space<vmem>>, vector<1x1x128xf32>
    %346 = vector.shape_cast %345 : vector<1x1x128xf32> to vector<1x128xf32>
    %c1_140 = arith.constant 1 : index
    %c0_141 = arith.constant 0 : index
    %c0_142 = arith.constant 0 : index
    %347 = vector.load %arg11[%c1_140, %c0_141, %c0_142] : memref<2x1x128xf32, #tpu.memory_space<vmem>>, vector<1x1x128xf32>
    %348 = vector.shape_cast %347 : vector<1x1x128xf32> to vector<1x128xf32>
    %cst_143 = arith.constant dense<0.000000e+00> : vector<8xf32>
    %349 = vector.multi_reduction <add>, %344, %cst_143 [1] : vector<8x128xf32> to vector<8xf32>
    %350 = vector.shape_cast %349 : vector<8xf32> to vector<8x1xf32>
    %cst_144 = arith.constant 1.280000e+02 : f32
    %351 = vector.broadcast %cst_144 : f32 to vector<8x1xf32>
    %352 = arith.divf %350, %351 : vector<8x1xf32>
    %353 = vector.broadcast %352 : vector<8x1xf32> to vector<8x128xf32>
    %354 = arith.subf %344, %353 : vector<8x128xf32>
    %355 = arith.mulf %354, %354 : vector<8x128xf32>
    %cst_145 = arith.constant dense<0.000000e+00> : vector<8xf32>
    %356 = vector.multi_reduction <add>, %355, %cst_145 [1] : vector<8x128xf32> to vector<8xf32>
    %357 = vector.shape_cast %356 : vector<8xf32> to vector<8x1xf32>
    %cst_146 = arith.constant 1.280000e+02 : f32
    %358 = vector.broadcast %cst_146 : f32 to vector<8x1xf32>
    %359 = arith.divf %357, %358 : vector<8x1xf32>
    %cst_147 = arith.constant 9.99999974E-6 : f32
    %360 = vector.broadcast %cst_147 : f32 to vector<8x1xf32>
    %361 = arith.addf %359, %360 : vector<8x1xf32>
    %362 = math.rsqrt %361 : vector<8x1xf32>
    %363 = vector.broadcast %362 : vector<8x1xf32> to vector<8x128xf32>
    %364 = arith.mulf %354, %363 : vector<8x128xf32>
    %365 = vector.broadcast %346 : vector<1x128xf32> to vector<8x128xf32>
    %366 = arith.mulf %364, %365 : vector<8x128xf32>
    %367 = vector.broadcast %348 : vector<1x128xf32> to vector<8x128xf32>
    %368 = arith.addf %366, %367 : vector<8x128xf32>
    %c0_148 = arith.constant 0 : index
    %c0_149 = arith.constant 0 : index
    %c0_150 = arith.constant 0 : index
    %369 = vector.load %arg16[%c0_148, %c0_149, %c0_150] : memref<2x128x384xbf16, #tpu.memory_space<vmem>>, vector<1x128x384xbf16>
    %370 = vector.shape_cast %369 : vector<1x128x384xbf16> to vector<128x384xbf16>
    %c0_151 = arith.constant 0 : index
    %c0_152 = arith.constant 0 : index
    %c0_153 = arith.constant 0 : index
    %371 = vector.load %arg17[%c0_151, %c0_152, %c0_153] : memref<2x1x384xf32, #tpu.memory_space<vmem>>, vector<1x1x384xf32>
    %372 = vector.shape_cast %371 : vector<1x1x384xf32> to vector<1x384xf32>
    %c0_154 = arith.constant 0 : index
    %c0_155 = arith.constant 0 : index
    %c0_156 = arith.constant 0 : index
    %373 = vector.load %arg18[%c0_154, %c0_155, %c0_156] : memref<2x128x128xbf16, #tpu.memory_space<vmem>>, vector<1x128x128xbf16>
    %374 = vector.shape_cast %373 : vector<1x128x128xbf16> to vector<128x128xbf16>
    %c0_157 = arith.constant 0 : index
    %c0_158 = arith.constant 0 : index
    %c0_159 = arith.constant 0 : index
    %375 = vector.load %arg19[%c0_157, %c0_158, %c0_159] : memref<2x1x128xf32, #tpu.memory_space<vmem>>, vector<1x1x128xf32>
    %376 = vector.shape_cast %375 : vector<1x1x128xf32> to vector<1x128xf32>
    %377 = arith.truncf %8 : vector<8x128xf32> to vector<8x128xbf16>
    %cst_160 = arith.constant dense<0.000000e+00> : vector<8x384xf32>
    %378 = tpu.matmul %377, %370, %cst_160 {dimension_numbers = #tpu.dot_dimension_numbers<[1], [0], [0], [1], [0, 0, 1, 1], [], []>} : vector<8x128xbf16>, vector<128x384xbf16>, vector<8x384xf32> -> vector<8x384xf32>
    %379 = vector.broadcast %372 : vector<1x384xf32> to vector<8x384xf32>
    %380 = arith.addf %378, %379 : vector<8x384xf32>
    %381 = vector.extract_strided_slice %380 {offsets = [0, 0], sizes = [8, 128], strides = [1, 1]} : vector<8x384xf32> to vector<8x128xf32>
    %cst_161 = arith.constant 0.176776692 : f32
    %382 = vector.broadcast %cst_161 : f32 to vector<8x128xf32>
    %383 = arith.mulf %381, %382 : vector<8x128xf32>
    %384 = vector.extract_strided_slice %380 {offsets = [0, 128], sizes = [8, 128], strides = [1, 1]} : vector<8x384xf32> to vector<8x128xf32>
    %385 = vector.extract_strided_slice %380 {offsets = [0, 256], sizes = [8, 128], strides = [1, 1]} : vector<8x384xf32> to vector<8x128xf32>
    %cst_162 = arith.constant 0.000000e+00 : f32
    %386 = vector.broadcast %cst_162 : f32 to vector<8x128xf32>
    %387 = vector.extract_strided_slice %383 {offsets = [0, 0], sizes = [8, 32], strides = [1, 1]} : vector<8x128xf32> to vector<8x32xf32>
    %388 = arith.truncf %387 : vector<8x32xf32> to vector<8x32xbf16>
    %389 = vector.extract_strided_slice %384 {offsets = [0, 0], sizes = [8, 32], strides = [1, 1]} : vector<8x128xf32> to vector<8x32xf32>
    %390 = arith.truncf %389 : vector<8x32xf32> to vector<8x32xbf16>
    %391 = vector.extract_strided_slice %385 {offsets = [0, 0], sizes = [8, 32], strides = [1, 1]} : vector<8x128xf32> to vector<8x32xf32>
    %392 = arith.truncf %391 : vector<8x32xf32> to vector<8x32xbf16>
    "tpu.trace_start"() <{level = 10 : i32, message = "qd,kd->qk"}> : () -> ()
    %cst_163 = arith.constant dense<0.000000e+00> : vector<8x8xf32>
    %393 = tpu.matmul %388, %390, %cst_163 {dimension_numbers = #tpu.dot_dimension_numbers<[1], [1], [0], [0], [0, 0, 1, 0], [], []>} : vector<8x32xbf16>, vector<8x32xbf16>, vector<8x8xf32> -> vector<8x8xf32>
    "tpu.trace_stop"() : () -> ()
    %cst_164 = arith.constant dense<0xFF800000> : vector<8xf32>
    %394 = vector.multi_reduction <maximumf>, %393, %cst_164 [1] : vector<8x8xf32> to vector<8xf32>
    %395 = vector.shape_cast %394 : vector<8xf32> to vector<8x1xf32>
    %396 = vector.broadcast %395 : vector<8x1xf32> to vector<8x8xf32>
    %397 = arith.subf %393, %396 : vector<8x8xf32>
    %398 = math.exp %397 : vector<8x8xf32>
    %cst_165 = arith.constant dense<0.000000e+00> : vector<8xf32>
    %399 = vector.multi_reduction <add>, %398, %cst_165 [1] : vector<8x8xf32> to vector<8xf32>
    %400 = vector.shape_cast %399 : vector<8xf32> to vector<8x1xf32>
    %401 = tpu.reciprocal %400 {approx = true} : vector<8x1xf32> -> vector<8x1xf32>
    %402 = vector.broadcast %401 : vector<8x1xf32> to vector<8x8xf32>
    %403 = arith.mulf %398, %402 : vector<8x8xf32>
    %404 = arith.truncf %403 : vector<8x8xf32> to vector<8x8xbf16>
    "tpu.trace_start"() <{level = 10 : i32, message = "qk,kd->qd"}> : () -> ()
    %cst_166 = arith.constant dense<0.000000e+00> : vector<8x32xf32>
    %405 = tpu.matmul %404, %392, %cst_166 {dimension_numbers = #tpu.dot_dimension_numbers<[1], [0], [0], [1], [0, 0, 1, 1], [], []>} : vector<8x8xbf16>, vector<8x32xbf16>, vector<8x32xf32> -> vector<8x32xf32>
    "tpu.trace_stop"() : () -> ()
    %406 = arith.truncf %405 : vector<8x32xf32> to vector<8x32xbf16>
    %407 = vector.extract_strided_slice %374 {offsets = [0, 0], sizes = [32, 128], strides = [1, 1]} : vector<128x128xbf16> to vector<32x128xbf16>
    %cst_167 = arith.constant dense<0.000000e+00> : vector<8x128xf32>
    %408 = tpu.matmul %406, %407, %cst_167 {dimension_numbers = #tpu.dot_dimension_numbers<[1], [0], [0], [1], [0, 0, 1, 1], [], []>} : vector<8x32xbf16>, vector<32x128xbf16>, vector<8x128xf32> -> vector<8x128xf32>
    %409 = arith.addf %386, %408 : vector<8x128xf32>
    %410 = vector.extract_strided_slice %383 {offsets = [0, 32], sizes = [8, 32], strides = [1, 1]} : vector<8x128xf32> to vector<8x32xf32>
    %411 = arith.truncf %410 : vector<8x32xf32> to vector<8x32xbf16>
    %412 = vector.extract_strided_slice %384 {offsets = [0, 32], sizes = [8, 32], strides = [1, 1]} : vector<8x128xf32> to vector<8x32xf32>
    %413 = arith.truncf %412 : vector<8x32xf32> to vector<8x32xbf16>
    %414 = vector.extract_strided_slice %385 {offsets = [0, 32], sizes = [8, 32], strides = [1, 1]} : vector<8x128xf32> to vector<8x32xf32>
    %415 = arith.truncf %414 : vector<8x32xf32> to vector<8x32xbf16>
    "tpu.trace_start"() <{level = 10 : i32, message = "qd,kd->qk"}> : () -> ()
    %cst_168 = arith.constant dense<0.000000e+00> : vector<8x8xf32>
    %416 = tpu.matmul %411, %413, %cst_168 {dimension_numbers = #tpu.dot_dimension_numbers<[1], [1], [0], [0], [0, 0, 1, 0], [], []>} : vector<8x32xbf16>, vector<8x32xbf16>, vector<8x8xf32> -> vector<8x8xf32>
    "tpu.trace_stop"() : () -> ()
    %cst_169 = arith.constant dense<0xFF800000> : vector<8xf32>
    %417 = vector.multi_reduction <maximumf>, %416, %cst_169 [1] : vector<8x8xf32> to vector<8xf32>
    %418 = vector.shape_cast %417 : vector<8xf32> to vector<8x1xf32>
    %419 = vector.broadcast %418 : vector<8x1xf32> to vector<8x8xf32>
    %420 = arith.subf %416, %419 : vector<8x8xf32>
    %421 = math.exp %420 : vector<8x8xf32>
    %cst_170 = arith.constant dense<0.000000e+00> : vector<8xf32>
    %422 = vector.multi_reduction <add>, %421, %cst_170 [1] : vector<8x8xf32> to vector<8xf32>
    %423 = vector.shape_cast %422 : vector<8xf32> to vector<8x1xf32>
    %424 = tpu.reciprocal %423 {approx = true} : vector<8x1xf32> -> vector<8x1xf32>
    %425 = vector.broadcast %424 : vector<8x1xf32> to vector<8x8xf32>
    %426 = arith.mulf %421, %425 : vector<8x8xf32>
    %427 = arith.truncf %426 : vector<8x8xf32> to vector<8x8xbf16>
    "tpu.trace_start"() <{level = 10 : i32, message = "qk,kd->qd"}> : () -> ()
    %cst_171 = arith.constant dense<0.000000e+00> : vector<8x32xf32>
    %428 = tpu.matmul %427, %415, %cst_171 {dimension_numbers = #tpu.dot_dimension_numbers<[1], [0], [0], [1], [0, 0, 1, 1], [], []>} : vector<8x8xbf16>, vector<8x32xbf16>, vector<8x32xf32> -> vector<8x32xf32>
    "tpu.trace_stop"() : () -> ()
    %429 = arith.truncf %428 : vector<8x32xf32> to vector<8x32xbf16>
    %430 = vector.extract_strided_slice %374 {offsets = [32, 0], sizes = [32, 128], strides = [1, 1]} : vector<128x128xbf16> to vector<32x128xbf16>
    %cst_172 = arith.constant dense<0.000000e+00> : vector<8x128xf32>
    %431 = tpu.matmul %429, %430, %cst_172 {dimension_numbers = #tpu.dot_dimension_numbers<[1], [0], [0], [1], [0, 0, 1, 1], [], []>} : vector<8x32xbf16>, vector<32x128xbf16>, vector<8x128xf32> -> vector<8x128xf32>
    %432 = arith.addf %409, %431 : vector<8x128xf32>
    %433 = vector.extract_strided_slice %383 {offsets = [0, 64], sizes = [8, 32], strides = [1, 1]} : vector<8x128xf32> to vector<8x32xf32>
    %434 = arith.truncf %433 : vector<8x32xf32> to vector<8x32xbf16>
    %435 = vector.extract_strided_slice %384 {offsets = [0, 64], sizes = [8, 32], strides = [1, 1]} : vector<8x128xf32> to vector<8x32xf32>
    %436 = arith.truncf %435 : vector<8x32xf32> to vector<8x32xbf16>
    %437 = vector.extract_strided_slice %385 {offsets = [0, 64], sizes = [8, 32], strides = [1, 1]} : vector<8x128xf32> to vector<8x32xf32>
    %438 = arith.truncf %437 : vector<8x32xf32> to vector<8x32xbf16>
    "tpu.trace_start"() <{level = 10 : i32, message = "qd,kd->qk"}> : () -> ()
    %cst_173 = arith.constant dense<0.000000e+00> : vector<8x8xf32>
    %439 = tpu.matmul %434, %436, %cst_173 {dimension_numbers = #tpu.dot_dimension_numbers<[1], [1], [0], [0], [0, 0, 1, 0], [], []>} : vector<8x32xbf16>, vector<8x32xbf16>, vector<8x8xf32> -> vector<8x8xf32>
    "tpu.trace_stop"() : () -> ()
    %cst_174 = arith.constant dense<0xFF800000> : vector<8xf32>
    %440 = vector.multi_reduction <maximumf>, %439, %cst_174 [1] : vector<8x8xf32> to vector<8xf32>
    %441 = vector.shape_cast %440 : vector<8xf32> to vector<8x1xf32>
    %442 = vector.broadcast %441 : vector<8x1xf32> to vector<8x8xf32>
    %443 = arith.subf %439, %442 : vector<8x8xf32>
    %444 = math.exp %443 : vector<8x8xf32>
    %cst_175 = arith.constant dense<0.000000e+00> : vector<8xf32>
    %445 = vector.multi_reduction <add>, %444, %cst_175 [1] : vector<8x8xf32> to vector<8xf32>
    %446 = vector.shape_cast %445 : vector<8xf32> to vector<8x1xf32>
    %447 = tpu.reciprocal %446 {approx = true} : vector<8x1xf32> -> vector<8x1xf32>
    %448 = vector.broadcast %447 : vector<8x1xf32> to vector<8x8xf32>
    %449 = arith.mulf %444, %448 : vector<8x8xf32>
    %450 = arith.truncf %449 : vector<8x8xf32> to vector<8x8xbf16>
    "tpu.trace_start"() <{level = 10 : i32, message = "qk,kd->qd"}> : () -> ()
    %cst_176 = arith.constant dense<0.000000e+00> : vector<8x32xf32>
    %451 = tpu.matmul %450, %438, %cst_176 {dimension_numbers = #tpu.dot_dimension_numbers<[1], [0], [0], [1], [0, 0, 1, 1], [], []>} : vector<8x8xbf16>, vector<8x32xbf16>, vector<8x32xf32> -> vector<8x32xf32>
    "tpu.trace_stop"() : () -> ()
    %452 = arith.truncf %451 : vector<8x32xf32> to vector<8x32xbf16>
    %453 = vector.extract_strided_slice %374 {offsets = [64, 0], sizes = [32, 128], strides = [1, 1]} : vector<128x128xbf16> to vector<32x128xbf16>
    %cst_177 = arith.constant dense<0.000000e+00> : vector<8x128xf32>
    %454 = tpu.matmul %452, %453, %cst_177 {dimension_numbers = #tpu.dot_dimension_numbers<[1], [0], [0], [1], [0, 0, 1, 1], [], []>} : vector<8x32xbf16>, vector<32x128xbf16>, vector<8x128xf32> -> vector<8x128xf32>
    %455 = arith.addf %432, %454 : vector<8x128xf32>
    %456 = vector.extract_strided_slice %383 {offsets = [0, 96], sizes = [8, 32], strides = [1, 1]} : vector<8x128xf32> to vector<8x32xf32>
    %457 = arith.truncf %456 : vector<8x32xf32> to vector<8x32xbf16>
    %458 = vector.extract_strided_slice %384 {offsets = [0, 96], sizes = [8, 32], strides = [1, 1]} : vector<8x128xf32> to vector<8x32xf32>
    %459 = arith.truncf %458 : vector<8x32xf32> to vector<8x32xbf16>
    %460 = vector.extract_strided_slice %385 {offsets = [0, 96], sizes = [8, 32], strides = [1, 1]} : vector<8x128xf32> to vector<8x32xf32>
    %461 = arith.truncf %460 : vector<8x32xf32> to vector<8x32xbf16>
    "tpu.trace_start"() <{level = 10 : i32, message = "qd,kd->qk"}> : () -> ()
    %cst_178 = arith.constant dense<0.000000e+00> : vector<8x8xf32>
    %462 = tpu.matmul %457, %459, %cst_178 {dimension_numbers = #tpu.dot_dimension_numbers<[1], [1], [0], [0], [0, 0, 1, 0], [], []>} : vector<8x32xbf16>, vector<8x32xbf16>, vector<8x8xf32> -> vector<8x8xf32>
    "tpu.trace_stop"() : () -> ()
    %cst_179 = arith.constant dense<0xFF800000> : vector<8xf32>
    %463 = vector.multi_reduction <maximumf>, %462, %cst_179 [1] : vector<8x8xf32> to vector<8xf32>
    %464 = vector.shape_cast %463 : vector<8xf32> to vector<8x1xf32>
    %465 = vector.broadcast %464 : vector<8x1xf32> to vector<8x8xf32>
    %466 = arith.subf %462, %465 : vector<8x8xf32>
    %467 = math.exp %466 : vector<8x8xf32>
    %cst_180 = arith.constant dense<0.000000e+00> : vector<8xf32>
    %468 = vector.multi_reduction <add>, %467, %cst_180 [1] : vector<8x8xf32> to vector<8xf32>
    %469 = vector.shape_cast %468 : vector<8xf32> to vector<8x1xf32>
    %470 = tpu.reciprocal %469 {approx = true} : vector<8x1xf32> -> vector<8x1xf32>
    %471 = vector.broadcast %470 : vector<8x1xf32> to vector<8x8xf32>
    %472 = arith.mulf %467, %471 : vector<8x8xf32>
    %473 = arith.truncf %472 : vector<8x8xf32> to vector<8x8xbf16>
    "tpu.trace_start"() <{level = 10 : i32, message = "qk,kd->qd"}> : () -> ()
    %cst_181 = arith.constant dense<0.000000e+00> : vector<8x32xf32>
    %474 = tpu.matmul %473, %461, %cst_181 {dimension_numbers = #tpu.dot_dimension_numbers<[1], [0], [0], [1], [0, 0, 1, 1], [], []>} : vector<8x8xbf16>, vector<8x32xbf16>, vector<8x32xf32> -> vector<8x32xf32>
    "tpu.trace_stop"() : () -> ()
    %475 = arith.truncf %474 : vector<8x32xf32> to vector<8x32xbf16>
    %476 = vector.extract_strided_slice %374 {offsets = [96, 0], sizes = [32, 128], strides = [1, 1]} : vector<128x128xbf16> to vector<32x128xbf16>
    %cst_182 = arith.constant dense<0.000000e+00> : vector<8x128xf32>
    %477 = tpu.matmul %475, %476, %cst_182 {dimension_numbers = #tpu.dot_dimension_numbers<[1], [0], [0], [1], [0, 0, 1, 1], [], []>} : vector<8x32xbf16>, vector<32x128xbf16>, vector<8x128xf32> -> vector<8x128xf32>
    %478 = arith.addf %455, %477 : vector<8x128xf32>
    %479 = vector.broadcast %376 : vector<1x128xf32> to vector<8x128xf32>
    %480 = arith.addf %478, %479 : vector<8x128xf32>
    %481 = arith.addf %8, %480 : vector<8x128xf32>
    %c0_183 = arith.constant 0 : index
    %c0_184 = arith.constant 0 : index
    %c0_185 = arith.constant 0 : index
    %482 = vector.load %arg26[%c0_183, %c0_184, %c0_185] : memref<2x1x128xf32, #tpu.memory_space<vmem>>, vector<1x1x128xf32>
    %483 = vector.shape_cast %482 : vector<1x1x128xf32> to vector<1x128xf32>
    %c0_186 = arith.constant 0 : index
    %c0_187 = arith.constant 0 : index
    %c0_188 = arith.constant 0 : index
    %484 = vector.load %arg27[%c0_186, %c0_187, %c0_188] : memref<2x1x128xf32, #tpu.memory_space<vmem>>, vector<1x1x128xf32>
    %485 = vector.shape_cast %484 : vector<1x1x128xf32> to vector<1x128xf32>
    %cst_189 = arith.constant dense<0.000000e+00> : vector<8xf32>
    %486 = vector.multi_reduction <add>, %481, %cst_189 [1] : vector<8x128xf32> to vector<8xf32>
    %487 = vector.shape_cast %486 : vector<8xf32> to vector<8x1xf32>
    %cst_190 = arith.constant 1.280000e+02 : f32
    %488 = vector.broadcast %cst_190 : f32 to vector<8x1xf32>
    %489 = arith.divf %487, %488 : vector<8x1xf32>
    %490 = vector.broadcast %489 : vector<8x1xf32> to vector<8x128xf32>
    %491 = arith.subf %481, %490 : vector<8x128xf32>
    %492 = arith.mulf %491, %491 : vector<8x128xf32>
    %cst_191 = arith.constant dense<0.000000e+00> : vector<8xf32>
    %493 = vector.multi_reduction <add>, %492, %cst_191 [1] : vector<8x128xf32> to vector<8xf32>
    %494 = vector.shape_cast %493 : vector<8xf32> to vector<8x1xf32>
    %cst_192 = arith.constant 1.280000e+02 : f32
    %495 = vector.broadcast %cst_192 : f32 to vector<8x1xf32>
    %496 = arith.divf %494, %495 : vector<8x1xf32>
    %cst_193 = arith.constant 9.99999974E-6 : f32
    %497 = vector.broadcast %cst_193 : f32 to vector<8x1xf32>
    %498 = arith.addf %496, %497 : vector<8x1xf32>
    %499 = math.rsqrt %498 : vector<8x1xf32>
    %500 = vector.broadcast %499 : vector<8x1xf32> to vector<8x128xf32>
    %501 = arith.mulf %491, %500 : vector<8x128xf32>
    %502 = vector.broadcast %483 : vector<1x128xf32> to vector<8x128xf32>
    %503 = arith.mulf %501, %502 : vector<8x128xf32>
    %504 = vector.broadcast %485 : vector<1x128xf32> to vector<8x128xf32>
    %505 = arith.addf %503, %504 : vector<8x128xf32>
    %c0_194 = arith.constant 0 : index
    %c0_195 = arith.constant 0 : index
    %c0_196 = arith.constant 0 : index
    %506 = vector.load %arg20[%c0_194, %c0_195, %c0_196] : memref<2x128x128xbf16, #tpu.memory_space<vmem>>, vector<1x128x128xbf16>
    %507 = vector.shape_cast %506 : vector<1x128x128xbf16> to vector<128x128xbf16>
    %c0_197 = arith.constant 0 : index
    %c0_198 = arith.constant 0 : index
    %c0_199 = arith.constant 0 : index
    %508 = vector.load %arg21[%c0_197, %c0_198, %c0_199] : memref<2x1x128xf32, #tpu.memory_space<vmem>>, vector<1x1x128xf32>
    %509 = vector.shape_cast %508 : vector<1x1x128xf32> to vector<1x128xf32>
    %c0_200 = arith.constant 0 : index
    %c0_201 = arith.constant 0 : index
    %c0_202 = arith.constant 0 : index
    %510 = vector.load %arg22[%c0_200, %c0_201, %c0_202] : memref<2x128x256xbf16, #tpu.memory_space<vmem>>, vector<1x128x256xbf16>
    %511 = vector.shape_cast %510 : vector<1x128x256xbf16> to vector<128x256xbf16>
    %c0_203 = arith.constant 0 : index
    %c0_204 = arith.constant 0 : index
    %c0_205 = arith.constant 0 : index
    %512 = vector.load %arg23[%c0_203, %c0_204, %c0_205] : memref<2x1x256xf32, #tpu.memory_space<vmem>>, vector<1x1x256xf32>
    %513 = vector.shape_cast %512 : vector<1x1x256xf32> to vector<1x256xf32>
    %c0_206 = arith.constant 0 : index
    %c0_207 = arith.constant 0 : index
    %c0_208 = arith.constant 0 : index
    %514 = vector.load %arg24[%c0_206, %c0_207, %c0_208] : memref<2x128x128xbf16, #tpu.memory_space<vmem>>, vector<1x128x128xbf16>
    %515 = vector.shape_cast %514 : vector<1x128x128xbf16> to vector<128x128xbf16>
    %c0_209 = arith.constant 0 : index
    %c0_210 = arith.constant 0 : index
    %c0_211 = arith.constant 0 : index
    %516 = vector.load %arg25[%c0_209, %c0_210, %c0_211] : memref<2x1x128xf32, #tpu.memory_space<vmem>>, vector<1x1x128xf32>
    %517 = vector.shape_cast %516 : vector<1x1x128xf32> to vector<1x128xf32>
    %518 = arith.truncf %505 : vector<8x128xf32> to vector<8x128xbf16>
    %cst_212 = arith.constant dense<0.000000e+00> : vector<8x128xf32>
    %519 = tpu.matmul %518, %507, %cst_212 {dimension_numbers = #tpu.dot_dimension_numbers<[1], [0], [0], [1], [0, 0, 1, 1], [], []>} : vector<8x128xbf16>, vector<128x128xbf16>, vector<8x128xf32> -> vector<8x128xf32>
    %520 = vector.broadcast %509 : vector<1x128xf32> to vector<8x128xf32>
    %521 = arith.addf %519, %520 : vector<8x128xf32>
    %cst_213 = arith.constant 0.176776692 : f32
    %522 = vector.broadcast %cst_213 : f32 to vector<8x128xf32>
    %523 = arith.mulf %521, %522 : vector<8x128xf32>
    %524 = arith.truncf %368 : vector<8x128xf32> to vector<8x128xbf16>
    %cst_214 = arith.constant dense<0.000000e+00> : vector<8x256xf32>
    %525 = tpu.matmul %524, %511, %cst_214 {dimension_numbers = #tpu.dot_dimension_numbers<[1], [0], [0], [1], [0, 0, 1, 1], [], []>} : vector<8x128xbf16>, vector<128x256xbf16>, vector<8x256xf32> -> vector<8x256xf32>
    %526 = vector.broadcast %513 : vector<1x256xf32> to vector<8x256xf32>
    %527 = arith.addf %525, %526 : vector<8x256xf32>
    %528 = vector.extract_strided_slice %527 {offsets = [0, 0], sizes = [8, 128], strides = [1, 1]} : vector<8x256xf32> to vector<8x128xf32>
    %529 = vector.extract_strided_slice %527 {offsets = [0, 128], sizes = [8, 128], strides = [1, 1]} : vector<8x256xf32> to vector<8x128xf32>
    %cst_215 = arith.constant 0.000000e+00 : f32
    %530 = vector.broadcast %cst_215 : f32 to vector<8x128xf32>
    %531 = vector.extract_strided_slice %523 {offsets = [0, 0], sizes = [8, 32], strides = [1, 1]} : vector<8x128xf32> to vector<8x32xf32>
    %532 = arith.truncf %531 : vector<8x32xf32> to vector<8x32xbf16>
    %533 = vector.extract_strided_slice %528 {offsets = [0, 0], sizes = [8, 32], strides = [1, 1]} : vector<8x128xf32> to vector<8x32xf32>
    %534 = arith.truncf %533 : vector<8x32xf32> to vector<8x32xbf16>
    %535 = vector.extract_strided_slice %529 {offsets = [0, 0], sizes = [8, 32], strides = [1, 1]} : vector<8x128xf32> to vector<8x32xf32>
    %536 = arith.truncf %535 : vector<8x32xf32> to vector<8x32xbf16>
    "tpu.trace_start"() <{level = 10 : i32, message = "qd,kd->qk"}> : () -> ()
    %cst_216 = arith.constant dense<0.000000e+00> : vector<8x8xf32>
    %537 = tpu.matmul %532, %534, %cst_216 {dimension_numbers = #tpu.dot_dimension_numbers<[1], [1], [0], [0], [0, 0, 1, 0], [], []>} : vector<8x32xbf16>, vector<8x32xbf16>, vector<8x8xf32> -> vector<8x8xf32>
    "tpu.trace_stop"() : () -> ()
    %cst_217 = arith.constant dense<0xFF800000> : vector<8xf32>
    %538 = vector.multi_reduction <maximumf>, %537, %cst_217 [1] : vector<8x8xf32> to vector<8xf32>
    %539 = vector.shape_cast %538 : vector<8xf32> to vector<8x1xf32>
    %540 = vector.broadcast %539 : vector<8x1xf32> to vector<8x8xf32>
    %541 = arith.subf %537, %540 : vector<8x8xf32>
    %542 = math.exp %541 : vector<8x8xf32>
    %cst_218 = arith.constant dense<0.000000e+00> : vector<8xf32>
    %543 = vector.multi_reduction <add>, %542, %cst_218 [1] : vector<8x8xf32> to vector<8xf32>
    %544 = vector.shape_cast %543 : vector<8xf32> to vector<8x1xf32>
    %545 = tpu.reciprocal %544 {approx = true} : vector<8x1xf32> -> vector<8x1xf32>
    %546 = vector.broadcast %545 : vector<8x1xf32> to vector<8x8xf32>
    %547 = arith.mulf %542, %546 : vector<8x8xf32>
    %548 = arith.truncf %547 : vector<8x8xf32> to vector<8x8xbf16>
    "tpu.trace_start"() <{level = 10 : i32, message = "qk,kd->qd"}> : () -> ()
    %cst_219 = arith.constant dense<0.000000e+00> : vector<8x32xf32>
    %549 = tpu.matmul %548, %536, %cst_219 {dimension_numbers = #tpu.dot_dimension_numbers<[1], [0], [0], [1], [0, 0, 1, 1], [], []>} : vector<8x8xbf16>, vector<8x32xbf16>, vector<8x32xf32> -> vector<8x32xf32>
    "tpu.trace_stop"() : () -> ()
    %550 = arith.truncf %549 : vector<8x32xf32> to vector<8x32xbf16>
    %551 = vector.extract_strided_slice %515 {offsets = [0, 0], sizes = [32, 128], strides = [1, 1]} : vector<128x128xbf16> to vector<32x128xbf16>
    %cst_220 = arith.constant dense<0.000000e+00> : vector<8x128xf32>
    %552 = tpu.matmul %550, %551, %cst_220 {dimension_numbers = #tpu.dot_dimension_numbers<[1], [0], [0], [1], [0, 0, 1, 1], [], []>} : vector<8x32xbf16>, vector<32x128xbf16>, vector<8x128xf32> -> vector<8x128xf32>
    %553 = arith.addf %530, %552 : vector<8x128xf32>
    %554 = vector.extract_strided_slice %523 {offsets = [0, 32], sizes = [8, 32], strides = [1, 1]} : vector<8x128xf32> to vector<8x32xf32>
    %555 = arith.truncf %554 : vector<8x32xf32> to vector<8x32xbf16>
    %556 = vector.extract_strided_slice %528 {offsets = [0, 32], sizes = [8, 32], strides = [1, 1]} : vector<8x128xf32> to vector<8x32xf32>
    %557 = arith.truncf %556 : vector<8x32xf32> to vector<8x32xbf16>
    %558 = vector.extract_strided_slice %529 {offsets = [0, 32], sizes = [8, 32], strides = [1, 1]} : vector<8x128xf32> to vector<8x32xf32>
    %559 = arith.truncf %558 : vector<8x32xf32> to vector<8x32xbf16>
    "tpu.trace_start"() <{level = 10 : i32, message = "qd,kd->qk"}> : () -> ()
    %cst_221 = arith.constant dense<0.000000e+00> : vector<8x8xf32>
    %560 = tpu.matmul %555, %557, %cst_221 {dimension_numbers = #tpu.dot_dimension_numbers<[1], [1], [0], [0], [0, 0, 1, 0], [], []>} : vector<8x32xbf16>, vector<8x32xbf16>, vector<8x8xf32> -> vector<8x8xf32>
    "tpu.trace_stop"() : () -> ()
    %cst_222 = arith.constant dense<0xFF800000> : vector<8xf32>
    %561 = vector.multi_reduction <maximumf>, %560, %cst_222 [1] : vector<8x8xf32> to vector<8xf32>
    %562 = vector.shape_cast %561 : vector<8xf32> to vector<8x1xf32>
    %563 = vector.broadcast %562 : vector<8x1xf32> to vector<8x8xf32>
    %564 = arith.subf %560, %563 : vector<8x8xf32>
    %565 = math.exp %564 : vector<8x8xf32>
    %cst_223 = arith.constant dense<0.000000e+00> : vector<8xf32>
    %566 = vector.multi_reduction <add>, %565, %cst_223 [1] : vector<8x8xf32> to vector<8xf32>
    %567 = vector.shape_cast %566 : vector<8xf32> to vector<8x1xf32>
    %568 = tpu.reciprocal %567 {approx = true} : vector<8x1xf32> -> vector<8x1xf32>
    %569 = vector.broadcast %568 : vector<8x1xf32> to vector<8x8xf32>
    %570 = arith.mulf %565, %569 : vector<8x8xf32>
    %571 = arith.truncf %570 : vector<8x8xf32> to vector<8x8xbf16>
    "tpu.trace_start"() <{level = 10 : i32, message = "qk,kd->qd"}> : () -> ()
    %cst_224 = arith.constant dense<0.000000e+00> : vector<8x32xf32>
    %572 = tpu.matmul %571, %559, %cst_224 {dimension_numbers = #tpu.dot_dimension_numbers<[1], [0], [0], [1], [0, 0, 1, 1], [], []>} : vector<8x8xbf16>, vector<8x32xbf16>, vector<8x32xf32> -> vector<8x32xf32>
    "tpu.trace_stop"() : () -> ()
    %573 = arith.truncf %572 : vector<8x32xf32> to vector<8x32xbf16>
    %574 = vector.extract_strided_slice %515 {offsets = [32, 0], sizes = [32, 128], strides = [1, 1]} : vector<128x128xbf16> to vector<32x128xbf16>
    %cst_225 = arith.constant dense<0.000000e+00> : vector<8x128xf32>
    %575 = tpu.matmul %573, %574, %cst_225 {dimension_numbers = #tpu.dot_dimension_numbers<[1], [0], [0], [1], [0, 0, 1, 1], [], []>} : vector<8x32xbf16>, vector<32x128xbf16>, vector<8x128xf32> -> vector<8x128xf32>
    %576 = arith.addf %553, %575 : vector<8x128xf32>
    %577 = vector.extract_strided_slice %523 {offsets = [0, 64], sizes = [8, 32], strides = [1, 1]} : vector<8x128xf32> to vector<8x32xf32>
    %578 = arith.truncf %577 : vector<8x32xf32> to vector<8x32xbf16>
    %579 = vector.extract_strided_slice %528 {offsets = [0, 64], sizes = [8, 32], strides = [1, 1]} : vector<8x128xf32> to vector<8x32xf32>
    %580 = arith.truncf %579 : vector<8x32xf32> to vector<8x32xbf16>
    %581 = vector.extract_strided_slice %529 {offsets = [0, 64], sizes = [8, 32], strides = [1, 1]} : vector<8x128xf32> to vector<8x32xf32>
    %582 = arith.truncf %581 : vector<8x32xf32> to vector<8x32xbf16>
    "tpu.trace_start"() <{level = 10 : i32, message = "qd,kd->qk"}> : () -> ()
    %cst_226 = arith.constant dense<0.000000e+00> : vector<8x8xf32>
    %583 = tpu.matmul %578, %580, %cst_226 {dimension_numbers = #tpu.dot_dimension_numbers<[1], [1], [0], [0], [0, 0, 1, 0], [], []>} : vector<8x32xbf16>, vector<8x32xbf16>, vector<8x8xf32> -> vector<8x8xf32>
    "tpu.trace_stop"() : () -> ()
    %cst_227 = arith.constant dense<0xFF800000> : vector<8xf32>
    %584 = vector.multi_reduction <maximumf>, %583, %cst_227 [1] : vector<8x8xf32> to vector<8xf32>
    %585 = vector.shape_cast %584 : vector<8xf32> to vector<8x1xf32>
    %586 = vector.broadcast %585 : vector<8x1xf32> to vector<8x8xf32>
    %587 = arith.subf %583, %586 : vector<8x8xf32>
    %588 = math.exp %587 : vector<8x8xf32>
    %cst_228 = arith.constant dense<0.000000e+00> : vector<8xf32>
    %589 = vector.multi_reduction <add>, %588, %cst_228 [1] : vector<8x8xf32> to vector<8xf32>
    %590 = vector.shape_cast %589 : vector<8xf32> to vector<8x1xf32>
    %591 = tpu.reciprocal %590 {approx = true} : vector<8x1xf32> -> vector<8x1xf32>
    %592 = vector.broadcast %591 : vector<8x1xf32> to vector<8x8xf32>
    %593 = arith.mulf %588, %592 : vector<8x8xf32>
    %594 = arith.truncf %593 : vector<8x8xf32> to vector<8x8xbf16>
    "tpu.trace_start"() <{level = 10 : i32, message = "qk,kd->qd"}> : () -> ()
    %cst_229 = arith.constant dense<0.000000e+00> : vector<8x32xf32>
    %595 = tpu.matmul %594, %582, %cst_229 {dimension_numbers = #tpu.dot_dimension_numbers<[1], [0], [0], [1], [0, 0, 1, 1], [], []>} : vector<8x8xbf16>, vector<8x32xbf16>, vector<8x32xf32> -> vector<8x32xf32>
    "tpu.trace_stop"() : () -> ()
    %596 = arith.truncf %595 : vector<8x32xf32> to vector<8x32xbf16>
    %597 = vector.extract_strided_slice %515 {offsets = [64, 0], sizes = [32, 128], strides = [1, 1]} : vector<128x128xbf16> to vector<32x128xbf16>
    %cst_230 = arith.constant dense<0.000000e+00> : vector<8x128xf32>
    %598 = tpu.matmul %596, %597, %cst_230 {dimension_numbers = #tpu.dot_dimension_numbers<[1], [0], [0], [1], [0, 0, 1, 1], [], []>} : vector<8x32xbf16>, vector<32x128xbf16>, vector<8x128xf32> -> vector<8x128xf32>
    %599 = arith.addf %576, %598 : vector<8x128xf32>
    %600 = vector.extract_strided_slice %523 {offsets = [0, 96], sizes = [8, 32], strides = [1, 1]} : vector<8x128xf32> to vector<8x32xf32>
    %601 = arith.truncf %600 : vector<8x32xf32> to vector<8x32xbf16>
    %602 = vector.extract_strided_slice %528 {offsets = [0, 96], sizes = [8, 32], strides = [1, 1]} : vector<8x128xf32> to vector<8x32xf32>
    %603 = arith.truncf %602 : vector<8x32xf32> to vector<8x32xbf16>
    %604 = vector.extract_strided_slice %529 {offsets = [0, 96], sizes = [8, 32], strides = [1, 1]} : vector<8x128xf32> to vector<8x32xf32>
    %605 = arith.truncf %604 : vector<8x32xf32> to vector<8x32xbf16>
    "tpu.trace_start"() <{level = 10 : i32, message = "qd,kd->qk"}> : () -> ()
    %cst_231 = arith.constant dense<0.000000e+00> : vector<8x8xf32>
    %606 = tpu.matmul %601, %603, %cst_231 {dimension_numbers = #tpu.dot_dimension_numbers<[1], [1], [0], [0], [0, 0, 1, 0], [], []>} : vector<8x32xbf16>, vector<8x32xbf16>, vector<8x8xf32> -> vector<8x8xf32>
    "tpu.trace_stop"() : () -> ()
    %cst_232 = arith.constant dense<0xFF800000> : vector<8xf32>
    %607 = vector.multi_reduction <maximumf>, %606, %cst_232 [1] : vector<8x8xf32> to vector<8xf32>
    %608 = vector.shape_cast %607 : vector<8xf32> to vector<8x1xf32>
    %609 = vector.broadcast %608 : vector<8x1xf32> to vector<8x8xf32>
    %610 = arith.subf %606, %609 : vector<8x8xf32>
    %611 = math.exp %610 : vector<8x8xf32>
    %cst_233 = arith.constant dense<0.000000e+00> : vector<8xf32>
    %612 = vector.multi_reduction <add>, %611, %cst_233 [1] : vector<8x8xf32> to vector<8xf32>
    %613 = vector.shape_cast %612 : vector<8xf32> to vector<8x1xf32>
    %614 = tpu.reciprocal %613 {approx = true} : vector<8x1xf32> -> vector<8x1xf32>
    %615 = vector.broadcast %614 : vector<8x1xf32> to vector<8x8xf32>
    %616 = arith.mulf %611, %615 : vector<8x8xf32>
    %617 = arith.truncf %616 : vector<8x8xf32> to vector<8x8xbf16>
    "tpu.trace_start"() <{level = 10 : i32, message = "qk,kd->qd"}> : () -> ()
    %cst_234 = arith.constant dense<0.000000e+00> : vector<8x32xf32>
    %618 = tpu.matmul %617, %605, %cst_234 {dimension_numbers = #tpu.dot_dimension_numbers<[1], [0], [0], [1], [0, 0, 1, 1], [], []>} : vector<8x8xbf16>, vector<8x32xbf16>, vector<8x32xf32> -> vector<8x32xf32>
    "tpu.trace_stop"() : () -> ()
    %619 = arith.truncf %618 : vector<8x32xf32> to vector<8x32xbf16>
    %620 = vector.extract_strided_slice %515 {offsets = [96, 0], sizes = [32, 128], strides = [1, 1]} : vector<128x128xbf16> to vector<32x128xbf16>
    %cst_235 = arith.constant dense<0.000000e+00> : vector<8x128xf32>
    %621 = tpu.matmul %619, %620, %cst_235 {dimension_numbers = #tpu.dot_dimension_numbers<[1], [0], [0], [1], [0, 0, 1, 1], [], []>} : vector<8x32xbf16>, vector<32x128xbf16>, vector<8x128xf32> -> vector<8x128xf32>
    %622 = arith.addf %599, %621 : vector<8x128xf32>
    %623 = vector.broadcast %517 : vector<1x128xf32> to vector<8x128xf32>
    %624 = arith.addf %622, %623 : vector<8x128xf32>
    %625 = arith.addf %505, %624 : vector<8x128xf32>
    %c0_236 = arith.constant 0 : index
    %c0_237 = arith.constant 0 : index
    %c0_238 = arith.constant 0 : index
    %626 = vector.load %arg28[%c0_236, %c0_237, %c0_238] : memref<2x1x128xf32, #tpu.memory_space<vmem>>, vector<1x1x128xf32>
    %627 = vector.shape_cast %626 : vector<1x1x128xf32> to vector<1x128xf32>
    %c0_239 = arith.constant 0 : index
    %c0_240 = arith.constant 0 : index
    %c0_241 = arith.constant 0 : index
    %628 = vector.load %arg29[%c0_239, %c0_240, %c0_241] : memref<2x1x128xf32, #tpu.memory_space<vmem>>, vector<1x1x128xf32>
    %629 = vector.shape_cast %628 : vector<1x1x128xf32> to vector<1x128xf32>
    %cst_242 = arith.constant dense<0.000000e+00> : vector<8xf32>
    %630 = vector.multi_reduction <add>, %625, %cst_242 [1] : vector<8x128xf32> to vector<8xf32>
    %631 = vector.shape_cast %630 : vector<8xf32> to vector<8x1xf32>
    %cst_243 = arith.constant 1.280000e+02 : f32
    %632 = vector.broadcast %cst_243 : f32 to vector<8x1xf32>
    %633 = arith.divf %631, %632 : vector<8x1xf32>
    %634 = vector.broadcast %633 : vector<8x1xf32> to vector<8x128xf32>
    %635 = arith.subf %625, %634 : vector<8x128xf32>
    %636 = arith.mulf %635, %635 : vector<8x128xf32>
    %cst_244 = arith.constant dense<0.000000e+00> : vector<8xf32>
    %637 = vector.multi_reduction <add>, %636, %cst_244 [1] : vector<8x128xf32> to vector<8xf32>
    %638 = vector.shape_cast %637 : vector<8xf32> to vector<8x1xf32>
    %cst_245 = arith.constant 1.280000e+02 : f32
    %639 = vector.broadcast %cst_245 : f32 to vector<8x1xf32>
    %640 = arith.divf %638, %639 : vector<8x1xf32>
    %cst_246 = arith.constant 9.99999974E-6 : f32
    %641 = vector.broadcast %cst_246 : f32 to vector<8x1xf32>
    %642 = arith.addf %640, %641 : vector<8x1xf32>
    %643 = math.rsqrt %642 : vector<8x1xf32>
    %644 = vector.broadcast %643 : vector<8x1xf32> to vector<8x128xf32>
    %645 = arith.mulf %635, %644 : vector<8x128xf32>
    %646 = vector.broadcast %627 : vector<1x128xf32> to vector<8x128xf32>
    %647 = arith.mulf %645, %646 : vector<8x128xf32>
    %648 = vector.broadcast %629 : vector<1x128xf32> to vector<8x128xf32>
    %649 = arith.addf %647, %648 : vector<8x128xf32>
    %c0_247 = arith.constant 0 : index
    %c0_248 = arith.constant 0 : index
    %c0_249 = arith.constant 0 : index
    %650 = vector.load %arg32[%c0_247, %c0_248, %c0_249] : memref<2x128x128xbf16, #tpu.memory_space<vmem>>, vector<1x128x128xbf16>
    %651 = vector.shape_cast %650 : vector<1x128x128xbf16> to vector<128x128xbf16>
    %c0_250 = arith.constant 0 : index
    %c0_251 = arith.constant 0 : index
    %c0_252 = arith.constant 0 : index
    %652 = vector.load %arg33[%c0_250, %c0_251, %c0_252] : memref<2x1x128xf32, #tpu.memory_space<vmem>>, vector<1x1x128xf32>
    %653 = vector.shape_cast %652 : vector<1x1x128xf32> to vector<1x128xf32>
    %c0_253 = arith.constant 0 : index
    %c0_254 = arith.constant 0 : index
    %c0_255 = arith.constant 0 : index
    %654 = vector.load %arg34[%c0_253, %c0_254, %c0_255] : memref<2x128x128xbf16, #tpu.memory_space<vmem>>, vector<1x128x128xbf16>
    %655 = vector.shape_cast %654 : vector<1x128x128xbf16> to vector<128x128xbf16>
    %c0_256 = arith.constant 0 : index
    %c0_257 = arith.constant 0 : index
    %c0_258 = arith.constant 0 : index
    %656 = vector.load %arg35[%c0_256, %c0_257, %c0_258] : memref<2x1x128xf32, #tpu.memory_space<vmem>>, vector<1x1x128xf32>
    %657 = vector.shape_cast %656 : vector<1x1x128xf32> to vector<1x128xf32>
    %658 = arith.truncf %649 : vector<8x128xf32> to vector<8x128xbf16>
    %cst_259 = arith.constant dense<0.000000e+00> : vector<8x128xf32>
    %659 = tpu.matmul %658, %651, %cst_259 {dimension_numbers = #tpu.dot_dimension_numbers<[1], [0], [0], [1], [0, 0, 1, 1], [], []>} : vector<8x128xbf16>, vector<128x128xbf16>, vector<8x128xf32> -> vector<8x128xf32>
    %660 = vector.broadcast %653 : vector<1x128xf32> to vector<8x128xf32>
    %661 = arith.addf %659, %660 : vector<8x128xf32>
    %cst_260 = arith.constant 0.000000e+00 : f32
    %662 = vector.broadcast %cst_260 : f32 to vector<8x128xf32>
    %663 = arith.maximumf %661, %662 : vector<8x128xf32>
    %664 = arith.truncf %663 : vector<8x128xf32> to vector<8x128xbf16>
    %cst_261 = arith.constant dense<0.000000e+00> : vector<8x128xf32>
    %665 = tpu.matmul %664, %655, %cst_261 {dimension_numbers = #tpu.dot_dimension_numbers<[1], [0], [0], [1], [0, 0, 1, 1], [], []>} : vector<8x128xbf16>, vector<128x128xbf16>, vector<8x128xf32> -> vector<8x128xf32>
    %666 = vector.broadcast %657 : vector<1x128xf32> to vector<8x128xf32>
    %667 = arith.addf %665, %666 : vector<8x128xf32>
    %668 = arith.addf %649, %667 : vector<8x128xf32>
    %c0_262 = arith.constant 0 : index
    %c0_263 = arith.constant 0 : index
    %c0_264 = arith.constant 0 : index
    %669 = vector.load %arg30[%c0_262, %c0_263, %c0_264] : memref<2x1x128xf32, #tpu.memory_space<vmem>>, vector<1x1x128xf32>
    %670 = vector.shape_cast %669 : vector<1x1x128xf32> to vector<1x128xf32>
    %c0_265 = arith.constant 0 : index
    %c0_266 = arith.constant 0 : index
    %c0_267 = arith.constant 0 : index
    %671 = vector.load %arg31[%c0_265, %c0_266, %c0_267] : memref<2x1x128xf32, #tpu.memory_space<vmem>>, vector<1x1x128xf32>
    %672 = vector.shape_cast %671 : vector<1x1x128xf32> to vector<1x128xf32>
    %cst_268 = arith.constant dense<0.000000e+00> : vector<8xf32>
    %673 = vector.multi_reduction <add>, %668, %cst_268 [1] : vector<8x128xf32> to vector<8xf32>
    %674 = vector.shape_cast %673 : vector<8xf32> to vector<8x1xf32>
    %cst_269 = arith.constant 1.280000e+02 : f32
    %675 = vector.broadcast %cst_269 : f32 to vector<8x1xf32>
    %676 = arith.divf %674, %675 : vector<8x1xf32>
    %677 = vector.broadcast %676 : vector<8x1xf32> to vector<8x128xf32>
    %678 = arith.subf %668, %677 : vector<8x128xf32>
    %679 = arith.mulf %678, %678 : vector<8x128xf32>
    %cst_270 = arith.constant dense<0.000000e+00> : vector<8xf32>
    %680 = vector.multi_reduction <add>, %679, %cst_270 [1] : vector<8x128xf32> to vector<8xf32>
    %681 = vector.shape_cast %680 : vector<8xf32> to vector<8x1xf32>
    %cst_271 = arith.constant 1.280000e+02 : f32
    %682 = vector.broadcast %cst_271 : f32 to vector<8x1xf32>
    %683 = arith.divf %681, %682 : vector<8x1xf32>
    %cst_272 = arith.constant 9.99999974E-6 : f32
    %684 = vector.broadcast %cst_272 : f32 to vector<8x1xf32>
    %685 = arith.addf %683, %684 : vector<8x1xf32>
    %686 = math.rsqrt %685 : vector<8x1xf32>
    %687 = vector.broadcast %686 : vector<8x1xf32> to vector<8x128xf32>
    %688 = arith.mulf %678, %687 : vector<8x128xf32>
    %689 = vector.broadcast %670 : vector<1x128xf32> to vector<8x128xf32>
    %690 = arith.mulf %688, %689 : vector<8x128xf32>
    %691 = vector.broadcast %672 : vector<1x128xf32> to vector<8x128xf32>
    %692 = arith.addf %690, %691 : vector<8x128xf32>
    %c1_273 = arith.constant 1 : index
    %c0_274 = arith.constant 0 : index
    %c0_275 = arith.constant 0 : index
    %693 = vector.load %arg16[%c1_273, %c0_274, %c0_275] : memref<2x128x384xbf16, #tpu.memory_space<vmem>>, vector<1x128x384xbf16>
    %694 = vector.shape_cast %693 : vector<1x128x384xbf16> to vector<128x384xbf16>
    %c1_276 = arith.constant 1 : index
    %c0_277 = arith.constant 0 : index
    %c0_278 = arith.constant 0 : index
    %695 = vector.load %arg17[%c1_276, %c0_277, %c0_278] : memref<2x1x384xf32, #tpu.memory_space<vmem>>, vector<1x1x384xf32>
    %696 = vector.shape_cast %695 : vector<1x1x384xf32> to vector<1x384xf32>
    %c1_279 = arith.constant 1 : index
    %c0_280 = arith.constant 0 : index
    %c0_281 = arith.constant 0 : index
    %697 = vector.load %arg18[%c1_279, %c0_280, %c0_281] : memref<2x128x128xbf16, #tpu.memory_space<vmem>>, vector<1x128x128xbf16>
    %698 = vector.shape_cast %697 : vector<1x128x128xbf16> to vector<128x128xbf16>
    %c1_282 = arith.constant 1 : index
    %c0_283 = arith.constant 0 : index
    %c0_284 = arith.constant 0 : index
    %699 = vector.load %arg19[%c1_282, %c0_283, %c0_284] : memref<2x1x128xf32, #tpu.memory_space<vmem>>, vector<1x1x128xf32>
    %700 = vector.shape_cast %699 : vector<1x1x128xf32> to vector<1x128xf32>
    %701 = arith.truncf %692 : vector<8x128xf32> to vector<8x128xbf16>
    %cst_285 = arith.constant dense<0.000000e+00> : vector<8x384xf32>
    %702 = tpu.matmul %701, %694, %cst_285 {dimension_numbers = #tpu.dot_dimension_numbers<[1], [0], [0], [1], [0, 0, 1, 1], [], []>} : vector<8x128xbf16>, vector<128x384xbf16>, vector<8x384xf32> -> vector<8x384xf32>
    %703 = vector.broadcast %696 : vector<1x384xf32> to vector<8x384xf32>
    %704 = arith.addf %702, %703 : vector<8x384xf32>
    %705 = vector.extract_strided_slice %704 {offsets = [0, 0], sizes = [8, 128], strides = [1, 1]} : vector<8x384xf32> to vector<8x128xf32>
    %cst_286 = arith.constant 0.176776692 : f32
    %706 = vector.broadcast %cst_286 : f32 to vector<8x128xf32>
    %707 = arith.mulf %705, %706 : vector<8x128xf32>
    %708 = vector.extract_strided_slice %704 {offsets = [0, 128], sizes = [8, 128], strides = [1, 1]} : vector<8x384xf32> to vector<8x128xf32>
    %709 = vector.extract_strided_slice %704 {offsets = [0, 256], sizes = [8, 128], strides = [1, 1]} : vector<8x384xf32> to vector<8x128xf32>
    %cst_287 = arith.constant 0.000000e+00 : f32
    %710 = vector.broadcast %cst_287 : f32 to vector<8x128xf32>
    %711 = vector.extract_strided_slice %707 {offsets = [0, 0], sizes = [8, 32], strides = [1, 1]} : vector<8x128xf32> to vector<8x32xf32>
    %712 = arith.truncf %711 : vector<8x32xf32> to vector<8x32xbf16>
    %713 = vector.extract_strided_slice %708 {offsets = [0, 0], sizes = [8, 32], strides = [1, 1]} : vector<8x128xf32> to vector<8x32xf32>
    %714 = arith.truncf %713 : vector<8x32xf32> to vector<8x32xbf16>
    %715 = vector.extract_strided_slice %709 {offsets = [0, 0], sizes = [8, 32], strides = [1, 1]} : vector<8x128xf32> to vector<8x32xf32>
    %716 = arith.truncf %715 : vector<8x32xf32> to vector<8x32xbf16>
    "tpu.trace_start"() <{level = 10 : i32, message = "qd,kd->qk"}> : () -> ()
    %cst_288 = arith.constant dense<0.000000e+00> : vector<8x8xf32>
    %717 = tpu.matmul %712, %714, %cst_288 {dimension_numbers = #tpu.dot_dimension_numbers<[1], [1], [0], [0], [0, 0, 1, 0], [], []>} : vector<8x32xbf16>, vector<8x32xbf16>, vector<8x8xf32> -> vector<8x8xf32>
    "tpu.trace_stop"() : () -> ()
    %cst_289 = arith.constant dense<0xFF800000> : vector<8xf32>
    %718 = vector.multi_reduction <maximumf>, %717, %cst_289 [1] : vector<8x8xf32> to vector<8xf32>
    %719 = vector.shape_cast %718 : vector<8xf32> to vector<8x1xf32>
    %720 = vector.broadcast %719 : vector<8x1xf32> to vector<8x8xf32>
    %721 = arith.subf %717, %720 : vector<8x8xf32>
    %722 = math.exp %721 : vector<8x8xf32>
    %cst_290 = arith.constant dense<0.000000e+00> : vector<8xf32>
    %723 = vector.multi_reduction <add>, %722, %cst_290 [1] : vector<8x8xf32> to vector<8xf32>
    %724 = vector.shape_cast %723 : vector<8xf32> to vector<8x1xf32>
    %725 = tpu.reciprocal %724 {approx = true} : vector<8x1xf32> -> vector<8x1xf32>
    %726 = vector.broadcast %725 : vector<8x1xf32> to vector<8x8xf32>
    %727 = arith.mulf %722, %726 : vector<8x8xf32>
    %728 = arith.truncf %727 : vector<8x8xf32> to vector<8x8xbf16>
    "tpu.trace_start"() <{level = 10 : i32, message = "qk,kd->qd"}> : () -> ()
    %cst_291 = arith.constant dense<0.000000e+00> : vector<8x32xf32>
    %729 = tpu.matmul %728, %716, %cst_291 {dimension_numbers = #tpu.dot_dimension_numbers<[1], [0], [0], [1], [0, 0, 1, 1], [], []>} : vector<8x8xbf16>, vector<8x32xbf16>, vector<8x32xf32> -> vector<8x32xf32>
    "tpu.trace_stop"() : () -> ()
    %730 = arith.truncf %729 : vector<8x32xf32> to vector<8x32xbf16>
    %731 = vector.extract_strided_slice %698 {offsets = [0, 0], sizes = [32, 128], strides = [1, 1]} : vector<128x128xbf16> to vector<32x128xbf16>
    %cst_292 = arith.constant dense<0.000000e+00> : vector<8x128xf32>
    %732 = tpu.matmul %730, %731, %cst_292 {dimension_numbers = #tpu.dot_dimension_numbers<[1], [0], [0], [1], [0, 0, 1, 1], [], []>} : vector<8x32xbf16>, vector<32x128xbf16>, vector<8x128xf32> -> vector<8x128xf32>
    %733 = arith.addf %710, %732 : vector<8x128xf32>
    %734 = vector.extract_strided_slice %707 {offsets = [0, 32], sizes = [8, 32], strides = [1, 1]} : vector<8x128xf32> to vector<8x32xf32>
    %735 = arith.truncf %734 : vector<8x32xf32> to vector<8x32xbf16>
    %736 = vector.extract_strided_slice %708 {offsets = [0, 32], sizes = [8, 32], strides = [1, 1]} : vector<8x128xf32> to vector<8x32xf32>
    %737 = arith.truncf %736 : vector<8x32xf32> to vector<8x32xbf16>
    %738 = vector.extract_strided_slice %709 {offsets = [0, 32], sizes = [8, 32], strides = [1, 1]} : vector<8x128xf32> to vector<8x32xf32>
    %739 = arith.truncf %738 : vector<8x32xf32> to vector<8x32xbf16>
    "tpu.trace_start"() <{level = 10 : i32, message = "qd,kd->qk"}> : () -> ()
    %cst_293 = arith.constant dense<0.000000e+00> : vector<8x8xf32>
    %740 = tpu.matmul %735, %737, %cst_293 {dimension_numbers = #tpu.dot_dimension_numbers<[1], [1], [0], [0], [0, 0, 1, 0], [], []>} : vector<8x32xbf16>, vector<8x32xbf16>, vector<8x8xf32> -> vector<8x8xf32>
    "tpu.trace_stop"() : () -> ()
    %cst_294 = arith.constant dense<0xFF800000> : vector<8xf32>
    %741 = vector.multi_reduction <maximumf>, %740, %cst_294 [1] : vector<8x8xf32> to vector<8xf32>
    %742 = vector.shape_cast %741 : vector<8xf32> to vector<8x1xf32>
    %743 = vector.broadcast %742 : vector<8x1xf32> to vector<8x8xf32>
    %744 = arith.subf %740, %743 : vector<8x8xf32>
    %745 = math.exp %744 : vector<8x8xf32>
    %cst_295 = arith.constant dense<0.000000e+00> : vector<8xf32>
    %746 = vector.multi_reduction <add>, %745, %cst_295 [1] : vector<8x8xf32> to vector<8xf32>
    %747 = vector.shape_cast %746 : vector<8xf32> to vector<8x1xf32>
    %748 = tpu.reciprocal %747 {approx = true} : vector<8x1xf32> -> vector<8x1xf32>
    %749 = vector.broadcast %748 : vector<8x1xf32> to vector<8x8xf32>
    %750 = arith.mulf %745, %749 : vector<8x8xf32>
    %751 = arith.truncf %750 : vector<8x8xf32> to vector<8x8xbf16>
    "tpu.trace_start"() <{level = 10 : i32, message = "qk,kd->qd"}> : () -> ()
    %cst_296 = arith.constant dense<0.000000e+00> : vector<8x32xf32>
    %752 = tpu.matmul %751, %739, %cst_296 {dimension_numbers = #tpu.dot_dimension_numbers<[1], [0], [0], [1], [0, 0, 1, 1], [], []>} : vector<8x8xbf16>, vector<8x32xbf16>, vector<8x32xf32> -> vector<8x32xf32>
    "tpu.trace_stop"() : () -> ()
    %753 = arith.truncf %752 : vector<8x32xf32> to vector<8x32xbf16>
    %754 = vector.extract_strided_slice %698 {offsets = [32, 0], sizes = [32, 128], strides = [1, 1]} : vector<128x128xbf16> to vector<32x128xbf16>
    %cst_297 = arith.constant dense<0.000000e+00> : vector<8x128xf32>
    %755 = tpu.matmul %753, %754, %cst_297 {dimension_numbers = #tpu.dot_dimension_numbers<[1], [0], [0], [1], [0, 0, 1, 1], [], []>} : vector<8x32xbf16>, vector<32x128xbf16>, vector<8x128xf32> -> vector<8x128xf32>
    %756 = arith.addf %733, %755 : vector<8x128xf32>
    %757 = vector.extract_strided_slice %707 {offsets = [0, 64], sizes = [8, 32], strides = [1, 1]} : vector<8x128xf32> to vector<8x32xf32>
    %758 = arith.truncf %757 : vector<8x32xf32> to vector<8x32xbf16>
    %759 = vector.extract_strided_slice %708 {offsets = [0, 64], sizes = [8, 32], strides = [1, 1]} : vector<8x128xf32> to vector<8x32xf32>
    %760 = arith.truncf %759 : vector<8x32xf32> to vector<8x32xbf16>
    %761 = vector.extract_strided_slice %709 {offsets = [0, 64], sizes = [8, 32], strides = [1, 1]} : vector<8x128xf32> to vector<8x32xf32>
    %762 = arith.truncf %761 : vector<8x32xf32> to vector<8x32xbf16>
    "tpu.trace_start"() <{level = 10 : i32, message = "qd,kd->qk"}> : () -> ()
    %cst_298 = arith.constant dense<0.000000e+00> : vector<8x8xf32>
    %763 = tpu.matmul %758, %760, %cst_298 {dimension_numbers = #tpu.dot_dimension_numbers<[1], [1], [0], [0], [0, 0, 1, 0], [], []>} : vector<8x32xbf16>, vector<8x32xbf16>, vector<8x8xf32> -> vector<8x8xf32>
    "tpu.trace_stop"() : () -> ()
    %cst_299 = arith.constant dense<0xFF800000> : vector<8xf32>
    %764 = vector.multi_reduction <maximumf>, %763, %cst_299 [1] : vector<8x8xf32> to vector<8xf32>
    %765 = vector.shape_cast %764 : vector<8xf32> to vector<8x1xf32>
    %766 = vector.broadcast %765 : vector<8x1xf32> to vector<8x8xf32>
    %767 = arith.subf %763, %766 : vector<8x8xf32>
    %768 = math.exp %767 : vector<8x8xf32>
    %cst_300 = arith.constant dense<0.000000e+00> : vector<8xf32>
    %769 = vector.multi_reduction <add>, %768, %cst_300 [1] : vector<8x8xf32> to vector<8xf32>
    %770 = vector.shape_cast %769 : vector<8xf32> to vector<8x1xf32>
    %771 = tpu.reciprocal %770 {approx = true} : vector<8x1xf32> -> vector<8x1xf32>
    %772 = vector.broadcast %771 : vector<8x1xf32> to vector<8x8xf32>
    %773 = arith.mulf %768, %772 : vector<8x8xf32>
    %774 = arith.truncf %773 : vector<8x8xf32> to vector<8x8xbf16>
    "tpu.trace_start"() <{level = 10 : i32, message = "qk,kd->qd"}> : () -> ()
    %cst_301 = arith.constant dense<0.000000e+00> : vector<8x32xf32>
    %775 = tpu.matmul %774, %762, %cst_301 {dimension_numbers = #tpu.dot_dimension_numbers<[1], [0], [0], [1], [0, 0, 1, 1], [], []>} : vector<8x8xbf16>, vector<8x32xbf16>, vector<8x32xf32> -> vector<8x32xf32>
    "tpu.trace_stop"() : () -> ()
    %776 = arith.truncf %775 : vector<8x32xf32> to vector<8x32xbf16>
    %777 = vector.extract_strided_slice %698 {offsets = [64, 0], sizes = [32, 128], strides = [1, 1]} : vector<128x128xbf16> to vector<32x128xbf16>
    %cst_302 = arith.constant dense<0.000000e+00> : vector<8x128xf32>
    %778 = tpu.matmul %776, %777, %cst_302 {dimension_numbers = #tpu.dot_dimension_numbers<[1], [0], [0], [1], [0, 0, 1, 1], [], []>} : vector<8x32xbf16>, vector<32x128xbf16>, vector<8x128xf32> -> vector<8x128xf32>
    %779 = arith.addf %756, %778 : vector<8x128xf32>
    %780 = vector.extract_strided_slice %707 {offsets = [0, 96], sizes = [8, 32], strides = [1, 1]} : vector<8x128xf32> to vector<8x32xf32>
    %781 = arith.truncf %780 : vector<8x32xf32> to vector<8x32xbf16>
    %782 = vector.extract_strided_slice %708 {offsets = [0, 96], sizes = [8, 32], strides = [1, 1]} : vector<8x128xf32> to vector<8x32xf32>
    %783 = arith.truncf %782 : vector<8x32xf32> to vector<8x32xbf16>
    %784 = vector.extract_strided_slice %709 {offsets = [0, 96], sizes = [8, 32], strides = [1, 1]} : vector<8x128xf32> to vector<8x32xf32>
    %785 = arith.truncf %784 : vector<8x32xf32> to vector<8x32xbf16>
    "tpu.trace_start"() <{level = 10 : i32, message = "qd,kd->qk"}> : () -> ()
    %cst_303 = arith.constant dense<0.000000e+00> : vector<8x8xf32>
    %786 = tpu.matmul %781, %783, %cst_303 {dimension_numbers = #tpu.dot_dimension_numbers<[1], [1], [0], [0], [0, 0, 1, 0], [], []>} : vector<8x32xbf16>, vector<8x32xbf16>, vector<8x8xf32> -> vector<8x8xf32>
    "tpu.trace_stop"() : () -> ()
    %cst_304 = arith.constant dense<0xFF800000> : vector<8xf32>
    %787 = vector.multi_reduction <maximumf>, %786, %cst_304 [1] : vector<8x8xf32> to vector<8xf32>
    %788 = vector.shape_cast %787 : vector<8xf32> to vector<8x1xf32>
    %789 = vector.broadcast %788 : vector<8x1xf32> to vector<8x8xf32>
    %790 = arith.subf %786, %789 : vector<8x8xf32>
    %791 = math.exp %790 : vector<8x8xf32>
    %cst_305 = arith.constant dense<0.000000e+00> : vector<8xf32>
    %792 = vector.multi_reduction <add>, %791, %cst_305 [1] : vector<8x8xf32> to vector<8xf32>
    %793 = vector.shape_cast %792 : vector<8xf32> to vector<8x1xf32>
    %794 = tpu.reciprocal %793 {approx = true} : vector<8x1xf32> -> vector<8x1xf32>
    %795 = vector.broadcast %794 : vector<8x1xf32> to vector<8x8xf32>
    %796 = arith.mulf %791, %795 : vector<8x8xf32>
    %797 = arith.truncf %796 : vector<8x8xf32> to vector<8x8xbf16>
    "tpu.trace_start"() <{level = 10 : i32, message = "qk,kd->qd"}> : () -> ()
    %cst_306 = arith.constant dense<0.000000e+00> : vector<8x32xf32>
    %798 = tpu.matmul %797, %785, %cst_306 {dimension_numbers = #tpu.dot_dimension_numbers<[1], [0], [0], [1], [0, 0, 1, 1], [], []>} : vector<8x8xbf16>, vector<8x32xbf16>, vector<8x32xf32> -> vector<8x32xf32>
    "tpu.trace_stop"() : () -> ()
    %799 = arith.truncf %798 : vector<8x32xf32> to vector<8x32xbf16>
    %800 = vector.extract_strided_slice %698 {offsets = [96, 0], sizes = [32, 128], strides = [1, 1]} : vector<128x128xbf16> to vector<32x128xbf16>
    %cst_307 = arith.constant dense<0.000000e+00> : vector<8x128xf32>
    %801 = tpu.matmul %799, %800, %cst_307 {dimension_numbers = #tpu.dot_dimension_numbers<[1], [0], [0], [1], [0, 0, 1, 1], [], []>} : vector<8x32xbf16>, vector<32x128xbf16>, vector<8x128xf32> -> vector<8x128xf32>
    %802 = arith.addf %779, %801 : vector<8x128xf32>
    %803 = vector.broadcast %700 : vector<1x128xf32> to vector<8x128xf32>
    %804 = arith.addf %802, %803 : vector<8x128xf32>
    %805 = arith.addf %692, %804 : vector<8x128xf32>
    %c1_308 = arith.constant 1 : index
    %c0_309 = arith.constant 0 : index
    %c0_310 = arith.constant 0 : index
    %806 = vector.load %arg26[%c1_308, %c0_309, %c0_310] : memref<2x1x128xf32, #tpu.memory_space<vmem>>, vector<1x1x128xf32>
    %807 = vector.shape_cast %806 : vector<1x1x128xf32> to vector<1x128xf32>
    %c1_311 = arith.constant 1 : index
    %c0_312 = arith.constant 0 : index
    %c0_313 = arith.constant 0 : index
    %808 = vector.load %arg27[%c1_311, %c0_312, %c0_313] : memref<2x1x128xf32, #tpu.memory_space<vmem>>, vector<1x1x128xf32>
    %809 = vector.shape_cast %808 : vector<1x1x128xf32> to vector<1x128xf32>
    %cst_314 = arith.constant dense<0.000000e+00> : vector<8xf32>
    %810 = vector.multi_reduction <add>, %805, %cst_314 [1] : vector<8x128xf32> to vector<8xf32>
    %811 = vector.shape_cast %810 : vector<8xf32> to vector<8x1xf32>
    %cst_315 = arith.constant 1.280000e+02 : f32
    %812 = vector.broadcast %cst_315 : f32 to vector<8x1xf32>
    %813 = arith.divf %811, %812 : vector<8x1xf32>
    %814 = vector.broadcast %813 : vector<8x1xf32> to vector<8x128xf32>
    %815 = arith.subf %805, %814 : vector<8x128xf32>
    %816 = arith.mulf %815, %815 : vector<8x128xf32>
    %cst_316 = arith.constant dense<0.000000e+00> : vector<8xf32>
    %817 = vector.multi_reduction <add>, %816, %cst_316 [1] : vector<8x128xf32> to vector<8xf32>
    %818 = vector.shape_cast %817 : vector<8xf32> to vector<8x1xf32>
    %cst_317 = arith.constant 1.280000e+02 : f32
    %819 = vector.broadcast %cst_317 : f32 to vector<8x1xf32>
    %820 = arith.divf %818, %819 : vector<8x1xf32>
    %cst_318 = arith.constant 9.99999974E-6 : f32
    %821 = vector.broadcast %cst_318 : f32 to vector<8x1xf32>
    %822 = arith.addf %820, %821 : vector<8x1xf32>
    %823 = math.rsqrt %822 : vector<8x1xf32>
    %824 = vector.broadcast %823 : vector<8x1xf32> to vector<8x128xf32>
    %825 = arith.mulf %815, %824 : vector<8x128xf32>
    %826 = vector.broadcast %807 : vector<1x128xf32> to vector<8x128xf32>
    %827 = arith.mulf %825, %826 : vector<8x128xf32>
    %828 = vector.broadcast %809 : vector<1x128xf32> to vector<8x128xf32>
    %829 = arith.addf %827, %828 : vector<8x128xf32>
    %c1_319 = arith.constant 1 : index
    %c0_320 = arith.constant 0 : index
    %c0_321 = arith.constant 0 : index
    %830 = vector.load %arg20[%c1_319, %c0_320, %c0_321] : memref<2x128x128xbf16, #tpu.memory_space<vmem>>, vector<1x128x128xbf16>
    %831 = vector.shape_cast %830 : vector<1x128x128xbf16> to vector<128x128xbf16>
    %c1_322 = arith.constant 1 : index
    %c0_323 = arith.constant 0 : index
    %c0_324 = arith.constant 0 : index
    %832 = vector.load %arg21[%c1_322, %c0_323, %c0_324] : memref<2x1x128xf32, #tpu.memory_space<vmem>>, vector<1x1x128xf32>
    %833 = vector.shape_cast %832 : vector<1x1x128xf32> to vector<1x128xf32>
    %c1_325 = arith.constant 1 : index
    %c0_326 = arith.constant 0 : index
    %c0_327 = arith.constant 0 : index
    %834 = vector.load %arg22[%c1_325, %c0_326, %c0_327] : memref<2x128x256xbf16, #tpu.memory_space<vmem>>, vector<1x128x256xbf16>
    %835 = vector.shape_cast %834 : vector<1x128x256xbf16> to vector<128x256xbf16>
    %c1_328 = arith.constant 1 : index
    %c0_329 = arith.constant 0 : index
    %c0_330 = arith.constant 0 : index
    %836 = vector.load %arg23[%c1_328, %c0_329, %c0_330] : memref<2x1x256xf32, #tpu.memory_space<vmem>>, vector<1x1x256xf32>
    %837 = vector.shape_cast %836 : vector<1x1x256xf32> to vector<1x256xf32>
    %c1_331 = arith.constant 1 : index
    %c0_332 = arith.constant 0 : index
    %c0_333 = arith.constant 0 : index
    %838 = vector.load %arg24[%c1_331, %c0_332, %c0_333] : memref<2x128x128xbf16, #tpu.memory_space<vmem>>, vector<1x128x128xbf16>
    %839 = vector.shape_cast %838 : vector<1x128x128xbf16> to vector<128x128xbf16>
    %c1_334 = arith.constant 1 : index
    %c0_335 = arith.constant 0 : index
    %c0_336 = arith.constant 0 : index
    %840 = vector.load %arg25[%c1_334, %c0_335, %c0_336] : memref<2x1x128xf32, #tpu.memory_space<vmem>>, vector<1x1x128xf32>
    %841 = vector.shape_cast %840 : vector<1x1x128xf32> to vector<1x128xf32>
    %842 = arith.truncf %829 : vector<8x128xf32> to vector<8x128xbf16>
    %cst_337 = arith.constant dense<0.000000e+00> : vector<8x128xf32>
    %843 = tpu.matmul %842, %831, %cst_337 {dimension_numbers = #tpu.dot_dimension_numbers<[1], [0], [0], [1], [0, 0, 1, 1], [], []>} : vector<8x128xbf16>, vector<128x128xbf16>, vector<8x128xf32> -> vector<8x128xf32>
    %844 = vector.broadcast %833 : vector<1x128xf32> to vector<8x128xf32>
    %845 = arith.addf %843, %844 : vector<8x128xf32>
    %cst_338 = arith.constant 0.176776692 : f32
    %846 = vector.broadcast %cst_338 : f32 to vector<8x128xf32>
    %847 = arith.mulf %845, %846 : vector<8x128xf32>
    %848 = arith.truncf %368 : vector<8x128xf32> to vector<8x128xbf16>
    %cst_339 = arith.constant dense<0.000000e+00> : vector<8x256xf32>
    %849 = tpu.matmul %848, %835, %cst_339 {dimension_numbers = #tpu.dot_dimension_numbers<[1], [0], [0], [1], [0, 0, 1, 1], [], []>} : vector<8x128xbf16>, vector<128x256xbf16>, vector<8x256xf32> -> vector<8x256xf32>
    %850 = vector.broadcast %837 : vector<1x256xf32> to vector<8x256xf32>
    %851 = arith.addf %849, %850 : vector<8x256xf32>
    %852 = vector.extract_strided_slice %851 {offsets = [0, 0], sizes = [8, 128], strides = [1, 1]} : vector<8x256xf32> to vector<8x128xf32>
    %853 = vector.extract_strided_slice %851 {offsets = [0, 128], sizes = [8, 128], strides = [1, 1]} : vector<8x256xf32> to vector<8x128xf32>
    %cst_340 = arith.constant 0.000000e+00 : f32
    %854 = vector.broadcast %cst_340 : f32 to vector<8x128xf32>
    %855 = vector.extract_strided_slice %847 {offsets = [0, 0], sizes = [8, 32], strides = [1, 1]} : vector<8x128xf32> to vector<8x32xf32>
    %856 = arith.truncf %855 : vector<8x32xf32> to vector<8x32xbf16>
    %857 = vector.extract_strided_slice %852 {offsets = [0, 0], sizes = [8, 32], strides = [1, 1]} : vector<8x128xf32> to vector<8x32xf32>
    %858 = arith.truncf %857 : vector<8x32xf32> to vector<8x32xbf16>
    %859 = vector.extract_strided_slice %853 {offsets = [0, 0], sizes = [8, 32], strides = [1, 1]} : vector<8x128xf32> to vector<8x32xf32>
    %860 = arith.truncf %859 : vector<8x32xf32> to vector<8x32xbf16>
    "tpu.trace_start"() <{level = 10 : i32, message = "qd,kd->qk"}> : () -> ()
    %cst_341 = arith.constant dense<0.000000e+00> : vector<8x8xf32>
    %861 = tpu.matmul %856, %858, %cst_341 {dimension_numbers = #tpu.dot_dimension_numbers<[1], [1], [0], [0], [0, 0, 1, 0], [], []>} : vector<8x32xbf16>, vector<8x32xbf16>, vector<8x8xf32> -> vector<8x8xf32>
    "tpu.trace_stop"() : () -> ()
    %cst_342 = arith.constant dense<0xFF800000> : vector<8xf32>
    %862 = vector.multi_reduction <maximumf>, %861, %cst_342 [1] : vector<8x8xf32> to vector<8xf32>
    %863 = vector.shape_cast %862 : vector<8xf32> to vector<8x1xf32>
    %864 = vector.broadcast %863 : vector<8x1xf32> to vector<8x8xf32>
    %865 = arith.subf %861, %864 : vector<8x8xf32>
    %866 = math.exp %865 : vector<8x8xf32>
    %cst_343 = arith.constant dense<0.000000e+00> : vector<8xf32>
    %867 = vector.multi_reduction <add>, %866, %cst_343 [1] : vector<8x8xf32> to vector<8xf32>
    %868 = vector.shape_cast %867 : vector<8xf32> to vector<8x1xf32>
    %869 = tpu.reciprocal %868 {approx = true} : vector<8x1xf32> -> vector<8x1xf32>
    %870 = vector.broadcast %869 : vector<8x1xf32> to vector<8x8xf32>
    %871 = arith.mulf %866, %870 : vector<8x8xf32>
    %872 = arith.truncf %871 : vector<8x8xf32> to vector<8x8xbf16>
    "tpu.trace_start"() <{level = 10 : i32, message = "qk,kd->qd"}> : () -> ()
    %cst_344 = arith.constant dense<0.000000e+00> : vector<8x32xf32>
    %873 = tpu.matmul %872, %860, %cst_344 {dimension_numbers = #tpu.dot_dimension_numbers<[1], [0], [0], [1], [0, 0, 1, 1], [], []>} : vector<8x8xbf16>, vector<8x32xbf16>, vector<8x32xf32> -> vector<8x32xf32>
    "tpu.trace_stop"() : () -> ()
    %874 = arith.truncf %873 : vector<8x32xf32> to vector<8x32xbf16>
    %875 = vector.extract_strided_slice %839 {offsets = [0, 0], sizes = [32, 128], strides = [1, 1]} : vector<128x128xbf16> to vector<32x128xbf16>
    %cst_345 = arith.constant dense<0.000000e+00> : vector<8x128xf32>
    %876 = tpu.matmul %874, %875, %cst_345 {dimension_numbers = #tpu.dot_dimension_numbers<[1], [0], [0], [1], [0, 0, 1, 1], [], []>} : vector<8x32xbf16>, vector<32x128xbf16>, vector<8x128xf32> -> vector<8x128xf32>
    %877 = arith.addf %854, %876 : vector<8x128xf32>
    %878 = vector.extract_strided_slice %847 {offsets = [0, 32], sizes = [8, 32], strides = [1, 1]} : vector<8x128xf32> to vector<8x32xf32>
    %879 = arith.truncf %878 : vector<8x32xf32> to vector<8x32xbf16>
    %880 = vector.extract_strided_slice %852 {offsets = [0, 32], sizes = [8, 32], strides = [1, 1]} : vector<8x128xf32> to vector<8x32xf32>
    %881 = arith.truncf %880 : vector<8x32xf32> to vector<8x32xbf16>
    %882 = vector.extract_strided_slice %853 {offsets = [0, 32], sizes = [8, 32], strides = [1, 1]} : vector<8x128xf32> to vector<8x32xf32>
    %883 = arith.truncf %882 : vector<8x32xf32> to vector<8x32xbf16>
    "tpu.trace_start"() <{level = 10 : i32, message = "qd,kd->qk"}> : () -> ()
    %cst_346 = arith.constant dense<0.000000e+00> : vector<8x8xf32>
    %884 = tpu.matmul %879, %881, %cst_346 {dimension_numbers = #tpu.dot_dimension_numbers<[1], [1], [0], [0], [0, 0, 1, 0], [], []>} : vector<8x32xbf16>, vector<8x32xbf16>, vector<8x8xf32> -> vector<8x8xf32>
    "tpu.trace_stop"() : () -> ()
    %cst_347 = arith.constant dense<0xFF800000> : vector<8xf32>
    %885 = vector.multi_reduction <maximumf>, %884, %cst_347 [1] : vector<8x8xf32> to vector<8xf32>
    %886 = vector.shape_cast %885 : vector<8xf32> to vector<8x1xf32>
    %887 = vector.broadcast %886 : vector<8x1xf32> to vector<8x8xf32>
    %888 = arith.subf %884, %887 : vector<8x8xf32>
    %889 = math.exp %888 : vector<8x8xf32>
    %cst_348 = arith.constant dense<0.000000e+00> : vector<8xf32>
    %890 = vector.multi_reduction <add>, %889, %cst_348 [1] : vector<8x8xf32> to vector<8xf32>
    %891 = vector.shape_cast %890 : vector<8xf32> to vector<8x1xf32>
    %892 = tpu.reciprocal %891 {approx = true} : vector<8x1xf32> -> vector<8x1xf32>
    %893 = vector.broadcast %892 : vector<8x1xf32> to vector<8x8xf32>
    %894 = arith.mulf %889, %893 : vector<8x8xf32>
    %895 = arith.truncf %894 : vector<8x8xf32> to vector<8x8xbf16>
    "tpu.trace_start"() <{level = 10 : i32, message = "qk,kd->qd"}> : () -> ()
    %cst_349 = arith.constant dense<0.000000e+00> : vector<8x32xf32>
    %896 = tpu.matmul %895, %883, %cst_349 {dimension_numbers = #tpu.dot_dimension_numbers<[1], [0], [0], [1], [0, 0, 1, 1], [], []>} : vector<8x8xbf16>, vector<8x32xbf16>, vector<8x32xf32> -> vector<8x32xf32>
    "tpu.trace_stop"() : () -> ()
    %897 = arith.truncf %896 : vector<8x32xf32> to vector<8x32xbf16>
    %898 = vector.extract_strided_slice %839 {offsets = [32, 0], sizes = [32, 128], strides = [1, 1]} : vector<128x128xbf16> to vector<32x128xbf16>
    %cst_350 = arith.constant dense<0.000000e+00> : vector<8x128xf32>
    %899 = tpu.matmul %897, %898, %cst_350 {dimension_numbers = #tpu.dot_dimension_numbers<[1], [0], [0], [1], [0, 0, 1, 1], [], []>} : vector<8x32xbf16>, vector<32x128xbf16>, vector<8x128xf32> -> vector<8x128xf32>
    %900 = arith.addf %877, %899 : vector<8x128xf32>
    %901 = vector.extract_strided_slice %847 {offsets = [0, 64], sizes = [8, 32], strides = [1, 1]} : vector<8x128xf32> to vector<8x32xf32>
    %902 = arith.truncf %901 : vector<8x32xf32> to vector<8x32xbf16>
    %903 = vector.extract_strided_slice %852 {offsets = [0, 64], sizes = [8, 32], strides = [1, 1]} : vector<8x128xf32> to vector<8x32xf32>
    %904 = arith.truncf %903 : vector<8x32xf32> to vector<8x32xbf16>
    %905 = vector.extract_strided_slice %853 {offsets = [0, 64], sizes = [8, 32], strides = [1, 1]} : vector<8x128xf32> to vector<8x32xf32>
    %906 = arith.truncf %905 : vector<8x32xf32> to vector<8x32xbf16>
    "tpu.trace_start"() <{level = 10 : i32, message = "qd,kd->qk"}> : () -> ()
    %cst_351 = arith.constant dense<0.000000e+00> : vector<8x8xf32>
    %907 = tpu.matmul %902, %904, %cst_351 {dimension_numbers = #tpu.dot_dimension_numbers<[1], [1], [0], [0], [0, 0, 1, 0], [], []>} : vector<8x32xbf16>, vector<8x32xbf16>, vector<8x8xf32> -> vector<8x8xf32>
    "tpu.trace_stop"() : () -> ()
    %cst_352 = arith.constant dense<0xFF800000> : vector<8xf32>
    %908 = vector.multi_reduction <maximumf>, %907, %cst_352 [1] : vector<8x8xf32> to vector<8xf32>
    %909 = vector.shape_cast %908 : vector<8xf32> to vector<8x1xf32>
    %910 = vector.broadcast %909 : vector<8x1xf32> to vector<8x8xf32>
    %911 = arith.subf %907, %910 : vector<8x8xf32>
    %912 = math.exp %911 : vector<8x8xf32>
    %cst_353 = arith.constant dense<0.000000e+00> : vector<8xf32>
    %913 = vector.multi_reduction <add>, %912, %cst_353 [1] : vector<8x8xf32> to vector<8xf32>
    %914 = vector.shape_cast %913 : vector<8xf32> to vector<8x1xf32>
    %915 = tpu.reciprocal %914 {approx = true} : vector<8x1xf32> -> vector<8x1xf32>
    %916 = vector.broadcast %915 : vector<8x1xf32> to vector<8x8xf32>
    %917 = arith.mulf %912, %916 : vector<8x8xf32>
    %918 = arith.truncf %917 : vector<8x8xf32> to vector<8x8xbf16>
    "tpu.trace_start"() <{level = 10 : i32, message = "qk,kd->qd"}> : () -> ()
    %cst_354 = arith.constant dense<0.000000e+00> : vector<8x32xf32>
    %919 = tpu.matmul %918, %906, %cst_354 {dimension_numbers = #tpu.dot_dimension_numbers<[1], [0], [0], [1], [0, 0, 1, 1], [], []>} : vector<8x8xbf16>, vector<8x32xbf16>, vector<8x32xf32> -> vector<8x32xf32>
    "tpu.trace_stop"() : () -> ()
    %920 = arith.truncf %919 : vector<8x32xf32> to vector<8x32xbf16>
    %921 = vector.extract_strided_slice %839 {offsets = [64, 0], sizes = [32, 128], strides = [1, 1]} : vector<128x128xbf16> to vector<32x128xbf16>
    %cst_355 = arith.constant dense<0.000000e+00> : vector<8x128xf32>
    %922 = tpu.matmul %920, %921, %cst_355 {dimension_numbers = #tpu.dot_dimension_numbers<[1], [0], [0], [1], [0, 0, 1, 1], [], []>} : vector<8x32xbf16>, vector<32x128xbf16>, vector<8x128xf32> -> vector<8x128xf32>
    %923 = arith.addf %900, %922 : vector<8x128xf32>
    %924 = vector.extract_strided_slice %847 {offsets = [0, 96], sizes = [8, 32], strides = [1, 1]} : vector<8x128xf32> to vector<8x32xf32>
    %925 = arith.truncf %924 : vector<8x32xf32> to vector<8x32xbf16>
    %926 = vector.extract_strided_slice %852 {offsets = [0, 96], sizes = [8, 32], strides = [1, 1]} : vector<8x128xf32> to vector<8x32xf32>
    %927 = arith.truncf %926 : vector<8x32xf32> to vector<8x32xbf16>
    %928 = vector.extract_strided_slice %853 {offsets = [0, 96], sizes = [8, 32], strides = [1, 1]} : vector<8x128xf32> to vector<8x32xf32>
    %929 = arith.truncf %928 : vector<8x32xf32> to vector<8x32xbf16>
    "tpu.trace_start"() <{level = 10 : i32, message = "qd,kd->qk"}> : () -> ()
    %cst_356 = arith.constant dense<0.000000e+00> : vector<8x8xf32>
    %930 = tpu.matmul %925, %927, %cst_356 {dimension_numbers = #tpu.dot_dimension_numbers<[1], [1], [0], [0], [0, 0, 1, 0], [], []>} : vector<8x32xbf16>, vector<8x32xbf16>, vector<8x8xf32> -> vector<8x8xf32>
    "tpu.trace_stop"() : () -> ()
    %cst_357 = arith.constant dense<0xFF800000> : vector<8xf32>
    %931 = vector.multi_reduction <maximumf>, %930, %cst_357 [1] : vector<8x8xf32> to vector<8xf32>
    %932 = vector.shape_cast %931 : vector<8xf32> to vector<8x1xf32>
    %933 = vector.broadcast %932 : vector<8x1xf32> to vector<8x8xf32>
    %934 = arith.subf %930, %933 : vector<8x8xf32>
    %935 = math.exp %934 : vector<8x8xf32>
    %cst_358 = arith.constant dense<0.000000e+00> : vector<8xf32>
    %936 = vector.multi_reduction <add>, %935, %cst_358 [1] : vector<8x8xf32> to vector<8xf32>
    %937 = vector.shape_cast %936 : vector<8xf32> to vector<8x1xf32>
    %938 = tpu.reciprocal %937 {approx = true} : vector<8x1xf32> -> vector<8x1xf32>
    %939 = vector.broadcast %938 : vector<8x1xf32> to vector<8x8xf32>
    %940 = arith.mulf %935, %939 : vector<8x8xf32>
    %941 = arith.truncf %940 : vector<8x8xf32> to vector<8x8xbf16>
    "tpu.trace_start"() <{level = 10 : i32, message = "qk,kd->qd"}> : () -> ()
    %cst_359 = arith.constant dense<0.000000e+00> : vector<8x32xf32>
    %942 = tpu.matmul %941, %929, %cst_359 {dimension_numbers = #tpu.dot_dimension_numbers<[1], [0], [0], [1], [0, 0, 1, 1], [], []>} : vector<8x8xbf16>, vector<8x32xbf16>, vector<8x32xf32> -> vector<8x32xf32>
    "tpu.trace_stop"() : () -> ()
    %943 = arith.truncf %942 : vector<8x32xf32> to vector<8x32xbf16>
    %944 = vector.extract_strided_slice %839 {offsets = [96, 0], sizes = [32, 128], strides = [1, 1]} : vector<128x128xbf16> to vector<32x128xbf16>
    %cst_360 = arith.constant dense<0.000000e+00> : vector<8x128xf32>
    %945 = tpu.matmul %943, %944, %cst_360 {dimension_numbers = #tpu.dot_dimension_numbers<[1], [0], [0], [1], [0, 0, 1, 1], [], []>} : vector<8x32xbf16>, vector<32x128xbf16>, vector<8x128xf32> -> vector<8x128xf32>
    %946 = arith.addf %923, %945 : vector<8x128xf32>
    %947 = vector.broadcast %841 : vector<1x128xf32> to vector<8x128xf32>
    %948 = arith.addf %946, %947 : vector<8x128xf32>
    %949 = arith.addf %829, %948 : vector<8x128xf32>
    %c1_361 = arith.constant 1 : index
    %c0_362 = arith.constant 0 : index
    %c0_363 = arith.constant 0 : index
    %950 = vector.load %arg28[%c1_361, %c0_362, %c0_363] : memref<2x1x128xf32, #tpu.memory_space<vmem>>, vector<1x1x128xf32>
    %951 = vector.shape_cast %950 : vector<1x1x128xf32> to vector<1x128xf32>
    %c1_364 = arith.constant 1 : index
    %c0_365 = arith.constant 0 : index
    %c0_366 = arith.constant 0 : index
    %952 = vector.load %arg29[%c1_364, %c0_365, %c0_366] : memref<2x1x128xf32, #tpu.memory_space<vmem>>, vector<1x1x128xf32>
    %953 = vector.shape_cast %952 : vector<1x1x128xf32> to vector<1x128xf32>
    %cst_367 = arith.constant dense<0.000000e+00> : vector<8xf32>
    %954 = vector.multi_reduction <add>, %949, %cst_367 [1] : vector<8x128xf32> to vector<8xf32>
    %955 = vector.shape_cast %954 : vector<8xf32> to vector<8x1xf32>
    %cst_368 = arith.constant 1.280000e+02 : f32
    %956 = vector.broadcast %cst_368 : f32 to vector<8x1xf32>
    %957 = arith.divf %955, %956 : vector<8x1xf32>
    %958 = vector.broadcast %957 : vector<8x1xf32> to vector<8x128xf32>
    %959 = arith.subf %949, %958 : vector<8x128xf32>
    %960 = arith.mulf %959, %959 : vector<8x128xf32>
    %cst_369 = arith.constant dense<0.000000e+00> : vector<8xf32>
    %961 = vector.multi_reduction <add>, %960, %cst_369 [1] : vector<8x128xf32> to vector<8xf32>
    %962 = vector.shape_cast %961 : vector<8xf32> to vector<8x1xf32>
    %cst_370 = arith.constant 1.280000e+02 : f32
    %963 = vector.broadcast %cst_370 : f32 to vector<8x1xf32>
    %964 = arith.divf %962, %963 : vector<8x1xf32>
    %cst_371 = arith.constant 9.99999974E-6 : f32
    %965 = vector.broadcast %cst_371 : f32 to vector<8x1xf32>
    %966 = arith.addf %964, %965 : vector<8x1xf32>
    %967 = math.rsqrt %966 : vector<8x1xf32>
    %968 = vector.broadcast %967 : vector<8x1xf32> to vector<8x128xf32>
    %969 = arith.mulf %959, %968 : vector<8x128xf32>
    %970 = vector.broadcast %951 : vector<1x128xf32> to vector<8x128xf32>
    %971 = arith.mulf %969, %970 : vector<8x128xf32>
    %972 = vector.broadcast %953 : vector<1x128xf32> to vector<8x128xf32>
    %973 = arith.addf %971, %972 : vector<8x128xf32>
    %c1_372 = arith.constant 1 : index
    %c0_373 = arith.constant 0 : index
    %c0_374 = arith.constant 0 : index
    %974 = vector.load %arg32[%c1_372, %c0_373, %c0_374] : memref<2x128x128xbf16, #tpu.memory_space<vmem>>, vector<1x128x128xbf16>
    %975 = vector.shape_cast %974 : vector<1x128x128xbf16> to vector<128x128xbf16>
    %c1_375 = arith.constant 1 : index
    %c0_376 = arith.constant 0 : index
    %c0_377 = arith.constant 0 : index
    %976 = vector.load %arg33[%c1_375, %c0_376, %c0_377] : memref<2x1x128xf32, #tpu.memory_space<vmem>>, vector<1x1x128xf32>
    %977 = vector.shape_cast %976 : vector<1x1x128xf32> to vector<1x128xf32>
    %c1_378 = arith.constant 1 : index
    %c0_379 = arith.constant 0 : index
    %c0_380 = arith.constant 0 : index
    %978 = vector.load %arg34[%c1_378, %c0_379, %c0_380] : memref<2x128x128xbf16, #tpu.memory_space<vmem>>, vector<1x128x128xbf16>
    %979 = vector.shape_cast %978 : vector<1x128x128xbf16> to vector<128x128xbf16>
    %c1_381 = arith.constant 1 : index
    %c0_382 = arith.constant 0 : index
    %c0_383 = arith.constant 0 : index
    %980 = vector.load %arg35[%c1_381, %c0_382, %c0_383] : memref<2x1x128xf32, #tpu.memory_space<vmem>>, vector<1x1x128xf32>
    %981 = vector.shape_cast %980 : vector<1x1x128xf32> to vector<1x128xf32>
    %982 = arith.truncf %973 : vector<8x128xf32> to vector<8x128xbf16>
    %cst_384 = arith.constant dense<0.000000e+00> : vector<8x128xf32>
    %983 = tpu.matmul %982, %975, %cst_384 {dimension_numbers = #tpu.dot_dimension_numbers<[1], [0], [0], [1], [0, 0, 1, 1], [], []>} : vector<8x128xbf16>, vector<128x128xbf16>, vector<8x128xf32> -> vector<8x128xf32>
    %984 = vector.broadcast %977 : vector<1x128xf32> to vector<8x128xf32>
    %985 = arith.addf %983, %984 : vector<8x128xf32>
    %cst_385 = arith.constant 0.000000e+00 : f32
    %986 = vector.broadcast %cst_385 : f32 to vector<8x128xf32>
    %987 = arith.maximumf %985, %986 : vector<8x128xf32>
    %988 = arith.truncf %987 : vector<8x128xf32> to vector<8x128xbf16>
    %cst_386 = arith.constant dense<0.000000e+00> : vector<8x128xf32>
    %989 = tpu.matmul %988, %979, %cst_386 {dimension_numbers = #tpu.dot_dimension_numbers<[1], [0], [0], [1], [0, 0, 1, 1], [], []>} : vector<8x128xbf16>, vector<128x128xbf16>, vector<8x128xf32> -> vector<8x128xf32>
    %990 = vector.broadcast %981 : vector<1x128xf32> to vector<8x128xf32>
    %991 = arith.addf %989, %990 : vector<8x128xf32>
    %992 = arith.addf %973, %991 : vector<8x128xf32>
    %c1_387 = arith.constant 1 : index
    %c0_388 = arith.constant 0 : index
    %c0_389 = arith.constant 0 : index
    %993 = vector.load %arg30[%c1_387, %c0_388, %c0_389] : memref<2x1x128xf32, #tpu.memory_space<vmem>>, vector<1x1x128xf32>
    %994 = vector.shape_cast %993 : vector<1x1x128xf32> to vector<1x128xf32>
    %c1_390 = arith.constant 1 : index
    %c0_391 = arith.constant 0 : index
    %c0_392 = arith.constant 0 : index
    %995 = vector.load %arg31[%c1_390, %c0_391, %c0_392] : memref<2x1x128xf32, #tpu.memory_space<vmem>>, vector<1x1x128xf32>
    %996 = vector.shape_cast %995 : vector<1x1x128xf32> to vector<1x128xf32>
    %cst_393 = arith.constant dense<0.000000e+00> : vector<8xf32>
    %997 = vector.multi_reduction <add>, %992, %cst_393 [1] : vector<8x128xf32> to vector<8xf32>
    %998 = vector.shape_cast %997 : vector<8xf32> to vector<8x1xf32>
    %cst_394 = arith.constant 1.280000e+02 : f32
    %999 = vector.broadcast %cst_394 : f32 to vector<8x1xf32>
    %1000 = arith.divf %998, %999 : vector<8x1xf32>
    %1001 = vector.broadcast %1000 : vector<8x1xf32> to vector<8x128xf32>
    %1002 = arith.subf %992, %1001 : vector<8x128xf32>
    %1003 = arith.mulf %1002, %1002 : vector<8x128xf32>
    %cst_395 = arith.constant dense<0.000000e+00> : vector<8xf32>
    %1004 = vector.multi_reduction <add>, %1003, %cst_395 [1] : vector<8x128xf32> to vector<8xf32>
    %1005 = vector.shape_cast %1004 : vector<8xf32> to vector<8x1xf32>
    %cst_396 = arith.constant 1.280000e+02 : f32
    %1006 = vector.broadcast %cst_396 : f32 to vector<8x1xf32>
    %1007 = arith.divf %1005, %1006 : vector<8x1xf32>
    %cst_397 = arith.constant 9.99999974E-6 : f32
    %1008 = vector.broadcast %cst_397 : f32 to vector<8x1xf32>
    %1009 = arith.addf %1007, %1008 : vector<8x1xf32>
    %1010 = math.rsqrt %1009 : vector<8x1xf32>
    %1011 = vector.broadcast %1010 : vector<8x1xf32> to vector<8x128xf32>
    %1012 = arith.mulf %1002, %1011 : vector<8x128xf32>
    %1013 = vector.broadcast %994 : vector<1x128xf32> to vector<8x128xf32>
    %1014 = arith.mulf %1012, %1013 : vector<8x128xf32>
    %1015 = vector.broadcast %996 : vector<1x128xf32> to vector<8x128xf32>
    %1016 = arith.addf %1014, %1015 : vector<8x128xf32>
    %1017 = vector.extract_strided_slice %1016 {offsets = [7, 0], sizes = [1, 128], strides = [1, 1]} : vector<8x128xf32> to vector<1x128xf32>
    %1018 = arith.truncf %1017 : vector<1x128xf32> to vector<1x128xbf16>
    %c0_398 = arith.constant 0 : index
    %c0_399 = arith.constant 0 : index
    %1019 = vector.load %arg36[%c0_398, %c0_399] : memref<128x1xbf16, #tpu.memory_space<vmem>>, vector<128x1xbf16>
    %cst_400 = arith.constant dense<0.000000e+00> : vector<1x1xf32>
    %1020 = tpu.matmul %1018, %1019, %cst_400 {dimension_numbers = #tpu.dot_dimension_numbers<[1], [0], [0], [1], [0, 0, 1, 1], [], []>} : vector<1x128xbf16>, vector<128x1xbf16>, vector<1x1xf32> -> vector<1x1xf32>
    %c0_401 = arith.constant 0 : index
    %c0_402 = arith.constant 0 : index
    %1021 = vector.load %arg37[%c0_401, %c0_402] : memref<1x1xf32, #tpu.memory_space<vmem>>, vector<1x1xf32>
    %1022 = arith.addf %1020, %1021 : vector<1x1xf32>
    %c0_403 = arith.constant 0 : index
    %c0_404 = arith.constant 0 : index
    %c0_405 = arith.constant 0 : index
    %1023 = vector.load %arg38[%c0_403, %c0_404, %c0_405] : memref<1x1x1xf32, #tpu.memory_space<vmem>>, vector<1x1x1xf32>
    %1024 = vector.shape_cast %1023 : vector<1x1x1xf32> to vector<1x1xf32>
    %1025 = vector.shape_cast %1022 : vector<1x1xf32> to vector<1x1x1xf32>
    tpu.vector_store %arg38[%c0_403, %c0_404, %c0_405], %1025 {strides = array<i32>} : memref<1x1x1xf32, #tpu.memory_space<vmem>>, vector<1x1x1xf32>,
    return
  }
  func.func @transform_0(%arg0: i32) -> (i32, i32, i32) {
    %c0_i32 = arith.constant 0 : i32
    %c0_i32_0 = arith.constant 0 : i32
    %c0_i32_1 = arith.constant 0 : i32
    return %arg0, %c0_i32, %c0_i32_0 : i32, i32, i32
  }
  func.func @transform_1(%arg0: i32) -> (i32, i32) {
    %c0_i32 = arith.constant 0 : i32
    %c0_i32_0 = arith.constant 0 : i32
    %c0_i32_1 = arith.constant 0 : i32
    return %c0_i32, %c0_i32_0 : i32, i32
  }
  func.func @transform_2(%arg0: i32) -> (i32, i32) {
    %c0_i32 = arith.constant 0 : i32
    %c0_i32_0 = arith.constant 0 : i32
    %c0_i32_1 = arith.constant 0 : i32
    return %c0_i32, %c0_i32_0 : i32, i32
  }
  func.func @transform_3(%arg0: i32) -> (i32, i32, i32) {
    %c0_i32 = arith.constant 0 : i32
    %c0_i32_0 = arith.constant 0 : i32
    %c0_i32_1 = arith.constant 0 : i32
    %c0_i32_2 = arith.constant 0 : i32
    return %c0_i32, %c0_i32_0, %c0_i32_1 : i32, i32, i32
  }
  func.func @transform_4(%arg0: i32) -> (i32, i32, i32) {
    %c0_i32 = arith.constant 0 : i32
    %c0_i32_0 = arith.constant 0 : i32
    %c0_i32_1 = arith.constant 0 : i32
    %c0_i32_2 = arith.constant 0 : i32
    return %c0_i32, %c0_i32_0, %c0_i32_1 : i32, i32, i32
  }
  func.func @transform_5(%arg0: i32) -> (i32, i32, i32) {
    %c0_i32 = arith.constant 0 : i32
    %c0_i32_0 = arith.constant 0 : i32
    %c0_i32_1 = arith.constant 0 : i32
    %c0_i32_2 = arith.constant 0 : i32
    return %c0_i32, %c0_i32_0, %c0_i32_1 : i32, i32, i32
  }
  func.func @transform_6(%arg0: i32) -> (i32, i32, i32) {
    %c0_i32 = arith.constant 0 : i32
    %c0_i32_0 = arith.constant 0 : i32
    %c0_i32_1 = arith.constant 0 : i32
    %c0_i32_2 = arith.constant 0 : i32
    return %c0_i32, %c0_i32_0, %c0_i32_1 : i32, i32, i32
  }
  func.func @transform_7(%arg0: i32) -> (i32, i32, i32) {
    %c0_i32 = arith.constant 0 : i32
    %c0_i32_0 = arith.constant 0 : i32
    %c0_i32_1 = arith.constant 0 : i32
    %c0_i32_2 = arith.constant 0 : i32
    return %c0_i32, %c0_i32_0, %c0_i32_1 : i32, i32, i32
  }
  func.func @transform_8(%arg0: i32) -> (i32, i32, i32) {
    %c0_i32 = arith.constant 0 : i32
    %c0_i32_0 = arith.constant 0 : i32
    %c0_i32_1 = arith.constant 0 : i32
    %c0_i32_2 = arith.constant 0 : i32
    return %c0_i32, %c0_i32_0, %c0_i32_1 : i32, i32, i32
  }
  func.func @transform_9(%arg0: i32) -> (i32, i32, i32) {
    %c0_i32 = arith.constant 0 : i32
    %c0_i32_0 = arith.constant 0 : i32
    %c0_i32_1 = arith.constant 0 : i32
    %c0_i32_2 = arith.constant 0 : i32
    return %c0_i32, %c0_i32_0, %c0_i32_1 : i32, i32, i32
  }
  func.func @transform_10(%arg0: i32) -> (i32, i32, i32) {
    %c0_i32 = arith.constant 0 : i32
    %c0_i32_0 = arith.constant 0 : i32
    %c0_i32_1 = arith.constant 0 : i32
    %c0_i32_2 = arith.constant 0 : i32
    return %c0_i32, %c0_i32_0, %c0_i32_1 : i32, i32, i32
  }
  func.func @transform_11(%arg0: i32) -> (i32, i32, i32) {
    %c0_i32 = arith.constant 0 : i32
    %c0_i32_0 = arith.constant 0 : i32
    %c0_i32_1 = arith.constant 0 : i32
    %c0_i32_2 = arith.constant 0 : i32
    return %c0_i32, %c0_i32_0, %c0_i32_1 : i32, i32, i32
  }
  func.func @transform_12(%arg0: i32) -> (i32, i32, i32) {
    %c0_i32 = arith.constant 0 : i32
    %c0_i32_0 = arith.constant 0 : i32
    %c0_i32_1 = arith.constant 0 : i32
    %c0_i32_2 = arith.constant 0 : i32
    return %c0_i32, %c0_i32_0, %c0_i32_1 : i32, i32, i32
  }
  func.func @transform_13(%arg0: i32) -> (i32, i32, i32) {
    %c0_i32 = arith.constant 0 : i32
    %c0_i32_0 = arith.constant 0 : i32
    %c0_i32_1 = arith.constant 0 : i32
    %c0_i32_2 = arith.constant 0 : i32
    return %c0_i32, %c0_i32_0, %c0_i32_1 : i32, i32, i32
  }
  func.func @transform_14(%arg0: i32) -> (i32, i32, i32) {
    %c0_i32 = arith.constant 0 : i32
    %c0_i32_0 = arith.constant 0 : i32
    %c0_i32_1 = arith.constant 0 : i32
    %c0_i32_2 = arith.constant 0 : i32
    return %c0_i32, %c0_i32_0, %c0_i32_1 : i32, i32, i32
  }
  func.func @transform_15(%arg0: i32) -> (i32, i32, i32) {
    %c0_i32 = arith.constant 0 : i32
    %c0_i32_0 = arith.constant 0 : i32
    %c0_i32_1 = arith.constant 0 : i32
    %c0_i32_2 = arith.constant 0 : i32
    return %c0_i32, %c0_i32_0, %c0_i32_1 : i32, i32, i32
  }
  func.func @transform_16(%arg0: i32) -> (i32, i32, i32) {
    %c0_i32 = arith.constant 0 : i32
    %c0_i32_0 = arith.constant 0 : i32
    %c0_i32_1 = arith.constant 0 : i32
    %c0_i32_2 = arith.constant 0 : i32
    return %c0_i32, %c0_i32_0, %c0_i32_1 : i32, i32, i32
  }
  func.func @transform_17(%arg0: i32) -> (i32, i32, i32) {
    %c0_i32 = arith.constant 0 : i32
    %c0_i32_0 = arith.constant 0 : i32
    %c0_i32_1 = arith.constant 0 : i32
    %c0_i32_2 = arith.constant 0 : i32
    return %c0_i32, %c0_i32_0, %c0_i32_1 : i32, i32, i32
  }
  func.func @transform_18(%arg0: i32) -> (i32, i32, i32) {
    %c0_i32 = arith.constant 0 : i32
    %c0_i32_0 = arith.constant 0 : i32
    %c0_i32_1 = arith.constant 0 : i32
    %c0_i32_2 = arith.constant 0 : i32
    return %c0_i32, %c0_i32_0, %c0_i32_1 : i32, i32, i32
  }
  func.func @transform_19(%arg0: i32) -> (i32, i32, i32) {
    %c0_i32 = arith.constant 0 : i32
    %c0_i32_0 = arith.constant 0 : i32
    %c0_i32_1 = arith.constant 0 : i32
    %c0_i32_2 = arith.constant 0 : i32
    return %c0_i32, %c0_i32_0, %c0_i32_1 : i32, i32, i32
  }
  func.func @transform_20(%arg0: i32) -> (i32, i32, i32) {
    %c0_i32 = arith.constant 0 : i32
    %c0_i32_0 = arith.constant 0 : i32
    %c0_i32_1 = arith.constant 0 : i32
    %c0_i32_2 = arith.constant 0 : i32
    return %c0_i32, %c0_i32_0, %c0_i32_1 : i32, i32, i32
  }
  func.func @transform_21(%arg0: i32) -> (i32, i32, i32) {
    %c0_i32 = arith.constant 0 : i32
    %c0_i32_0 = arith.constant 0 : i32
    %c0_i32_1 = arith.constant 0 : i32
    %c0_i32_2 = arith.constant 0 : i32
    return %c0_i32, %c0_i32_0, %c0_i32_1 : i32, i32, i32
  }
  func.func @transform_22(%arg0: i32) -> (i32, i32, i32) {
    %c0_i32 = arith.constant 0 : i32
    %c0_i32_0 = arith.constant 0 : i32
    %c0_i32_1 = arith.constant 0 : i32
    %c0_i32_2 = arith.constant 0 : i32
    return %c0_i32, %c0_i32_0, %c0_i32_1 : i32, i32, i32
  }
  func.func @transform_23(%arg0: i32) -> (i32, i32, i32) {
    %c0_i32 = arith.constant 0 : i32
    %c0_i32_0 = arith.constant 0 : i32
    %c0_i32_1 = arith.constant 0 : i32
    %c0_i32_2 = arith.constant 0 : i32
    return %c0_i32, %c0_i32_0, %c0_i32_1 : i32, i32, i32
  }
  func.func @transform_24(%arg0: i32) -> (i32, i32, i32) {
    %c0_i32 = arith.constant 0 : i32
    %c0_i32_0 = arith.constant 0 : i32
    %c0_i32_1 = arith.constant 0 : i32
    %c0_i32_2 = arith.constant 0 : i32
    return %c0_i32, %c0_i32_0, %c0_i32_1 : i32, i32, i32
  }
  func.func @transform_25(%arg0: i32) -> (i32, i32, i32) {
    %c0_i32 = arith.constant 0 : i32
    %c0_i32_0 = arith.constant 0 : i32
    %c0_i32_1 = arith.constant 0 : i32
    %c0_i32_2 = arith.constant 0 : i32
    return %c0_i32, %c0_i32_0, %c0_i32_1 : i32, i32, i32
  }
  func.func @transform_26(%arg0: i32) -> (i32, i32, i32) {
    %c0_i32 = arith.constant 0 : i32
    %c0_i32_0 = arith.constant 0 : i32
    %c0_i32_1 = arith.constant 0 : i32
    %c0_i32_2 = arith.constant 0 : i32
    return %c0_i32, %c0_i32_0, %c0_i32_1 : i32, i32, i32
  }
  func.func @transform_27(%arg0: i32) -> (i32, i32, i32) {
    %c0_i32 = arith.constant 0 : i32
    %c0_i32_0 = arith.constant 0 : i32
    %c0_i32_1 = arith.constant 0 : i32
    %c0_i32_2 = arith.constant 0 : i32
    return %c0_i32, %c0_i32_0, %c0_i32_1 : i32, i32, i32
  }
  func.func @transform_28(%arg0: i32) -> (i32, i32, i32) {
    %c0_i32 = arith.constant 0 : i32
    %c0_i32_0 = arith.constant 0 : i32
    %c0_i32_1 = arith.constant 0 : i32
    %c0_i32_2 = arith.constant 0 : i32
    return %c0_i32, %c0_i32_0, %c0_i32_1 : i32, i32, i32
  }
  func.func @transform_29(%arg0: i32) -> (i32, i32, i32) {
    %c0_i32 = arith.constant 0 : i32
    %c0_i32_0 = arith.constant 0 : i32
    %c0_i32_1 = arith.constant 0 : i32
    %c0_i32_2 = arith.constant 0 : i32
    return %c0_i32, %c0_i32_0, %c0_i32_1 : i32, i32, i32
  }
  func.func @transform_30(%arg0: i32) -> (i32, i32, i32) {
    %c0_i32 = arith.constant 0 : i32
    %c0_i32_0 = arith.constant 0 : i32
    %c0_i32_1 = arith.constant 0 : i32
    %c0_i32_2 = arith.constant 0 : i32
    return %c0_i32, %c0_i32_0, %c0_i32_1 : i32, i32, i32
  }
  func.func @transform_31(%arg0: i32) -> (i32, i32, i32) {
    %c0_i32 = arith.constant 0 : i32
    %c0_i32_0 = arith.constant 0 : i32
    %c0_i32_1 = arith.constant 0 : i32
    %c0_i32_2 = arith.constant 0 : i32
    return %c0_i32, %c0_i32_0, %c0_i32_1 : i32, i32, i32
  }
  func.func @transform_32(%arg0: i32) -> (i32, i32, i32) {
    %c0_i32 = arith.constant 0 : i32
    %c0_i32_0 = arith.constant 0 : i32
    %c0_i32_1 = arith.constant 0 : i32
    %c0_i32_2 = arith.constant 0 : i32
    return %c0_i32, %c0_i32_0, %c0_i32_1 : i32, i32, i32
  }
  func.func @transform_33(%arg0: i32) -> (i32, i32, i32) {
    %c0_i32 = arith.constant 0 : i32
    %c0_i32_0 = arith.constant 0 : i32
    %c0_i32_1 = arith.constant 0 : i32
    %c0_i32_2 = arith.constant 0 : i32
    return %c0_i32, %c0_i32_0, %c0_i32_1 : i32, i32, i32
  }
  func.func @transform_34(%arg0: i32) -> (i32, i32, i32) {
    %c0_i32 = arith.constant 0 : i32
    %c0_i32_0 = arith.constant 0 : i32
    %c0_i32_1 = arith.constant 0 : i32
    %c0_i32_2 = arith.constant 0 : i32
    return %c0_i32, %c0_i32_0, %c0_i32_1 : i32, i32, i32
  }
  func.func @transform_35(%arg0: i32) -> (i32, i32) {
    %c0_i32 = arith.constant 0 : i32
    %c0_i32_0 = arith.constant 0 : i32
    %c0_i32_1 = arith.constant 0 : i32
    return %c0_i32, %c0_i32_0 : i32, i32
  }
  func.func @transform_36(%arg0: i32) -> (i32, i32) {
    %c0_i32 = arith.constant 0 : i32
    %c0_i32_0 = arith.constant 0 : i32
    %c0_i32_1 = arith.constant 0 : i32
    return %c0_i32, %c0_i32_0 : i32, i32
  }
  func.func @transform_37(%arg0: i32) -> (i32, i32, i32) {
    %c0_i32 = arith.constant 0 : i32
    %c0_i32_0 = arith.constant 0 : i32
    %c0_i32_1 = arith.constant 0 : i32
    return %arg0, %c0_i32, %c0_i32_0 : i32, i32, i32
  }
}

</mosaic_0001>

<llo_original>
// kernel: transformer_model.1
$region0: #{transformer_model.1}
  #allocation0 [shape = 'u32[]', space=smem, size = 0x4, offset = 0x4, fixed_abs, tag = 'smem constant byte address 0x4 - core index']
  #allocation1 [shape = 'u32[144,128]{1,0:T(1,128)}', space=vmem, size = 0x12000, scoped, tag = 'internal scratch']
  #allocation2 [shape = 'f32[1,1]{1,0:T(1,128)S(1)}', space=vmem, size = 0x200, scoped, tag = 'scoped memory for transformer_model.1']
  %s0 = inlined_call_operand.smem [shape: u32[38], index: -1, kind: input, shape index: {}]
  %s1 = sld [smem:[%s0]]
  %s2 = scalar_lea.smem %s0, 1
  %s3 = sld [smem:[%s2]]
  %s4 = scalar_lea.smem %s0, 2
  %s5 = sld [smem:[%s4]]
  %s6 = scalar_lea.smem %s0, 3
  %s7 = sld [smem:[%s6]]
  %s8 = scalar_lea.smem %s0, 4
  %s9 = sld [smem:[%s8]]
  %s10 = scalar_lea.smem %s0, 5
  %s11 = sld [smem:[%s10]]
  %s12 = scalar_lea.smem %s0, 6
  %s13 = sld [smem:[%s12]]
  %s14 = scalar_lea.smem %s0, 7
  %s15 = sld [smem:[%s14]]
  %s16 = scalar_lea.smem %s0, 8
  %s17 = sld [smem:[%s16]]
  %s18 = scalar_lea.smem %s0, 9
  %s19 = sld [smem:[%s18]]
  %s20 = scalar_lea.smem %s0, 10
  %s21 = sld [smem:[%s20]]
  %s22 = scalar_lea.smem %s0, 11
  %s23 = sld [smem:[%s22]]
  %s24 = scalar_lea.smem %s0, 12
  %s25 = sld [smem:[%s24]]
  %s26 = scalar_lea.smem %s0, 13
  %s27 = sld [smem:[%s26]]
  %s28 = scalar_lea.smem %s0, 14
  %s29 = sld [smem:[%s28]]
  %s30 = scalar_lea.smem %s0, 15
  %s31 = sld [smem:[%s30]]
  %s32 = scalar_lea.smem %s0, 16
  %s33 = sld [smem:[%s32]]
  %s34 = scalar_lea.smem %s0, 17
  %s35 = sld [smem:[%s34]]
  %s36 = scalar_lea.smem %s0, 18
  %s37 = sld [smem:[%s36]]
  %s38 = scalar_lea.smem %s0, 19
  %s39 = sld [smem:[%s38]]
  %s40 = scalar_lea.smem %s0, 20
  %s41 = sld [smem:[%s40]]
  %s42 = scalar_lea.smem %s0, 21
  %s43 = sld [smem:[%s42]]
  %s44 = scalar_lea.smem %s0, 22
  %s45 = sld [smem:[%s44]]
  %s46 = scalar_lea.smem %s0, 23
  %s47 = sld [smem:[%s46]]
  %s48 = scalar_lea.smem %s0, 24
  %s49 = sld [smem:[%s48]]
  %s50 = scalar_lea.smem %s0, 25
  %s51 = sld [smem:[%s50]]
  %s52 = scalar_lea.smem %s0, 26
  %s53 = sld [smem:[%s52]]
  %s54 = scalar_lea.smem %s0, 27
  %s55 = sld [smem:[%s54]]
  %s56 = scalar_lea.smem %s0, 28
  %s57 = sld [smem:[%s56]]
  %s58 = scalar_lea.smem %s0, 29
  %s59 = sld [smem:[%s58]]
  %s60 = scalar_lea.smem %s0, 30
  %s61 = sld [smem:[%s60]]
  %s62 = scalar_lea.smem %s0, 31
  %s63 = sld [smem:[%s62]]
  %s64 = scalar_lea.smem %s0, 32
  %s65 = sld [smem:[%s64]]
  %s66 = scalar_lea.smem %s0, 33
  %s67 = sld [smem:[%s66]]
  %s68 = scalar_lea.smem %s0, 34
  %s69 = sld [smem:[%s68]]
  %s70 = scalar_lea.smem %s0, 35
  %s71 = sld [smem:[%s70]]
  %s72 = scalar_lea.smem %s0, 36
  %s73 = sld [smem:[%s72]]
  %s74 = scalar_lea.smem %s0, 37
  %s75 = sld [smem:[%s74]]
  %s76 = sld [smem:[#allocation0]]
  $region293: #{transformer_model.1} parent=0
    _
  %s78 = ssub.s32 1, %s76
  %s79 = scalar_select 0, %s78, %s76
  %v80 = vstv %s73
  %81 = vst [vmem:[#allocation2] sm:$0x1] %v80
  $region1: #{transformer_model.1} parent=0
    #allocation3 [shape = 'u8[512]{0}', space=vmem, size = 0x400, scoped, tag = 'input window, operand 1, single buffered']
    #allocation4 [shape = 's32[2]{0}', space=sflag, size = 0x8, scoped, tag = 'scoped memory for transformer_model.1']
    #allocation5 [shape = 'u8[512]{0}', space=vmem, size = 0x400, scoped, tag = 'input window, operand 2, single buffered']
    #allocation6 [shape = 's32[1]{0}', space=sflag, size = 0x4, scoped, tag = 'scoped memory for transformer_model.1']
    #allocation7 [shape = 'u8[196608]{0}', space=vmem, size = 0x30000, scoped, tag = 'input window, operand 3, single buffered']
    #allocation8 [shape = 'u8[1024]{0}', space=vmem, size = 0x400, scoped, tag = 'input window, operand 8, single buffered']
    #allocation9 [shape = 's32[1]{0}', space=sflag, size = 0x4, scoped, tag = 'scoped memory for transformer_model.1']
    #allocation10 [shape = 'u8[1024]{0}', space=vmem, size = 0x400, scoped, tag = 'input window, operand 9, single buffered']
    #allocation11 [shape = 'u8[1024]{0}', space=vmem, size = 0x400, scoped, tag = 'input window, operand 10, single buffered']
    #allocation12 [shape = 's32[1]{0}', space=sflag, size = 0x4, scoped, tag = 'scoped memory for transformer_model.1']
    #allocation13 [shape = 'u8[65536]{0}', space=vmem, size = 0x10000, scoped, tag = 'input window, operand 11, single buffered']
    #allocation14 [shape = 'u8[1024]{0}', space=vmem, size = 0x400, scoped, tag = 'input window, operand 12, single buffered']
    #allocation15 [shape = 's32[1]{0}', space=sflag, size = 0x4, scoped, tag = 'scoped memory for transformer_model.1']
    #allocation16 [shape = 'u8[65536]{0}', space=vmem, size = 0x10000, scoped, tag = 'input window, operand 13, single buffered']
    #allocation17 [shape = 'u8[1024]{0}', space=vmem, size = 0x400, scoped, tag = 'input window, operand 14, single buffered']
    #allocation18 [shape = 's32[1]{0}', space=sflag, size = 0x4, scoped, tag = 'scoped memory for transformer_model.1']
    #allocation19 [shape = 'u8[196608]{0}', space=vmem, size = 0x30000, scoped, tag = 'input window, operand 15, single buffered']
    #allocation20 [shape = 'u8[65536]{0}', space=vmem, size = 0x10000, scoped, tag = 'input window, operand 17, single buffered']
    #allocation21 [shape = 's32[1]{0}', space=sflag, size = 0x4, scoped, tag = 'scoped memory for transformer_model.1']
    #allocation22 [shape = 'u8[1024]{0}', space=vmem, size = 0x400, scoped, tag = 'input window, operand 18, single buffered']
    #allocation23 [shape = 'u8[65536]{0}', space=vmem, size = 0x10000, scoped, tag = 'input window, operand 19, single buffered']
    #allocation24 [shape = 's32[1]{0}', space=sflag, size = 0x4, scoped, tag = 'scoped memory for transformer_model.1']
    #allocation25 [shape = 'u8[1024]{0}', space=vmem, size = 0x400, scoped, tag = 'input window, operand 20, single buffered']
    #allocation26 [shape = 'u8[131072]{0}', space=vmem, size = 0x20000, scoped, tag = 'input window, operand 21, single buffered']
    #allocation27 [shape = 's32[1]{0}', space=sflag, size = 0x4, scoped, tag = 'scoped memory for transformer_model.1']
    #allocation28 [shape = 'u8[65536]{0}', space=vmem, size = 0x10000, scoped, tag = 'input window, operand 23, single buffered']
    #allocation29 [shape = 'u8[1024]{0}', space=vmem, size = 0x400, scoped, tag = 'input window, operand 24, single buffered']
    #allocation30 [shape = 's32[1]{0}', space=sflag, size = 0x4, scoped, tag = 'scoped memory for transformer_model.1']
    #allocation31 [shape = 'u8[1024]{0}', space=vmem, size = 0x400, scoped, tag = 'input window, operand 25, single buffered']
    #allocation32 [shape = 'u8[1024]{0}', space=vmem, size = 0x400, scoped, tag = 'input window, operand 26, single buffered']
    #allocation33 [shape = 's32[1]{0}', space=sflag, size = 0x4, scoped, tag = 'scoped memory for transformer_model.1']
    #allocation34 [shape = 'u8[1024]{0}', space=vmem, size = 0x400, scoped, tag = 'input window, operand 27, single buffered']
    #allocation35 [shape = 'u8[1024]{0}', space=vmem, size = 0x400, scoped, tag = 'input window, operand 28, single buffered']
    #allocation36 [shape = 's32[1]{0}', space=sflag, size = 0x4, scoped, tag = 'scoped memory for transformer_model.1']
    #allocation37 [shape = 'u8[1024]{0}', space=vmem, size = 0x400, scoped, tag = 'input window, operand 29, single buffered']
    #allocation38 [shape = 'u8[1024]{0}', space=vmem, size = 0x400, scoped, tag = 'input window, operand 30, single buffered']
    #allocation39 [shape = 's32[1]{0}', space=sflag, size = 0x4, scoped, tag = 'scoped memory for transformer_model.1']
    #allocation40 [shape = 'u8[65536]{0}', space=vmem, size = 0x10000, scoped, tag = 'input window, operand 31, single buffered']
    #allocation41 [shape = 'u8[1024]{0}', space=vmem, size = 0x400, scoped, tag = 'input window, operand 32, single buffered']
    #allocation42 [shape = 's32[1]{0}', space=sflag, size = 0x4, scoped, tag = 'scoped memory for transformer_model.1']
    #allocation43 [shape = 'u8[65536]{0}', space=vmem, size = 0x10000, scoped, tag = 'input window, operand 33, single buffered']
    #allocation44 [shape = 'u8[1024]{0}', space=vmem, size = 0x400, scoped, tag = 'input window, operand 34, single buffered']
    #allocation45 [shape = 's32[1]{0}', space=sflag, size = 0x4, scoped, tag = 'scoped memory for transformer_model.1']
    %82 = vsyncpa [#allocation4], 0
    %83 = vsyncpa [#allocation6], 0
    %84 = vsyncpa [#allocation9], 0
    %85 = vsyncpa [#allocation12], 0
    %86 = vsyncpa [#allocation15], 0
    %87 = vsyncpa [#allocation18], 0
    %88 = vsyncpa [#allocation21], 0
    %89 = vsyncpa [#allocation24], 0
    %90 = vsyncpa [#allocation27], 0
    %91 = vsyncpa [#allocation30], 0
    %92 = vsyncpa [#allocation33], 0
    %93 = vsyncpa [#allocation36], 0
    %94 = vsyncpa [#allocation39], 0
    %95 = vsyncpa [#allocation42], 0
    %96 = vsyncpa [#allocation45], 0
    loop: start=0, step=1, limit=4
    $region2: #{transformer_model.1} parent=1 // loop_pre_header
      _
    $region3: #{transformer_model.1} parent=1 // loop_header
      %s98 = sphi 0, %s102
      %p99 = scmp.ge.s32.totalorder %s98, 4
      %s108 = sphi 0, %s110
      %s111 = sphi 0, %s108
      %s112 = sphi 0, %s111
      %s128 = sphi 0, %s112
      %s132 = sphi 0, %s132
      %s134 = sphi 0, %s132
      %s135 = sphi 0, %s134
      %s149 = sphi 0, %s135
      %s153 = sphi 0, %s153
      %s155 = sphi 0, %s153
      %s156 = sphi 0, %s155
      %s170 = sphi 0, %s156
      %s174 = sphi 0, %s174
      %s176 = sphi 0, %s174
      %s177 = sphi 0, %s176
      %s191 = sphi 0, %s177
      %s195 = sphi 0, %s195
      %s197 = sphi 0, %s195
      %s198 = sphi 0, %s197
      %s212 = sphi 0, %s198
      %s216 = sphi 0, %s216
      %s218 = sphi 0, %s216
      %s219 = sphi 0, %s218
      %s233 = sphi 0, %s219
      %s237 = sphi 0, %s237
      %s239 = sphi 0, %s237
      %s240 = sphi 0, %s239
      %s254 = sphi 0, %s240
      %s258 = sphi 0, %s258
      %s260 = sphi 0, %s258
      %s261 = sphi 0, %s260
      %s275 = sphi 0, %s261
      %s279 = sphi 0, %s279
      %s281 = sphi 0, %s279
      %s282 = sphi 0, %s281
      %s296 = sphi 0, %s282
      %s300 = sphi 0, %s300
      %s302 = sphi 0, %s300
      %s303 = sphi 0, %s302
      %s317 = sphi 0, %s303
      %s321 = sphi 0, %s321
      %s323 = sphi 0, %s321
      %s324 = sphi 0, %s323
      %s338 = sphi 0, %s324
      %s342 = sphi 0, %s342
      %s344 = sphi 0, %s342
      %s345 = sphi 0, %s344
      %s359 = sphi 0, %s345
      %s363 = sphi 0, %s363
      %s365 = sphi 0, %s363
      %s366 = sphi 0, %s365
      %s380 = sphi 0, %s366
      %s384 = sphi 0, %s384
      %s386 = sphi 0, %s384
      %s387 = sphi 0, %s386
      %s401 = sphi 0, %s387
      %s405 = sphi 0, %s405
      %s407 = sphi 0, %s405
      %s408 = sphi 0, %s407
      %s422 = sphi 0, %s408
      %s426 = sphi 0, %s426
      %s428 = sphi 0, %s426
      %s429 = sphi 0, %s428
      %s443 = sphi 0, %s429
      %s447 = sphi 0, %s447
      %s449 = sphi 0, %s447
      %s450 = sphi 0, %s449
      %s464 = sphi 0, %s450
      %s468 = sphi 0, %s468
      %s470 = sphi 0, %s468
      %s471 = sphi 0, %s470
      %s485 = sphi 0, %s471
      %s489 = sphi 0, %s489
      %s491 = sphi 0, %s489
      %s492 = sphi 0, %s491
      %s506 = sphi 0, %s492
      %s510 = sphi 0, %s510
      %s512 = sphi 0, %s510
      %s513 = sphi 0, %s512
      %s527 = sphi 0, %s513
      %s531 = sphi 0, %s531
      %s533 = sphi 0, %s531
      %s534 = sphi 0, %s533
      %s548 = sphi 0, %s534
      %s552 = sphi 0, %s552
      %s554 = sphi 0, %s552
      %s555 = sphi 0, %s554
      %s569 = sphi 0, %s555
      %s573 = sphi 0, %s573
      %s575 = sphi 0, %s573
      %s576 = sphi 0, %s575
      %s590 = sphi 0, %s576
      %s594 = sphi 0, %s594
      %s596 = sphi 0, %s594
      %s597 = sphi 0, %s596
      %s611 = sphi 0, %s597
      %s615 = sphi 0, %s615
      %s617 = sphi 0, %s615
      %s618 = sphi 0, %s617
      %s632 = sphi 0, %s618
      %s636 = sphi 0, %s636
      %s638 = sphi 0, %s636
      %s639 = sphi 0, %s638
      %s653 = sphi 0, %s639
      %s657 = sphi 0, %s657
      %s659 = sphi 0, %s657
      %s660 = sphi 0, %s659
      %s674 = sphi 0, %s660
      %s678 = sphi 0, %s678
      %s680 = sphi 0, %s678
      %s681 = sphi 0, %s680
      %s695 = sphi 0, %s681
      %s699 = sphi 0, %s699
      %s701 = sphi 0, %s699
      %s702 = sphi 0, %s701
      %s716 = sphi 0, %s702
      %s720 = sphi 0, %s720
      %s722 = sphi 0, %s720
      %s723 = sphi 0, %s722
      %s737 = sphi 0, %s723
      %s741 = sphi 0, %s741
      %s743 = sphi 0, %s741
      %s744 = sphi 0, %s743
      %s758 = sphi 0, %s744
      %s762 = sphi 0, %s762
      %s764 = sphi 0, %s762
      %s765 = sphi 0, %s764
      %s779 = sphi 0, %s765
      %s783 = sphi 0, %s783
      %s785 = sphi 0, %s783
      %s786 = sphi 0, %s785
      %s800 = sphi 0, %s786
      %s804 = sphi 0, %s804
      %s806 = sphi 0, %s804
      %s807 = sphi 0, %s806
      %s821 = sphi 0, %s807
      %s825 = sphi 0, %s825
      %s827 = sphi 0, %s825
      %s828 = sphi 0, %s827
      %s842 = sphi 0, %s828
      %s846 = sphi 0, %s846
      %s848 = sphi 0, %s846
      %s849 = sphi 0, %s848
      %s863 = sphi 0, %s849
      %s867 = sphi 0, %s867
      %s869 = sphi 0, %s867
      %s870 = sphi 0, %s869
      %s884 = sphi 0, %s870
      %s890 = sphi 0, %s892
      %s893 = sphi 0, %s890
      %s894 = sphi 0, %s893
      %s910 = sphi 0, %s894
    $region4: #{transformer_model.1} parent=1 // loop_header_branch
      %101 = sbr.rel (%p99) target = $region8
    $region5: #{transformer_model.1} parent=1 // loop_body
      %s103 = ssub.s32 %s98, 1
      %s104 = ssub.s32 %s98, 2
      %s105 = sadd.s32 %s98, 1
      %s106 = ssub.s32 %s98, %s105
      %p107 = scmp.eq.s32.totalorder %s106, 0
      %s109 = sadd.s32 %s108, 1
      %s110 = scalar_select %p107, %s108, %s109
      %p113 = pneg %p107
      %p114 = scmp.eq.s32.totalorder %s98, 1
      %p115 = por %p113, %p114
      %p116 = scmp.ne.s32.totalorder %s108, %s111
      %p117 = scmp.eq.s32.totalorder %s98, 0
      %p118 = por %p116, %p117
      %p119 = scmp.ne.s32.totalorder %s108, %s111
      %p120 = scmp.eq.s32.totalorder %s103, 1
      %p121 = por %p119, %p120
      %p122 = scmp.ne.s32.totalorder %s111, %s112
      %p123 = scmp.eq.s32.totalorder %s103, 0
      %p124 = por %p122, %p123
      %p125 = scmp.ne.s32.totalorder %s111, %s112
      %p126 = scmp.eq.s32.totalorder %s104, 1
      %p127 = por %p125, %p126
      %p129 = scmp.ne.s32.totalorder %s112, %s128
      %p130 = scmp.eq.s32.totalorder %s104, 0
      %p131 = por %p129, %p130
      %s133 = sadd.s32 %s132, 1
      %p136 = scmp.eq.s32.totalorder %s98, 1
      %p137 = scmp.ne.s32.totalorder %s132, %s134
      %p138 = scmp.eq.s32.totalorder %s98, 0
      %p139 = por %p137, %p138
      %p140 = scmp.ne.s32.totalorder %s132, %s134
      %p141 = scmp.eq.s32.totalorder %s103, 1
      %p142 = por %p140, %p141
      %p143 = scmp.ne.s32.totalorder %s134, %s135
      %p144 = scmp.eq.s32.totalorder %s103, 0
      %p145 = por %p143, %p144
      %p146 = scmp.ne.s32.totalorder %s134, %s135
      %p147 = scmp.eq.s32.totalorder %s104, 1
      %p148 = por %p146, %p147
      %p150 = scmp.ne.s32.totalorder %s135, %s149
      %p151 = scmp.eq.s32.totalorder %s104, 0
      %p152 = por %p150, %p151
      %s154 = sadd.s32 %s153, 1
      %p157 = scmp.eq.s32.totalorder %s98, 1
      %p158 = scmp.ne.s32.totalorder %s153, %s155
      %p159 = scmp.eq.s32.totalorder %s98, 0
      %p160 = por %p158, %p159
      %p161 = scmp.ne.s32.totalorder %s153, %s155
      %p162 = scmp.eq.s32.totalorder %s103, 1
      %p163 = por %p161, %p162
      %p164 = scmp.ne.s32.totalorder %s155, %s156
      %p165 = scmp.eq.s32.totalorder %s103, 0
      %p166 = por %p164, %p165
      %p167 = scmp.ne.s32.totalorder %s155, %s156
      %p168 = scmp.eq.s32.totalorder %s104, 1
      %p169 = por %p167, %p168
      %p171 = scmp.ne.s32.totalorder %s156, %s170
      %p172 = scmp.eq.s32.totalorder %s104, 0
      %p173 = por %p171, %p172
      %s175 = sadd.s32 %s174, 1
      %p178 = scmp.eq.s32.totalorder %s98, 1
      %p179 = scmp.ne.s32.totalorder %s174, %s176
      %p180 = scmp.eq.s32.totalorder %s98, 0
      %p181 = por %p179, %p180
      %p182 = scmp.ne.s32.totalorder %s174, %s176
      %p183 = scmp.eq.s32.totalorder %s103, 1
      %p184 = por %p182, %p183
      %p185 = scmp.ne.s32.totalorder %s176, %s177
      %p186 = scmp.eq.s32.totalorder %s103, 0
      %p187 = por %p185, %p186
      %p188 = scmp.ne.s32.totalorder %s176, %s177
      %p189 = scmp.eq.s32.totalorder %s104, 1
      %p190 = por %p188, %p189
      %p192 = scmp.ne.s32.totalorder %s177, %s191
      %p193 = scmp.eq.s32.totalorder %s104, 0
      %p194 = por %p192, %p193
      %s196 = sadd.s32 %s195, 1
      %p199 = scmp.eq.s32.totalorder %s98, 1
      %p200 = scmp.ne.s32.totalorder %s195, %s197
      %p201 = scmp.eq.s32.totalorder %s98, 0
      %p202 = por %p200, %p201
      %p203 = scmp.ne.s32.totalorder %s195, %s197
      %p204 = scmp.eq.s32.totalorder %s103, 1
      %p205 = por %p203, %p204
      %p206 = scmp.ne.s32.totalorder %s197, %s198
      %p207 = scmp.eq.s32.totalorder %s103, 0
      %p208 = por %p206, %p207
      %p209 = scmp.ne.s32.totalorder %s197, %s198
      %p210 = scmp.eq.s32.totalorder %s104, 1
      %p211 = por %p209, %p210
      %p213 = scmp.ne.s32.totalorder %s198, %s212
      %p214 = scmp.eq.s32.totalorder %s104, 0
      %p215 = por %p213, %p214
      %s217 = sadd.s32 %s216, 1
      %p220 = scmp.eq.s32.totalorder %s98, 1
      %p221 = scmp.ne.s32.totalorder %s216, %s218
      %p222 = scmp.eq.s32.totalorder %s98, 0
      %p223 = por %p221, %p222
      %p224 = scmp.ne.s32.totalorder %s216, %s218
      %p225 = scmp.eq.s32.totalorder %s103, 1
      %p226 = por %p224, %p225
      %p227 = scmp.ne.s32.totalorder %s218, %s219
      %p228 = scmp.eq.s32.totalorder %s103, 0
      %p229 = por %p227, %p228
      %p230 = scmp.ne.s32.totalorder %s218, %s219
      %p231 = scmp.eq.s32.totalorder %s104, 1
      %p232 = por %p230, %p231
      %p234 = scmp.ne.s32.totalorder %s219, %s233
      %p235 = scmp.eq.s32.totalorder %s104, 0
      %p236 = por %p234, %p235
      %s238 = sadd.s32 %s237, 1
      %p241 = scmp.eq.s32.totalorder %s98, 1
      %p242 = scmp.ne.s32.totalorder %s237, %s239
      %p243 = scmp.eq.s32.totalorder %s98, 0
      %p244 = por %p242, %p243
      %p245 = scmp.ne.s32.totalorder %s237, %s239
      %p246 = scmp.eq.s32.totalorder %s103, 1
      %p247 = por %p245, %p246
      %p248 = scmp.ne.s32.totalorder %s239, %s240
      %p249 = scmp.eq.s32.totalorder %s103, 0
      %p250 = por %p248, %p249
      %p251 = scmp.ne.s32.totalorder %s239, %s240
      %p252 = scmp.eq.s32.totalorder %s104, 1
      %p253 = por %p251, %p252
      %p255 = scmp.ne.s32.totalorder %s240, %s254
      %p256 = scmp.eq.s32.totalorder %s104, 0
      %p257 = por %p255, %p256
      %s259 = sadd.s32 %s258, 1
      %p262 = scmp.eq.s32.totalorder %s98, 1
      %p263 = scmp.ne.s32.totalorder %s258, %s260
      %p264 = scmp.eq.s32.totalorder %s98, 0
      %p265 = por %p263, %p264
      %p266 = scmp.ne.s32.totalorder %s258, %s260
      %p267 = scmp.eq.s32.totalorder %s103, 1
      %p268 = por %p266, %p267
      %p269 = scmp.ne.s32.totalorder %s260, %s261
      %p270 = scmp.eq.s32.totalorder %s103, 0
      %p271 = por %p269, %p270
      %p272 = scmp.ne.s32.totalorder %s260, %s261
      %p273 = scmp.eq.s32.totalorder %s104, 1
      %p274 = por %p272, %p273
      %p276 = scmp.ne.s32.totalorder %s261, %s275
      %p277 = scmp.eq.s32.totalorder %s104, 0
      %p278 = por %p276, %p277
      %s280 = sadd.s32 %s279, 1
      %p283 = scmp.eq.s32.totalorder %s98, 1
      %p284 = scmp.ne.s32.totalorder %s279, %s281
      %p285 = scmp.eq.s32.totalorder %s98, 0
      %p286 = por %p284, %p285
      %p287 = scmp.ne.s32.totalorder %s279, %s281
      %p288 = scmp.eq.s32.totalorder %s103, 1
      %p289 = por %p287, %p288
      %p290 = scmp.ne.s32.totalorder %s281, %s282
      %p291 = scmp.eq.s32.totalorder %s103, 0
      %p292 = por %p290, %p291
      %p293 = scmp.ne.s32.totalorder %s281, %s282
      %p294 = scmp.eq.s32.totalorder %s104, 1
      %p295 = por %p293, %p294
      %p297 = scmp.ne.s32.totalorder %s282, %s296
      %p298 = scmp.eq.s32.totalorder %s104, 0
      %p299 = por %p297, %p298
      %s301 = sadd.s32 %s300, 1
      %p304 = scmp.eq.s32.totalorder %s98, 1
      %p305 = scmp.ne.s32.totalorder %s300, %s302
      %p306 = scmp.eq.s32.totalorder %s98, 0
      %p307 = por %p305, %p306
      %p308 = scmp.ne.s32.totalorder %s300, %s302
      %p309 = scmp.eq.s32.totalorder %s103, 1
      %p310 = por %p308, %p309
      %p311 = scmp.ne.s32.totalorder %s302, %s303
      %p312 = scmp.eq.s32.totalorder %s103, 0
      %p313 = por %p311, %p312
      %p314 = scmp.ne.s32.totalorder %s302, %s303
      %p315 = scmp.eq.s32.totalorder %s104, 1
      %p316 = por %p314, %p315
      %p318 = scmp.ne.s32.totalorder %s303, %s317
      %p319 = scmp.eq.s32.totalorder %s104, 0
      %p320 = por %p318, %p319
      %s322 = sadd.s32 %s321, 1
      %p325 = scmp.eq.s32.totalorder %s98, 1
      %p326 = scmp.ne.s32.totalorder %s321, %s323
      %p327 = scmp.eq.s32.totalorder %s98, 0
      %p328 = por %p326, %p327
      %p329 = scmp.ne.s32.totalorder %s321, %s323
      %p330 = scmp.eq.s32.totalorder %s103, 1
      %p331 = por %p329, %p330
      %p332 = scmp.ne.s32.totalorder %s323, %s324
      %p333 = scmp.eq.s32.totalorder %s103, 0
      %p334 = por %p332, %p333
      %p335 = scmp.ne.s32.totalorder %s323, %s324
      %p336 = scmp.eq.s32.totalorder %s104, 1
      %p337 = por %p335, %p336
      %p339 = scmp.ne.s32.totalorder %s324, %s338
      %p340 = scmp.eq.s32.totalorder %s104, 0
      %p341 = por %p339, %p340
      %s343 = sadd.s32 %s342, 1
      %p346 = scmp.eq.s32.totalorder %s98, 1
      %p347 = scmp.ne.s32.totalorder %s342, %s344
      %p348 = scmp.eq.s32.totalorder %s98, 0
      %p349 = por %p347, %p348
      %p350 = scmp.ne.s32.totalorder %s342, %s344
      %p351 = scmp.eq.s32.totalorder %s103, 1
      %p352 = por %p350, %p351
      %p353 = scmp.ne.s32.totalorder %s344, %s345
      %p354 = scmp.eq.s32.totalorder %s103, 0
      %p355 = por %p353, %p354
      %p356 = scmp.ne.s32.totalorder %s344, %s345
      %p357 = scmp.eq.s32.totalorder %s104, 1
      %p358 = por %p356, %p357
      %p360 = scmp.ne.s32.totalorder %s345, %s359
      %p361 = scmp.eq.s32.totalorder %s104, 0
      %p362 = por %p360, %p361
      %s364 = sadd.s32 %s363, 1
      %p367 = scmp.eq.s32.totalorder %s98, 1
      %p368 = scmp.ne.s32.totalorder %s363, %s365
      %p369 = scmp.eq.s32.totalorder %s98, 0
      %p370 = por %p368, %p369
      %p371 = scmp.ne.s32.totalorder %s363, %s365
      %p372 = scmp.eq.s32.totalorder %s103, 1
      %p373 = por %p371, %p372
      %p374 = scmp.ne.s32.totalorder %s365, %s366
      %p375 = scmp.eq.s32.totalorder %s103, 0
      %p376 = por %p374, %p375
      %p377 = scmp.ne.s32.totalorder %s365, %s366
      %p378 = scmp.eq.s32.totalorder %s104, 1
      %p379 = por %p377, %p378
      %p381 = scmp.ne.s32.totalorder %s366, %s380
      %p382 = scmp.eq.s32.totalorder %s104, 0
      %p383 = por %p381, %p382
      %s385 = sadd.s32 %s384, 1
      %p388 = scmp.eq.s32.totalorder %s98, 1
      %p389 = scmp.ne.s32.totalorder %s384, %s386
      %p390 = scmp.eq.s32.totalorder %s98, 0
      %p391 = por %p389, %p390
      %p392 = scmp.ne.s32.totalorder %s384, %s386
      %p393 = scmp.eq.s32.totalorder %s103, 1
      %p394 = por %p392, %p393
      %p395 = scmp.ne.s32.totalorder %s386, %s387
      %p396 = scmp.eq.s32.totalorder %s103, 0
      %p397 = por %p395, %p396
      %p398 = scmp.ne.s32.totalorder %s386, %s387
      %p399 = scmp.eq.s32.totalorder %s104, 1
      %p400 = por %p398, %p399
      %p402 = scmp.ne.s32.totalorder %s387, %s401
      %p403 = scmp.eq.s32.totalorder %s104, 0
      %p404 = por %p402, %p403
      %s406 = sadd.s32 %s405, 1
      %p409 = scmp.eq.s32.totalorder %s98, 1
      %p410 = scmp.ne.s32.totalorder %s405, %s407
      %p411 = scmp.eq.s32.totalorder %s98, 0
      %p412 = por %p410, %p411
      %p413 = scmp.ne.s32.totalorder %s405, %s407
      %p414 = scmp.eq.s32.totalorder %s103, 1
      %p415 = por %p413, %p414
      %p416 = scmp.ne.s32.totalorder %s407, %s408
      %p417 = scmp.eq.s32.totalorder %s103, 0
      %p418 = por %p416, %p417
      %p419 = scmp.ne.s32.totalorder %s407, %s408
      %p420 = scmp.eq.s32.totalorder %s104, 1
      %p421 = por %p419, %p420
      %p423 = scmp.ne.s32.totalorder %s408, %s422
      %p424 = scmp.eq.s32.totalorder %s104, 0
      %p425 = por %p423, %p424
      %s427 = sadd.s32 %s426, 1
      %p430 = scmp.eq.s32.totalorder %s98, 1
      %p431 = scmp.ne.s32.totalorder %s426, %s428
      %p432 = scmp.eq.s32.totalorder %s98, 0
      %p433 = por %p431, %p432
      %p434 = scmp.ne.s32.totalorder %s426, %s428
      %p435 = scmp.eq.s32.totalorder %s103, 1
      %p436 = por %p434, %p435
      %p437 = scmp.ne.s32.totalorder %s428, %s429
      %p438 = scmp.eq.s32.totalorder %s103, 0
      %p439 = por %p437, %p438
      %p440 = scmp.ne.s32.totalorder %s428, %s429
      %p441 = scmp.eq.s32.totalorder %s104, 1
      %p442 = por %p440, %p441
      %p444 = scmp.ne.s32.totalorder %s429, %s443
      %p445 = scmp.eq.s32.totalorder %s104, 0
      %p446 = por %p444, %p445
      %s448 = sadd.s32 %s447, 1
      %p451 = scmp.eq.s32.totalorder %s98, 1
      %p452 = scmp.ne.s32.totalorder %s447, %s449
      %p453 = scmp.eq.s32.totalorder %s98, 0
      %p454 = por %p452, %p453
      %p455 = scmp.ne.s32.totalorder %s447, %s449
      %p456 = scmp.eq.s32.totalorder %s103, 1
      %p457 = por %p455, %p456
      %p458 = scmp.ne.s32.totalorder %s449, %s450
      %p459 = scmp.eq.s32.totalorder %s103, 0
      %p460 = por %p458, %p459
      %p461 = scmp.ne.s32.totalorder %s449, %s450
      %p462 = scmp.eq.s32.totalorder %s104, 1
      %p463 = por %p461, %p462
      %p465 = scmp.ne.s32.totalorder %s450, %s464
      %p466 = scmp.eq.s32.totalorder %s104, 0
      %p467 = por %p465, %p466
      %s469 = sadd.s32 %s468, 1
      %p472 = scmp.eq.s32.totalorder %s98, 1
      %p473 = scmp.ne.s32.totalorder %s468, %s470
      %p474 = scmp.eq.s32.totalorder %s98, 0
      %p475 = por %p473, %p474
      %p476 = scmp.ne.s32.totalorder %s468, %s470
      %p477 = scmp.eq.s32.totalorder %s103, 1
      %p478 = por %p476, %p477
      %p479 = scmp.ne.s32.totalorder %s470, %s471
      %p480 = scmp.eq.s32.totalorder %s103, 0
      %p481 = por %p479, %p480
      %p482 = scmp.ne.s32.totalorder %s470, %s471
      %p483 = scmp.eq.s32.totalorder %s104, 1
      %p484 = por %p482, %p483
      %p486 = scmp.ne.s32.totalorder %s471, %s485
      %p487 = scmp.eq.s32.totalorder %s104, 0
      %p488 = por %p486, %p487
      %s490 = sadd.s32 %s489, 1
      %p493 = scmp.eq.s32.totalorder %s98, 1
      %p494 = scmp.ne.s32.totalorder %s489, %s491
      %p495 = scmp.eq.s32.totalorder %s98, 0
      %p496 = por %p494, %p495
      %p497 = scmp.ne.s32.totalorder %s489, %s491
      %p498 = scmp.eq.s32.totalorder %s103, 1
      %p499 = por %p497, %p498
      %p500 = scmp.ne.s32.totalorder %s491, %s492
      %p501 = scmp.eq.s32.totalorder %s103, 0
      %p502 = por %p500, %p501
      %p503 = scmp.ne.s32.totalorder %s491, %s492
      %p504 = scmp.eq.s32.totalorder %s104, 1
      %p505 = por %p503, %p504
      %p507 = scmp.ne.s32.totalorder %s492, %s506
      %p508 = scmp.eq.s32.totalorder %s104, 0
      %p509 = por %p507, %p508
      %s511 = sadd.s32 %s510, 1
      %p514 = scmp.eq.s32.totalorder %s98, 1
      %p515 = scmp.ne.s32.totalorder %s510, %s512
      %p516 = scmp.eq.s32.totalorder %s98, 0
      %p517 = por %p515, %p516
      %p518 = scmp.ne.s32.totalorder %s510, %s512
      %p519 = scmp.eq.s32.totalorder %s103, 1
      %p520 = por %p518, %p519
      %p521 = scmp.ne.s32.totalorder %s512, %s513
      %p522 = scmp.eq.s32.totalorder %s103, 0
      %p523 = por %p521, %p522
      %p524 = scmp.ne.s32.totalorder %s512, %s513
      %p525 = scmp.eq.s32.totalorder %s104, 1
      %p526 = por %p524, %p525
      %p528 = scmp.ne.s32.totalorder %s513, %s527
      %p529 = scmp.eq.s32.totalorder %s104, 0
      %p530 = por %p528, %p529
      %s532 = sadd.s32 %s531, 1
      %p535 = scmp.eq.s32.totalorder %s98, 1
      %p536 = scmp.ne.s32.totalorder %s531, %s533
      %p537 = scmp.eq.s32.totalorder %s98, 0
      %p538 = por %p536, %p537
      %p539 = scmp.ne.s32.totalorder %s531, %s533
      %p540 = scmp.eq.s32.totalorder %s103, 1
      %p541 = por %p539, %p540
      %p542 = scmp.ne.s32.totalorder %s533, %s534
      %p543 = scmp.eq.s32.totalorder %s103, 0
      %p544 = por %p542, %p543
      %p545 = scmp.ne.s32.totalorder %s533, %s534
      %p546 = scmp.eq.s32.totalorder %s104, 1
      %p547 = por %p545, %p546
      %p549 = scmp.ne.s32.totalorder %s534, %s548
      %p550 = scmp.eq.s32.totalorder %s104, 0
      %p551 = por %p549, %p550
      %s553 = sadd.s32 %s552, 1
      %p556 = scmp.eq.s32.totalorder %s98, 1
      %p557 = scmp.ne.s32.totalorder %s552, %s554
      %p558 = scmp.eq.s32.totalorder %s98, 0
      %p559 = por %p557, %p558
      %p560 = scmp.ne.s32.totalorder %s552, %s554
      %p561 = scmp.eq.s32.totalorder %s103, 1
      %p562 = por %p560, %p561
      %p563 = scmp.ne.s32.totalorder %s554, %s555
      %p564 = scmp.eq.s32.totalorder %s103, 0
      %p565 = por %p563, %p564
      %p566 = scmp.ne.s32.totalorder %s554, %s555
      %p567 = scmp.eq.s32.totalorder %s104, 1
      %p568 = por %p566, %p567
      %p570 = scmp.ne.s32.totalorder %s555, %s569
      %p571 = scmp.eq.s32.totalorder %s104, 0
      %p572 = por %p570, %p571
      %s574 = sadd.s32 %s573, 1
      %p577 = scmp.eq.s32.totalorder %s98, 1
      %p578 = scmp.ne.s32.totalorder %s573, %s575
      %p579 = scmp.eq.s32.totalorder %s98, 0
      %p580 = por %p578, %p579
      %p581 = scmp.ne.s32.totalorder %s573, %s575
      %p582 = scmp.eq.s32.totalorder %s103, 1
      %p583 = por %p581, %p582
      %p584 = scmp.ne.s32.totalorder %s575, %s576
      %p585 = scmp.eq.s32.totalorder %s103, 0
      %p586 = por %p584, %p585
      %p587 = scmp.ne.s32.totalorder %s575, %s576
      %p588 = scmp.eq.s32.totalorder %s104, 1
      %p589 = por %p587, %p588
      %p591 = scmp.ne.s32.totalorder %s576, %s590
      %p592 = scmp.eq.s32.totalorder %s104, 0
      %p593 = por %p591, %p592
      %s595 = sadd.s32 %s594, 1
      %p598 = scmp.eq.s32.totalorder %s98, 1
      %p599 = scmp.ne.s32.totalorder %s594, %s596
      %p600 = scmp.eq.s32.totalorder %s98, 0
      %p601 = por %p599, %p600
      %p602 = scmp.ne.s32.totalorder %s594, %s596
      %p603 = scmp.eq.s32.totalorder %s103, 1
      %p604 = por %p602, %p603
      %p605 = scmp.ne.s32.totalorder %s596, %s597
      %p606 = scmp.eq.s32.totalorder %s103, 0
      %p607 = por %p605, %p606
      %p608 = scmp.ne.s32.totalorder %s596, %s597
      %p609 = scmp.eq.s32.totalorder %s104, 1
      %p610 = por %p608, %p609
      %p612 = scmp.ne.s32.totalorder %s597, %s611
      %p613 = scmp.eq.s32.totalorder %s104, 0
      %p614 = por %p612, %p613
      %s616 = sadd.s32 %s615, 1
      %p619 = scmp.eq.s32.totalorder %s98, 1
      %p620 = scmp.ne.s32.totalorder %s615, %s617
      %p621 = scmp.eq.s32.totalorder %s98, 0
      %p622 = por %p620, %p621
      %p623 = scmp.ne.s32.totalorder %s615, %s617
      %p624 = scmp.eq.s32.totalorder %s103, 1
      %p625 = por %p623, %p624
      %p626 = scmp.ne.s32.totalorder %s617, %s618
      %p627 = scmp.eq.s32.totalorder %s103, 0
      %p628 = por %p626, %p627
      %p629 = scmp.ne.s32.totalorder %s617, %s618
      %p630 = scmp.eq.s32.totalorder %s104, 1
      %p631 = por %p629, %p630
      %p633 = scmp.ne.s32.totalorder %s618, %s632
      %p634 = scmp.eq.s32.totalorder %s104, 0
      %p635 = por %p633, %p634
      %s637 = sadd.s32 %s636, 1
      %p640 = scmp.eq.s32.totalorder %s98, 1
      %p641 = scmp.ne.s32.totalorder %s636, %s638
      %p642 = scmp.eq.s32.totalorder %s98, 0
      %p643 = por %p641, %p642
      %p644 = scmp.ne.s32.totalorder %s636, %s638
      %p645 = scmp.eq.s32.totalorder %s103, 1
      %p646 = por %p644, %p645
      %p647 = scmp.ne.s32.totalorder %s638, %s639
      %p648 = scmp.eq.s32.totalorder %s103, 0
      %p649 = por %p647, %p648
      %p650 = scmp.ne.s32.totalorder %s638, %s639
      %p651 = scmp.eq.s32.totalorder %s104, 1
      %p652 = por %p650, %p651
      %p654 = scmp.ne.s32.totalorder %s639, %s653
      %p655 = scmp.eq.s32.totalorder %s104, 0
      %p656 = por %p654, %p655
      %s658 = sadd.s32 %s657, 1
      %p661 = scmp.eq.s32.totalorder %s98, 1
      %p662 = scmp.ne.s32.totalorder %s657, %s659
      %p663 = scmp.eq.s32.totalorder %s98, 0
      %p664 = por %p662, %p663
      %p665 = scmp.ne.s32.totalorder %s657, %s659
      %p666 = scmp.eq.s32.totalorder %s103, 1
      %p667 = por %p665, %p666
      %p668 = scmp.ne.s32.totalorder %s659, %s660
      %p669 = scmp.eq.s32.totalorder %s103, 0
      %p670 = por %p668, %p669
      %p671 = scmp.ne.s32.totalorder %s659, %s660
      %p672 = scmp.eq.s32.totalorder %s104, 1
      %p673 = por %p671, %p672
      %p675 = scmp.ne.s32.totalorder %s660, %s674
      %p676 = scmp.eq.s32.totalorder %s104, 0
      %p677 = por %p675, %p676
      %s679 = sadd.s32 %s678, 1
      %p682 = scmp.eq.s32.totalorder %s98, 1
      %p683 = scmp.ne.s32.totalorder %s678, %s680
      %p684 = scmp.eq.s32.totalorder %s98, 0
      %p685 = por %p683, %p684
      %p686 = scmp.ne.s32.totalorder %s678, %s680
      %p687 = scmp.eq.s32.totalorder %s103, 1
      %p688 = por %p686, %p687
      %p689 = scmp.ne.s32.totalorder %s680, %s681
      %p690 = scmp.eq.s32.totalorder %s103, 0
      %p691 = por %p689, %p690
      %p692 = scmp.ne.s32.totalorder %s680, %s681
      %p693 = scmp.eq.s32.totalorder %s104, 1
      %p694 = por %p692, %p693
      %p696 = scmp.ne.s32.totalorder %s681, %s695
      %p697 = scmp.eq.s32.totalorder %s104, 0
      %p698 = por %p696, %p697
      %s700 = sadd.s32 %s699, 1
      %p703 = scmp.eq.s32.totalorder %s98, 1
      %p704 = scmp.ne.s32.totalorder %s699, %s701
      %p705 = scmp.eq.s32.totalorder %s98, 0
      %p706 = por %p704, %p705
      %p707 = scmp.ne.s32.totalorder %s699, %s701
      %p708 = scmp.eq.s32.totalorder %s103, 1
      %p709 = por %p707, %p708
      %p710 = scmp.ne.s32.totalorder %s701, %s702
      %p711 = scmp.eq.s32.totalorder %s103, 0
      %p712 = por %p710, %p711
      %p713 = scmp.ne.s32.totalorder %s701, %s702
      %p714 = scmp.eq.s32.totalorder %s104, 1
      %p715 = por %p713, %p714
      %p717 = scmp.ne.s32.totalorder %s702, %s716
      %p718 = scmp.eq.s32.totalorder %s104, 0
      %p719 = por %p717, %p718
      %s721 = sadd.s32 %s720, 1
      %p724 = scmp.eq.s32.totalorder %s98, 1
      %p725 = scmp.ne.s32.totalorder %s720, %s722
      %p726 = scmp.eq.s32.totalorder %s98, 0
      %p727 = por %p725, %p726
      %p728 = scmp.ne.s32.totalorder %s720, %s722
      %p729 = scmp.eq.s32.totalorder %s103, 1
      %p730 = por %p728, %p729
      %p731 = scmp.ne.s32.totalorder %s722, %s723
      %p732 = scmp.eq.s32.totalorder %s103, 0
      %p733 = por %p731, %p732
      %p734 = scmp.ne.s32.totalorder %s722, %s723
      %p735 = scmp.eq.s32.totalorder %s104, 1
      %p736 = por %p734, %p735
      %p738 = scmp.ne.s32.totalorder %s723, %s737
      %p739 = scmp.eq.s32.totalorder %s104, 0
      %p740 = por %p738, %p739
      %s742 = sadd.s32 %s741, 1
      %p745 = scmp.eq.s32.totalorder %s98, 1
      %p746 = scmp.ne.s32.totalorder %s741, %s743
      %p747 = scmp.eq.s32.totalorder %s98, 0
      %p748 = por %p746, %p747
      %p749 = scmp.ne.s32.totalorder %s741, %s743
      %p750 = scmp.eq.s32.totalorder %s103, 1
      %p751 = por %p749, %p750
      %p752 = scmp.ne.s32.totalorder %s743, %s744
      %p753 = scmp.eq.s32.totalorder %s103, 0
      %p754 = por %p752, %p753
      %p755 = scmp.ne.s32.totalorder %s743, %s744
      %p756 = scmp.eq.s32.totalorder %s104, 1
      %p757 = por %p755, %p756
      %p759 = scmp.ne.s32.totalorder %s744, %s758
      %p760 = scmp.eq.s32.totalorder %s104, 0
      %p761 = por %p759, %p760
      %s763 = sadd.s32 %s762, 1
      %p766 = scmp.eq.s32.totalorder %s98, 1
      %p767 = scmp.ne.s32.totalorder %s762, %s764
      %p768 = scmp.eq.s32.totalorder %s98, 0
      %p769 = por %p767, %p768
      %p770 = scmp.ne.s32.totalorder %s762, %s764
      %p771 = scmp.eq.s32.totalorder %s103, 1
      %p772 = por %p770, %p771
      %p773 = scmp.ne.s32.totalorder %s764, %s765
      %p774 = scmp.eq.s32.totalorder %s103, 0
      %p775 = por %p773, %p774
      %p776 = scmp.ne.s32.totalorder %s764, %s765
      %p777 = scmp.eq.s32.totalorder %s104, 1
      %p778 = por %p776, %p777
      %p780 = scmp.ne.s32.totalorder %s765, %s779
      %p781 = scmp.eq.s32.totalorder %s104, 0
      %p782 = por %p780, %p781
      %s784 = sadd.s32 %s783, 1
      %p787 = scmp.eq.s32.totalorder %s98, 1
      %p788 = scmp.ne.s32.totalorder %s783, %s785
      %p789 = scmp.eq.s32.totalorder %s98, 0
      %p790 = por %p788, %p789
      %p791 = scmp.ne.s32.totalorder %s783, %s785
      %p792 = scmp.eq.s32.totalorder %s103, 1
      %p793 = por %p791, %p792
      %p794 = scmp.ne.s32.totalorder %s785, %s786
      %p795 = scmp.eq.s32.totalorder %s103, 0
      %p796 = por %p794, %p795
      %p797 = scmp.ne.s32.totalorder %s785, %s786
      %p798 = scmp.eq.s32.totalorder %s104, 1
      %p799 = por %p797, %p798
      %p801 = scmp.ne.s32.totalorder %s786, %s800
      %p802 = scmp.eq.s32.totalorder %s104, 0
      %p803 = por %p801, %p802
      %s805 = sadd.s32 %s804, 1
      %p808 = scmp.eq.s32.totalorder %s98, 1
      %p809 = scmp.ne.s32.totalorder %s804, %s806
      %p810 = scmp.eq.s32.totalorder %s98, 0
      %p811 = por %p809, %p810
      %p812 = scmp.ne.s32.totalorder %s804, %s806
      %p813 = scmp.eq.s32.totalorder %s103, 1
      %p814 = por %p812, %p813
      %p815 = scmp.ne.s32.totalorder %s806, %s807
      %p816 = scmp.eq.s32.totalorder %s103, 0
      %p817 = por %p815, %p816
      %p818 = scmp.ne.s32.totalorder %s806, %s807
      %p819 = scmp.eq.s32.totalorder %s104, 1
      %p820 = por %p818, %p819
      %p822 = scmp.ne.s32.totalorder %s807, %s821
      %p823 = scmp.eq.s32.totalorder %s104, 0
      %p824 = por %p822, %p823
      %s826 = sadd.s32 %s825, 1
      %p829 = scmp.eq.s32.totalorder %s98, 1
      %p830 = scmp.ne.s32.totalorder %s825, %s827
      %p831 = scmp.eq.s32.totalorder %s98, 0
      %p832 = por %p830, %p831
      %p833 = scmp.ne.s32.totalorder %s825, %s827
      %p834 = scmp.eq.s32.totalorder %s103, 1
      %p835 = por %p833, %p834
      %p836 = scmp.ne.s32.totalorder %s827, %s828
      %p837 = scmp.eq.s32.totalorder %s103, 0
      %p838 = por %p836, %p837
      %p839 = scmp.ne.s32.totalorder %s827, %s828
      %p840 = scmp.eq.s32.totalorder %s104, 1
      %p841 = por %p839, %p840
      %p843 = scmp.ne.s32.totalorder %s828, %s842
      %p844 = scmp.eq.s32.totalorder %s104, 0
      %p845 = por %p843, %p844
      %s847 = sadd.s32 %s846, 1
      %p850 = scmp.eq.s32.totalorder %s98, 1
      %p851 = scmp.ne.s32.totalorder %s846, %s848
      %p852 = scmp.eq.s32.totalorder %s98, 0
      %p853 = por %p851, %p852
      %p854 = scmp.ne.s32.totalorder %s846, %s848
      %p855 = scmp.eq.s32.totalorder %s103, 1
      %p856 = por %p854, %p855
      %p857 = scmp.ne.s32.totalorder %s848, %s849
      %p858 = scmp.eq.s32.totalorder %s103, 0
      %p859 = por %p857, %p858
      %p860 = scmp.ne.s32.totalorder %s848, %s849
      %p861 = scmp.eq.s32.totalorder %s104, 1
      %p862 = por %p860, %p861
      %p864 = scmp.ne.s32.totalorder %s849, %s863
      %p865 = scmp.eq.s32.totalorder %s104, 0
      %p866 = por %p864, %p865
      %s868 = sadd.s32 %s867, 1
      %p871 = scmp.eq.s32.totalorder %s98, 1
      %p872 = scmp.ne.s32.totalorder %s867, %s869
      %p873 = scmp.eq.s32.totalorder %s98, 0
      %p874 = por %p872, %p873
      %p875 = scmp.ne.s32.totalorder %s867, %s869
      %p876 = scmp.eq.s32.totalorder %s103, 1
      %p877 = por %p875, %p876
      %p878 = scmp.ne.s32.totalorder %s869, %s870
      %p879 = scmp.eq.s32.totalorder %s103, 0
      %p880 = por %p878, %p879
      %p881 = scmp.ne.s32.totalorder %s869, %s870
      %p882 = scmp.eq.s32.totalorder %s104, 1
      %p883 = por %p881, %p882
      %p885 = scmp.ne.s32.totalorder %s870, %s884
      %p886 = scmp.eq.s32.totalorder %s104, 0
      %p887 = por %p885, %p886
      %s888 = ssub.s32 %s98, %s105
      %p889 = scmp.eq.s32.totalorder %s888, 0
      %s891 = sadd.s32 %s890, 1
      %s892 = scalar_select %p889, %s890, %s891
      %p895 = pneg %p889
      %p896 = scmp.eq.s32.totalorder %s98, 1
      %p897 = por %p895, %p896
      %p898 = scmp.ne.s32.totalorder %s890, %s893
      %p899 = scmp.eq.s32.totalorder %s98, 0
      %p900 = por %p898, %p899
      %p901 = scmp.ne.s32.totalorder %s890, %s893
      %p902 = scmp.eq.s32.totalorder %s103, 1
      %p903 = por %p901, %p902
      %p904 = scmp.ne.s32.totalorder %s893, %s894
      %p905 = scmp.eq.s32.totalorder %s103, 0
      %p906 = por %p904, %p905
      %p907 = scmp.ne.s32.totalorder %s893, %s894
      %p908 = scmp.eq.s32.totalorder %s104, 1
      %p909 = por %p907, %p908
      %p911 = scmp.ne.s32.totalorder %s894, %s910
      %p912 = scmp.eq.s32.totalorder %s104, 0
      %p913 = por %p911, %p912
      %p914 = scmp.le.s32.totalorder 1, %s98
      %p915 = scmp.lt.s32.totalorder %s98, 3
      %p916 = pnand %p914, %p915
      %p917 = pneg %p916
      // Predicated region
      $region9: #{transformer_model.1} parent=5 // pred_check
        _
      $region10: #{transformer_model.1} parent=5 // pred_check_branch
        %919 = sbr.rel (%p916) target = $region12
      $region11: #{transformer_model.1} parent=5 // pred_region
        %s920 = ssub.s32 %s98, 1
        // Predicated region
        $region13: #{transformer_model.1} parent=11 // pred_check
          %p921 = pneg %p145
        $region14: #{transformer_model.1} parent=11 // pred_check_branch
          %923 = sbr.rel (%p921) target = $region16
        $region15: #{transformer_model.1} parent=11 // pred_region
          %s925 = ssub.s32 16, 16
          %926 = vsyncadd [#allocation4], %s925
          %s928 = sshll.u32 [#allocation3], 4
          %s929 = int_to_ptr.vmem [resolvable:$true] %s928
          %931 = dma.hbm_to_vmem [thread:$0]  %s3, 16, %s929, [#allocation4]
        $region16: #{transformer_model.1} parent=11 // pred_fallthru
          _
        // Predicated region
        $region17: #{transformer_model.1} parent=11 // pred_check
          %p932 = pneg %p166
        $region18: #{transformer_model.1} parent=11 // pred_check_branch
          %934 = sbr.rel (%p932) target = $region20
        $region19: #{transformer_model.1} parent=11 // pred_region
          %s936 = ssub.s32 16, 16
          %937 = vsyncadd [#allocation6], %s936
          %s939 = sshll.u32 [#allocation5], 4
          %s940 = int_to_ptr.vmem [resolvable:$true] %s939
          %942 = dma.hbm_to_vmem [thread:$0]  %s5, 16, %s940, [#allocation6]
        $region20: #{transformer_model.1} parent=11 // pred_fallthru
          _
        // Predicated region
        $region21: #{transformer_model.1} parent=11 // pred_check
          %p943 = pneg %p187
        $region22: #{transformer_model.1} parent=11 // pred_check_branch
          %945 = sbr.rel (%p943) target = $region24
        $region23: #{transformer_model.1} parent=11 // pred_region
          %s947 = ssub.s32 6144, 6144
          %948 = vsyncadd [#allocation6], %s947
          %s949 = sshll.u32 [#allocation7], 4
          %s950 = int_to_ptr.vmem [resolvable:$true] %s949
          %955 = dma.hbm_to_vmem [thread:$0]  %s7, 6144, %s950, [#allocation6], 192, 192, 12
        $region24: #{transformer_model.1} parent=11 // pred_fallthru
          _
        // Predicated region
        $region25: #{transformer_model.1} parent=11 // pred_check
          %p956 = pneg %p208
        $region26: #{transformer_model.1} parent=11 // pred_check_branch
          %958 = sbr.rel (%p956) target = $region28
        $region27: #{transformer_model.1} parent=11 // pred_region
          _
        $region28: #{transformer_model.1} parent=11 // pred_fallthru
          _
        // Predicated region
        $region29: #{transformer_model.1} parent=11 // pred_check
          %p959 = pneg %p229
        $region30: #{transformer_model.1} parent=11 // pred_check_branch
          %961 = sbr.rel (%p959) target = $region32
        $region31: #{transformer_model.1} parent=11 // pred_region
          _
        $region32: #{transformer_model.1} parent=11 // pred_fallthru
          _
        // Predicated region
        $region33: #{transformer_model.1} parent=11 // pred_check
          %p962 = pneg %p250
        $region34: #{transformer_model.1} parent=11 // pred_check_branch
          %964 = sbr.rel (%p962) target = $region36
        $region35: #{transformer_model.1} parent=11 // pred_region
          _
        $region36: #{transformer_model.1} parent=11 // pred_fallthru
          _
        // Predicated region
        $region37: #{transformer_model.1} parent=11 // pred_check
          %p965 = pneg %p271
        $region38: #{transformer_model.1} parent=11 // pred_check_branch
          %967 = sbr.rel (%p965) target = $region40
        $region39: #{transformer_model.1} parent=11 // pred_region
          _
        $region40: #{transformer_model.1} parent=11 // pred_fallthru
          _
        // Predicated region
        $region41: #{transformer_model.1} parent=11 // pred_check
          %p968 = pneg %p292
        $region42: #{transformer_model.1} parent=11 // pred_check_branch
          %970 = sbr.rel (%p968) target = $region44
        $region43: #{transformer_model.1} parent=11 // pred_region
          %s972 = ssub.s32 32, 32
          %973 = vsyncadd [#allocation9], %s972
          %s974 = sshll.u32 [#allocation8], 4
          %s975 = int_to_ptr.vmem [resolvable:$true] %s974
          %980 = dma.hbm_to_vmem [thread:$0]  %s17, 32, %s975, [#allocation9], 16, 16, 1
        $region44: #{transformer_model.1} parent=11 // pred_fallthru
          _
        // Predicated region
        $region45: #{transformer_model.1} parent=11 // pred_check
          %p981 = pneg %p313
        $region46: #{transformer_model.1} parent=11 // pred_check_branch
          %983 = sbr.rel (%p981) target = $region48
        $region47: #{transformer_model.1} parent=11 // pred_region
          %s985 = ssub.s32 32, 32
          %986 = vsyncadd [#allocation9], %s985
          %s987 = sshll.u32 [#allocation10], 4
          %s988 = int_to_ptr.vmem [resolvable:$true] %s987
          %993 = dma.hbm_to_vmem [thread:$0]  %s19, 32, %s988, [#allocation9], 16, 16, 1
        $region48: #{transformer_model.1} parent=11 // pred_fallthru
          _
        // Predicated region
        $region49: #{transformer_model.1} parent=11 // pred_check
          %p994 = pneg %p334
        $region50: #{transformer_model.1} parent=11 // pred_check_branch
          %996 = sbr.rel (%p994) target = $region52
        $region51: #{transformer_model.1} parent=11 // pred_region
          %s998 = ssub.s32 32, 32
          %999 = vsyncadd [#allocation12], %s998
          %s1000 = sshll.u32 [#allocation11], 4
          %s1001 = int_to_ptr.vmem [resolvable:$true] %s1000
          %1006 = dma.hbm_to_vmem [thread:$0]  %s21, 32, %s1001, [#allocation12], 16, 16, 1
        $region52: #{transformer_model.1} parent=11 // pred_fallthru
          _
        // Predicated region
        $region53: #{transformer_model.1} parent=11 // pred_check
          %p1007 = pneg %p355
        $region54: #{transformer_model.1} parent=11 // pred_check_branch
          %1009 = sbr.rel (%p1007) target = $region56
        $region55: #{transformer_model.1} parent=11 // pred_region
          %s1011 = ssub.s32 2048, 2048
          %1012 = vsyncadd [#allocation12], %s1011
          %s1013 = sshll.u32 [#allocation13], 4
          %s1014 = int_to_ptr.vmem [resolvable:$true] %s1013
          %1019 = dma.hbm_to_vmem [thread:$0]  %s23, 2048, %s1014, [#allocation12], 64, 64, 4
        $region56: #{transformer_model.1} parent=11 // pred_fallthru
          _
        // Predicated region
        $region57: #{transformer_model.1} parent=11 // pred_check
          %p1020 = pneg %p376
        $region58: #{transformer_model.1} parent=11 // pred_check_branch
          %1022 = sbr.rel (%p1020) target = $region60
        $region59: #{transformer_model.1} parent=11 // pred_region
          %s1024 = ssub.s32 32, 32
          %1025 = vsyncadd [#allocation15], %s1024
          %s1026 = sshll.u32 [#allocation14], 4
          %s1027 = int_to_ptr.vmem [resolvable:$true] %s1026
          %1032 = dma.hbm_to_vmem [thread:$0]  %s25, 32, %s1027, [#allocation15], 16, 16, 1
        $region60: #{transformer_model.1} parent=11 // pred_fallthru
          _
        // Predicated region
        $region61: #{transformer_model.1} parent=11 // pred_check
          %p1033 = pneg %p397
        $region62: #{transformer_model.1} parent=11 // pred_check_branch
          %1035 = sbr.rel (%p1033) target = $region64
        $region63: #{transformer_model.1} parent=11 // pred_region
          %s1037 = ssub.s32 2048, 2048
          %1038 = vsyncadd [#allocation15], %s1037
          %s1039 = sshll.u32 [#allocation16], 4
          %s1040 = int_to_ptr.vmem [resolvable:$true] %s1039
          %1045 = dma.hbm_to_vmem [thread:$0]  %s27, 2048, %s1040, [#allocation15], 64, 64, 4
        $region64: #{transformer_model.1} parent=11 // pred_fallthru
          _
        // Predicated region
        $region65: #{transformer_model.1} parent=11 // pred_check
          %p1046 = pneg %p418
        $region66: #{transformer_model.1} parent=11 // pred_check_branch
          %1048 = sbr.rel (%p1046) target = $region68
        $region67: #{transformer_model.1} parent=11 // pred_region
          %s1050 = ssub.s32 32, 32
          %1051 = vsyncadd [#allocation18], %s1050
          %s1052 = sshll.u32 [#allocation17], 4
          %s1053 = int_to_ptr.vmem [resolvable:$true] %s1052
          %1058 = dma.hbm_to_vmem [thread:$0]  %s29, 32, %s1053, [#allocation18], 16, 16, 1
        $region68: #{transformer_model.1} parent=11 // pred_fallthru
          _
        // Predicated region
        $region69: #{transformer_model.1} parent=11 // pred_check
          %p1059 = pneg %p439
        $region70: #{transformer_model.1} parent=11 // pred_check_branch
          %1061 = sbr.rel (%p1059) target = $region72
        $region71: #{transformer_model.1} parent=11 // pred_region
          %s1063 = ssub.s32 6144, 6144
          %1064 = vsyncadd [#allocation18], %s1063
          %s1065 = sshll.u32 [#allocation19], 4
          %s1066 = int_to_ptr.vmem [resolvable:$true] %s1065
          %1071 = dma.hbm_to_vmem [thread:$0]  %s31, 6144, %s1066, [#allocation18], 192, 192, 12
        $region72: #{transformer_model.1} parent=11 // pred_fallthru
          _
        // Predicated region
        $region73: #{transformer_model.1} parent=11 // pred_check
          %p1072 = pneg %p460
        $region74: #{transformer_model.1} parent=11 // pred_check_branch
          %1074 = sbr.rel (%p1072) target = $region76
        $region75: #{transformer_model.1} parent=11 // pred_region
          _
        $region76: #{transformer_model.1} parent=11 // pred_fallthru
          _
        // Predicated region
        $region77: #{transformer_model.1} parent=11 // pred_check
          %p1075 = pneg %p481
        $region78: #{transformer_model.1} parent=11 // pred_check_branch
          %1077 = sbr.rel (%p1075) target = $region80
        $region79: #{transformer_model.1} parent=11 // pred_region
          %s1079 = ssub.s32 2048, 2048
          %1080 = vsyncadd [#allocation21], %s1079
          %s1081 = sshll.u32 [#allocation20], 4
          %s1082 = int_to_ptr.vmem [resolvable:$true] %s1081
          %1087 = dma.hbm_to_vmem [thread:$0]  %s35, 2048, %s1082, [#allocation21], 64, 64, 4
        $region80: #{transformer_model.1} parent=11 // pred_fallthru
          _
        // Predicated region
        $region81: #{transformer_model.1} parent=11 // pred_check
          %p1088 = pneg %p502
        $region82: #{transformer_model.1} parent=11 // pred_check_branch
          %1090 = sbr.rel (%p1088) target = $region84
        $region83: #{transformer_model.1} parent=11 // pred_region
          %s1092 = ssub.s32 32, 32
          %1093 = vsyncadd [#allocation21], %s1092
          %s1094 = sshll.u32 [#allocation22], 4
          %s1095 = int_to_ptr.vmem [resolvable:$true] %s1094
          %1100 = dma.hbm_to_vmem [thread:$0]  %s37, 32, %s1095, [#allocation21], 16, 16, 1
        $region84: #{transformer_model.1} parent=11 // pred_fallthru
          _
        // Predicated region
        $region85: #{transformer_model.1} parent=11 // pred_check
          %p1101 = pneg %p523
        $region86: #{transformer_model.1} parent=11 // pred_check_branch
          %1103 = sbr.rel (%p1101) target = $region88
        $region87: #{transformer_model.1} parent=11 // pred_region
          %s1105 = ssub.s32 2048, 2048
          %1106 = vsyncadd [#allocation24], %s1105
          %s1107 = sshll.u32 [#allocation23], 4
          %s1108 = int_to_ptr.vmem [resolvable:$true] %s1107
          %1113 = dma.hbm_to_vmem [thread:$0]  %s39, 2048, %s1108, [#allocation24], 64, 64, 4
        $region88: #{transformer_model.1} parent=11 // pred_fallthru
          _
        // Predicated region
        $region89: #{transformer_model.1} parent=11 // pred_check
          %p1114 = pneg %p544
        $region90: #{transformer_model.1} parent=11 // pred_check_branch
          %1116 = sbr.rel (%p1114) target = $region92
        $region91: #{transformer_model.1} parent=11 // pred_region
          %s1118 = ssub.s32 32, 32
          %1119 = vsyncadd [#allocation24], %s1118
          %s1120 = sshll.u32 [#allocation25], 4
          %s1121 = int_to_ptr.vmem [resolvable:$true] %s1120
          %1126 = dma.hbm_to_vmem [thread:$0]  %s41, 32, %s1121, [#allocation24], 16, 16, 1
        $region92: #{transformer_model.1} parent=11 // pred_fallthru
          _
        // Predicated region
        $region93: #{transformer_model.1} parent=11 // pred_check
          %p1127 = pneg %p565
        $region94: #{transformer_model.1} parent=11 // pred_check_branch
          %1129 = sbr.rel (%p1127) target = $region96
        $region95: #{transformer_model.1} parent=11 // pred_region
          %s1131 = ssub.s32 4096, 4096
          %1132 = vsyncadd [#allocation27], %s1131
          %s1133 = sshll.u32 [#allocation26], 4
          %s1134 = int_to_ptr.vmem [resolvable:$true] %s1133
          %1139 = dma.hbm_to_vmem [thread:$0]  %s43, 4096, %s1134, [#allocation27], 128, 128, 8
        $region96: #{transformer_model.1} parent=11 // pred_fallthru
          _
        // Predicated region
        $region97: #{transformer_model.1} parent=11 // pred_check
          %p1140 = pneg %p586
        $region98: #{transformer_model.1} parent=11 // pred_check_branch
          %1142 = sbr.rel (%p1140) target = $region100
        $region99: #{transformer_model.1} parent=11 // pred_region
          _
        $region100: #{transformer_model.1} parent=11 // pred_fallthru
          _
        // Predicated region
        $region101: #{transformer_model.1} parent=11 // pred_check
          %p1143 = pneg %p607
        $region102: #{transformer_model.1} parent=11 // pred_check_branch
          %1145 = sbr.rel (%p1143) target = $region104
        $region103: #{transformer_model.1} parent=11 // pred_region
          %s1147 = ssub.s32 2048, 2048
          %1148 = vsyncadd [#allocation27], %s1147
          %s1149 = sshll.u32 [#allocation28], 4
          %s1150 = int_to_ptr.vmem [resolvable:$true] %s1149
          %1155 = dma.hbm_to_vmem [thread:$0]  %s47, 2048, %s1150, [#allocation27], 64, 64, 4
        $region104: #{transformer_model.1} parent=11 // pred_fallthru
          _
        // Predicated region
        $region105: #{transformer_model.1} parent=11 // pred_check
          %p1156 = pneg %p628
        $region106: #{transformer_model.1} parent=11 // pred_check_branch
          %1158 = sbr.rel (%p1156) target = $region108
        $region107: #{transformer_model.1} parent=11 // pred_region
          %s1160 = ssub.s32 32, 32
          %1161 = vsyncadd [#allocation30], %s1160
          %s1162 = sshll.u32 [#allocation29], 4
          %s1163 = int_to_ptr.vmem [resolvable:$true] %s1162
          %1168 = dma.hbm_to_vmem [thread:$0]  %s49, 32, %s1163, [#allocation30], 16, 16, 1
        $region108: #{transformer_model.1} parent=11 // pred_fallthru
          _
        // Predicated region
        $region109: #{transformer_model.1} parent=11 // pred_check
          %p1169 = pneg %p649
        $region110: #{transformer_model.1} parent=11 // pred_check_branch
          %1171 = sbr.rel (%p1169) target = $region112
        $region111: #{transformer_model.1} parent=11 // pred_region
          %s1173 = ssub.s32 32, 32
          %1174 = vsyncadd [#allocation30], %s1173
          %s1175 = sshll.u32 [#allocation31], 4
          %s1176 = int_to_ptr.vmem [resolvable:$true] %s1175
          %1181 = dma.hbm_to_vmem [thread:$0]  %s51, 32, %s1176, [#allocation30], 16, 16, 1
        $region112: #{transformer_model.1} parent=11 // pred_fallthru
          _
        // Predicated region
        $region113: #{transformer_model.1} parent=11 // pred_check
          %p1182 = pneg %p670
        $region114: #{transformer_model.1} parent=11 // pred_check_branch
          %1184 = sbr.rel (%p1182) target = $region116
        $region115: #{transformer_model.1} parent=11 // pred_region
          %s1186 = ssub.s32 32, 32
          %1187 = vsyncadd [#allocation33], %s1186
          %s1188 = sshll.u32 [#allocation32], 4
          %s1189 = int_to_ptr.vmem [resolvable:$true] %s1188
          %1194 = dma.hbm_to_vmem [thread:$0]  %s53, 32, %s1189, [#allocation33], 16, 16, 1
        $region116: #{transformer_model.1} parent=11 // pred_fallthru
          _
        // Predicated region
        $region117: #{transformer_model.1} parent=11 // pred_check
          %p1195 = pneg %p691
        $region118: #{transformer_model.1} parent=11 // pred_check_branch
          %1197 = sbr.rel (%p1195) target = $region120
        $region119: #{transformer_model.1} parent=11 // pred_region
          %s1199 = ssub.s32 32, 32
          %1200 = vsyncadd [#allocation33], %s1199
          %s1201 = sshll.u32 [#allocation34], 4
          %s1202 = int_to_ptr.vmem [resolvable:$true] %s1201
          %1207 = dma.hbm_to_vmem [thread:$0]  %s55, 32, %s1202, [#allocation33], 16, 16, 1
        $region120: #{transformer_model.1} parent=11 // pred_fallthru
          _
        // Predicated region
        $region121: #{transformer_model.1} parent=11 // pred_check
          %p1208 = pneg %p712
        $region122: #{transformer_model.1} parent=11 // pred_check_branch
          %1210 = sbr.rel (%p1208) target = $region124
        $region123: #{transformer_model.1} parent=11 // pred_region
          %s1212 = ssub.s32 32, 32
          %1213 = vsyncadd [#allocation36], %s1212
          %s1214 = sshll.u32 [#allocation35], 4
          %s1215 = int_to_ptr.vmem [resolvable:$true] %s1214
          %1220 = dma.hbm_to_vmem [thread:$0]  %s57, 32, %s1215, [#allocation36], 16, 16, 1
        $region124: #{transformer_model.1} parent=11 // pred_fallthru
          _
        // Predicated region
        $region125: #{transformer_model.1} parent=11 // pred_check
          %p1221 = pneg %p733
        $region126: #{transformer_model.1} parent=11 // pred_check_branch
          %1223 = sbr.rel (%p1221) target = $region128
        $region127: #{transformer_model.1} parent=11 // pred_region
          %s1225 = ssub.s32 32, 32
          %1226 = vsyncadd [#allocation36], %s1225
          %s1227 = sshll.u32 [#allocation37], 4
          %s1228 = int_to_ptr.vmem [resolvable:$true] %s1227
          %1233 = dma.hbm_to_vmem [thread:$0]  %s59, 32, %s1228, [#allocation36], 16, 16, 1
        $region128: #{transformer_model.1} parent=11 // pred_fallthru
          _
        // Predicated region
        $region129: #{transformer_model.1} parent=11 // pred_check
          %p1234 = pneg %p754
        $region130: #{transformer_model.1} parent=11 // pred_check_branch
          %1236 = sbr.rel (%p1234) target = $region132
        $region131: #{transformer_model.1} parent=11 // pred_region
          %s1238 = ssub.s32 32, 32
          %1239 = vsyncadd [#allocation39], %s1238
          %s1240 = sshll.u32 [#allocation38], 4
          %s1241 = int_to_ptr.vmem [resolvable:$true] %s1240
          %1246 = dma.hbm_to_vmem [thread:$0]  %s61, 32, %s1241, [#allocation39], 16, 16, 1
        $region132: #{transformer_model.1} parent=11 // pred_fallthru
          _
        // Predicated region
        $region133: #{transformer_model.1} parent=11 // pred_check
          %p1247 = pneg %p775
        $region134: #{transformer_model.1} parent=11 // pred_check_branch
          %1249 = sbr.rel (%p1247) target = $region136
        $region135: #{transformer_model.1} parent=11 // pred_region
          %s1251 = ssub.s32 2048, 2048
          %1252 = vsyncadd [#allocation39], %s1251
          %s1253 = sshll.u32 [#allocation40], 4
          %s1254 = int_to_ptr.vmem [resolvable:$true] %s1253
          %1259 = dma.hbm_to_vmem [thread:$0]  %s63, 2048, %s1254, [#allocation39], 64, 64, 4
        $region136: #{transformer_model.1} parent=11 // pred_fallthru
          _
        // Predicated region
        $region137: #{transformer_model.1} parent=11 // pred_check
          %p1260 = pneg %p796
        $region138: #{transformer_model.1} parent=11 // pred_check_branch
          %1262 = sbr.rel (%p1260) target = $region140
        $region139: #{transformer_model.1} parent=11 // pred_region
          %s1264 = ssub.s32 32, 32
          %1265 = vsyncadd [#allocation42], %s1264
          %s1266 = sshll.u32 [#allocation41], 4
          %s1267 = int_to_ptr.vmem [resolvable:$true] %s1266
          %1272 = dma.hbm_to_vmem [thread:$0]  %s65, 32, %s1267, [#allocation42], 16, 16, 1
        $region140: #{transformer_model.1} parent=11 // pred_fallthru
          _
        // Predicated region
        $region141: #{transformer_model.1} parent=11 // pred_check
          %p1273 = pneg %p817
        $region142: #{transformer_model.1} parent=11 // pred_check_branch
          %1275 = sbr.rel (%p1273) target = $region144
        $region143: #{transformer_model.1} parent=11 // pred_region
          %s1277 = ssub.s32 2048, 2048
          %1278 = vsyncadd [#allocation42], %s1277
          %s1279 = sshll.u32 [#allocation43], 4
          %s1280 = int_to_ptr.vmem [resolvable:$true] %s1279
          %1285 = dma.hbm_to_vmem [thread:$0]  %s67, 2048, %s1280, [#allocation42], 64, 64, 4
        $region144: #{transformer_model.1} parent=11 // pred_fallthru
          _
        // Predicated region
        $region145: #{transformer_model.1} parent=11 // pred_check
          %p1286 = pneg %p838
        $region146: #{transformer_model.1} parent=11 // pred_check_branch
          %1288 = sbr.rel (%p1286) target = $region148
        $region147: #{transformer_model.1} parent=11 // pred_region
          %s1290 = ssub.s32 32, 32
          %1291 = vsyncadd [#allocation45], %s1290
          %s1292 = sshll.u32 [#allocation44], 4
          %s1293 = int_to_ptr.vmem [resolvable:$true] %s1292
          %1298 = dma.hbm_to_vmem [thread:$0]  %s69, 32, %s1293, [#allocation45], 16, 16, 1
        $region148: #{transformer_model.1} parent=11 // pred_fallthru
          _
        // Predicated region
        $region149: #{transformer_model.1} parent=11 // pred_check
          %p1299 = pneg %p859
        $region150: #{transformer_model.1} parent=11 // pred_check_branch
          %1301 = sbr.rel (%p1299) target = $region152
        $region151: #{transformer_model.1} parent=11 // pred_region
          _
        $region152: #{transformer_model.1} parent=11 // pred_fallthru
          _
        // Predicated region
        $region153: #{transformer_model.1} parent=11 // pred_check
          %p1302 = pneg %p880
        $region154: #{transformer_model.1} parent=11 // pred_check_branch
          %1304 = sbr.rel (%p1302) target = $region156
        $region155: #{transformer_model.1} parent=11 // pred_region
          _
        $region156: #{transformer_model.1} parent=11 // pred_fallthru
          _
      $region12: #{transformer_model.1} parent=5 // pred_fallthru
        _
      %p1305 = scmp.lt.s32.totalorder %s98, 2
      // Predicated region
      $region157: #{transformer_model.1} parent=5 // pred_check
        %p1306 = pneg %p1305
      $region158: #{transformer_model.1} parent=5 // pred_check_branch
        %1308 = sbr.rel (%p1306) target = $region160
      $region159: #{transformer_model.1} parent=5 // pred_region
        // Predicated region
        $region161: #{transformer_model.1} parent=159 // pred_check
          %p1309 = pneg %p118
        $region162: #{transformer_model.1} parent=159 // pred_check_branch
          %1311 = sbr.rel (%p1309) target = $region164
        $region163: #{transformer_model.1} parent=159 // pred_region
          %p1312 = scmp.lt.s32.totalorder %s98, 1
          %s1313 = scalar_select %p1312, %s98, 1
          %s1314 = smul.addr %s1313, 8
          %s1315 = scalar_lea.vmem %s1, %s1314
        $region164: #{transformer_model.1} parent=159 // pred_fallthru
          _
      $region160: #{transformer_model.1} parent=5 // pred_fallthru
        _
      %p1316 = scmp.le.s32.totalorder 1, %s98
      %p1317 = scmp.lt.s32.totalorder %s98, 3
      %p1318 = pnand %p1316, %p1317
      %p1319 = pneg %p1318
      // Predicated region
      $region165: #{transformer_model.1} parent=5 // pred_check
        _
      $region166: #{transformer_model.1} parent=5 // pred_check_branch
        %1321 = sbr.rel (%p1318) target = $region168
      $region167: #{transformer_model.1} parent=5 // pred_region
        %s1322 = ssub.s32 %s98, 1
        // Predicated region
        $region169: #{transformer_model.1} parent=167 // pred_check
          %p1323 = pneg %p145
        $region170: #{transformer_model.1} parent=167 // pred_check_branch
          %1325 = sbr.rel (%p1323) target = $region172
        $region171: #{transformer_model.1} parent=167 // pred_region
          %1326 = dma.done [#allocation4], 16
        $region172: #{transformer_model.1} parent=167 // pred_fallthru
          _
        // Predicated region
        $region173: #{transformer_model.1} parent=167 // pred_check
          %p1327 = pneg %p166
        $region174: #{transformer_model.1} parent=167 // pred_check_branch
          %1329 = sbr.rel (%p1327) target = $region176
        $region175: #{transformer_model.1} parent=167 // pred_region
          %1330 = dma.done [#allocation6], 16
        $region176: #{transformer_model.1} parent=167 // pred_fallthru
          _
        // Predicated region
        $region177: #{transformer_model.1} parent=167 // pred_check
          %p1331 = pneg %p187
        $region178: #{transformer_model.1} parent=167 // pred_check_branch
          %1333 = sbr.rel (%p1331) target = $region180
        $region179: #{transformer_model.1} parent=167 // pred_region
          %1334 = dma.done [#allocation6], 6144
        $region180: #{transformer_model.1} parent=167 // pred_fallthru
          _
        // Predicated region
        $region181: #{transformer_model.1} parent=167 // pred_check
          %p1335 = pneg %p292
        $region182: #{transformer_model.1} parent=167 // pred_check_branch
          %1337 = sbr.rel (%p1335) target = $region184
        $region183: #{transformer_model.1} parent=167 // pred_region
          %1338 = dma.done [#allocation9], 32
        $region184: #{transformer_model.1} parent=167 // pred_fallthru
          _
        // Predicated region
        $region185: #{transformer_model.1} parent=167 // pred_check
          %p1339 = pneg %p313
        $region186: #{transformer_model.1} parent=167 // pred_check_branch
          %1341 = sbr.rel (%p1339) target = $region188
        $region187: #{transformer_model.1} parent=167 // pred_region
          %1342 = dma.done [#allocation9], 32
        $region188: #{transformer_model.1} parent=167 // pred_fallthru
          _
        // Predicated region
        $region189: #{transformer_model.1} parent=167 // pred_check
          %p1343 = pneg %p334
        $region190: #{transformer_model.1} parent=167 // pred_check_branch
          %1345 = sbr.rel (%p1343) target = $region192
        $region191: #{transformer_model.1} parent=167 // pred_region
          %1346 = dma.done [#allocation12], 32
        $region192: #{transformer_model.1} parent=167 // pred_fallthru
          _
        // Predicated region
        $region193: #{transformer_model.1} parent=167 // pred_check
          %p1347 = pneg %p355
        $region194: #{transformer_model.1} parent=167 // pred_check_branch
          %1349 = sbr.rel (%p1347) target = $region196
        $region195: #{transformer_model.1} parent=167 // pred_region
          %1350 = dma.done [#allocation12], 2048
        $region196: #{transformer_model.1} parent=167 // pred_fallthru
          _
        // Predicated region
        $region197: #{transformer_model.1} parent=167 // pred_check
          %p1351 = pneg %p376
        $region198: #{transformer_model.1} parent=167 // pred_check_branch
          %1353 = sbr.rel (%p1351) target = $region200
        $region199: #{transformer_model.1} parent=167 // pred_region
          %1354 = dma.done [#allocation15], 32
        $region200: #{transformer_model.1} parent=167 // pred_fallthru
          _
        // Predicated region
        $region201: #{transformer_model.1} parent=167 // pred_check
          %p1355 = pneg %p397
        $region202: #{transformer_model.1} parent=167 // pred_check_branch
          %1357 = sbr.rel (%p1355) target = $region204
        $region203: #{transformer_model.1} parent=167 // pred_region
          %1358 = dma.done [#allocation15], 2048
        $region204: #{transformer_model.1} parent=167 // pred_fallthru
          _
        // Predicated region
        $region205: #{transformer_model.1} parent=167 // pred_check
          %p1359 = pneg %p418
        $region206: #{transformer_model.1} parent=167 // pred_check_branch
          %1361 = sbr.rel (%p1359) target = $region208
        $region207: #{transformer_model.1} parent=167 // pred_region
          %1362 = dma.done [#allocation18], 32
        $region208: #{transformer_model.1} parent=167 // pred_fallthru
          _
        // Predicated region
        $region209: #{transformer_model.1} parent=167 // pred_check
          %p1363 = pneg %p439
        $region210: #{transformer_model.1} parent=167 // pred_check_branch
          %1365 = sbr.rel (%p1363) target = $region212
        $region211: #{transformer_model.1} parent=167 // pred_region
          %1366 = dma.done [#allocation18], 6144
        $region212: #{transformer_model.1} parent=167 // pred_fallthru
          _
        // Predicated region
        $region213: #{transformer_model.1} parent=167 // pred_check
          %p1367 = pneg %p481
        $region214: #{transformer_model.1} parent=167 // pred_check_branch
          %1369 = sbr.rel (%p1367) target = $region216
        $region215: #{transformer_model.1} parent=167 // pred_region
          %1370 = dma.done [#allocation21], 2048
        $region216: #{transformer_model.1} parent=167 // pred_fallthru
          _
        // Predicated region
        $region217: #{transformer_model.1} parent=167 // pred_check
          %p1371 = pneg %p502
        $region218: #{transformer_model.1} parent=167 // pred_check_branch
          %1373 = sbr.rel (%p1371) target = $region220
        $region219: #{transformer_model.1} parent=167 // pred_region
          %1374 = dma.done [#allocation21], 32
        $region220: #{transformer_model.1} parent=167 // pred_fallthru
          _
        // Predicated region
        $region221: #{transformer_model.1} parent=167 // pred_check
          %p1375 = pneg %p523
        $region222: #{transformer_model.1} parent=167 // pred_check_branch
          %1377 = sbr.rel (%p1375) target = $region224
        $region223: #{transformer_model.1} parent=167 // pred_region
          %1378 = dma.done [#allocation24], 2048
        $region224: #{transformer_model.1} parent=167 // pred_fallthru
          _
        // Predicated region
        $region225: #{transformer_model.1} parent=167 // pred_check
          %p1379 = pneg %p544
        $region226: #{transformer_model.1} parent=167 // pred_check_branch
          %1381 = sbr.rel (%p1379) target = $region228
        $region227: #{transformer_model.1} parent=167 // pred_region
          %1382 = dma.done [#allocation24], 32
        $region228: #{transformer_model.1} parent=167 // pred_fallthru
          _
        // Predicated region
        $region229: #{transformer_model.1} parent=167 // pred_check
          %p1383 = pneg %p565
        $region230: #{transformer_model.1} parent=167 // pred_check_branch
          %1385 = sbr.rel (%p1383) target = $region232
        $region231: #{transformer_model.1} parent=167 // pred_region
          %1386 = dma.done [#allocation27], 4096
        $region232: #{transformer_model.1} parent=167 // pred_fallthru
          _
        // Predicated region
        $region233: #{transformer_model.1} parent=167 // pred_check
          %p1387 = pneg %p607
        $region234: #{transformer_model.1} parent=167 // pred_check_branch
          %1389 = sbr.rel (%p1387) target = $region236
        $region235: #{transformer_model.1} parent=167 // pred_region
          %1390 = dma.done [#allocation27], 2048
        $region236: #{transformer_model.1} parent=167 // pred_fallthru
          _
        // Predicated region
        $region237: #{transformer_model.1} parent=167 // pred_check
          %p1391 = pneg %p628
        $region238: #{transformer_model.1} parent=167 // pred_check_branch
          %1393 = sbr.rel (%p1391) target = $region240
        $region239: #{transformer_model.1} parent=167 // pred_region
          %1394 = dma.done [#allocation30], 32
        $region240: #{transformer_model.1} parent=167 // pred_fallthru
          _
        // Predicated region
        $region241: #{transformer_model.1} parent=167 // pred_check
          %p1395 = pneg %p649
        $region242: #{transformer_model.1} parent=167 // pred_check_branch
          %1397 = sbr.rel (%p1395) target = $region244
        $region243: #{transformer_model.1} parent=167 // pred_region
          %1398 = dma.done [#allocation30], 32
        $region244: #{transformer_model.1} parent=167 // pred_fallthru
          _
        // Predicated region
        $region245: #{transformer_model.1} parent=167 // pred_check
          %p1399 = pneg %p670
        $region246: #{transformer_model.1} parent=167 // pred_check_branch
          %1401 = sbr.rel (%p1399) target = $region248
        $region247: #{transformer_model.1} parent=167 // pred_region
          %1402 = dma.done [#allocation33], 32
        $region248: #{transformer_model.1} parent=167 // pred_fallthru
          _
        // Predicated region
        $region249: #{transformer_model.1} parent=167 // pred_check
          %p1403 = pneg %p691
        $region250: #{transformer_model.1} parent=167 // pred_check_branch
          %1405 = sbr.rel (%p1403) target = $region252
        $region251: #{transformer_model.1} parent=167 // pred_region
          %1406 = dma.done [#allocation33], 32
        $region252: #{transformer_model.1} parent=167 // pred_fallthru
          _
        // Predicated region
        $region253: #{transformer_model.1} parent=167 // pred_check
          %p1407 = pneg %p712
        $region254: #{transformer_model.1} parent=167 // pred_check_branch
          %1409 = sbr.rel (%p1407) target = $region256
        $region255: #{transformer_model.1} parent=167 // pred_region
          %1410 = dma.done [#allocation36], 32
        $region256: #{transformer_model.1} parent=167 // pred_fallthru
          _
        // Predicated region
        $region257: #{transformer_model.1} parent=167 // pred_check
          %p1411 = pneg %p733
        $region258: #{transformer_model.1} parent=167 // pred_check_branch
          %1413 = sbr.rel (%p1411) target = $region260
        $region259: #{transformer_model.1} parent=167 // pred_region
          %1414 = dma.done [#allocation36], 32
        $region260: #{transformer_model.1} parent=167 // pred_fallthru
          _
        // Predicated region
        $region261: #{transformer_model.1} parent=167 // pred_check
          %p1415 = pneg %p754
        $region262: #{transformer_model.1} parent=167 // pred_check_branch
          %1417 = sbr.rel (%p1415) target = $region264
        $region263: #{transformer_model.1} parent=167 // pred_region
          %1418 = dma.done [#allocation39], 32
        $region264: #{transformer_model.1} parent=167 // pred_fallthru
          _
        // Predicated region
        $region265: #{transformer_model.1} parent=167 // pred_check
          %p1419 = pneg %p775
        $region266: #{transformer_model.1} parent=167 // pred_check_branch
          %1421 = sbr.rel (%p1419) target = $region268
        $region267: #{transformer_model.1} parent=167 // pred_region
          %1422 = dma.done [#allocation39], 2048
        $region268: #{transformer_model.1} parent=167 // pred_fallthru
          _
        // Predicated region
        $region269: #{transformer_model.1} parent=167 // pred_check
          %p1423 = pneg %p796
        $region270: #{transformer_model.1} parent=167 // pred_check_branch
          %1425 = sbr.rel (%p1423) target = $region272
        $region271: #{transformer_model.1} parent=167 // pred_region
          %1426 = dma.done [#allocation42], 32
        $region272: #{transformer_model.1} parent=167 // pred_fallthru
          _
        // Predicated region
        $region273: #{transformer_model.1} parent=167 // pred_check
          %p1427 = pneg %p817
        $region274: #{transformer_model.1} parent=167 // pred_check_branch
          %1429 = sbr.rel (%p1427) target = $region276
        $region275: #{transformer_model.1} parent=167 // pred_region
          %1430 = dma.done [#allocation42], 2048
        $region276: #{transformer_model.1} parent=167 // pred_fallthru
          _
        // Predicated region
        $region277: #{transformer_model.1} parent=167 // pred_check
          %p1431 = pneg %p838
        $region278: #{transformer_model.1} parent=167 // pred_check_branch
          %1433 = sbr.rel (%p1431) target = $region280
        $region279: #{transformer_model.1} parent=167 // pred_region
          %1434 = dma.done [#allocation45], 32
        $region280: #{transformer_model.1} parent=167 // pred_fallthru
          _
        %p1435 = scmp.lt.s32.totalorder %s103, 1
        %s1436 = scalar_select %p1435, %s103, 1
        %s1437 = smul.addr %s1436, 8
        %s1438 = scalar_lea.vmem %s1, %s1437
        %p1439 = pneg %p124
        %p1440 = pneg %p121
        %p1441 = pneg %p145
        %p1442 = pneg %p142
        %p1443 = pneg %p166
        %p1444 = pneg %p163
        %p1445 = pneg %p187
        %p1446 = pneg %p184
        %p1447 = pneg %p208
        %p1448 = pneg %p205
        %p1449 = pneg %p229
        %p1450 = pneg %p226
        %p1451 = pneg %p250
        %p1452 = pneg %p247
        %p1453 = pneg %p271
        %p1454 = pneg %p268
        %p1455 = pneg %p292
        %p1456 = pneg %p289
        %p1457 = pneg %p313
        %p1458 = pneg %p310
        %p1459 = pneg %p334
        %p1460 = pneg %p331
        %p1461 = pneg %p355
        %p1462 = pneg %p352
        %p1463 = pneg %p376
        %p1464 = pneg %p373
        %p1465 = pneg %p397
        %p1466 = pneg %p394
        %p1467 = pneg %p418
        %p1468 = pneg %p415
        %p1469 = pneg %p439
        %p1470 = pneg %p436
        %p1471 = pneg %p460
        %p1472 = pneg %p457
        %p1473 = pneg %p481
        %p1474 = pneg %p478
        %p1475 = pneg %p502
        %p1476 = pneg %p499
        %p1477 = pneg %p523
        %p1478 = pneg %p520
        %p1479 = pneg %p544
        %p1480 = pneg %p541
        %p1481 = pneg %p565
        %p1482 = pneg %p562
        %p1483 = pneg %p586
        %p1484 = pneg %p583
        %p1485 = pneg %p607
        %p1486 = pneg %p604
        %p1487 = pneg %p628
        %p1488 = pneg %p625
        %p1489 = pneg %p649
        %p1490 = pneg %p646
        %p1491 = pneg %p670
        %p1492 = pneg %p667
        %p1493 = pneg %p691
        %p1494 = pneg %p688
        %p1495 = pneg %p712
        %p1496 = pneg %p709
        %p1497 = pneg %p733
        %p1498 = pneg %p730
        %p1499 = pneg %p754
        %p1500 = pneg %p751
        %p1501 = pneg %p775
        %p1502 = pneg %p772
        %p1503 = pneg %p796
        %p1504 = pneg %p793
        %p1505 = pneg %p817
        %p1506 = pneg %p814
        %p1507 = pneg %p838
        %p1508 = pneg %p835
        %p1509 = pneg %p859
        %p1510 = pneg %p856
        %p1511 = pneg %p880
        %p1512 = pneg %p877
        %p1513 = pneg %p906
        %p1514 = pneg %p903
        %p1515 = scmp.lt.s32.totalorder %s103, 1
        %s1516 = scalar_select %p1515, %s103, 1
        %s1517 = scalar_lea.vmem %s75, %s1516
        %p1518 = scmp.lt.s32.totalorder %s103, 1
        %s1519 = scalar_select %p1518, %s103, 1
        %s1520 = smul.addr %s1519, 8
        %s1521 = scalar_lea.vmem %s1, %s1520
        %p1522 = scmp.lt.s32.totalorder %s103, 1
        %s1523 = scalar_select %p1522, %s103, 1
        %s1524 = scalar_lea.vmem %s75, %s1523
        %v1526 = vld [vmem:[%s1521] sm:$0xff]
        %v1527 = vld [vmem:[#allocation3] sm:$0x1]
        %1529 = vset.pattern.permute.xlu0 0
        %1530 = vperm.xlu0 %1529, %v1526
        %v1531 = vpop.permute.xlu0 %1530
        %v1534 = vlaneseq
        %v1535 = vshrl.u32 %v1534, 7
        %v1536 = vsub.s32 0, %v1535
        %v1537 = vrot.slane %v1527, %v1536
        %v1539 = vmul.f32 %v1531, %v1537
        %v1540 = vld [vmem:[#allocation5] sm:$0x1]
        %v1542 = vlaneseq
        %v1543 = vshrl.u32 %v1542, 7
        %v1544 = vsub.s32 0, %v1543
        %v1545 = vrot.slane %v1540, %v1544
        %v1547 = vadd.f32 %v1539, %v1545
        %v1548 = vld [vmem:[#allocation7] sm:$0xff]
        %v1549 = vld [vmem:[#allocation7 + $0x8] sm:$0xf]
        %v1550 = vld [vmem:[#allocation7 + $0xc] sm:$0xff]
        %v1551 = vld [vmem:[#allocation7 + $0x14] sm:$0xf]
        %v1552 = vld [vmem:[#allocation7 + $0x18] sm:$0xff]
        %v1553 = vld [vmem:[#allocation7 + $0x20] sm:$0xf]
        %v1554 = vld [vmem:[#allocation7 + $0x24] sm:$0xff]
        %v1555 = vld [vmem:[#allocation7 + $0x2c] sm:$0xf]
        %v1556 = vld [vmem:[#allocation7 + $0x30] sm:$0xff]
        %v1557 = vld [vmem:[#allocation7 + $0x38] sm:$0xf]
        %v1558 = vld [vmem:[#allocation7 + $0x3c] sm:$0xff]
        %v1559 = vld [vmem:[#allocation7 + $0x44] sm:$0xf]
        %v1560 = vld [vmem:[#allocation7 + $0x48] sm:$0xff]
        %v1561 = vld [vmem:[#allocation7 + $0x50] sm:$0xf]
        %v1562 = vld [vmem:[#allocation7 + $0x54] sm:$0xff]
        %v1563 = vld [vmem:[#allocation7 + $0x5c] sm:$0xf]
        %v1564 = vld [vmem:[#allocation7 + $0x60] sm:$0xff]
        %v1565 = vld [vmem:[#allocation7 + $0x68] sm:$0xf]
        %v1566 = vld [vmem:[#allocation7 + $0x6c] sm:$0xff]
        %v1567 = vld [vmem:[#allocation7 + $0x74] sm:$0xf]
        %v1568 = vld [vmem:[#allocation7 + $0x78] sm:$0xff]
        %v1569 = vld [vmem:[#allocation7 + $0x80] sm:$0xf]
        %v1570 = vld [vmem:[#allocation7 + $0x84] sm:$0xff]
        %v1571 = vld [vmem:[#allocation7 + $0x8c] sm:$0xf]
        %v1572 = vld [vmem:[#allocation7 + $0x90] sm:$0xff]
        %v1573 = vld [vmem:[#allocation7 + $0x98] sm:$0xf]
        %v1574 = vld [vmem:[#allocation7 + $0x9c] sm:$0xff]
        %v1575 = vld [vmem:[#allocation7 + $0xa4] sm:$0xf]
        %v1576 = vld [vmem:[#allocation7 + $0xa8] sm:$0xff]
        %v1577 = vld [vmem:[#allocation7 + $0xb0] sm:$0xf]
        %v1578 = vld [vmem:[#allocation7 + $0xb4] sm:$0xff]
        %v1579 = vld [vmem:[#allocation7 + $0xbc] sm:$0xf]
        %v1580 = vld [vmem:[%s9] sm:$0x7]
        %v1581 = vld [vmem:[%s11] sm:$0xf]
        %v1582 = vld [vmem:[%s11 + $0x4] sm:$0xf]
        %v1583 = vld [vmem:[%s11 + $0x8] sm:$0xf]
        %v1584 = vld [vmem:[%s11 + $0xc] sm:$0xf]
        %v1585 = vld [vmem:[%s11 + $0x10] sm:$0xf]
        %v1586 = vld [vmem:[%s11 + $0x14] sm:$0xf]
        %v1587 = vld [vmem:[%s11 + $0x18] sm:$0xf]
        %v1588 = vld [vmem:[%s11 + $0x1c] sm:$0xf]
        %v1589 = vld [vmem:[%s11 + $0x20] sm:$0xf]
        %v1590 = vld [vmem:[%s11 + $0x24] sm:$0xf]
        %v1591 = vld [vmem:[%s11 + $0x28] sm:$0xf]
        %v1592 = vld [vmem:[%s11 + $0x2c] sm:$0xf]
        %v1593 = vld [vmem:[%s11 + $0x30] sm:$0xf]
        %v1594 = vld [vmem:[%s11 + $0x34] sm:$0xf]
        %v1595 = vld [vmem:[%s11 + $0x38] sm:$0xf]
        %v1596 = vld [vmem:[%s11 + $0x3c] sm:$0xf]
        %v1597 = vld [vmem:[%s13] sm:$0x1]
        %v1598 = vpack.c.bf16 %v1547, %v1547
        %v1600 = vlaneseq
        %v1601 = vshrl.u32 %v1600, 7
        %v1602 = vsub.s32 0, %v1601
        %v1603 = vrot.slane %v1580, %v1602
        %v1604 = vlaneseq
        %v1605 = vshrl.u32 %v1604, 7
        %v1606 = vsub.s32 1, %v1605
        %v1607 = vrot.slane %v1580, %v1606
        %v1608 = vlaneseq
        %v1609 = vshrl.u32 %v1608, 7
        %v1610 = vsub.s32 2, %v1609
        %v1611 = vrot.slane %v1580, %v1610
        %v1647 = vunpack.c.l.b16 %v1548
        %v1648 = vunpack.c.h.b16 %v1548
        %v1649 = vunpack.c.l.b16 %v1549
        %v1650 = vunpack.c.l.b16 %v1550
        %v1651 = vunpack.c.h.b16 %v1550
        %v1652 = vunpack.c.l.b16 %v1551
        %v1653 = vunpack.c.l.b16 %v1552
        %v1654 = vunpack.c.h.b16 %v1552
        %v1655 = vunpack.c.l.b16 %v1553
        %v1656 = vunpack.c.l.b16 %v1554
        %v1657 = vunpack.c.h.b16 %v1554
        %v1658 = vunpack.c.l.b16 %v1555
        %v1659 = vunpack.c.l.b16 %v1556
        %v1660 = vunpack.c.h.b16 %v1556
        %v1661 = vunpack.c.l.b16 %v1557
        %v1662 = vunpack.c.l.b16 %v1558
        %v1663 = vunpack.c.h.b16 %v1558
        %v1664 = vunpack.c.l.b16 %v1559
        %v1665 = vunpack.c.l.b16 %v1560
        %v1666 = vunpack.c.h.b16 %v1560
        %v1667 = vunpack.c.l.b16 %v1561
        %v1668 = vunpack.c.l.b16 %v1562
        %v1669 = vunpack.c.h.b16 %v1562
        %v1670 = vunpack.c.l.b16 %v1563
        %v1671 = vunpack.c.l.b16 %v1564
        %v1672 = vunpack.c.h.b16 %v1564
        %v1673 = vunpack.c.l.b16 %v1565
        %v1674 = vunpack.c.l.b16 %v1566
        %v1675 = vunpack.c.h.b16 %v1566
        %v1676 = vunpack.c.l.b16 %v1567
        %v1677 = vunpack.c.l.b16 %v1568
        %v1678 = vunpack.c.h.b16 %v1568
        %v1679 = vunpack.c.l.b16 %v1569
        %v1680 = vunpack.c.l.b16 %v1570
        %v1681 = vunpack.c.h.b16 %v1570
        %v1682 = vunpack.c.l.b16 %v1571
        %v1683 = vunpack.c.l.b16 %v1572
        %v1684 = vunpack.c.h.b16 %v1572
        %v1685 = vunpack.c.l.b16 %v1573
        %v1686 = vunpack.c.l.b16 %v1574
        %v1687 = vunpack.c.h.b16 %v1574
        %v1688 = vunpack.c.l.b16 %v1575
        %v1689 = vunpack.c.l.b16 %v1576
        %v1690 = vunpack.c.h.b16 %v1576
        %v1691 = vunpack.c.l.b16 %v1577
        %v1692 = vunpack.c.l.b16 %v1578
        %v1693 = vunpack.c.h.b16 %v1578
        %v1694 = vunpack.c.l.b16 %v1579
        %v1695 = vpack.c.b16 %v1650, %v1647
        %v1696 = vpack.c.b16 %v1651, %v1648
        %v1697 = vpack.c.b16 %v1652, %v1649
        %v1698 = vpack.c.b16 %v1656, %v1653
        %v1699 = vpack.c.b16 %v1657, %v1654
        %v1700 = vpack.c.b16 %v1658, %v1655
        %v1701 = vpack.c.b16 %v1662, %v1659
        %v1702 = vpack.c.b16 %v1663, %v1660
        %v1703 = vpack.c.b16 %v1664, %v1661
        %v1704 = vpack.c.b16 %v1668, %v1665
        %v1705 = vpack.c.b16 %v1669, %v1666
        %v1706 = vpack.c.b16 %v1670, %v1667
        %v1707 = vpack.c.b16 %v1674, %v1671
        %v1708 = vpack.c.b16 %v1675, %v1672
        %v1709 = vpack.c.b16 %v1676, %v1673
        %v1710 = vpack.c.b16 %v1680, %v1677
        %v1711 = vpack.c.b16 %v1681, %v1678
        %v1712 = vpack.c.b16 %v1682, %v1679
        %v1713 = vpack.c.b16 %v1686, %v1683
        %v1714 = vpack.c.b16 %v1687, %v1684
        %v1715 = vpack.c.b16 %v1688, %v1685
        %v1716 = vpack.c.b16 %v1692, %v1689
        %v1717 = vpack.c.b16 %v1693, %v1690
        %v1718 = vpack.c.b16 %v1694, %v1691
        %1743 = vmatprep.subr.bf16.mxu0 %v1717
        %1744 = vmatpush1.bf16.msra.mxu0 %v1716
        %1745 = vmatprep.subr.bf16.mxu0 %v1714
        %1746 = vmatpush1.bf16.msra.mxu0 %v1713
        %1747 = vmatprep.subr.bf16.mxu0 %v1711
        %1748 = vmatpush1.bf16.msra.mxu0 %v1710
        %1749 = vmatprep.subr.bf16.mxu0 %v1708
        %1750 = vmatpush1.bf16.msra.mxu0 %v1707
        %1751 = vmatprep.subr.bf16.mxu0 %v1705
        %1752 = vmatpush1.bf16.msra.mxu0 %v1704
        %1753 = vmatprep.subr.bf16.mxu0 %v1702
        %1754 = vmatpush1.bf16.msra.mxu0 %v1701
        %1755 = vmatprep.subr.bf16.mxu0 %v1699
        %1756 = vmatpush1.bf16.msra.mxu0 %v1698
        %1757 = vmatprep.subr.bf16.mxu0 %v1696
        %1758 = vmatpush1.bf16.msra.mxu0 %v1695
        %1759 = vmatprep.subr.bf16.mxu0 0
        %1760 = vmatpush2.bf16.msra.mxu0 0
        %1761 = vmatprep.subr.bf16.mxu0 0
        %1762 = vmatpush2.bf16.msra.mxu0 0
        %1763 = vmatprep.subr.bf16.mxu0 0
        %1764 = vmatpush2.bf16.msra.mxu0 0
        %1765 = vmatprep.subr.bf16.mxu0 0
        %1766 = vmatpush2.bf16.msra.mxu0 0
        %1767 = vmatprep.subr.bf16.mxu0 0
        %1768 = vmatpush2.bf16.msra.mxu0 0
        %1769 = vmatprep.subr.bf16.mxu0 0
        %1770 = vmatpush2.bf16.msra.mxu0 0
        %1771 = vmatprep.subr.bf16.mxu0 0
        %1772 = vmatpush2.bf16.msra.mxu0 0
        %1773 = vmatprep.subr.bf16.mxu0 0
        %1774 = vmatpush2.bf16.msra.mxu0 0
        %1775 = vmatprep.mubr.bf16.mxu0 0
        %1776 = vmatmul.mubr.bf16.gmra.mxu0 %v1598
        %v1777 = vpop.f32.mrf.mxu0
        %v1778 = vadd.f32 %v1603, %v1777
        %v1779 = vpop.f32.mrf.mxu0
        %v1780 = vadd.f32 %v1607, %v1779
        %v1781 = vpop.f32.mrf.mxu0
        %v1782 = vpop.f32.mrf.mxu0
        %1783 = vdwg.mxu0
        %1784 = vmatprep.subr.bf16.mxu0 0
        %1785 = vmatpush1.bf16.msra.mxu0 %v1718
        %1786 = vmatprep.subr.bf16.mxu0 0
        %1787 = vmatpush1.bf16.msra.mxu0 %v1715
        %1788 = vmatprep.subr.bf16.mxu0 0
        %1789 = vmatpush1.bf16.msra.mxu0 %v1712
        %1790 = vmatprep.subr.bf16.mxu0 0
        %1791 = vmatpush1.bf16.msra.mxu0 %v1709
        %1792 = vmatprep.subr.bf16.mxu0 0
        %1793 = vmatpush1.bf16.msra.mxu0 %v1706
        %1794 = vmatprep.subr.bf16.mxu0 0
        %1795 = vmatpush1.bf16.msra.mxu0 %v1703
        %1796 = vmatprep.subr.bf16.mxu0 0
        %1797 = vmatpush1.bf16.msra.mxu0 %v1700
        %1798 = vmatprep.subr.bf16.mxu0 0
        %1799 = vmatpush1.bf16.msra.mxu0 %v1697
        %1800 = vmatprep.subr.bf16.mxu0 0
        %1801 = vmatpush2.bf16.msra.mxu0 0
        %1802 = vmatprep.subr.bf16.mxu0 0
        %1803 = vmatpush2.bf16.msra.mxu0 0
        %1804 = vmatprep.subr.bf16.mxu0 0
        %1805 = vmatpush2.bf16.msra.mxu0 0
        %1806 = vmatprep.subr.bf16.mxu0 0
        %1807 = vmatpush2.bf16.msra.mxu0 0
        %1808 = vmatprep.subr.bf16.mxu0 0
        %1809 = vmatpush2.bf16.msra.mxu0 0
        %1810 = vmatprep.subr.bf16.mxu0 0
        %1811 = vmatpush2.bf16.msra.mxu0 0
        %1812 = vmatprep.subr.bf16.mxu0 0
        %1813 = vmatpush2.bf16.msra.mxu0 0
        %1814 = vmatprep.subr.bf16.mxu0 0
        %1815 = vmatpush2.bf16.msra.mxu0 0
        %1816 = vmatprep.mubr.bf16.mxu0 0
        %1817 = vmatmul.mubr.bf16.gmra.mxu0 %v1598
        %v1818 = vpop.f32.mrf.mxu0
        %v1819 = vadd.f32 %v1611, %v1818
        %v1820 = vpop.f32.mrf.mxu0
        %v1821 = vpop.f32.mrf.mxu0
        %v1822 = vpop.f32.mrf.mxu0
        %1823 = vdwg.mxu0
        %v1824 = vmul.f32 %v1778, 0.17677669
        %v1825 = vpack.c.bf16 %v1824, %v1824
        %v1826 = vpack.c.bf16 %v1780, %v1780
        %v1827 = vpack.c.bf16 %v1819, %v1819
        %vm1828 = vcmask 261120
        %v1830 = vsel %vm1828, %v1825, 0
        %v1833 = vsel %vm1828, %v1826, 0
        %1835 = vmatprep.subr.bf16.mxu0 0
        %1836 = vmatpush1.bf16.xpose.msra.mxu0 0
        %1837 = vmatprep.subr.bf16.mxu0 0
        %1838 = vmatpush1.bf16.xpose.msra.mxu0 0
        %1839 = vmatprep.subr.bf16.mxu0 0
        %1840 = vmatpush1.bf16.xpose.msra.mxu0 0
        %1841 = vmatprep.subr.bf16.mxu0 0
        %1842 = vmatpush1.bf16.xpose.msra.mxu0 0
        %1843 = vmatprep.subr.bf16.mxu0 0
        %1844 = vmatpush1.bf16.xpose.msra.mxu0 0
        %1845 = vmatprep.subr.bf16.mxu0 0
        %1846 = vmatpush1.bf16.xpose.msra.mxu0 0
        %1847 = vmatprep.subr.bf16.mxu0 0
        %1848 = vmatpush1.bf16.xpose.msra.mxu0 0
        %1849 = vmatprep.subr.bf16.mxu0 0
        %1850 = vmatpush1.bf16.xpose.msra.mxu0 %v1833
        %1851 = vmatprep.subr.bf16.mxu0 0
        %1852 = vmatpush2.bf16.xpose.msra.mxu0 0
        %1853 = vmatprep.subr.bf16.mxu0 0
        %1854 = vmatpush2.bf16.xpose.msra.mxu0 0
        %1855 = vmatprep.subr.bf16.mxu0 0
        %1856 = vmatpush2.bf16.xpose.msra.mxu0 0
        %1857 = vmatprep.subr.bf16.mxu0 0
        %1858 = vmatpush2.bf16.xpose.msra.mxu0 0
        %1859 = vmatprep.subr.bf16.mxu0 0
        %1860 = vmatpush2.bf16.xpose.msra.mxu0 0
        %1861 = vmatprep.subr.bf16.mxu0 0
        %1862 = vmatpush2.bf16.xpose.msra.mxu0 0
        %1863 = vmatprep.subr.bf16.mxu0 0
        %1864 = vmatpush2.bf16.xpose.msra.mxu0 0
        %1865 = vmatprep.subr.bf16.mxu0 0
        %1866 = vmatpush2.bf16.xpose.msra.mxu0 0
        %1867 = vmatprep.mubr.bf16.mxu0 0
        %1868 = vmatmul.mubr.bf16.gmra.mxu0 %v1830
        %v1869 = vpop.f32.mrf.mxu0
        %v1870 = vadd.f32 0.0, %v1869
        %v1871 = vpop.f32.mrf.mxu0
        %v1872 = vpop.f32.mrf.mxu0
        %v1873 = vpop.f32.mrf.mxu0
        %1874 = vdwg.mxu0
        %vm1875 = vcmask 64512
        %v1876 = vsel %vm1875, %v1870, -inf
        %1877 = vmax.xlane.f32.xlu0 %v1876
        %v1878 = vpop.xlane.xlu0 %1877
        %v1879 = vsub.f32 %v1870, %v1878
        %v1880 = vmul.f32 %v1879, 1.442695
        %v1881 = vpow.pop %v1880
        %v1882 = vsel %vm1875, %v1881, 0.0
        %1883 = vadd.xlane.f32.xlu0 %v1882
        %v1884 = vpop.xlane.xlu0 %1883
        %v1885 = vrcp.pop %v1884
        %v1886 = vmul.f32 %v1881, %v1885
        %v1887 = vpack.c.bf16 %v1886, %v1886
        %v1889 = vsel %vm1875, %v1887, 0
        %vm1891 = vcmask 1043456
        %v1893 = vsel %vm1891, %v1827, 0
        %1895 = vmatprep.subr.bf16.mxu0 0
        %1896 = vmatpush1.bf16.msra.mxu0 0
        %1897 = vmatprep.subr.bf16.mxu0 0
        %1898 = vmatpush1.bf16.msra.mxu0 0
        %1899 = vmatprep.subr.bf16.mxu0 0
        %1900 = vmatpush1.bf16.msra.mxu0 0
        %1901 = vmatprep.subr.bf16.mxu0 0
        %1902 = vmatpush1.bf16.msra.mxu0 0
        %1903 = vmatprep.subr.bf16.mxu0 0
        %1904 = vmatpush1.bf16.msra.mxu0 0
        %1905 = vmatprep.subr.bf16.mxu0 0
        %1906 = vmatpush1.bf16.msra.mxu0 0
        %1907 = vmatprep.subr.bf16.mxu0 0
        %1908 = vmatpush1.bf16.msra.mxu0 0
        %1909 = vmatprep.subr.bf16.mxu0 0
        %1910 = vmatpush1.bf16.msra.mxu0 %v1893
        %1911 = vmatprep.subr.bf16.mxu0 0
        %1912 = vmatpush2.bf16.msra.mxu0 0
        %1913 = vmatprep.subr.bf16.mxu0 0
        %1914 = vmatpush2.bf16.msra.mxu0 0
        %1915 = vmatprep.subr.bf16.mxu0 0
        %1916 = vmatpush2.bf16.msra.mxu0 0
        %1917 = vmatprep.subr.bf16.mxu0 0
        %1918 = vmatpush2.bf16.msra.mxu0 0
        %1919 = vmatprep.subr.bf16.mxu0 0
        %1920 = vmatpush2.bf16.msra.mxu0 0
        %1921 = vmatprep.subr.bf16.mxu0 0
        %1922 = vmatpush2.bf16.msra.mxu0 0
        %1923 = vmatprep.subr.bf16.mxu0 0
        %1924 = vmatpush2.bf16.msra.mxu0 0
        %1925 = vmatprep.subr.bf16.mxu0 0
        %1926 = vmatpush2.bf16.msra.mxu0 0
        %1927 = vmatprep.mubr.bf16.mxu0 0
        %1928 = vmatmul.mubr.bf16.gmra.mxu0 %v1889
        %v1929 = vpop.f32.mrf.mxu0
        %v1930 = vadd.f32 0.0, %v1929
        %v1931 = vpop.f32.mrf.mxu0
        %v1932 = vpop.f32.mrf.mxu0
        %v1933 = vpop.f32.mrf.mxu0
        %1934 = vdwg.mxu0
        %v1935 = vpack.c.bf16 %v1930, %v1930
        %1937 = vrot.lane.b32.xlu0 %v1825, 96
        %v1938 = vpop.permute.xlu0 %1937
        %1940 = vrot.lane.b32.xlu0 %v1826, 96
        %v1941 = vpop.permute.xlu0 %1940
        %v1943 = vsel %vm1828, %v1938, 0
        %v1946 = vsel %vm1828, %v1941, 0
        %1948 = vmatprep.subr.bf16.mxu0 0
        %1949 = vmatpush1.bf16.xpose.msra.mxu0 0
        %1950 = vmatprep.subr.bf16.mxu0 0
        %1951 = vmatpush1.bf16.xpose.msra.mxu0 0
        %1952 = vmatprep.subr.bf16.mxu0 0
        %1953 = vmatpush1.bf16.xpose.msra.mxu0 0
        %1954 = vmatprep.subr.bf16.mxu0 0
        %1955 = vmatpush1.bf16.xpose.msra.mxu0 0
        %1956 = vmatprep.subr.bf16.mxu0 0
        %1957 = vmatpush1.bf16.xpose.msra.mxu0 0
        %1958 = vmatprep.subr.bf16.mxu0 0
        %1959 = vmatpush1.bf16.xpose.msra.mxu0 0
        %1960 = vmatprep.subr.bf16.mxu0 0
        %1961 = vmatpush1.bf16.xpose.msra.mxu0 0
        %1962 = vmatprep.subr.bf16.mxu0 0
        %1963 = vmatpush1.bf16.xpose.msra.mxu0 %v1946
        %1964 = vmatprep.subr.bf16.mxu0 0
        %1965 = vmatpush2.bf16.xpose.msra.mxu0 0
        %1966 = vmatprep.subr.bf16.mxu0 0
        %1967 = vmatpush2.bf16.xpose.msra.mxu0 0
        %1968 = vmatprep.subr.bf16.mxu0 0
        %1969 = vmatpush2.bf16.xpose.msra.mxu0 0
        %1970 = vmatprep.subr.bf16.mxu0 0
        %1971 = vmatpush2.bf16.xpose.msra.mxu0 0
        %1972 = vmatprep.subr.bf16.mxu0 0
        %1973 = vmatpush2.bf16.xpose.msra.mxu0 0
        %1974 = vmatprep.subr.bf16.mxu0 0
        %1975 = vmatpush2.bf16.xpose.msra.mxu0 0
        %1976 = vmatprep.subr.bf16.mxu0 0
        %1977 = vmatpush2.bf16.xpose.msra.mxu0 0
        %1978 = vmatprep.subr.bf16.mxu0 0
        %1979 = vmatpush2.bf16.xpose.msra.mxu0 0
        %1980 = vmatprep.mubr.bf16.mxu0 0
        %1981 = vmatmul.mubr.bf16.gmra.mxu0 %v1943
        %v1982 = vpop.f32.mrf.mxu0
        %v1983 = vadd.f32 0.0, %v1982
        %v1984 = vpop.f32.mrf.mxu0
        %v1985 = vpop.f32.mrf.mxu0
        %v1986 = vpop.f32.mrf.mxu0
        %1987 = vdwg.mxu0
        %v1988 = vsel %vm1875, %v1983, -inf
        %1989 = vmax.xlane.f32.xlu0 %v1988
        %v1990 = vpop.xlane.xlu0 %1989
        %v1991 = vsub.f32 %v1983, %v1990
        %v1992 = vmul.f32 %v1991, 1.442695
        %v1993 = vpow.pop %v1992
        %v1994 = vsel %vm1875, %v1993, 0.0
        %1995 = vadd.xlane.f32.xlu0 %v1994
        %v1996 = vpop.xlane.xlu0 %1995
        %v1997 = vrcp.pop %v1996
        %v1998 = vmul.f32 %v1993, %v1997
        %v1999 = vpack.c.bf16 %v1998, %v1998
        %2001 = vrot.lane.b32.xlu0 %v1827, 96
        %v2002 = vpop.permute.xlu0 %2001
        %v2004 = vsel %vm1875, %v1999, 0
        %v2007 = vsel %vm1891, %v2002, 0
        %2009 = vmatprep.subr.bf16.mxu0 0
        %2010 = vmatpush1.bf16.msra.mxu0 0
        %2011 = vmatprep.subr.bf16.mxu0 0
        %2012 = vmatpush1.bf16.msra.mxu0 0
        %2013 = vmatprep.subr.bf16.mxu0 0
        %2014 = vmatpush1.bf16.msra.mxu0 0
        %2015 = vmatprep.subr.bf16.mxu0 0
        %2016 = vmatpush1.bf16.msra.mxu0 0
        %2017 = vmatprep.subr.bf16.mxu0 0
        %2018 = vmatpush1.bf16.msra.mxu0 0
        %2019 = vmatprep.subr.bf16.mxu0 0
        %2020 = vmatpush1.bf16.msra.mxu0 0
        %2021 = vmatprep.subr.bf16.mxu0 0
        %2022 = vmatpush1.bf16.msra.mxu0 0
        %2023 = vmatprep.subr.bf16.mxu0 0
        %2024 = vmatpush1.bf16.msra.mxu0 %v2007
        %2025 = vmatprep.subr.bf16.mxu0 0
        %2026 = vmatpush2.bf16.msra.mxu0 0
        %2027 = vmatprep.subr.bf16.mxu0 0
        %2028 = vmatpush2.bf16.msra.mxu0 0
        %2029 = vmatprep.subr.bf16.mxu0 0
        %2030 = vmatpush2.bf16.msra.mxu0 0
        %2031 = vmatprep.subr.bf16.mxu0 0
        %2032 = vmatpush2.bf16.msra.mxu0 0
        %2033 = vmatprep.subr.bf16.mxu0 0
        %2034 = vmatpush2.bf16.msra.mxu0 0
        %2035 = vmatprep.subr.bf16.mxu0 0
        %2036 = vmatpush2.bf16.msra.mxu0 0
        %2037 = vmatprep.subr.bf16.mxu0 0
        %2038 = vmatpush2.bf16.msra.mxu0 0
        %2039 = vmatprep.subr.bf16.mxu0 0
        %2040 = vmatpush2.bf16.msra.mxu0 0
        %2041 = vmatprep.mubr.bf16.mxu0 0
        %2042 = vmatmul.mubr.bf16.gmra.mxu0 %v2004
        %v2043 = vpop.f32.mrf.mxu0
        %v2044 = vadd.f32 0.0, %v2043
        %v2045 = vpop.f32.mrf.mxu0
        %v2046 = vpop.f32.mrf.mxu0
        %v2047 = vpop.f32.mrf.mxu0
        %2048 = vdwg.mxu0
        %v2049 = vpack.c.bf16 %v2044, %v2044
        %v2054 = vunpack.c.l.b16 %v1585
        %v2055 = vunpack.c.l.b16 %v1586
        %v2056 = vunpack.c.l.b16 %v1587
        %v2057 = vunpack.c.l.b16 %v1588
        %v2058 = vpack.c.b16 %v2055, %v2054
        %v2059 = vpack.c.b16 %v2057, %v2056
        %v2063 = vsel %vm1828, %v2049, 0
        %2065 = vmatprep.subr.bf16.mxu0 0
        %2066 = vmatpush1.bf16.msra.mxu0 0
        %2067 = vmatprep.subr.bf16.mxu0 0
        %2068 = vmatpush1.bf16.msra.mxu0 0
        %2069 = vmatprep.subr.bf16.mxu0 0
        %2070 = vmatpush1.bf16.msra.mxu0 0
        %2071 = vmatprep.subr.bf16.mxu0 0
        %2072 = vmatpush1.bf16.msra.mxu0 0
        %2073 = vmatprep.subr.bf16.mxu0 0
        %2074 = vmatpush1.bf16.msra.mxu0 0
        %2075 = vmatprep.subr.bf16.mxu0 0
        %2076 = vmatpush1.bf16.msra.mxu0 0
        %2077 = vmatprep.subr.bf16.mxu0 0
        %2078 = vmatpush1.bf16.msra.mxu0 %v2059
        %2079 = vmatprep.subr.bf16.mxu0 0
        %2080 = vmatpush1.bf16.msra.mxu0 %v2058
        %2081 = vmatprep.subr.bf16.mxu0 0
        %2082 = vmatpush2.bf16.msra.mxu0 0
        %2083 = vmatprep.subr.bf16.mxu0 0
        %2084 = vmatpush2.bf16.msra.mxu0 0
        %2085 = vmatprep.subr.bf16.mxu0 0
        %2086 = vmatpush2.bf16.msra.mxu0 0
        %2087 = vmatprep.subr.bf16.mxu0 0
        %2088 = vmatpush2.bf16.msra.mxu0 0
        %2089 = vmatprep.subr.bf16.mxu0 0
        %2090 = vmatpush2.bf16.msra.mxu0 0
        %2091 = vmatprep.subr.bf16.mxu0 0
        %2092 = vmatpush2.bf16.msra.mxu0 0
        %2093 = vmatprep.subr.bf16.mxu0 0
        %2094 = vmatpush2.bf16.msra.mxu0 0
        %2095 = vmatprep.subr.bf16.mxu0 0
        %2096 = vmatpush2.bf16.msra.mxu0 0
        %2097 = vmatprep.mubr.bf16.mxu0 0
        %2098 = vmatmul.mubr.bf16.gmra.mxu0 %v2063
        %v2099 = vpop.f32.mrf.mxu0
        %v2100 = vadd.f32 0.0, %v2099
        %v2101 = vpop.f32.mrf.mxu0
        %v2102 = vpop.f32.mrf.mxu0
        %v2103 = vpop.f32.mrf.mxu0
        %2104 = vdwg.mxu0
        %v2109 = vunpack.c.l.b16 %v1581
        %v2110 = vunpack.c.l.b16 %v1582
        %v2111 = vunpack.c.l.b16 %v1583
        %v2112 = vunpack.c.l.b16 %v1584
        %v2113 = vpack.c.b16 %v2110, %v2109
        %v2114 = vpack.c.b16 %v2112, %v2111
        %v2118 = vsel %vm1828, %v1935, 0
        %2120 = vmatprep.subr.bf16.mxu0 0
        %2121 = vmatpush1.bf16.msra.mxu0 0
        %2122 = vmatprep.subr.bf16.mxu0 0
        %2123 = vmatpush1.bf16.msra.mxu0 0
        %2124 = vmatprep.subr.bf16.mxu0 0
        %2125 = vmatpush1.bf16.msra.mxu0 0
        %2126 = vmatprep.subr.bf16.mxu0 0
        %2127 = vmatpush1.bf16.msra.mxu0 0
        %2128 = vmatprep.subr.bf16.mxu0 0
        %2129 = vmatpush1.bf16.msra.mxu0 0
        %2130 = vmatprep.subr.bf16.mxu0 0
        %2131 = vmatpush1.bf16.msra.mxu0 0
        %2132 = vmatprep.subr.bf16.mxu0 0
        %2133 = vmatpush1.bf16.msra.mxu0 %v2114
        %2134 = vmatprep.subr.bf16.mxu0 0
        %2135 = vmatpush1.bf16.msra.mxu0 %v2113
        %2136 = vmatprep.subr.bf16.mxu0 0
        %2137 = vmatpush2.bf16.msra.mxu0 0
        %2138 = vmatprep.subr.bf16.mxu0 0
        %2139 = vmatpush2.bf16.msra.mxu0 0
        %2140 = vmatprep.subr.bf16.mxu0 0
        %2141 = vmatpush2.bf16.msra.mxu0 0
        %2142 = vmatprep.subr.bf16.mxu0 0
        %2143 = vmatpush2.bf16.msra.mxu0 0
        %2144 = vmatprep.subr.bf16.mxu0 0
        %2145 = vmatpush2.bf16.msra.mxu0 0
        %2146 = vmatprep.subr.bf16.mxu0 0
        %2147 = vmatpush2.bf16.msra.mxu0 0
        %2148 = vmatprep.subr.bf16.mxu0 0
        %2149 = vmatpush2.bf16.msra.mxu0 0
        %2150 = vmatprep.subr.bf16.mxu0 0
        %2151 = vmatpush2.bf16.msra.mxu0 0
        %2152 = vmatprep.mubr.bf16.mxu0 0
        %2153 = vmatmul.mubr.bf16.gmra.mxu0 %v2118
        %v2154 = vpop.f32.mrf.mxu0
        %v2155 = vadd.f32 %v2100, %v2154
        %v2156 = vpop.f32.mrf.mxu0
        %v2157 = vpop.f32.mrf.mxu0
        %v2158 = vpop.f32.mrf.mxu0
        %2159 = vdwg.mxu0
        %2160 = vrot.lane.b32.xlu0 %v1825, 64
        %v2161 = vpop.permute.xlu0 %2160
        %2162 = vrot.lane.b32.xlu0 %v1826, 64
        %v2163 = vpop.permute.xlu0 %2162
        %v2165 = vsel %vm1828, %v2161, 0
        %v2168 = vsel %vm1828, %v2163, 0
        %2170 = vmatprep.subr.bf16.mxu0 0
        %2171 = vmatpush1.bf16.xpose.msra.mxu0 0
        %2172 = vmatprep.subr.bf16.mxu0 0
        %2173 = vmatpush1.bf16.xpose.msra.mxu0 0
        %2174 = vmatprep.subr.bf16.mxu0 0
        %2175 = vmatpush1.bf16.xpose.msra.mxu0 0
        %2176 = vmatprep.subr.bf16.mxu0 0
        %2177 = vmatpush1.bf16.xpose.msra.mxu0 0
        %2178 = vmatprep.subr.bf16.mxu0 0
        %2179 = vmatpush1.bf16.xpose.msra.mxu0 0
        %2180 = vmatprep.subr.bf16.mxu0 0
        %2181 = vmatpush1.bf16.xpose.msra.mxu0 0
        %2182 = vmatprep.subr.bf16.mxu0 0
        %2183 = vmatpush1.bf16.xpose.msra.mxu0 0
        %2184 = vmatprep.subr.bf16.mxu0 0
        %2185 = vmatpush1.bf16.xpose.msra.mxu0 %v2168
        %2186 = vmatprep.subr.bf16.mxu0 0
        %2187 = vmatpush2.bf16.xpose.msra.mxu0 0
        %2188 = vmatprep.subr.bf16.mxu0 0
        %2189 = vmatpush2.bf16.xpose.msra.mxu0 0
        %2190 = vmatprep.subr.bf16.mxu0 0
        %2191 = vmatpush2.bf16.xpose.msra.mxu0 0
        %2192 = vmatprep.subr.bf16.mxu0 0
        %2193 = vmatpush2.bf16.xpose.msra.mxu0 0
        %2194 = vmatprep.subr.bf16.mxu0 0
        %2195 = vmatpush2.bf16.xpose.msra.mxu0 0
        %2196 = vmatprep.subr.bf16.mxu0 0
        %2197 = vmatpush2.bf16.xpose.msra.mxu0 0
        %2198 = vmatprep.subr.bf16.mxu0 0
        %2199 = vmatpush2.bf16.xpose.msra.mxu0 0
        %2200 = vmatprep.subr.bf16.mxu0 0
        %2201 = vmatpush2.bf16.xpose.msra.mxu0 0
        %2202 = vmatprep.mubr.bf16.mxu0 0
        %2203 = vmatmul.mubr.bf16.gmra.mxu0 %v2165
        %v2204 = vpop.f32.mrf.mxu0
        %v2205 = vadd.f32 0.0, %v2204
        %v2206 = vpop.f32.mrf.mxu0
        %v2207 = vpop.f32.mrf.mxu0
        %v2208 = vpop.f32.mrf.mxu0
        %2209 = vdwg.mxu0
        %v2210 = vsel %vm1875, %v2205, -inf
        %2211 = vmax.xlane.f32.xlu0 %v2210
        %v2212 = vpop.xlane.xlu0 %2211
        %v2213 = vsub.f32 %v2205, %v2212
        %v2214 = vmul.f32 %v2213, 1.442695
        %v2215 = vpow.pop %v2214
        %v2216 = vsel %vm1875, %v2215, 0.0
        %2217 = vadd.xlane.f32.xlu0 %v2216
        %v2218 = vpop.xlane.xlu0 %2217
        %v2219 = vrcp.pop %v2218
        %v2220 = vmul.f32 %v2215, %v2219
        %v2221 = vpack.c.bf16 %v2220, %v2220
        %2222 = vrot.lane.b32.xlu0 %v1827, 64
        %v2223 = vpop.permute.xlu0 %2222
        %v2225 = vsel %vm1875, %v2221, 0
        %v2228 = vsel %vm1891, %v2223, 0
        %2230 = vmatprep.subr.bf16.mxu0 0
        %2231 = vmatpush1.bf16.msra.mxu0 0
        %2232 = vmatprep.subr.bf16.mxu0 0
        %2233 = vmatpush1.bf16.msra.mxu0 0
        %2234 = vmatprep.subr.bf16.mxu0 0
        %2235 = vmatpush1.bf16.msra.mxu0 0
        %2236 = vmatprep.subr.bf16.mxu0 0
        %2237 = vmatpush1.bf16.msra.mxu0 0
        %2238 = vmatprep.subr.bf16.mxu0 0
        %2239 = vmatpush1.bf16.msra.mxu0 0
        %2240 = vmatprep.subr.bf16.mxu0 0
        %2241 = vmatpush1.bf16.msra.mxu0 0
        %2242 = vmatprep.subr.bf16.mxu0 0
        %2243 = vmatpush1.bf16.msra.mxu0 0
        %2244 = vmatprep.subr.bf16.mxu0 0
        %2245 = vmatpush1.bf16.msra.mxu0 %v2228
        %2246 = vmatprep.subr.bf16.mxu0 0
        %2247 = vmatpush2.bf16.msra.mxu0 0
        %2248 = vmatprep.subr.bf16.mxu0 0
        %2249 = vmatpush2.bf16.msra.mxu0 0
        %2250 = vmatprep.subr.bf16.mxu0 0
        %2251 = vmatpush2.bf16.msra.mxu0 0
        %2252 = vmatprep.subr.bf16.mxu0 0
        %2253 = vmatpush2.bf16.msra.mxu0 0
        %2254 = vmatprep.subr.bf16.mxu0 0
        %2255 = vmatpush2.bf16.msra.mxu0 0
        %2256 = vmatprep.subr.bf16.mxu0 0
        %2257 = vmatpush2.bf16.msra.mxu0 0
        %2258 = vmatprep.subr.bf16.mxu0 0
        %2259 = vmatpush2.bf16.msra.mxu0 0
        %2260 = vmatprep.subr.bf16.mxu0 0
        %2261 = vmatpush2.bf16.msra.mxu0 0
        %2262 = vmatprep.mubr.bf16.mxu0 0
        %2263 = vmatmul.mubr.bf16.gmra.mxu0 %v2225
        %v2264 = vpop.f32.mrf.mxu0
        %v2265 = vadd.f32 0.0, %v2264
        %v2266 = vpop.f32.mrf.mxu0
        %v2267 = vpop.f32.mrf.mxu0
        %v2268 = vpop.f32.mrf.mxu0
        %2269 = vdwg.mxu0
        %v2270 = vpack.c.bf16 %v2265, %v2265
        %v2275 = vunpack.c.l.b16 %v1589
        %v2276 = vunpack.c.l.b16 %v1590
        %v2277 = vunpack.c.l.b16 %v1591
        %v2278 = vunpack.c.l.b16 %v1592
        %v2279 = vpack.c.b16 %v2276, %v2275
        %v2280 = vpack.c.b16 %v2278, %v2277
        %v2284 = vsel %vm1828, %v2270, 0
        %2286 = vmatprep.subr.bf16.mxu0 0
        %2287 = vmatpush1.bf16.msra.mxu0 0
        %2288 = vmatprep.subr.bf16.mxu0 0
        %2289 = vmatpush1.bf16.msra.mxu0 0
        %2290 = vmatprep.subr.bf16.mxu0 0
        %2291 = vmatpush1.bf16.msra.mxu0 0
        %2292 = vmatprep.subr.bf16.mxu0 0
        %2293 = vmatpush1.bf16.msra.mxu0 0
        %2294 = vmatprep.subr.bf16.mxu0 0
        %2295 = vmatpush1.bf16.msra.mxu0 0
        %2296 = vmatprep.subr.bf16.mxu0 0
        %2297 = vmatpush1.bf16.msra.mxu0 0
        %2298 = vmatprep.subr.bf16.mxu0 0
        %2299 = vmatpush1.bf16.msra.mxu0 %v2280
        %2300 = vmatprep.subr.bf16.mxu0 0
        %2301 = vmatpush1.bf16.msra.mxu0 %v2279
        %2302 = vmatprep.subr.bf16.mxu0 0
        %2303 = vmatpush2.bf16.msra.mxu0 0
        %2304 = vmatprep.subr.bf16.mxu0 0
        %2305 = vmatpush2.bf16.msra.mxu0 0
        %2306 = vmatprep.subr.bf16.mxu0 0
        %2307 = vmatpush2.bf16.msra.mxu0 0
        %2308 = vmatprep.subr.bf16.mxu0 0
        %2309 = vmatpush2.bf16.msra.mxu0 0
        %2310 = vmatprep.subr.bf16.mxu0 0
        %2311 = vmatpush2.bf16.msra.mxu0 0
        %2312 = vmatprep.subr.bf16.mxu0 0
        %2313 = vmatpush2.bf16.msra.mxu0 0
        %2314 = vmatprep.subr.bf16.mxu0 0
        %2315 = vmatpush2.bf16.msra.mxu0 0
        %2316 = vmatprep.subr.bf16.mxu0 0
        %2317 = vmatpush2.bf16.msra.mxu0 0
        %2318 = vmatprep.mubr.bf16.mxu0 0
        %2319 = vmatmul.mubr.bf16.gmra.mxu0 %v2284
        %v2320 = vpop.f32.mrf.mxu0
        %v2321 = vadd.f32 0.0, %v2320
        %v2322 = vpop.f32.mrf.mxu0
        %v2323 = vpop.f32.mrf.mxu0
        %v2324 = vpop.f32.mrf.mxu0
        %2325 = vdwg.mxu0
        %v2326 = vadd.f32 %v2155, %v2321
        %2327 = vrot.lane.b32.xlu0 %v1825, 32
        %v2328 = vpop.permute.xlu0 %2327
        %2329 = vrot.lane.b32.xlu0 %v1826, 32
        %v2330 = vpop.permute.xlu0 %2329
        %v2332 = vsel %vm1828, %v2328, 0
        %v2335 = vsel %vm1828, %v2330, 0
        %2337 = vmatprep.subr.bf16.mxu0 0
        %2338 = vmatpush1.bf16.xpose.msra.mxu0 0
        %2339 = vmatprep.subr.bf16.mxu0 0
        %2340 = vmatpush1.bf16.xpose.msra.mxu0 0
        %2341 = vmatprep.subr.bf16.mxu0 0
        %2342 = vmatpush1.bf16.xpose.msra.mxu0 0
        %2343 = vmatprep.subr.bf16.mxu0 0
        %2344 = vmatpush1.bf16.xpose.msra.mxu0 0
        %2345 = vmatprep.subr.bf16.mxu0 0
        %2346 = vmatpush1.bf16.xpose.msra.mxu0 0
        %2347 = vmatprep.subr.bf16.mxu0 0
        %2348 = vmatpush1.bf16.xpose.msra.mxu0 0
        %2349 = vmatprep.subr.bf16.mxu0 0
        %2350 = vmatpush1.bf16.xpose.msra.mxu0 0
        %2351 = vmatprep.subr.bf16.mxu0 0
        %2352 = vmatpush1.bf16.xpose.msra.mxu0 %v2335
        %2353 = vmatprep.subr.bf16.mxu0 0
        %2354 = vmatpush2.bf16.xpose.msra.mxu0 0
        %2355 = vmatprep.subr.bf16.mxu0 0
        %2356 = vmatpush2.bf16.xpose.msra.mxu0 0
        %2357 = vmatprep.subr.bf16.mxu0 0
        %2358 = vmatpush2.bf16.xpose.msra.mxu0 0
        %2359 = vmatprep.subr.bf16.mxu0 0
        %2360 = vmatpush2.bf16.xpose.msra.mxu0 0
        %2361 = vmatprep.subr.bf16.mxu0 0
        %2362 = vmatpush2.bf16.xpose.msra.mxu0 0
        %2363 = vmatprep.subr.bf16.mxu0 0
        %2364 = vmatpush2.bf16.xpose.msra.mxu0 0
        %2365 = vmatprep.subr.bf16.mxu0 0
        %2366 = vmatpush2.bf16.xpose.msra.mxu0 0
        %2367 = vmatprep.subr.bf16.mxu0 0
        %2368 = vmatpush2.bf16.xpose.msra.mxu0 0
        %2369 = vmatprep.mubr.bf16.mxu0 0
        %2370 = vmatmul.mubr.bf16.gmra.mxu0 %v2332
        %v2371 = vpop.f32.mrf.mxu0
        %v2372 = vadd.f32 0.0, %v2371
        %v2373 = vpop.f32.mrf.mxu0
        %v2374 = vpop.f32.mrf.mxu0
        %v2375 = vpop.f32.mrf.mxu0
        %2376 = vdwg.mxu0
        %v2377 = vsel %vm1875, %v2372, -inf
        %2378 = vmax.xlane.f32.xlu0 %v2377
        %v2379 = vpop.xlane.xlu0 %2378
        %v2380 = vsub.f32 %v2372, %v2379
        %v2381 = vmul.f32 %v2380, 1.442695
        %v2382 = vpow.pop %v2381
        %v2383 = vsel %vm1875, %v2382, 0.0
        %2384 = vadd.xlane.f32.xlu0 %v2383
        %v2385 = vpop.xlane.xlu0 %2384
        %v2386 = vrcp.pop %v2385
        %v2387 = vmul.f32 %v2382, %v2386
        %v2388 = vpack.c.bf16 %v2387, %v2387
        %2389 = vrot.lane.b32.xlu0 %v1827, 32
        %v2390 = vpop.permute.xlu0 %2389
        %v2392 = vsel %vm1875, %v2388, 0
        %v2395 = vsel %vm1891, %v2390, 0
        %2397 = vmatprep.subr.bf16.mxu0 0
        %2398 = vmatpush1.bf16.msra.mxu0 0
        %2399 = vmatprep.subr.bf16.mxu0 0
        %2400 = vmatpush1.bf16.msra.mxu0 0
        %2401 = vmatprep.subr.bf16.mxu0 0
        %2402 = vmatpush1.bf16.msra.mxu0 0
        %2403 = vmatprep.subr.bf16.mxu0 0
        %2404 = vmatpush1.bf16.msra.mxu0 0
        %2405 = vmatprep.subr.bf16.mxu0 0
        %2406 = vmatpush1.bf16.msra.mxu0 0
        %2407 = vmatprep.subr.bf16.mxu0 0
        %2408 = vmatpush1.bf16.msra.mxu0 0
        %2409 = vmatprep.subr.bf16.mxu0 0
        %2410 = vmatpush1.bf16.msra.mxu0 0
        %2411 = vmatprep.subr.bf16.mxu0 0
        %2412 = vmatpush1.bf16.msra.mxu0 %v2395
        %2413 = vmatprep.subr.bf16.mxu0 0
        %2414 = vmatpush2.bf16.msra.mxu0 0
        %2415 = vmatprep.subr.bf16.mxu0 0
        %2416 = vmatpush2.bf16.msra.mxu0 0
        %2417 = vmatprep.subr.bf16.mxu0 0
        %2418 = vmatpush2.bf16.msra.mxu0 0
        %2419 = vmatprep.subr.bf16.mxu0 0
        %2420 = vmatpush2.bf16.msra.mxu0 0
        %2421 = vmatprep.subr.bf16.mxu0 0
        %2422 = vmatpush2.bf16.msra.mxu0 0
        %2423 = vmatprep.subr.bf16.mxu0 0
        %2424 = vmatpush2.bf16.msra.mxu0 0
        %2425 = vmatprep.subr.bf16.mxu0 0
        %2426 = vmatpush2.bf16.msra.mxu0 0
        %2427 = vmatprep.subr.bf16.mxu0 0
        %2428 = vmatpush2.bf16.msra.mxu0 0
        %2429 = vmatprep.mubr.bf16.mxu0 0
        %2430 = vmatmul.mubr.bf16.gmra.mxu0 %v2392
        %v2431 = vpop.f32.mrf.mxu0
        %v2432 = vadd.f32 0.0, %v2431
        %v2433 = vpop.f32.mrf.mxu0
        %v2434 = vpop.f32.mrf.mxu0
        %v2435 = vpop.f32.mrf.mxu0
        %2436 = vdwg.mxu0
        %v2437 = vpack.c.bf16 %v2432, %v2432
        %v2442 = vunpack.c.l.b16 %v1593
        %v2443 = vunpack.c.l.b16 %v1594
        %v2444 = vunpack.c.l.b16 %v1595
        %v2445 = vunpack.c.l.b16 %v1596
        %v2446 = vpack.c.b16 %v2443, %v2442
        %v2447 = vpack.c.b16 %v2445, %v2444
        %v2451 = vsel %vm1828, %v2437, 0
        %2453 = vmatprep.subr.bf16.mxu0 0
        %2454 = vmatpush1.bf16.msra.mxu0 0
        %2455 = vmatprep.subr.bf16.mxu0 0
        %2456 = vmatpush1.bf16.msra.mxu0 0
        %2457 = vmatprep.subr.bf16.mxu0 0
        %2458 = vmatpush1.bf16.msra.mxu0 0
        %2459 = vmatprep.subr.bf16.mxu0 0
        %2460 = vmatpush1.bf16.msra.mxu0 0
        %2461 = vmatprep.subr.bf16.mxu0 0
        %2462 = vmatpush1.bf16.msra.mxu0 0
        %2463 = vmatprep.subr.bf16.mxu0 0
        %2464 = vmatpush1.bf16.msra.mxu0 0
        %2465 = vmatprep.subr.bf16.mxu0 0
        %2466 = vmatpush1.bf16.msra.mxu0 %v2447
        %2467 = vmatprep.subr.bf16.mxu0 0
        %2468 = vmatpush1.bf16.msra.mxu0 %v2446
        %2469 = vmatprep.subr.bf16.mxu0 0
        %2470 = vmatpush2.bf16.msra.mxu0 0
        %2471 = vmatprep.subr.bf16.mxu0 0
        %2472 = vmatpush2.bf16.msra.mxu0 0
        %2473 = vmatprep.subr.bf16.mxu0 0
        %2474 = vmatpush2.bf16.msra.mxu0 0
        %2475 = vmatprep.subr.bf16.mxu0 0
        %2476 = vmatpush2.bf16.msra.mxu0 0
        %2477 = vmatprep.subr.bf16.mxu0 0
        %2478 = vmatpush2.bf16.msra.mxu0 0
        %2479 = vmatprep.subr.bf16.mxu0 0
        %2480 = vmatpush2.bf16.msra.mxu0 0
        %2481 = vmatprep.subr.bf16.mxu0 0
        %2482 = vmatpush2.bf16.msra.mxu0 0
        %2483 = vmatprep.subr.bf16.mxu0 0
        %2484 = vmatpush2.bf16.msra.mxu0 0
        %2485 = vmatprep.mubr.bf16.mxu0 0
        %2486 = vmatmul.mubr.bf16.gmra.mxu0 %v2451
        %v2487 = vpop.f32.mrf.mxu0
        %v2488 = vadd.f32 0.0, %v2487
        %v2489 = vpop.f32.mrf.mxu0
        %v2490 = vpop.f32.mrf.mxu0
        %v2491 = vpop.f32.mrf.mxu0
        %2492 = vdwg.mxu0
        %v2493 = vadd.f32 %v2326, %v2488
        %v2495 = vlaneseq
        %v2496 = vshrl.u32 %v2495, 7
        %v2497 = vsub.s32 0, %v2496
        %v2498 = vrot.slane %v1597, %v2497
        %v2500 = vadd.f32 %v2493, %v2498
        %v2501 = vadd.f32 %v1547, %v2500
        %v2502 = vld [vmem:[%s15] sm:$0x1]
        %v2503 = vld [vmem:[#allocation8] sm:$0x1]
        %2504 = vadd.xlane.f32.xlu0 %v2501
        %v2505 = vpop.xlane.xlu0 %2504
        %v2506 = vrcp.pop 128.0
        %v2507 = vmul.f32 %v2505, %v2506
        %v2508 = vsub.f32 %v2501, %v2507
        %v2509 = vmul.f32 %v2508, %v2508
        %2510 = vadd.xlane.f32.xlu0 %v2509
        %v2511 = vpop.xlane.xlu0 %2510
        %v2512 = vmul.f32 %v2511, %v2506
        %v2513 = vadd.f32 %v2512, 1e-05
        %v2514 = vrsqrt.pop %v2513
        %v2515 = vmul.f32 %v2508, %v2514
        %v2517 = vlaneseq
        %v2518 = vshrl.u32 %v2517, 7
        %v2519 = vsub.s32 0, %v2518
        %v2520 = vrot.slane %v2502, %v2519
        %v2522 = vmul.f32 %v2515, %v2520
        %v2524 = vlaneseq
        %v2525 = vshrl.u32 %v2524, 7
        %v2526 = vsub.s32 0, %v2525
        %v2527 = vrot.slane %v2503, %v2526
        %v2529 = vadd.f32 %v2522, %v2527
        %v2530 = vld [vmem:[#allocation13] sm:$0xf]
        %v2531 = vld [vmem:[#allocation13 + $0x4] sm:$0xf]
        %v2532 = vld [vmem:[#allocation13 + $0x8] sm:$0xf]
        %v2533 = vld [vmem:[#allocation13 + $0xc] sm:$0xf]
        %v2534 = vld [vmem:[#allocation13 + $0x10] sm:$0xf]
        %v2535 = vld [vmem:[#allocation13 + $0x14] sm:$0xf]
        %v2536 = vld [vmem:[#allocation13 + $0x18] sm:$0xf]
        %v2537 = vld [vmem:[#allocation13 + $0x1c] sm:$0xf]
        %v2538 = vld [vmem:[#allocation13 + $0x20] sm:$0xf]
        %v2539 = vld [vmem:[#allocation13 + $0x24] sm:$0xf]
        %v2540 = vld [vmem:[#allocation13 + $0x28] sm:$0xf]
        %v2541 = vld [vmem:[#allocation13 + $0x2c] sm:$0xf]
        %v2542 = vld [vmem:[#allocation13 + $0x30] sm:$0xf]
        %v2543 = vld [vmem:[#allocation13 + $0x34] sm:$0xf]
        %v2544 = vld [vmem:[#allocation13 + $0x38] sm:$0xf]
        %v2545 = vld [vmem:[#allocation13 + $0x3c] sm:$0xf]
        %v2546 = vld [vmem:[#allocation14] sm:$0x1]
        %v2547 = vld [vmem:[#allocation16] sm:$0xf]
        %v2548 = vld [vmem:[#allocation16 + $0x4] sm:$0xf]
        %v2549 = vld [vmem:[#allocation16 + $0x8] sm:$0xf]
        %v2550 = vld [vmem:[#allocation16 + $0xc] sm:$0xf]
        %v2551 = vld [vmem:[#allocation16 + $0x10] sm:$0xf]
        %v2552 = vld [vmem:[#allocation16 + $0x14] sm:$0xf]
        %v2553 = vld [vmem:[#allocation16 + $0x18] sm:$0xf]
        %v2554 = vld [vmem:[#allocation16 + $0x1c] sm:$0xf]
        %v2555 = vld [vmem:[#allocation16 + $0x20] sm:$0xf]
        %v2556 = vld [vmem:[#allocation16 + $0x24] sm:$0xf]
        %v2557 = vld [vmem:[#allocation16 + $0x28] sm:$0xf]
        %v2558 = vld [vmem:[#allocation16 + $0x2c] sm:$0xf]
        %v2559 = vld [vmem:[#allocation16 + $0x30] sm:$0xf]
        %v2560 = vld [vmem:[#allocation16 + $0x34] sm:$0xf]
        %v2561 = vld [vmem:[#allocation16 + $0x38] sm:$0xf]
        %v2562 = vld [vmem:[#allocation16 + $0x3c] sm:$0xf]
        %v2563 = vld [vmem:[#allocation17] sm:$0x1]
        %v2564 = vpack.c.bf16 %v2529, %v2529
        %v2566 = vlaneseq
        %v2567 = vshrl.u32 %v2566, 7
        %v2568 = vsub.s32 0, %v2567
        %v2569 = vrot.slane %v2546, %v2568
        %v2587 = vunpack.c.l.b16 %v2530
        %v2588 = vunpack.c.l.b16 %v2531
        %v2589 = vunpack.c.l.b16 %v2532
        %v2590 = vunpack.c.l.b16 %v2533
        %v2591 = vunpack.c.l.b16 %v2534
        %v2592 = vunpack.c.l.b16 %v2535
        %v2593 = vunpack.c.l.b16 %v2536
        %v2594 = vunpack.c.l.b16 %v2537
        %v2595 = vunpack.c.l.b16 %v2538
        %v2596 = vunpack.c.l.b16 %v2539
        %v2597 = vunpack.c.l.b16 %v2540
        %v2598 = vunpack.c.l.b16 %v2541
        %v2599 = vunpack.c.l.b16 %v2542
        %v2600 = vunpack.c.l.b16 %v2543
        %v2601 = vunpack.c.l.b16 %v2544
        %v2602 = vunpack.c.l.b16 %v2545
        %v2603 = vpack.c.b16 %v2588, %v2587
        %v2604 = vpack.c.b16 %v2590, %v2589
        %v2605 = vpack.c.b16 %v2592, %v2591
        %v2606 = vpack.c.b16 %v2594, %v2593
        %v2607 = vpack.c.b16 %v2596, %v2595
        %v2608 = vpack.c.b16 %v2598, %v2597
        %v2609 = vpack.c.b16 %v2600, %v2599
        %v2610 = vpack.c.b16 %v2602, %v2601
        %2619 = vmatprep.subr.bf16.mxu0 0
        %2620 = vmatpush1.bf16.msra.mxu0 %v2610
        %2621 = vmatprep.subr.bf16.mxu0 0
        %2622 = vmatpush1.bf16.msra.mxu0 %v2609
        %2623 = vmatprep.subr.bf16.mxu0 0
        %2624 = vmatpush1.bf16.msra.mxu0 %v2608
        %2625 = vmatprep.subr.bf16.mxu0 0
        %2626 = vmatpush1.bf16.msra.mxu0 %v2607
        %2627 = vmatprep.subr.bf16.mxu0 0
        %2628 = vmatpush1.bf16.msra.mxu0 %v2606
        %2629 = vmatprep.subr.bf16.mxu0 0
        %2630 = vmatpush1.bf16.msra.mxu0 %v2605
        %2631 = vmatprep.subr.bf16.mxu0 0
        %2632 = vmatpush1.bf16.msra.mxu0 %v2604
        %2633 = vmatprep.subr.bf16.mxu0 0
        %2634 = vmatpush1.bf16.msra.mxu0 %v2603
        %2635 = vmatprep.subr.bf16.mxu0 0
        %2636 = vmatpush2.bf16.msra.mxu0 0
        %2637 = vmatprep.subr.bf16.mxu0 0
        %2638 = vmatpush2.bf16.msra.mxu0 0
        %2639 = vmatprep.subr.bf16.mxu0 0
        %2640 = vmatpush2.bf16.msra.mxu0 0
        %2641 = vmatprep.subr.bf16.mxu0 0
        %2642 = vmatpush2.bf16.msra.mxu0 0
        %2643 = vmatprep.subr.bf16.mxu0 0
        %2644 = vmatpush2.bf16.msra.mxu0 0
        %2645 = vmatprep.subr.bf16.mxu0 0
        %2646 = vmatpush2.bf16.msra.mxu0 0
        %2647 = vmatprep.subr.bf16.mxu0 0
        %2648 = vmatpush2.bf16.msra.mxu0 0
        %2649 = vmatprep.subr.bf16.mxu0 0
        %2650 = vmatpush2.bf16.msra.mxu0 0
        %2651 = vmatprep.mubr.bf16.mxu0 0
        %2652 = vmatmul.mubr.bf16.gmra.mxu0 %v2564
        %v2653 = vpop.f32.mrf.mxu0
        %v2654 = vadd.f32 %v2569, %v2653
        %v2655 = vpop.f32.mrf.mxu0
        %v2656 = vpop.f32.mrf.mxu0
        %v2657 = vpop.f32.mrf.mxu0
        %2658 = vdwg.mxu0
        %v2659 = vmax.f32 %v2654, 0.0
        %v2660 = vpack.c.bf16 %v2659, %v2659
        %v2662 = vlaneseq
        %v2663 = vshrl.u32 %v2662, 7
        %v2664 = vsub.s32 0, %v2663
        %v2665 = vrot.slane %v2563, %v2664
        %v2683 = vunpack.c.l.b16 %v2547
        %v2684 = vunpack.c.l.b16 %v2548
        %v2685 = vunpack.c.l.b16 %v2549
        %v2686 = vunpack.c.l.b16 %v2550
        %v2687 = vunpack.c.l.b16 %v2551
        %v2688 = vunpack.c.l.b16 %v2552
        %v2689 = vunpack.c.l.b16 %v2553
        %v2690 = vunpack.c.l.b16 %v2554
        %v2691 = vunpack.c.l.b16 %v2555
        %v2692 = vunpack.c.l.b16 %v2556
        %v2693 = vunpack.c.l.b16 %v2557
        %v2694 = vunpack.c.l.b16 %v2558
        %v2695 = vunpack.c.l.b16 %v2559
        %v2696 = vunpack.c.l.b16 %v2560
        %v2697 = vunpack.c.l.b16 %v2561
        %v2698 = vunpack.c.l.b16 %v2562
        %v2699 = vpack.c.b16 %v2684, %v2683
        %v2700 = vpack.c.b16 %v2686, %v2685
        %v2701 = vpack.c.b16 %v2688, %v2687
        %v2702 = vpack.c.b16 %v2690, %v2689
        %v2703 = vpack.c.b16 %v2692, %v2691
        %v2704 = vpack.c.b16 %v2694, %v2693
        %v2705 = vpack.c.b16 %v2696, %v2695
        %v2706 = vpack.c.b16 %v2698, %v2697
        %2715 = vmatprep.subr.bf16.mxu0 0
        %2716 = vmatpush1.bf16.msra.mxu0 %v2706
        %2717 = vmatprep.subr.bf16.mxu0 0
        %2718 = vmatpush1.bf16.msra.mxu0 %v2705
        %2719 = vmatprep.subr.bf16.mxu0 0
        %2720 = vmatpush1.bf16.msra.mxu0 %v2704
        %2721 = vmatprep.subr.bf16.mxu0 0
        %2722 = vmatpush1.bf16.msra.mxu0 %v2703
        %2723 = vmatprep.subr.bf16.mxu0 0
        %2724 = vmatpush1.bf16.msra.mxu0 %v2702
        %2725 = vmatprep.subr.bf16.mxu0 0
        %2726 = vmatpush1.bf16.msra.mxu0 %v2701
        %2727 = vmatprep.subr.bf16.mxu0 0
        %2728 = vmatpush1.bf16.msra.mxu0 %v2700
        %2729 = vmatprep.subr.bf16.mxu0 0
        %2730 = vmatpush1.bf16.msra.mxu0 %v2699
        %2731 = vmatprep.subr.bf16.mxu0 0
        %2732 = vmatpush2.bf16.msra.mxu0 0
        %2733 = vmatprep.subr.bf16.mxu0 0
        %2734 = vmatpush2.bf16.msra.mxu0 0
        %2735 = vmatprep.subr.bf16.mxu0 0
        %2736 = vmatpush2.bf16.msra.mxu0 0
        %2737 = vmatprep.subr.bf16.mxu0 0
        %2738 = vmatpush2.bf16.msra.mxu0 0
        %2739 = vmatprep.subr.bf16.mxu0 0
        %2740 = vmatpush2.bf16.msra.mxu0 0
        %2741 = vmatprep.subr.bf16.mxu0 0
        %2742 = vmatpush2.bf16.msra.mxu0 0
        %2743 = vmatprep.subr.bf16.mxu0 0
        %2744 = vmatpush2.bf16.msra.mxu0 0
        %2745 = vmatprep.subr.bf16.mxu0 0
        %2746 = vmatpush2.bf16.msra.mxu0 0
        %2747 = vmatprep.mubr.bf16.mxu0 0
        %2748 = vmatmul.mubr.bf16.gmra.mxu0 %v2660
        %v2749 = vpop.f32.mrf.mxu0
        %v2750 = vadd.f32 %v2665, %v2749
        %v2751 = vpop.f32.mrf.mxu0
        %v2752 = vpop.f32.mrf.mxu0
        %v2753 = vpop.f32.mrf.mxu0
        %2754 = vdwg.mxu0
        %v2755 = vadd.f32 %v2529, %v2750
        %v2756 = vld [vmem:[#allocation10] sm:$0x1]
        %v2757 = vld [vmem:[#allocation11] sm:$0x1]
        %2758 = vadd.xlane.f32.xlu0 %v2755
        %v2759 = vpop.xlane.xlu0 %2758
        %v2760 = vmul.f32 %v2759, %v2506
        %v2761 = vsub.f32 %v2755, %v2760
        %v2762 = vmul.f32 %v2761, %v2761
        %2763 = vadd.xlane.f32.xlu0 %v2762
        %v2764 = vpop.xlane.xlu0 %2763
        %v2765 = vmul.f32 %v2764, %v2506
        %v2766 = vadd.f32 %v2765, 1e-05
        %v2767 = vrsqrt.pop %v2766
        %v2768 = vmul.f32 %v2761, %v2767
        %v2770 = vlaneseq
        %v2771 = vshrl.u32 %v2770, 7
        %v2772 = vsub.s32 0, %v2771
        %v2773 = vrot.slane %v2756, %v2772
        %v2775 = vmul.f32 %v2768, %v2773
        %v2777 = vlaneseq
        %v2778 = vshrl.u32 %v2777, 7
        %v2779 = vsub.s32 0, %v2778
        %v2780 = vrot.slane %v2757, %v2779
        %v2782 = vadd.f32 %v2775, %v2780
        %s2783 = scalar_lea.vmem [#allocation7], 192
        %v2784 = vld [vmem:[%s2783] sm:$0xff]
        %v2785 = vld [vmem:[%s2783 + $0x8] sm:$0xf]
        %v2786 = vld [vmem:[%s2783 + $0xc] sm:$0xff]
        %v2787 = vld [vmem:[%s2783 + $0x14] sm:$0xf]
        %v2788 = vld [vmem:[%s2783 + $0x18] sm:$0xff]
        %v2789 = vld [vmem:[%s2783 + $0x20] sm:$0xf]
        %v2790 = vld [vmem:[%s2783 + $0x24] sm:$0xff]
        %v2791 = vld [vmem:[%s2783 + $0x2c] sm:$0xf]
        %v2792 = vld [vmem:[%s2783 + $0x30] sm:$0xff]
        %v2793 = vld [vmem:[%s2783 + $0x38] sm:$0xf]
        %v2794 = vld [vmem:[%s2783 + $0x3c] sm:$0xff]
        %v2795 = vld [vmem:[%s2783 + $0x44] sm:$0xf]
        %v2796 = vld [vmem:[%s2783 + $0x48] sm:$0xff]
        %v2797 = vld [vmem:[%s2783 + $0x50] sm:$0xf]
        %v2798 = vld [vmem:[%s2783 + $0x54] sm:$0xff]
        %v2799 = vld [vmem:[%s2783 + $0x5c] sm:$0xf]
        %v2800 = vld [vmem:[%s2783 + $0x60] sm:$0xff]
        %v2801 = vld [vmem:[%s2783 + $0x68] sm:$0xf]
        %v2802 = vld [vmem:[%s2783 + $0x6c] sm:$0xff]
        %v2803 = vld [vmem:[%s2783 + $0x74] sm:$0xf]
        %v2804 = vld [vmem:[%s2783 + $0x78] sm:$0xff]
        %v2805 = vld [vmem:[%s2783 + $0x80] sm:$0xf]
        %v2806 = vld [vmem:[%s2783 + $0x84] sm:$0xff]
        %v2807 = vld [vmem:[%s2783 + $0x8c] sm:$0xf]
        %v2808 = vld [vmem:[%s2783 + $0x90] sm:$0xff]
        %v2809 = vld [vmem:[%s2783 + $0x98] sm:$0xf]
        %v2810 = vld [vmem:[%s2783 + $0x9c] sm:$0xff]
        %v2811 = vld [vmem:[%s2783 + $0xa4] sm:$0xf]
        %v2812 = vld [vmem:[%s2783 + $0xa8] sm:$0xff]
        %v2813 = vld [vmem:[%s2783 + $0xb0] sm:$0xf]
        %v2814 = vld [vmem:[%s2783 + $0xb4] sm:$0xff]
        %v2815 = vld [vmem:[%s2783 + $0xbc] sm:$0xf]
        %s2816 = scalar_lea.vmem %s9, 3
        %v2817 = vld [vmem:[%s2816] sm:$0x7]
        %s2818 = scalar_lea.vmem %s11, 64
        %v2819 = vld [vmem:[%s2818] sm:$0xf]
        %v2820 = vld [vmem:[%s2818 + $0x4] sm:$0xf]
        %v2821 = vld [vmem:[%s2818 + $0x8] sm:$0xf]
        %v2822 = vld [vmem:[%s2818 + $0xc] sm:$0xf]
        %v2823 = vld [vmem:[%s2818 + $0x10] sm:$0xf]
        %v2824 = vld [vmem:[%s2818 + $0x14] sm:$0xf]
        %v2825 = vld [vmem:[%s2818 + $0x18] sm:$0xf]
        %v2826 = vld [vmem:[%s2818 + $0x1c] sm:$0xf]
        %v2827 = vld [vmem:[%s2818 + $0x20] sm:$0xf]
        %v2828 = vld [vmem:[%s2818 + $0x24] sm:$0xf]
        %v2829 = vld [vmem:[%s2818 + $0x28] sm:$0xf]
        %v2830 = vld [vmem:[%s2818 + $0x2c] sm:$0xf]
        %v2831 = vld [vmem:[%s2818 + $0x30] sm:$0xf]
        %v2832 = vld [vmem:[%s2818 + $0x34] sm:$0xf]
        %v2833 = vld [vmem:[%s2818 + $0x38] sm:$0xf]
        %v2834 = vld [vmem:[%s2818 + $0x3c] sm:$0xf]
        %s2835 = scalar_lea.vmem %s13, 1
        %v2836 = vld [vmem:[%s2835] sm:$0x1]
        %v2837 = vpack.c.bf16 %v2782, %v2782
        %v2839 = vlaneseq
        %v2840 = vshrl.u32 %v2839, 7
        %v2841 = vsub.s32 0, %v2840
        %v2842 = vrot.slane %v2817, %v2841
        %v2843 = vlaneseq
        %v2844 = vshrl.u32 %v2843, 7
        %v2845 = vsub.s32 1, %v2844
        %v2846 = vrot.slane %v2817, %v2845
        %v2847 = vlaneseq
        %v2848 = vshrl.u32 %v2847, 7
        %v2849 = vsub.s32 2, %v2848
        %v2850 = vrot.slane %v2817, %v2849
        %v2886 = vunpack.c.l.b16 %v2784
        %v2887 = vunpack.c.h.b16 %v2784
        %v2888 = vunpack.c.l.b16 %v2785
        %v2889 = vunpack.c.l.b16 %v2786
        %v2890 = vunpack.c.h.b16 %v2786
        %v2891 = vunpack.c.l.b16 %v2787
        %v2892 = vunpack.c.l.b16 %v2788
        %v2893 = vunpack.c.h.b16 %v2788
        %v2894 = vunpack.c.l.b16 %v2789
        %v2895 = vunpack.c.l.b16 %v2790
        %v2896 = vunpack.c.h.b16 %v2790
        %v2897 = vunpack.c.l.b16 %v2791
        %v2898 = vunpack.c.l.b16 %v2792
        %v2899 = vunpack.c.h.b16 %v2792
        %v2900 = vunpack.c.l.b16 %v2793
        %v2901 = vunpack.c.l.b16 %v2794
        %v2902 = vunpack.c.h.b16 %v2794
        %v2903 = vunpack.c.l.b16 %v2795
        %v2904 = vunpack.c.l.b16 %v2796
        %v2905 = vunpack.c.h.b16 %v2796
        %v2906 = vunpack.c.l.b16 %v2797
        %v2907 = vunpack.c.l.b16 %v2798
        %v2908 = vunpack.c.h.b16 %v2798
        %v2909 = vunpack.c.l.b16 %v2799
        %v2910 = vunpack.c.l.b16 %v2800
        %v2911 = vunpack.c.h.b16 %v2800
        %v2912 = vunpack.c.l.b16 %v2801
        %v2913 = vunpack.c.l.b16 %v2802
        %v2914 = vunpack.c.h.b16 %v2802
        %v2915 = vunpack.c.l.b16 %v2803
        %v2916 = vunpack.c.l.b16 %v2804
        %v2917 = vunpack.c.h.b16 %v2804
        %v2918 = vunpack.c.l.b16 %v2805
        %v2919 = vunpack.c.l.b16 %v2806
        %v2920 = vunpack.c.h.b16 %v2806
        %v2921 = vunpack.c.l.b16 %v2807
        %v2922 = vunpack.c.l.b16 %v2808
        %v2923 = vunpack.c.h.b16 %v2808
        %v2924 = vunpack.c.l.b16 %v2809
        %v2925 = vunpack.c.l.b16 %v2810
        %v2926 = vunpack.c.h.b16 %v2810
        %v2927 = vunpack.c.l.b16 %v2811
        %v2928 = vunpack.c.l.b16 %v2812
        %v2929 = vunpack.c.h.b16 %v2812
        %v2930 = vunpack.c.l.b16 %v2813
        %v2931 = vunpack.c.l.b16 %v2814
        %v2932 = vunpack.c.h.b16 %v2814
        %v2933 = vunpack.c.l.b16 %v2815
        %v2934 = vpack.c.b16 %v2889, %v2886
        %v2935 = vpack.c.b16 %v2890, %v2887
        %v2936 = vpack.c.b16 %v2891, %v2888
        %v2937 = vpack.c.b16 %v2895, %v2892
        %v2938 = vpack.c.b16 %v2896, %v2893
        %v2939 = vpack.c.b16 %v2897, %v2894
        %v2940 = vpack.c.b16 %v2901, %v2898
        %v2941 = vpack.c.b16 %v2902, %v2899
        %v2942 = vpack.c.b16 %v2903, %v2900
        %v2943 = vpack.c.b16 %v2907, %v2904
        %v2944 = vpack.c.b16 %v2908, %v2905
        %v2945 = vpack.c.b16 %v2909, %v2906
        %v2946 = vpack.c.b16 %v2913, %v2910
        %v2947 = vpack.c.b16 %v2914, %v2911
        %v2948 = vpack.c.b16 %v2915, %v2912
        %v2949 = vpack.c.b16 %v2919, %v2916
        %v2950 = vpack.c.b16 %v2920, %v2917
        %v2951 = vpack.c.b16 %v2921, %v2918
        %v2952 = vpack.c.b16 %v2925, %v2922
        %v2953 = vpack.c.b16 %v2926, %v2923
        %v2954 = vpack.c.b16 %v2927, %v2924
        %v2955 = vpack.c.b16 %v2931, %v2928
        %v2956 = vpack.c.b16 %v2932, %v2929
        %v2957 = vpack.c.b16 %v2933, %v2930
        %2982 = vmatprep.subr.bf16.mxu0 %v2956
        %2983 = vmatpush1.bf16.msra.mxu0 %v2955
        %2984 = vmatprep.subr.bf16.mxu0 %v2953
        %2985 = vmatpush1.bf16.msra.mxu0 %v2952
        %2986 = vmatprep.subr.bf16.mxu0 %v2950
        %2987 = vmatpush1.bf16.msra.mxu0 %v2949
        %2988 = vmatprep.subr.bf16.mxu0 %v2947
        %2989 = vmatpush1.bf16.msra.mxu0 %v2946
        %2990 = vmatprep.subr.bf16.mxu0 %v2944
        %2991 = vmatpush1.bf16.msra.mxu0 %v2943
        %2992 = vmatprep.subr.bf16.mxu0 %v2941
        %2993 = vmatpush1.bf16.msra.mxu0 %v2940
        %2994 = vmatprep.subr.bf16.mxu0 %v2938
        %2995 = vmatpush1.bf16.msra.mxu0 %v2937
        %2996 = vmatprep.subr.bf16.mxu0 %v2935
        %2997 = vmatpush1.bf16.msra.mxu0 %v2934
        %2998 = vmatprep.subr.bf16.mxu0 0
        %2999 = vmatpush2.bf16.msra.mxu0 0
        %3000 = vmatprep.subr.bf16.mxu0 0
        %3001 = vmatpush2.bf16.msra.mxu0 0
        %3002 = vmatprep.subr.bf16.mxu0 0
        %3003 = vmatpush2.bf16.msra.mxu0 0
        %3004 = vmatprep.subr.bf16.mxu0 0
        %3005 = vmatpush2.bf16.msra.mxu0 0
        %3006 = vmatprep.subr.bf16.mxu0 0
        %3007 = vmatpush2.bf16.msra.mxu0 0
        %3008 = vmatprep.subr.bf16.mxu0 0
        %3009 = vmatpush2.bf16.msra.mxu0 0
        %3010 = vmatprep.subr.bf16.mxu0 0
        %3011 = vmatpush2.bf16.msra.mxu0 0
        %3012 = vmatprep.subr.bf16.mxu0 0
        %3013 = vmatpush2.bf16.msra.mxu0 0
        %3014 = vmatprep.mubr.bf16.mxu0 0
        %3015 = vmatmul.mubr.bf16.gmra.mxu0 %v2837
        %v3016 = vpop.f32.mrf.mxu0
        %v3017 = vadd.f32 %v2842, %v3016
        %v3018 = vpop.f32.mrf.mxu0
        %v3019 = vadd.f32 %v2846, %v3018
        %v3020 = vpop.f32.mrf.mxu0
        %v3021 = vpop.f32.mrf.mxu0
        %3022 = vdwg.mxu0
        %3023 = vmatprep.subr.bf16.mxu0 0
        %3024 = vmatpush1.bf16.msra.mxu0 %v2957
        %3025 = vmatprep.subr.bf16.mxu0 0
        %3026 = vmatpush1.bf16.msra.mxu0 %v2954
        %3027 = vmatprep.subr.bf16.mxu0 0
        %3028 = vmatpush1.bf16.msra.mxu0 %v2951
        %3029 = vmatprep.subr.bf16.mxu0 0
        %3030 = vmatpush1.bf16.msra.mxu0 %v2948
        %3031 = vmatprep.subr.bf16.mxu0 0
        %3032 = vmatpush1.bf16.msra.mxu0 %v2945
        %3033 = vmatprep.subr.bf16.mxu0 0
        %3034 = vmatpush1.bf16.msra.mxu0 %v2942
        %3035 = vmatprep.subr.bf16.mxu0 0
        %3036 = vmatpush1.bf16.msra.mxu0 %v2939
        %3037 = vmatprep.subr.bf16.mxu0 0
        %3038 = vmatpush1.bf16.msra.mxu0 %v2936
        %3039 = vmatprep.subr.bf16.mxu0 0
        %3040 = vmatpush2.bf16.msra.mxu0 0
        %3041 = vmatprep.subr.bf16.mxu0 0
        %3042 = vmatpush2.bf16.msra.mxu0 0
        %3043 = vmatprep.subr.bf16.mxu0 0
        %3044 = vmatpush2.bf16.msra.mxu0 0
        %3045 = vmatprep.subr.bf16.mxu0 0
        %3046 = vmatpush2.bf16.msra.mxu0 0
        %3047 = vmatprep.subr.bf16.mxu0 0
        %3048 = vmatpush2.bf16.msra.mxu0 0
        %3049 = vmatprep.subr.bf16.mxu0 0
        %3050 = vmatpush2.bf16.msra.mxu0 0
        %3051 = vmatprep.subr.bf16.mxu0 0
        %3052 = vmatpush2.bf16.msra.mxu0 0
        %3053 = vmatprep.subr.bf16.mxu0 0
        %3054 = vmatpush2.bf16.msra.mxu0 0
        %3055 = vmatprep.mubr.bf16.mxu0 0
        %3056 = vmatmul.mubr.bf16.gmra.mxu0 %v2837
        %v3057 = vpop.f32.mrf.mxu0
        %v3058 = vadd.f32 %v2850, %v3057
        %v3059 = vpop.f32.mrf.mxu0
        %v3060 = vpop.f32.mrf.mxu0
        %v3061 = vpop.f32.mrf.mxu0
        %3062 = vdwg.mxu0
        %v3063 = vmul.f32 %v3017, 0.17677669
        %v3064 = vpack.c.bf16 %v3063, %v3063
        %v3065 = vpack.c.bf16 %v3019, %v3019
        %v3066 = vpack.c.bf16 %v3058, %v3058
        %v3068 = vsel %vm1828, %v3064, 0
        %v3071 = vsel %vm1828, %v3065, 0
        %3073 = vmatprep.subr.bf16.mxu0 0
        %3074 = vmatpush1.bf16.xpose.msra.mxu0 0
        %3075 = vmatprep.subr.bf16.mxu0 0
        %3076 = vmatpush1.bf16.xpose.msra.mxu0 0
        %3077 = vmatprep.subr.bf16.mxu0 0
        %3078 = vmatpush1.bf16.xpose.msra.mxu0 0
        %3079 = vmatprep.subr.bf16.mxu0 0
        %3080 = vmatpush1.bf16.xpose.msra.mxu0 0
        %3081 = vmatprep.subr.bf16.mxu0 0
        %3082 = vmatpush1.bf16.xpose.msra.mxu0 0
        %3083 = vmatprep.subr.bf16.mxu0 0
        %3084 = vmatpush1.bf16.xpose.msra.mxu0 0
        %3085 = vmatprep.subr.bf16.mxu0 0
        %3086 = vmatpush1.bf16.xpose.msra.mxu0 0
        %3087 = vmatprep.subr.bf16.mxu0 0
        %3088 = vmatpush1.bf16.xpose.msra.mxu0 %v3071
        %3089 = vmatprep.subr.bf16.mxu0 0
        %3090 = vmatpush2.bf16.xpose.msra.mxu0 0
        %3091 = vmatprep.subr.bf16.mxu0 0
        %3092 = vmatpush2.bf16.xpose.msra.mxu0 0
        %3093 = vmatprep.subr.bf16.mxu0 0
        %3094 = vmatpush2.bf16.xpose.msra.mxu0 0
        %3095 = vmatprep.subr.bf16.mxu0 0
        %3096 = vmatpush2.bf16.xpose.msra.mxu0 0
        %3097 = vmatprep.subr.bf16.mxu0 0
        %3098 = vmatpush2.bf16.xpose.msra.mxu0 0
        %3099 = vmatprep.subr.bf16.mxu0 0
        %3100 = vmatpush2.bf16.xpose.msra.mxu0 0
        %3101 = vmatprep.subr.bf16.mxu0 0
        %3102 = vmatpush2.bf16.xpose.msra.mxu0 0
        %3103 = vmatprep.subr.bf16.mxu0 0
        %3104 = vmatpush2.bf16.xpose.msra.mxu0 0
        %3105 = vmatprep.mubr.bf16.mxu0 0
        %3106 = vmatmul.mubr.bf16.gmra.mxu0 %v3068
        %v3107 = vpop.f32.mrf.mxu0
        %v3108 = vadd.f32 0.0, %v3107
        %v3109 = vpop.f32.mrf.mxu0
        %v3110 = vpop.f32.mrf.mxu0
        %v3111 = vpop.f32.mrf.mxu0
        %3112 = vdwg.mxu0
        %v3113 = vsel %vm1875, %v3108, -inf
        %3114 = vmax.xlane.f32.xlu0 %v3113
        %v3115 = vpop.xlane.xlu0 %3114
        %v3116 = vsub.f32 %v3108, %v3115
        %v3117 = vmul.f32 %v3116, 1.442695
        %v3118 = vpow.pop %v3117
        %v3119 = vsel %vm1875, %v3118, 0.0
        %3120 = vadd.xlane.f32.xlu0 %v3119
        %v3121 = vpop.xlane.xlu0 %3120
        %v3122 = vrcp.pop %v3121
        %v3123 = vmul.f32 %v3118, %v3122
        %v3124 = vpack.c.bf16 %v3123, %v3123
        %v3126 = vsel %vm1875, %v3124, 0
        %v3129 = vsel %vm1891, %v3066, 0
        %3131 = vmatprep.subr.bf16.mxu0 0
        %3132 = vmatpush1.bf16.msra.mxu0 0
        %3133 = vmatprep.subr.bf16.mxu0 0
        %3134 = vmatpush1.bf16.msra.mxu0 0
        %3135 = vmatprep.subr.bf16.mxu0 0
        %3136 = vmatpush1.bf16.msra.mxu0 0
        %3137 = vmatprep.subr.bf16.mxu0 0
        %3138 = vmatpush1.bf16.msra.mxu0 0
        %3139 = vmatprep.subr.bf16.mxu0 0
        %3140 = vmatpush1.bf16.msra.mxu0 0
        %3141 = vmatprep.subr.bf16.mxu0 0
        %3142 = vmatpush1.bf16.msra.mxu0 0
        %3143 = vmatprep.subr.bf16.mxu0 0
        %3144 = vmatpush1.bf16.msra.mxu0 0
        %3145 = vmatprep.subr.bf16.mxu0 0
        %3146 = vmatpush1.bf16.msra.mxu0 %v3129
        %3147 = vmatprep.subr.bf16.mxu0 0
        %3148 = vmatpush2.bf16.msra.mxu0 0
        %3149 = vmatprep.subr.bf16.mxu0 0
        %3150 = vmatpush2.bf16.msra.mxu0 0
        %3151 = vmatprep.subr.bf16.mxu0 0
        %3152 = vmatpush2.bf16.msra.mxu0 0
        %3153 = vmatprep.subr.bf16.mxu0 0
        %3154 = vmatpush2.bf16.msra.mxu0 0
        %3155 = vmatprep.subr.bf16.mxu0 0
        %3156 = vmatpush2.bf16.msra.mxu0 0
        %3157 = vmatprep.subr.bf16.mxu0 0
        %3158 = vmatpush2.bf16.msra.mxu0 0
        %3159 = vmatprep.subr.bf16.mxu0 0
        %3160 = vmatpush2.bf16.msra.mxu0 0
        %3161 = vmatprep.subr.bf16.mxu0 0
        %3162 = vmatpush2.bf16.msra.mxu0 0
        %3163 = vmatprep.mubr.bf16.mxu0 0
        %3164 = vmatmul.mubr.bf16.gmra.mxu0 %v3126
        %v3165 = vpop.f32.mrf.mxu0
        %v3166 = vadd.f32 0.0, %v3165
        %v3167 = vpop.f32.mrf.mxu0
        %v3168 = vpop.f32.mrf.mxu0
        %v3169 = vpop.f32.mrf.mxu0
        %3170 = vdwg.mxu0
        %v3171 = vpack.c.bf16 %v3166, %v3166
        %3173 = vrot.lane.b32.xlu0 %v3064, 96
        %v3174 = vpop.permute.xlu0 %3173
        %3176 = vrot.lane.b32.xlu0 %v3065, 96
        %v3177 = vpop.permute.xlu0 %3176
        %v3179 = vsel %vm1828, %v3174, 0
        %v3182 = vsel %vm1828, %v3177, 0
        %3184 = vmatprep.subr.bf16.mxu0 0
        %3185 = vmatpush1.bf16.xpose.msra.mxu0 0
        %3186 = vmatprep.subr.bf16.mxu0 0
        %3187 = vmatpush1.bf16.xpose.msra.mxu0 0
        %3188 = vmatprep.subr.bf16.mxu0 0
        %3189 = vmatpush1.bf16.xpose.msra.mxu0 0
        %3190 = vmatprep.subr.bf16.mxu0 0
        %3191 = vmatpush1.bf16.xpose.msra.mxu0 0
        %3192 = vmatprep.subr.bf16.mxu0 0
        %3193 = vmatpush1.bf16.xpose.msra.mxu0 0
        %3194 = vmatprep.subr.bf16.mxu0 0
        %3195 = vmatpush1.bf16.xpose.msra.mxu0 0
        %3196 = vmatprep.subr.bf16.mxu0 0
        %3197 = vmatpush1.bf16.xpose.msra.mxu0 0
        %3198 = vmatprep.subr.bf16.mxu0 0
        %3199 = vmatpush1.bf16.xpose.msra.mxu0 %v3182
        %3200 = vmatprep.subr.bf16.mxu0 0
        %3201 = vmatpush2.bf16.xpose.msra.mxu0 0
        %3202 = vmatprep.subr.bf16.mxu0 0
        %3203 = vmatpush2.bf16.xpose.msra.mxu0 0
        %3204 = vmatprep.subr.bf16.mxu0 0
        %3205 = vmatpush2.bf16.xpose.msra.mxu0 0
        %3206 = vmatprep.subr.bf16.mxu0 0
        %3207 = vmatpush2.bf16.xpose.msra.mxu0 0
        %3208 = vmatprep.subr.bf16.mxu0 0
        %3209 = vmatpush2.bf16.xpose.msra.mxu0 0
        %3210 = vmatprep.subr.bf16.mxu0 0
        %3211 = vmatpush2.bf16.xpose.msra.mxu0 0
        %3212 = vmatprep.subr.bf16.mxu0 0
        %3213 = vmatpush2.bf16.xpose.msra.mxu0 0
        %3214 = vmatprep.subr.bf16.mxu0 0
        %3215 = vmatpush2.bf16.xpose.msra.mxu0 0
        %3216 = vmatprep.mubr.bf16.mxu0 0
        %3217 = vmatmul.mubr.bf16.gmra.mxu0 %v3179
        %v3218 = vpop.f32.mrf.mxu0
        %v3219 = vadd.f32 0.0, %v3218
        %v3220 = vpop.f32.mrf.mxu0
        %v3221 = vpop.f32.mrf.mxu0
        %v3222 = vpop.f32.mrf.mxu0
        %3223 = vdwg.mxu0
        %v3224 = vsel %vm1875, %v3219, -inf
        %3225 = vmax.xlane.f32.xlu0 %v3224
        %v3226 = vpop.xlane.xlu0 %3225
        %v3227 = vsub.f32 %v3219, %v3226
        %v3228 = vmul.f32 %v3227, 1.442695
        %v3229 = vpow.pop %v3228
        %v3230 = vsel %vm1875, %v3229, 0.0
        %3231 = vadd.xlane.f32.xlu0 %v3230
        %v3232 = vpop.xlane.xlu0 %3231
        %v3233 = vrcp.pop %v3232
        %v3234 = vmul.f32 %v3229, %v3233
        %v3235 = vpack.c.bf16 %v3234, %v3234
        %3237 = vrot.lane.b32.xlu0 %v3066, 96
        %v3238 = vpop.permute.xlu0 %3237
        %v3240 = vsel %vm1875, %v3235, 0
        %v3243 = vsel %vm1891, %v3238, 0
        %3245 = vmatprep.subr.bf16.mxu0 0
        %3246 = vmatpush1.bf16.msra.mxu0 0
        %3247 = vmatprep.subr.bf16.mxu0 0
        %3248 = vmatpush1.bf16.msra.mxu0 0
        %3249 = vmatprep.subr.bf16.mxu0 0
        %3250 = vmatpush1.bf16.msra.mxu0 0
        %3251 = vmatprep.subr.bf16.mxu0 0
        %3252 = vmatpush1.bf16.msra.mxu0 0
        %3253 = vmatprep.subr.bf16.mxu0 0
        %3254 = vmatpush1.bf16.msra.mxu0 0
        %3255 = vmatprep.subr.bf16.mxu0 0
        %3256 = vmatpush1.bf16.msra.mxu0 0
        %3257 = vmatprep.subr.bf16.mxu0 0
        %3258 = vmatpush1.bf16.msra.mxu0 0
        %3259 = vmatprep.subr.bf16.mxu0 0
        %3260 = vmatpush1.bf16.msra.mxu0 %v3243
        %3261 = vmatprep.subr.bf16.mxu0 0
        %3262 = vmatpush2.bf16.msra.mxu0 0
        %3263 = vmatprep.subr.bf16.mxu0 0
        %3264 = vmatpush2.bf16.msra.mxu0 0
        %3265 = vmatprep.subr.bf16.mxu0 0
        %3266 = vmatpush2.bf16.msra.mxu0 0
        %3267 = vmatprep.subr.bf16.mxu0 0
        %3268 = vmatpush2.bf16.msra.mxu0 0
        %3269 = vmatprep.subr.bf16.mxu0 0
        %3270 = vmatpush2.bf16.msra.mxu0 0
        %3271 = vmatprep.subr.bf16.mxu0 0
        %3272 = vmatpush2.bf16.msra.mxu0 0
        %3273 = vmatprep.subr.bf16.mxu0 0
        %3274 = vmatpush2.bf16.msra.mxu0 0
        %3275 = vmatprep.subr.bf16.mxu0 0
        %3276 = vmatpush2.bf16.msra.mxu0 0
        %3277 = vmatprep.mubr.bf16.mxu0 0
        %3278 = vmatmul.mubr.bf16.gmra.mxu0 %v3240
        %v3279 = vpop.f32.mrf.mxu0
        %v3280 = vadd.f32 0.0, %v3279
        %v3281 = vpop.f32.mrf.mxu0
        %v3282 = vpop.f32.mrf.mxu0
        %v3283 = vpop.f32.mrf.mxu0
        %3284 = vdwg.mxu0
        %v3285 = vpack.c.bf16 %v3280, %v3280
        %v3290 = vunpack.c.l.b16 %v2823
        %v3291 = vunpack.c.l.b16 %v2824
        %v3292 = vunpack.c.l.b16 %v2825
        %v3293 = vunpack.c.l.b16 %v2826
        %v3294 = vpack.c.b16 %v3291, %v3290
        %v3295 = vpack.c.b16 %v3293, %v3292
        %v3299 = vsel %vm1828, %v3285, 0
        %3301 = vmatprep.subr.bf16.mxu0 0
        %3302 = vmatpush1.bf16.msra.mxu0 0
        %3303 = vmatprep.subr.bf16.mxu0 0
        %3304 = vmatpush1.bf16.msra.mxu0 0
        %3305 = vmatprep.subr.bf16.mxu0 0
        %3306 = vmatpush1.bf16.msra.mxu0 0
        %3307 = vmatprep.subr.bf16.mxu0 0
        %3308 = vmatpush1.bf16.msra.mxu0 0
        %3309 = vmatprep.subr.bf16.mxu0 0
        %3310 = vmatpush1.bf16.msra.mxu0 0
        %3311 = vmatprep.subr.bf16.mxu0 0
        %3312 = vmatpush1.bf16.msra.mxu0 0
        %3313 = vmatprep.subr.bf16.mxu0 0
        %3314 = vmatpush1.bf16.msra.mxu0 %v3295
        %3315 = vmatprep.subr.bf16.mxu0 0
        %3316 = vmatpush1.bf16.msra.mxu0 %v3294
        %3317 = vmatprep.subr.bf16.mxu0 0
        %3318 = vmatpush2.bf16.msra.mxu0 0
        %3319 = vmatprep.subr.bf16.mxu0 0
        %3320 = vmatpush2.bf16.msra.mxu0 0
        %3321 = vmatprep.subr.bf16.mxu0 0
        %3322 = vmatpush2.bf16.msra.mxu0 0
        %3323 = vmatprep.subr.bf16.mxu0 0
        %3324 = vmatpush2.bf16.msra.mxu0 0
        %3325 = vmatprep.subr.bf16.mxu0 0
        %3326 = vmatpush2.bf16.msra.mxu0 0
        %3327 = vmatprep.subr.bf16.mxu0 0
        %3328 = vmatpush2.bf16.msra.mxu0 0
        %3329 = vmatprep.subr.bf16.mxu0 0
        %3330 = vmatpush2.bf16.msra.mxu0 0
        %3331 = vmatprep.subr.bf16.mxu0 0
        %3332 = vmatpush2.bf16.msra.mxu0 0
        %3333 = vmatprep.mubr.bf16.mxu0 0
        %3334 = vmatmul.mubr.bf16.gmra.mxu0 %v3299
        %v3335 = vpop.f32.mrf.mxu0
        %v3336 = vadd.f32 0.0, %v3335
        %v3337 = vpop.f32.mrf.mxu0
        %v3338 = vpop.f32.mrf.mxu0
        %v3339 = vpop.f32.mrf.mxu0
        %3340 = vdwg.mxu0
        %v3345 = vunpack.c.l.b16 %v2819
        %v3346 = vunpack.c.l.b16 %v2820
        %v3347 = vunpack.c.l.b16 %v2821
        %v3348 = vunpack.c.l.b16 %v2822
        %v3349 = vpack.c.b16 %v3346, %v3345
        %v3350 = vpack.c.b16 %v3348, %v3347
        %v3354 = vsel %vm1828, %v3171, 0
        %3356 = vmatprep.subr.bf16.mxu0 0
        %3357 = vmatpush1.bf16.msra.mxu0 0
        %3358 = vmatprep.subr.bf16.mxu0 0
        %3359 = vmatpush1.bf16.msra.mxu0 0
        %3360 = vmatprep.subr.bf16.mxu0 0
        %3361 = vmatpush1.bf16.msra.mxu0 0
        %3362 = vmatprep.subr.bf16.mxu0 0
        %3363 = vmatpush1.bf16.msra.mxu0 0
        %3364 = vmatprep.subr.bf16.mxu0 0
        %3365 = vmatpush1.bf16.msra.mxu0 0
        %3366 = vmatprep.subr.bf16.mxu0 0
        %3367 = vmatpush1.bf16.msra.mxu0 0
        %3368 = vmatprep.subr.bf16.mxu0 0
        %3369 = vmatpush1.bf16.msra.mxu0 %v3350
        %3370 = vmatprep.subr.bf16.mxu0 0
        %3371 = vmatpush1.bf16.msra.mxu0 %v3349
        %3372 = vmatprep.subr.bf16.mxu0 0
        %3373 = vmatpush2.bf16.msra.mxu0 0
        %3374 = vmatprep.subr.bf16.mxu0 0
        %3375 = vmatpush2.bf16.msra.mxu0 0
        %3376 = vmatprep.subr.bf16.mxu0 0
        %3377 = vmatpush2.bf16.msra.mxu0 0
        %3378 = vmatprep.subr.bf16.mxu0 0
        %3379 = vmatpush2.bf16.msra.mxu0 0
        %3380 = vmatprep.subr.bf16.mxu0 0
        %3381 = vmatpush2.bf16.msra.mxu0 0
        %3382 = vmatprep.subr.bf16.mxu0 0
        %3383 = vmatpush2.bf16.msra.mxu0 0
        %3384 = vmatprep.subr.bf16.mxu0 0
        %3385 = vmatpush2.bf16.msra.mxu0 0
        %3386 = vmatprep.subr.bf16.mxu0 0
        %3387 = vmatpush2.bf16.msra.mxu0 0
        %3388 = vmatprep.mubr.bf16.mxu0 0
        %3389 = vmatmul.mubr.bf16.gmra.mxu0 %v3354
        %v3390 = vpop.f32.mrf.mxu0
        %v3391 = vadd.f32 %v3336, %v3390
        %v3392 = vpop.f32.mrf.mxu0
        %v3393 = vpop.f32.mrf.mxu0
        %v3394 = vpop.f32.mrf.mxu0
        %3395 = vdwg.mxu0
        %3396 = vrot.lane.b32.xlu0 %v3064, 64
        %v3397 = vpop.permute.xlu0 %3396
        %3398 = vrot.lane.b32.xlu0 %v3065, 64
        %v3399 = vpop.permute.xlu0 %3398
        %v3401 = vsel %vm1828, %v3397, 0
        %v3404 = vsel %vm1828, %v3399, 0
        %3406 = vmatprep.subr.bf16.mxu0 0
        %3407 = vmatpush1.bf16.xpose.msra.mxu0 0
        %3408 = vmatprep.subr.bf16.mxu0 0
        %3409 = vmatpush1.bf16.xpose.msra.mxu0 0
        %3410 = vmatprep.subr.bf16.mxu0 0
        %3411 = vmatpush1.bf16.xpose.msra.mxu0 0
        %3412 = vmatprep.subr.bf16.mxu0 0
        %3413 = vmatpush1.bf16.xpose.msra.mxu0 0
        %3414 = vmatprep.subr.bf16.mxu0 0
        %3415 = vmatpush1.bf16.xpose.msra.mxu0 0
        %3416 = vmatprep.subr.bf16.mxu0 0
        %3417 = vmatpush1.bf16.xpose.msra.mxu0 0
        %3418 = vmatprep.subr.bf16.mxu0 0
        %3419 = vmatpush1.bf16.xpose.msra.mxu0 0
        %3420 = vmatprep.subr.bf16.mxu0 0
        %3421 = vmatpush1.bf16.xpose.msra.mxu0 %v3404
        %3422 = vmatprep.subr.bf16.mxu0 0
        %3423 = vmatpush2.bf16.xpose.msra.mxu0 0
        %3424 = vmatprep.subr.bf16.mxu0 0
        %3425 = vmatpush2.bf16.xpose.msra.mxu0 0
        %3426 = vmatprep.subr.bf16.mxu0 0
        %3427 = vmatpush2.bf16.xpose.msra.mxu0 0
        %3428 = vmatprep.subr.bf16.mxu0 0
        %3429 = vmatpush2.bf16.xpose.msra.mxu0 0
        %3430 = vmatprep.subr.bf16.mxu0 0
        %3431 = vmatpush2.bf16.xpose.msra.mxu0 0
        %3432 = vmatprep.subr.bf16.mxu0 0
        %3433 = vmatpush2.bf16.xpose.msra.mxu0 0
        %3434 = vmatprep.subr.bf16.mxu0 0
        %3435 = vmatpush2.bf16.xpose.msra.mxu0 0
        %3436 = vmatprep.subr.bf16.mxu0 0
        %3437 = vmatpush2.bf16.xpose.msra.mxu0 0
        %3438 = vmatprep.mubr.bf16.mxu0 0
        %3439 = vmatmul.mubr.bf16.gmra.mxu0 %v3401
        %v3440 = vpop.f32.mrf.mxu0
        %v3441 = vadd.f32 0.0, %v3440
        %v3442 = vpop.f32.mrf.mxu0
        %v3443 = vpop.f32.mrf.mxu0
        %v3444 = vpop.f32.mrf.mxu0
        %3445 = vdwg.mxu0
        %v3446 = vsel %vm1875, %v3441, -inf
        %3447 = vmax.xlane.f32.xlu0 %v3446
        %v3448 = vpop.xlane.xlu0 %3447
        %v3449 = vsub.f32 %v3441, %v3448
        %v3450 = vmul.f32 %v3449, 1.442695
        %v3451 = vpow.pop %v3450
        %v3452 = vsel %vm1875, %v3451, 0.0
        %3453 = vadd.xlane.f32.xlu0 %v3452
        %v3454 = vpop.xlane.xlu0 %3453
        %v3455 = vrcp.pop %v3454
        %v3456 = vmul.f32 %v3451, %v3455
        %v3457 = vpack.c.bf16 %v3456, %v3456
        %3458 = vrot.lane.b32.xlu0 %v3066, 64
        %v3459 = vpop.permute.xlu0 %3458
        %v3461 = vsel %vm1875, %v3457, 0
        %v3464 = vsel %vm1891, %v3459, 0
        %3466 = vmatprep.subr.bf16.mxu0 0
        %3467 = vmatpush1.bf16.msra.mxu0 0
        %3468 = vmatprep.subr.bf16.mxu0 0
        %3469 = vmatpush1.bf16.msra.mxu0 0
        %3470 = vmatprep.subr.bf16.mxu0 0
        %3471 = vmatpush1.bf16.msra.mxu0 0
        %3472 = vmatprep.subr.bf16.mxu0 0
        %3473 = vmatpush1.bf16.msra.mxu0 0
        %3474 = vmatprep.subr.bf16.mxu0 0
        %3475 = vmatpush1.bf16.msra.mxu0 0
        %3476 = vmatprep.subr.bf16.mxu0 0
        %3477 = vmatpush1.bf16.msra.mxu0 0
        %3478 = vmatprep.subr.bf16.mxu0 0
        %3479 = vmatpush1.bf16.msra.mxu0 0
        %3480 = vmatprep.subr.bf16.mxu0 0
        %3481 = vmatpush1.bf16.msra.mxu0 %v3464
        %3482 = vmatprep.subr.bf16.mxu0 0
        %3483 = vmatpush2.bf16.msra.mxu0 0
        %3484 = vmatprep.subr.bf16.mxu0 0
        %3485 = vmatpush2.bf16.msra.mxu0 0
        %3486 = vmatprep.subr.bf16.mxu0 0
        %3487 = vmatpush2.bf16.msra.mxu0 0
        %3488 = vmatprep.subr.bf16.mxu0 0
        %3489 = vmatpush2.bf16.msra.mxu0 0
        %3490 = vmatprep.subr.bf16.mxu0 0
        %3491 = vmatpush2.bf16.msra.mxu0 0
        %3492 = vmatprep.subr.bf16.mxu0 0
        %3493 = vmatpush2.bf16.msra.mxu0 0
        %3494 = vmatprep.subr.bf16.mxu0 0
        %3495 = vmatpush2.bf16.msra.mxu0 0
        %3496 = vmatprep.subr.bf16.mxu0 0
        %3497 = vmatpush2.bf16.msra.mxu0 0
        %3498 = vmatprep.mubr.bf16.mxu0 0
        %3499 = vmatmul.mubr.bf16.gmra.mxu0 %v3461
        %v3500 = vpop.f32.mrf.mxu0
        %v3501 = vadd.f32 0.0, %v3500
        %v3502 = vpop.f32.mrf.mxu0
        %v3503 = vpop.f32.mrf.mxu0
        %v3504 = vpop.f32.mrf.mxu0
        %3505 = vdwg.mxu0
        %v3506 = vpack.c.bf16 %v3501, %v3501
        %v3511 = vunpack.c.l.b16 %v2827
        %v3512 = vunpack.c.l.b16 %v2828
        %v3513 = vunpack.c.l.b16 %v2829
        %v3514 = vunpack.c.l.b16 %v2830
        %v3515 = vpack.c.b16 %v3512, %v3511
        %v3516 = vpack.c.b16 %v3514, %v3513
        %v3520 = vsel %vm1828, %v3506, 0
        %3522 = vmatprep.subr.bf16.mxu0 0
        %3523 = vmatpush1.bf16.msra.mxu0 0
        %3524 = vmatprep.subr.bf16.mxu0 0
        %3525 = vmatpush1.bf16.msra.mxu0 0
        %3526 = vmatprep.subr.bf16.mxu0 0
        %3527 = vmatpush1.bf16.msra.mxu0 0
        %3528 = vmatprep.subr.bf16.mxu0 0
        %3529 = vmatpush1.bf16.msra.mxu0 0
        %3530 = vmatprep.subr.bf16.mxu0 0
        %3531 = vmatpush1.bf16.msra.mxu0 0
        %3532 = vmatprep.subr.bf16.mxu0 0
        %3533 = vmatpush1.bf16.msra.mxu0 0
        %3534 = vmatprep.subr.bf16.mxu0 0
        %3535 = vmatpush1.bf16.msra.mxu0 %v3516
        %3536 = vmatprep.subr.bf16.mxu0 0
        %3537 = vmatpush1.bf16.msra.mxu0 %v3515
        %3538 = vmatprep.subr.bf16.mxu0 0
        %3539 = vmatpush2.bf16.msra.mxu0 0
        %3540 = vmatprep.subr.bf16.mxu0 0
        %3541 = vmatpush2.bf16.msra.mxu0 0
        %3542 = vmatprep.subr.bf16.mxu0 0
        %3543 = vmatpush2.bf16.msra.mxu0 0
        %3544 = vmatprep.subr.bf16.mxu0 0
        %3545 = vmatpush2.bf16.msra.mxu0 0
        %3546 = vmatprep.subr.bf16.mxu0 0
        %3547 = vmatpush2.bf16.msra.mxu0 0
        %3548 = vmatprep.subr.bf16.mxu0 0
        %3549 = vmatpush2.bf16.msra.mxu0 0
        %3550 = vmatprep.subr.bf16.mxu0 0
        %3551 = vmatpush2.bf16.msra.mxu0 0
        %3552 = vmatprep.subr.bf16.mxu0 0
        %3553 = vmatpush2.bf16.msra.mxu0 0
        %3554 = vmatprep.mubr.bf16.mxu0 0
        %3555 = vmatmul.mubr.bf16.gmra.mxu0 %v3520
        %v3556 = vpop.f32.mrf.mxu0
        %v3557 = vadd.f32 0.0, %v3556
        %v3558 = vpop.f32.mrf.mxu0
        %v3559 = vpop.f32.mrf.mxu0
        %v3560 = vpop.f32.mrf.mxu0
        %3561 = vdwg.mxu0
        %v3562 = vadd.f32 %v3391, %v3557
        %3563 = vrot.lane.b32.xlu0 %v3064, 32
        %v3564 = vpop.permute.xlu0 %3563
        %3565 = vrot.lane.b32.xlu0 %v3065, 32
        %v3566 = vpop.permute.xlu0 %3565
        %v3568 = vsel %vm1828, %v3564, 0
        %v3571 = vsel %vm1828, %v3566, 0
        %3573 = vmatprep.subr.bf16.mxu0 0
        %3574 = vmatpush1.bf16.xpose.msra.mxu0 0
        %3575 = vmatprep.subr.bf16.mxu0 0
        %3576 = vmatpush1.bf16.xpose.msra.mxu0 0
        %3577 = vmatprep.subr.bf16.mxu0 0
        %3578 = vmatpush1.bf16.xpose.msra.mxu0 0
        %3579 = vmatprep.subr.bf16.mxu0 0
        %3580 = vmatpush1.bf16.xpose.msra.mxu0 0
        %3581 = vmatprep.subr.bf16.mxu0 0
        %3582 = vmatpush1.bf16.xpose.msra.mxu0 0
        %3583 = vmatprep.subr.bf16.mxu0 0
        %3584 = vmatpush1.bf16.xpose.msra.mxu0 0
        %3585 = vmatprep.subr.bf16.mxu0 0
        %3586 = vmatpush1.bf16.xpose.msra.mxu0 0
        %3587 = vmatprep.subr.bf16.mxu0 0
        %3588 = vmatpush1.bf16.xpose.msra.mxu0 %v3571
        %3589 = vmatprep.subr.bf16.mxu0 0
        %3590 = vmatpush2.bf16.xpose.msra.mxu0 0
        %3591 = vmatprep.subr.bf16.mxu0 0
        %3592 = vmatpush2.bf16.xpose.msra.mxu0 0
        %3593 = vmatprep.subr.bf16.mxu0 0
        %3594 = vmatpush2.bf16.xpose.msra.mxu0 0
        %3595 = vmatprep.subr.bf16.mxu0 0
        %3596 = vmatpush2.bf16.xpose.msra.mxu0 0
        %3597 = vmatprep.subr.bf16.mxu0 0
        %3598 = vmatpush2.bf16.xpose.msra.mxu0 0
        %3599 = vmatprep.subr.bf16.mxu0 0
        %3600 = vmatpush2.bf16.xpose.msra.mxu0 0
        %3601 = vmatprep.subr.bf16.mxu0 0
        %3602 = vmatpush2.bf16.xpose.msra.mxu0 0
        %3603 = vmatprep.subr.bf16.mxu0 0
        %3604 = vmatpush2.bf16.xpose.msra.mxu0 0
        %3605 = vmatprep.mubr.bf16.mxu0 0
        %3606 = vmatmul.mubr.bf16.gmra.mxu0 %v3568
        %v3607 = vpop.f32.mrf.mxu0
        %v3608 = vadd.f32 0.0, %v3607
        %v3609 = vpop.f32.mrf.mxu0
        %v3610 = vpop.f32.mrf.mxu0
        %v3611 = vpop.f32.mrf.mxu0
        %3612 = vdwg.mxu0
        %v3613 = vsel %vm1875, %v3608, -inf
        %3614 = vmax.xlane.f32.xlu0 %v3613
        %v3615 = vpop.xlane.xlu0 %3614
        %v3616 = vsub.f32 %v3608, %v3615
        %v3617 = vmul.f32 %v3616, 1.442695
        %v3618 = vpow.pop %v3617
        %v3619 = vsel %vm1875, %v3618, 0.0
        %3620 = vadd.xlane.f32.xlu0 %v3619
        %v3621 = vpop.xlane.xlu0 %3620
        %v3622 = vrcp.pop %v3621
        %v3623 = vmul.f32 %v3618, %v3622
        %v3624 = vpack.c.bf16 %v3623, %v3623
        %3625 = vrot.lane.b32.xlu0 %v3066, 32
        %v3626 = vpop.permute.xlu0 %3625
        %v3628 = vsel %vm1875, %v3624, 0
        %v3631 = vsel %vm1891, %v3626, 0
        %3633 = vmatprep.subr.bf16.mxu0 0
        %3634 = vmatpush1.bf16.msra.mxu0 0
        %3635 = vmatprep.subr.bf16.mxu0 0
        %3636 = vmatpush1.bf16.msra.mxu0 0
        %3637 = vmatprep.subr.bf16.mxu0 0
        %3638 = vmatpush1.bf16.msra.mxu0 0
        %3639 = vmatprep.subr.bf16.mxu0 0
        %3640 = vmatpush1.bf16.msra.mxu0 0
        %3641 = vmatprep.subr.bf16.mxu0 0
        %3642 = vmatpush1.bf16.msra.mxu0 0
        %3643 = vmatprep.subr.bf16.mxu0 0
        %3644 = vmatpush1.bf16.msra.mxu0 0
        %3645 = vmatprep.subr.bf16.mxu0 0
        %3646 = vmatpush1.bf16.msra.mxu0 0
        %3647 = vmatprep.subr.bf16.mxu0 0
        %3648 = vmatpush1.bf16.msra.mxu0 %v3631
        %3649 = vmatprep.subr.bf16.mxu0 0
        %3650 = vmatpush2.bf16.msra.mxu0 0
        %3651 = vmatprep.subr.bf16.mxu0 0
        %3652 = vmatpush2.bf16.msra.mxu0 0
        %3653 = vmatprep.subr.bf16.mxu0 0
        %3654 = vmatpush2.bf16.msra.mxu0 0
        %3655 = vmatprep.subr.bf16.mxu0 0
        %3656 = vmatpush2.bf16.msra.mxu0 0
        %3657 = vmatprep.subr.bf16.mxu0 0
        %3658 = vmatpush2.bf16.msra.mxu0 0
        %3659 = vmatprep.subr.bf16.mxu0 0
        %3660 = vmatpush2.bf16.msra.mxu0 0
        %3661 = vmatprep.subr.bf16.mxu0 0
        %3662 = vmatpush2.bf16.msra.mxu0 0
        %3663 = vmatprep.subr.bf16.mxu0 0
        %3664 = vmatpush2.bf16.msra.mxu0 0
        %3665 = vmatprep.mubr.bf16.mxu0 0
        %3666 = vmatmul.mubr.bf16.gmra.mxu0 %v3628
        %v3667 = vpop.f32.mrf.mxu0
        %v3668 = vadd.f32 0.0, %v3667
        %v3669 = vpop.f32.mrf.mxu0
        %v3670 = vpop.f32.mrf.mxu0
        %v3671 = vpop.f32.mrf.mxu0
        %3672 = vdwg.mxu0
        %v3673 = vpack.c.bf16 %v3668, %v3668
        %v3678 = vunpack.c.l.b16 %v2831
        %v3679 = vunpack.c.l.b16 %v2832
        %v3680 = vunpack.c.l.b16 %v2833
        %v3681 = vunpack.c.l.b16 %v2834
        %v3682 = vpack.c.b16 %v3679, %v3678
        %v3683 = vpack.c.b16 %v3681, %v3680
        %v3687 = vsel %vm1828, %v3673, 0
        %3689 = vmatprep.subr.bf16.mxu0 0
        %3690 = vmatpush1.bf16.msra.mxu0 0
        %3691 = vmatprep.subr.bf16.mxu0 0
        %3692 = vmatpush1.bf16.msra.mxu0 0
        %3693 = vmatprep.subr.bf16.mxu0 0
        %3694 = vmatpush1.bf16.msra.mxu0 0
        %3695 = vmatprep.subr.bf16.mxu0 0
        %3696 = vmatpush1.bf16.msra.mxu0 0
        %3697 = vmatprep.subr.bf16.mxu0 0
        %3698 = vmatpush1.bf16.msra.mxu0 0
        %3699 = vmatprep.subr.bf16.mxu0 0
        %3700 = vmatpush1.bf16.msra.mxu0 0
        %3701 = vmatprep.subr.bf16.mxu0 0
        %3702 = vmatpush1.bf16.msra.mxu0 %v3683
        %3703 = vmatprep.subr.bf16.mxu0 0
        %3704 = vmatpush1.bf16.msra.mxu0 %v3682
        %3705 = vmatprep.subr.bf16.mxu0 0
        %3706 = vmatpush2.bf16.msra.mxu0 0
        %3707 = vmatprep.subr.bf16.mxu0 0
        %3708 = vmatpush2.bf16.msra.mxu0 0
        %3709 = vmatprep.subr.bf16.mxu0 0
        %3710 = vmatpush2.bf16.msra.mxu0 0
        %3711 = vmatprep.subr.bf16.mxu0 0
        %3712 = vmatpush2.bf16.msra.mxu0 0
        %3713 = vmatprep.subr.bf16.mxu0 0
        %3714 = vmatpush2.bf16.msra.mxu0 0
        %3715 = vmatprep.subr.bf16.mxu0 0
        %3716 = vmatpush2.bf16.msra.mxu0 0
        %3717 = vmatprep.subr.bf16.mxu0 0
        %3718 = vmatpush2.bf16.msra.mxu0 0
        %3719 = vmatprep.subr.bf16.mxu0 0
        %3720 = vmatpush2.bf16.msra.mxu0 0
        %3721 = vmatprep.mubr.bf16.mxu0 0
        %3722 = vmatmul.mubr.bf16.gmra.mxu0 %v3687
        %v3723 = vpop.f32.mrf.mxu0
        %v3724 = vadd.f32 0.0, %v3723
        %v3725 = vpop.f32.mrf.mxu0
        %v3726 = vpop.f32.mrf.mxu0
        %v3727 = vpop.f32.mrf.mxu0
        %3728 = vdwg.mxu0
        %v3729 = vadd.f32 %v3562, %v3724
        %v3731 = vlaneseq
        %v3732 = vshrl.u32 %v3731, 7
        %v3733 = vsub.s32 0, %v3732
        %v3734 = vrot.slane %v2836, %v3733
        %v3736 = vadd.f32 %v3729, %v3734
        %v3737 = vadd.f32 %v2782, %v3736
        %s3738 = scalar_lea.vmem %s15, 1
        %v3739 = vld [vmem:[%s3738] sm:$0x1]
        %s3740 = scalar_lea.vmem [#allocation8], 1
        %v3741 = vld [vmem:[%s3740] sm:$0x1]
        %3742 = vadd.xlane.f32.xlu0 %v3737
        %v3743 = vpop.xlane.xlu0 %3742
        %v3744 = vmul.f32 %v3743, %v2506
        %v3745 = vsub.f32 %v3737, %v3744
        %v3746 = vmul.f32 %v3745, %v3745
        %3747 = vadd.xlane.f32.xlu0 %v3746
        %v3748 = vpop.xlane.xlu0 %3747
        %v3749 = vmul.f32 %v3748, %v2506
        %v3750 = vadd.f32 %v3749, 1e-05
        %v3751 = vrsqrt.pop %v3750
        %v3752 = vmul.f32 %v3745, %v3751
        %v3754 = vlaneseq
        %v3755 = vshrl.u32 %v3754, 7
        %v3756 = vsub.s32 0, %v3755
        %v3757 = vrot.slane %v3739, %v3756
        %v3759 = vmul.f32 %v3752, %v3757
        %v3761 = vlaneseq
        %v3762 = vshrl.u32 %v3761, 7
        %v3763 = vsub.s32 0, %v3762
        %v3764 = vrot.slane %v3741, %v3763
        %v3766 = vadd.f32 %v3759, %v3764
        %s3767 = scalar_lea.vmem [#allocation13], 64
        %v3768 = vld [vmem:[%s3767] sm:$0xf]
        %v3769 = vld [vmem:[%s3767 + $0x4] sm:$0xf]
        %v3770 = vld [vmem:[%s3767 + $0x8] sm:$0xf]
        %v3771 = vld [vmem:[%s3767 + $0xc] sm:$0xf]
        %v3772 = vld [vmem:[%s3767 + $0x10] sm:$0xf]
        %v3773 = vld [vmem:[%s3767 + $0x14] sm:$0xf]
        %v3774 = vld [vmem:[%s3767 + $0x18] sm:$0xf]
        %v3775 = vld [vmem:[%s3767 + $0x1c] sm:$0xf]
        %v3776 = vld [vmem:[%s3767 + $0x20] sm:$0xf]
        %v3777 = vld [vmem:[%s3767 + $0x24] sm:$0xf]
        %v3778 = vld [vmem:[%s3767 + $0x28] sm:$0xf]
        %v3779 = vld [vmem:[%s3767 + $0x2c] sm:$0xf]
        %v3780 = vld [vmem:[%s3767 + $0x30] sm:$0xf]
        %v3781 = vld [vmem:[%s3767 + $0x34] sm:$0xf]
        %v3782 = vld [vmem:[%s3767 + $0x38] sm:$0xf]
        %v3783 = vld [vmem:[%s3767 + $0x3c] sm:$0xf]
        %s3784 = scalar_lea.vmem [#allocation14], 1
        %v3785 = vld [vmem:[%s3784] sm:$0x1]
        %s3786 = scalar_lea.vmem [#allocation16], 64
        %v3787 = vld [vmem:[%s3786] sm:$0xf]
        %v3788 = vld [vmem:[%s3786 + $0x4] sm:$0xf]
        %v3789 = vld [vmem:[%s3786 + $0x8] sm:$0xf]
        %v3790 = vld [vmem:[%s3786 + $0xc] sm:$0xf]
        %v3791 = vld [vmem:[%s3786 + $0x10] sm:$0xf]
        %v3792 = vld [vmem:[%s3786 + $0x14] sm:$0xf]
        %v3793 = vld [vmem:[%s3786 + $0x18] sm:$0xf]
        %v3794 = vld [vmem:[%s3786 + $0x1c] sm:$0xf]
        %v3795 = vld [vmem:[%s3786 + $0x20] sm:$0xf]
        %v3796 = vld [vmem:[%s3786 + $0x24] sm:$0xf]
        %v3797 = vld [vmem:[%s3786 + $0x28] sm:$0xf]
        %v3798 = vld [vmem:[%s3786 + $0x2c] sm:$0xf]
        %v3799 = vld [vmem:[%s3786 + $0x30] sm:$0xf]
        %v3800 = vld [vmem:[%s3786 + $0x34] sm:$0xf]
        %v3801 = vld [vmem:[%s3786 + $0x38] sm:$0xf]
        %v3802 = vld [vmem:[%s3786 + $0x3c] sm:$0xf]
        %s3803 = scalar_lea.vmem [#allocation17], 1
        %v3804 = vld [vmem:[%s3803] sm:$0x1]
        %v3805 = vpack.c.bf16 %v3766, %v3766
        %v3807 = vlaneseq
        %v3808 = vshrl.u32 %v3807, 7
        %v3809 = vsub.s32 0, %v3808
        %v3810 = vrot.slane %v3785, %v3809
        %v3828 = vunpack.c.l.b16 %v3768
        %v3829 = vunpack.c.l.b16 %v3769
        %v3830 = vunpack.c.l.b16 %v3770
        %v3831 = vunpack.c.l.b16 %v3771
        %v3832 = vunpack.c.l.b16 %v3772
        %v3833 = vunpack.c.l.b16 %v3773
        %v3834 = vunpack.c.l.b16 %v3774
        %v3835 = vunpack.c.l.b16 %v3775
        %v3836 = vunpack.c.l.b16 %v3776
        %v3837 = vunpack.c.l.b16 %v3777
        %v3838 = vunpack.c.l.b16 %v3778
        %v3839 = vunpack.c.l.b16 %v3779
        %v3840 = vunpack.c.l.b16 %v3780
        %v3841 = vunpack.c.l.b16 %v3781
        %v3842 = vunpack.c.l.b16 %v3782
        %v3843 = vunpack.c.l.b16 %v3783
        %v3844 = vpack.c.b16 %v3829, %v3828
        %v3845 = vpack.c.b16 %v3831, %v3830
        %v3846 = vpack.c.b16 %v3833, %v3832
        %v3847 = vpack.c.b16 %v3835, %v3834
        %v3848 = vpack.c.b16 %v3837, %v3836
        %v3849 = vpack.c.b16 %v3839, %v3838
        %v3850 = vpack.c.b16 %v3841, %v3840
        %v3851 = vpack.c.b16 %v3843, %v3842
        %3860 = vmatprep.subr.bf16.mxu0 0
        %3861 = vmatpush1.bf16.msra.mxu0 %v3851
        %3862 = vmatprep.subr.bf16.mxu0 0
        %3863 = vmatpush1.bf16.msra.mxu0 %v3850
        %3864 = vmatprep.subr.bf16.mxu0 0
        %3865 = vmatpush1.bf16.msra.mxu0 %v3849
        %3866 = vmatprep.subr.bf16.mxu0 0
        %3867 = vmatpush1.bf16.msra.mxu0 %v3848
        %3868 = vmatprep.subr.bf16.mxu0 0
        %3869 = vmatpush1.bf16.msra.mxu0 %v3847
        %3870 = vmatprep.subr.bf16.mxu0 0
        %3871 = vmatpush1.bf16.msra.mxu0 %v3846
        %3872 = vmatprep.subr.bf16.mxu0 0
        %3873 = vmatpush1.bf16.msra.mxu0 %v3845
        %3874 = vmatprep.subr.bf16.mxu0 0
        %3875 = vmatpush1.bf16.msra.mxu0 %v3844
        %3876 = vmatprep.subr.bf16.mxu0 0
        %3877 = vmatpush2.bf16.msra.mxu0 0
        %3878 = vmatprep.subr.bf16.mxu0 0
        %3879 = vmatpush2.bf16.msra.mxu0 0
        %3880 = vmatprep.subr.bf16.mxu0 0
        %3881 = vmatpush2.bf16.msra.mxu0 0
        %3882 = vmatprep.subr.bf16.mxu0 0
        %3883 = vmatpush2.bf16.msra.mxu0 0
        %3884 = vmatprep.subr.bf16.mxu0 0
        %3885 = vmatpush2.bf16.msra.mxu0 0
        %3886 = vmatprep.subr.bf16.mxu0 0
        %3887 = vmatpush2.bf16.msra.mxu0 0
        %3888 = vmatprep.subr.bf16.mxu0 0
        %3889 = vmatpush2.bf16.msra.mxu0 0
        %3890 = vmatprep.subr.bf16.mxu0 0
        %3891 = vmatpush2.bf16.msra.mxu0 0
        %3892 = vmatprep.mubr.bf16.mxu0 0
        %3893 = vmatmul.mubr.bf16.gmra.mxu0 %v3805
        %v3894 = vpop.f32.mrf.mxu0
        %v3895 = vadd.f32 %v3810, %v3894
        %v3896 = vpop.f32.mrf.mxu0
        %v3897 = vpop.f32.mrf.mxu0
        %v3898 = vpop.f32.mrf.mxu0
        %3899 = vdwg.mxu0
        %v3900 = vmax.f32 %v3895, 0.0
        %v3901 = vpack.c.bf16 %v3900, %v3900
        %v3903 = vlaneseq
        %v3904 = vshrl.u32 %v3903, 7
        %v3905 = vsub.s32 0, %v3904
        %v3906 = vrot.slane %v3804, %v3905
        %v3924 = vunpack.c.l.b16 %v3787
        %v3925 = vunpack.c.l.b16 %v3788
        %v3926 = vunpack.c.l.b16 %v3789
        %v3927 = vunpack.c.l.b16 %v3790
        %v3928 = vunpack.c.l.b16 %v3791
        %v3929 = vunpack.c.l.b16 %v3792
        %v3930 = vunpack.c.l.b16 %v3793
        %v3931 = vunpack.c.l.b16 %v3794
        %v3932 = vunpack.c.l.b16 %v3795
        %v3933 = vunpack.c.l.b16 %v3796
        %v3934 = vunpack.c.l.b16 %v3797
        %v3935 = vunpack.c.l.b16 %v3798
        %v3936 = vunpack.c.l.b16 %v3799
        %v3937 = vunpack.c.l.b16 %v3800
        %v3938 = vunpack.c.l.b16 %v3801
        %v3939 = vunpack.c.l.b16 %v3802
        %v3940 = vpack.c.b16 %v3925, %v3924
        %v3941 = vpack.c.b16 %v3927, %v3926
        %v3942 = vpack.c.b16 %v3929, %v3928
        %v3943 = vpack.c.b16 %v3931, %v3930
        %v3944 = vpack.c.b16 %v3933, %v3932
        %v3945 = vpack.c.b16 %v3935, %v3934
        %v3946 = vpack.c.b16 %v3937, %v3936
        %v3947 = vpack.c.b16 %v3939, %v3938
        %3956 = vmatprep.subr.bf16.mxu0 0
        %3957 = vmatpush1.bf16.msra.mxu0 %v3947
        %3958 = vmatprep.subr.bf16.mxu0 0
        %3959 = vmatpush1.bf16.msra.mxu0 %v3946
        %3960 = vmatprep.subr.bf16.mxu0 0
        %3961 = vmatpush1.bf16.msra.mxu0 %v3945
        %3962 = vmatprep.subr.bf16.mxu0 0
        %3963 = vmatpush1.bf16.msra.mxu0 %v3944
        %3964 = vmatprep.subr.bf16.mxu0 0
        %3965 = vmatpush1.bf16.msra.mxu0 %v3943
        %3966 = vmatprep.subr.bf16.mxu0 0
        %3967 = vmatpush1.bf16.msra.mxu0 %v3942
        %3968 = vmatprep.subr.bf16.mxu0 0
        %3969 = vmatpush1.bf16.msra.mxu0 %v3941
        %3970 = vmatprep.subr.bf16.mxu0 0
        %3971 = vmatpush1.bf16.msra.mxu0 %v3940
        %3972 = vmatprep.subr.bf16.mxu0 0
        %3973 = vmatpush2.bf16.msra.mxu0 0
        %3974 = vmatprep.subr.bf16.mxu0 0
        %3975 = vmatpush2.bf16.msra.mxu0 0
        %3976 = vmatprep.subr.bf16.mxu0 0
        %3977 = vmatpush2.bf16.msra.mxu0 0
        %3978 = vmatprep.subr.bf16.mxu0 0
        %3979 = vmatpush2.bf16.msra.mxu0 0
        %3980 = vmatprep.subr.bf16.mxu0 0
        %3981 = vmatpush2.bf16.msra.mxu0 0
        %3982 = vmatprep.subr.bf16.mxu0 0
        %3983 = vmatpush2.bf16.msra.mxu0 0
        %3984 = vmatprep.subr.bf16.mxu0 0
        %3985 = vmatpush2.bf16.msra.mxu0 0
        %3986 = vmatprep.subr.bf16.mxu0 0
        %3987 = vmatpush2.bf16.msra.mxu0 0
        %3988 = vmatprep.mubr.bf16.mxu0 0
        %3989 = vmatmul.mubr.bf16.gmra.mxu0 %v3901
        %v3990 = vpop.f32.mrf.mxu0
        %v3991 = vadd.f32 %v3906, %v3990
        %v3992 = vpop.f32.mrf.mxu0
        %v3993 = vpop.f32.mrf.mxu0
        %v3994 = vpop.f32.mrf.mxu0
        %3995 = vdwg.mxu0
        %v3996 = vadd.f32 %v3766, %v3991
        %s3997 = scalar_lea.vmem [#allocation10], 1
        %v3998 = vld [vmem:[%s3997] sm:$0x1]
        %s3999 = scalar_lea.vmem [#allocation11], 1
        %v4000 = vld [vmem:[%s3999] sm:$0x1]
        %4001 = vadd.xlane.f32.xlu0 %v3996
        %v4002 = vpop.xlane.xlu0 %4001
        %v4003 = vmul.f32 %v4002, %v2506
        %v4004 = vsub.f32 %v3996, %v4003
        %v4005 = vmul.f32 %v4004, %v4004
        %4006 = vadd.xlane.f32.xlu0 %v4005
        %v4007 = vpop.xlane.xlu0 %4006
        %v4008 = vmul.f32 %v4007, %v2506
        %v4009 = vadd.f32 %v4008, 1e-05
        %v4010 = vrsqrt.pop %v4009
        %v4011 = vmul.f32 %v4004, %v4010
        %v4013 = vlaneseq
        %v4014 = vshrl.u32 %v4013, 7
        %v4015 = vsub.s32 0, %v4014
        %v4016 = vrot.slane %v3998, %v4015
        %v4018 = vmul.f32 %v4011, %v4016
        %v4020 = vlaneseq
        %v4021 = vshrl.u32 %v4020, 7
        %v4022 = vsub.s32 0, %v4021
        %v4023 = vrot.slane %v4000, %v4022
        %v4025 = vadd.f32 %v4018, %v4023
        %v4026 = vld [vmem:[#allocation19] sm:$0xff]
        %v4027 = vld [vmem:[#allocation19 + $0x8] sm:$0xf]
        %v4028 = vld [vmem:[#allocation19 + $0xc] sm:$0xff]
        %v4029 = vld [vmem:[#allocation19 + $0x14] sm:$0xf]
        %v4030 = vld [vmem:[#allocation19 + $0x18] sm:$0xff]
        %v4031 = vld [vmem:[#allocation19 + $0x20] sm:$0xf]
        %v4032 = vld [vmem:[#allocation19 + $0x24] sm:$0xff]
        %v4033 = vld [vmem:[#allocation19 + $0x2c] sm:$0xf]
        %v4034 = vld [vmem:[#allocation19 + $0x30] sm:$0xff]
        %v4035 = vld [vmem:[#allocation19 + $0x38] sm:$0xf]
        %v4036 = vld [vmem:[#allocation19 + $0x3c] sm:$0xff]
        %v4037 = vld [vmem:[#allocation19 + $0x44] sm:$0xf]
        %v4038 = vld [vmem:[#allocation19 + $0x48] sm:$0xff]
        %v4039 = vld [vmem:[#allocation19 + $0x50] sm:$0xf]
        %v4040 = vld [vmem:[#allocation19 + $0x54] sm:$0xff]
        %v4041 = vld [vmem:[#allocation19 + $0x5c] sm:$0xf]
        %v4042 = vld [vmem:[#allocation19 + $0x60] sm:$0xff]
        %v4043 = vld [vmem:[#allocation19 + $0x68] sm:$0xf]
        %v4044 = vld [vmem:[#allocation19 + $0x6c] sm:$0xff]
        %v4045 = vld [vmem:[#allocation19 + $0x74] sm:$0xf]
        %v4046 = vld [vmem:[#allocation19 + $0x78] sm:$0xff]
        %v4047 = vld [vmem:[#allocation19 + $0x80] sm:$0xf]
        %v4048 = vld [vmem:[#allocation19 + $0x84] sm:$0xff]
        %v4049 = vld [vmem:[#allocation19 + $0x8c] sm:$0xf]
        %v4050 = vld [vmem:[#allocation19 + $0x90] sm:$0xff]
        %v4051 = vld [vmem:[#allocation19 + $0x98] sm:$0xf]
        %v4052 = vld [vmem:[#allocation19 + $0x9c] sm:$0xff]
        %v4053 = vld [vmem:[#allocation19 + $0xa4] sm:$0xf]
        %v4054 = vld [vmem:[#allocation19 + $0xa8] sm:$0xff]
        %v4055 = vld [vmem:[#allocation19 + $0xb0] sm:$0xf]
        %v4056 = vld [vmem:[#allocation19 + $0xb4] sm:$0xff]
        %v4057 = vld [vmem:[#allocation19 + $0xbc] sm:$0xf]
        %v4058 = vld [vmem:[%s33] sm:$0x7]
        %v4059 = vld [vmem:[#allocation20] sm:$0xf]
        %v4060 = vld [vmem:[#allocation20 + $0x4] sm:$0xf]
        %v4061 = vld [vmem:[#allocation20 + $0x8] sm:$0xf]
        %v4062 = vld [vmem:[#allocation20 + $0xc] sm:$0xf]
        %v4063 = vld [vmem:[#allocation20 + $0x10] sm:$0xf]
        %v4064 = vld [vmem:[#allocation20 + $0x14] sm:$0xf]
        %v4065 = vld [vmem:[#allocation20 + $0x18] sm:$0xf]
        %v4066 = vld [vmem:[#allocation20 + $0x1c] sm:$0xf]
        %v4067 = vld [vmem:[#allocation20 + $0x20] sm:$0xf]
        %v4068 = vld [vmem:[#allocation20 + $0x24] sm:$0xf]
        %v4069 = vld [vmem:[#allocation20 + $0x28] sm:$0xf]
        %v4070 = vld [vmem:[#allocation20 + $0x2c] sm:$0xf]
        %v4071 = vld [vmem:[#allocation20 + $0x30] sm:$0xf]
        %v4072 = vld [vmem:[#allocation20 + $0x34] sm:$0xf]
        %v4073 = vld [vmem:[#allocation20 + $0x38] sm:$0xf]
        %v4074 = vld [vmem:[#allocation20 + $0x3c] sm:$0xf]
        %v4075 = vld [vmem:[#allocation22] sm:$0x1]
        %v4077 = vlaneseq
        %v4078 = vshrl.u32 %v4077, 7
        %v4079 = vsub.s32 0, %v4078
        %v4080 = vrot.slane %v4058, %v4079
        %v4081 = vlaneseq
        %v4082 = vshrl.u32 %v4081, 7
        %v4083 = vsub.s32 1, %v4082
        %v4084 = vrot.slane %v4058, %v4083
        %v4085 = vlaneseq
        %v4086 = vshrl.u32 %v4085, 7
        %v4087 = vsub.s32 2, %v4086
        %v4088 = vrot.slane %v4058, %v4087
        %v4124 = vunpack.c.l.b16 %v4026
        %v4125 = vunpack.c.h.b16 %v4026
        %v4126 = vunpack.c.l.b16 %v4027
        %v4127 = vunpack.c.l.b16 %v4028
        %v4128 = vunpack.c.h.b16 %v4028
        %v4129 = vunpack.c.l.b16 %v4029
        %v4130 = vunpack.c.l.b16 %v4030
        %v4131 = vunpack.c.h.b16 %v4030
        %v4132 = vunpack.c.l.b16 %v4031
        %v4133 = vunpack.c.l.b16 %v4032
        %v4134 = vunpack.c.h.b16 %v4032
        %v4135 = vunpack.c.l.b16 %v4033
        %v4136 = vunpack.c.l.b16 %v4034
        %v4137 = vunpack.c.h.b16 %v4034
        %v4138 = vunpack.c.l.b16 %v4035
        %v4139 = vunpack.c.l.b16 %v4036
        %v4140 = vunpack.c.h.b16 %v4036
        %v4141 = vunpack.c.l.b16 %v4037
        %v4142 = vunpack.c.l.b16 %v4038
        %v4143 = vunpack.c.h.b16 %v4038
        %v4144 = vunpack.c.l.b16 %v4039
        %v4145 = vunpack.c.l.b16 %v4040
        %v4146 = vunpack.c.h.b16 %v4040
        %v4147 = vunpack.c.l.b16 %v4041
        %v4148 = vunpack.c.l.b16 %v4042
        %v4149 = vunpack.c.h.b16 %v4042
        %v4150 = vunpack.c.l.b16 %v4043
        %v4151 = vunpack.c.l.b16 %v4044
        %v4152 = vunpack.c.h.b16 %v4044
        %v4153 = vunpack.c.l.b16 %v4045
        %v4154 = vunpack.c.l.b16 %v4046
        %v4155 = vunpack.c.h.b16 %v4046
        %v4156 = vunpack.c.l.b16 %v4047
        %v4157 = vunpack.c.l.b16 %v4048
        %v4158 = vunpack.c.h.b16 %v4048
        %v4159 = vunpack.c.l.b16 %v4049
        %v4160 = vunpack.c.l.b16 %v4050
        %v4161 = vunpack.c.h.b16 %v4050
        %v4162 = vunpack.c.l.b16 %v4051
        %v4163 = vunpack.c.l.b16 %v4052
        %v4164 = vunpack.c.h.b16 %v4052
        %v4165 = vunpack.c.l.b16 %v4053
        %v4166 = vunpack.c.l.b16 %v4054
        %v4167 = vunpack.c.h.b16 %v4054
        %v4168 = vunpack.c.l.b16 %v4055
        %v4169 = vunpack.c.l.b16 %v4056
        %v4170 = vunpack.c.h.b16 %v4056
        %v4171 = vunpack.c.l.b16 %v4057
        %v4172 = vpack.c.b16 %v4127, %v4124
        %v4173 = vpack.c.b16 %v4128, %v4125
        %v4174 = vpack.c.b16 %v4129, %v4126
        %v4175 = vpack.c.b16 %v4133, %v4130
        %v4176 = vpack.c.b16 %v4134, %v4131
        %v4177 = vpack.c.b16 %v4135, %v4132
        %v4178 = vpack.c.b16 %v4139, %v4136
        %v4179 = vpack.c.b16 %v4140, %v4137
        %v4180 = vpack.c.b16 %v4141, %v4138
        %v4181 = vpack.c.b16 %v4145, %v4142
        %v4182 = vpack.c.b16 %v4146, %v4143
        %v4183 = vpack.c.b16 %v4147, %v4144
        %v4184 = vpack.c.b16 %v4151, %v4148
        %v4185 = vpack.c.b16 %v4152, %v4149
        %v4186 = vpack.c.b16 %v4153, %v4150
        %v4187 = vpack.c.b16 %v4157, %v4154
        %v4188 = vpack.c.b16 %v4158, %v4155
        %v4189 = vpack.c.b16 %v4159, %v4156
        %v4190 = vpack.c.b16 %v4163, %v4160
        %v4191 = vpack.c.b16 %v4164, %v4161
        %v4192 = vpack.c.b16 %v4165, %v4162
        %v4193 = vpack.c.b16 %v4169, %v4166
        %v4194 = vpack.c.b16 %v4170, %v4167
        %v4195 = vpack.c.b16 %v4171, %v4168
        %4220 = vmatprep.subr.bf16.mxu0 %v4194
        %4221 = vmatpush1.bf16.msra.mxu0 %v4193
        %4222 = vmatprep.subr.bf16.mxu0 %v4191
        %4223 = vmatpush1.bf16.msra.mxu0 %v4190
        %4224 = vmatprep.subr.bf16.mxu0 %v4188
        %4225 = vmatpush1.bf16.msra.mxu0 %v4187
        %4226 = vmatprep.subr.bf16.mxu0 %v4185
        %4227 = vmatpush1.bf16.msra.mxu0 %v4184
        %4228 = vmatprep.subr.bf16.mxu0 %v4182
        %4229 = vmatpush1.bf16.msra.mxu0 %v4181
        %4230 = vmatprep.subr.bf16.mxu0 %v4179
        %4231 = vmatpush1.bf16.msra.mxu0 %v4178
        %4232 = vmatprep.subr.bf16.mxu0 %v4176
        %4233 = vmatpush1.bf16.msra.mxu0 %v4175
        %4234 = vmatprep.subr.bf16.mxu0 %v4173
        %4235 = vmatpush1.bf16.msra.mxu0 %v4172
        %4236 = vmatprep.subr.bf16.mxu0 0
        %4237 = vmatpush2.bf16.msra.mxu0 0
        %4238 = vmatprep.subr.bf16.mxu0 0
        %4239 = vmatpush2.bf16.msra.mxu0 0
        %4240 = vmatprep.subr.bf16.mxu0 0
        %4241 = vmatpush2.bf16.msra.mxu0 0
        %4242 = vmatprep.subr.bf16.mxu0 0
        %4243 = vmatpush2.bf16.msra.mxu0 0
        %4244 = vmatprep.subr.bf16.mxu0 0
        %4245 = vmatpush2.bf16.msra.mxu0 0
        %4246 = vmatprep.subr.bf16.mxu0 0
        %4247 = vmatpush2.bf16.msra.mxu0 0
        %4248 = vmatprep.subr.bf16.mxu0 0
        %4249 = vmatpush2.bf16.msra.mxu0 0
        %4250 = vmatprep.subr.bf16.mxu0 0
        %4251 = vmatpush2.bf16.msra.mxu0 0
        %4252 = vmatprep.mubr.bf16.mxu0 0
        %4253 = vmatmul.mubr.bf16.gmra.mxu0 %v1598
        %v4254 = vpop.f32.mrf.mxu0
        %v4255 = vadd.f32 %v4080, %v4254
        %v4256 = vpop.f32.mrf.mxu0
        %v4257 = vadd.f32 %v4084, %v4256
        %v4258 = vpop.f32.mrf.mxu0
        %v4259 = vpop.f32.mrf.mxu0
        %4260 = vdwg.mxu0
        %4261 = vmatprep.subr.bf16.mxu0 0
        %4262 = vmatpush1.bf16.msra.mxu0 %v4195
        %4263 = vmatprep.subr.bf16.mxu0 0
        %4264 = vmatpush1.bf16.msra.mxu0 %v4192
        %4265 = vmatprep.subr.bf16.mxu0 0
        %4266 = vmatpush1.bf16.msra.mxu0 %v4189
        %4267 = vmatprep.subr.bf16.mxu0 0
        %4268 = vmatpush1.bf16.msra.mxu0 %v4186
        %4269 = vmatprep.subr.bf16.mxu0 0
        %4270 = vmatpush1.bf16.msra.mxu0 %v4183
        %4271 = vmatprep.subr.bf16.mxu0 0
        %4272 = vmatpush1.bf16.msra.mxu0 %v4180
        %4273 = vmatprep.subr.bf16.mxu0 0
        %4274 = vmatpush1.bf16.msra.mxu0 %v4177
        %4275 = vmatprep.subr.bf16.mxu0 0
        %4276 = vmatpush1.bf16.msra.mxu0 %v4174
        %4277 = vmatprep.subr.bf16.mxu0 0
        %4278 = vmatpush2.bf16.msra.mxu0 0
        %4279 = vmatprep.subr.bf16.mxu0 0
        %4280 = vmatpush2.bf16.msra.mxu0 0
        %4281 = vmatprep.subr.bf16.mxu0 0
        %4282 = vmatpush2.bf16.msra.mxu0 0
        %4283 = vmatprep.subr.bf16.mxu0 0
        %4284 = vmatpush2.bf16.msra.mxu0 0
        %4285 = vmatprep.subr.bf16.mxu0 0
        %4286 = vmatpush2.bf16.msra.mxu0 0
        %4287 = vmatprep.subr.bf16.mxu0 0
        %4288 = vmatpush2.bf16.msra.mxu0 0
        %4289 = vmatprep.subr.bf16.mxu0 0
        %4290 = vmatpush2.bf16.msra.mxu0 0
        %4291 = vmatprep.subr.bf16.mxu0 0
        %4292 = vmatpush2.bf16.msra.mxu0 0
        %4293 = vmatprep.mubr.bf16.mxu0 0
        %4294 = vmatmul.mubr.bf16.gmra.mxu0 %v1598
        %v4295 = vpop.f32.mrf.mxu0
        %v4296 = vadd.f32 %v4088, %v4295
        %v4297 = vpop.f32.mrf.mxu0
        %v4298 = vpop.f32.mrf.mxu0
        %v4299 = vpop.f32.mrf.mxu0
        %4300 = vdwg.mxu0
        %v4301 = vmul.f32 %v4255, 0.17677669
        %v4302 = vpack.c.bf16 %v4301, %v4301
        %v4303 = vpack.c.bf16 %v4257, %v4257
        %v4304 = vpack.c.bf16 %v4296, %v4296
        %v4306 = vsel %vm1828, %v4302, 0
        %v4309 = vsel %vm1828, %v4303, 0
        %4311 = vmatprep.subr.bf16.mxu0 0
        %4312 = vmatpush1.bf16.xpose.msra.mxu0 0
        %4313 = vmatprep.subr.bf16.mxu0 0
        %4314 = vmatpush1.bf16.xpose.msra.mxu0 0
        %4315 = vmatprep.subr.bf16.mxu0 0
        %4316 = vmatpush1.bf16.xpose.msra.mxu0 0
        %4317 = vmatprep.subr.bf16.mxu0 0
        %4318 = vmatpush1.bf16.xpose.msra.mxu0 0
        %4319 = vmatprep.subr.bf16.mxu0 0
        %4320 = vmatpush1.bf16.xpose.msra.mxu0 0
        %4321 = vmatprep.subr.bf16.mxu0 0
        %4322 = vmatpush1.bf16.xpose.msra.mxu0 0
        %4323 = vmatprep.subr.bf16.mxu0 0
        %4324 = vmatpush1.bf16.xpose.msra.mxu0 0
        %4325 = vmatprep.subr.bf16.mxu0 0
        %4326 = vmatpush1.bf16.xpose.msra.mxu0 %v4309
        %4327 = vmatprep.subr.bf16.mxu0 0
        %4328 = vmatpush2.bf16.xpose.msra.mxu0 0
        %4329 = vmatprep.subr.bf16.mxu0 0
        %4330 = vmatpush2.bf16.xpose.msra.mxu0 0
        %4331 = vmatprep.subr.bf16.mxu0 0
        %4332 = vmatpush2.bf16.xpose.msra.mxu0 0
        %4333 = vmatprep.subr.bf16.mxu0 0
        %4334 = vmatpush2.bf16.xpose.msra.mxu0 0
        %4335 = vmatprep.subr.bf16.mxu0 0
        %4336 = vmatpush2.bf16.xpose.msra.mxu0 0
        %4337 = vmatprep.subr.bf16.mxu0 0
        %4338 = vmatpush2.bf16.xpose.msra.mxu0 0
        %4339 = vmatprep.subr.bf16.mxu0 0
        %4340 = vmatpush2.bf16.xpose.msra.mxu0 0
        %4341 = vmatprep.subr.bf16.mxu0 0
        %4342 = vmatpush2.bf16.xpose.msra.mxu0 0
        %4343 = vmatprep.mubr.bf16.mxu0 0
        %4344 = vmatmul.mubr.bf16.gmra.mxu0 %v4306
        %v4345 = vpop.f32.mrf.mxu0
        %v4346 = vadd.f32 0.0, %v4345
        %v4347 = vpop.f32.mrf.mxu0
        %v4348 = vpop.f32.mrf.mxu0
        %v4349 = vpop.f32.mrf.mxu0
        %4350 = vdwg.mxu0
        %v4351 = vsel %vm1875, %v4346, -inf
        %4352 = vmax.xlane.f32.xlu0 %v4351
        %v4353 = vpop.xlane.xlu0 %4352
        %v4354 = vsub.f32 %v4346, %v4353
        %v4355 = vmul.f32 %v4354, 1.442695
        %v4356 = vpow.pop %v4355
        %v4357 = vsel %vm1875, %v4356, 0.0
        %4358 = vadd.xlane.f32.xlu0 %v4357
        %v4359 = vpop.xlane.xlu0 %4358
        %v4360 = vrcp.pop %v4359
        %v4361 = vmul.f32 %v4356, %v4360
        %v4362 = vpack.c.bf16 %v4361, %v4361
        %v4364 = vsel %vm1875, %v4362, 0
        %v4367 = vsel %vm1891, %v4304, 0
        %4369 = vmatprep.subr.bf16.mxu0 0
        %4370 = vmatpush1.bf16.msra.mxu0 0
        %4371 = vmatprep.subr.bf16.mxu0 0
        %4372 = vmatpush1.bf16.msra.mxu0 0
        %4373 = vmatprep.subr.bf16.mxu0 0
        %4374 = vmatpush1.bf16.msra.mxu0 0
        %4375 = vmatprep.subr.bf16.mxu0 0
        %4376 = vmatpush1.bf16.msra.mxu0 0
        %4377 = vmatprep.subr.bf16.mxu0 0
        %4378 = vmatpush1.bf16.msra.mxu0 0
        %4379 = vmatprep.subr.bf16.mxu0 0
        %4380 = vmatpush1.bf16.msra.mxu0 0
        %4381 = vmatprep.subr.bf16.mxu0 0
        %4382 = vmatpush1.bf16.msra.mxu0 0
        %4383 = vmatprep.subr.bf16.mxu0 0
        %4384 = vmatpush1.bf16.msra.mxu0 %v4367
        %4385 = vmatprep.subr.bf16.mxu0 0
        %4386 = vmatpush2.bf16.msra.mxu0 0
        %4387 = vmatprep.subr.bf16.mxu0 0
        %4388 = vmatpush2.bf16.msra.mxu0 0
        %4389 = vmatprep.subr.bf16.mxu0 0
        %4390 = vmatpush2.bf16.msra.mxu0 0
        %4391 = vmatprep.subr.bf16.mxu0 0
        %4392 = vmatpush2.bf16.msra.mxu0 0
        %4393 = vmatprep.subr.bf16.mxu0 0
        %4394 = vmatpush2.bf16.msra.mxu0 0
        %4395 = vmatprep.subr.bf16.mxu0 0
        %4396 = vmatpush2.bf16.msra.mxu0 0
        %4397 = vmatprep.subr.bf16.mxu0 0
        %4398 = vmatpush2.bf16.msra.mxu0 0
        %4399 = vmatprep.subr.bf16.mxu0 0
        %4400 = vmatpush2.bf16.msra.mxu0 0
        %4401 = vmatprep.mubr.bf16.mxu0 0
        %4402 = vmatmul.mubr.bf16.gmra.mxu0 %v4364
        %v4403 = vpop.f32.mrf.mxu0
        %v4404 = vadd.f32 0.0, %v4403
        %v4405 = vpop.f32.mrf.mxu0
        %v4406 = vpop.f32.mrf.mxu0
        %v4407 = vpop.f32.mrf.mxu0
        %4408 = vdwg.mxu0
        %v4409 = vpack.c.bf16 %v4404, %v4404
        %4411 = vrot.lane.b32.xlu0 %v4302, 96
        %v4412 = vpop.permute.xlu0 %4411
        %4414 = vrot.lane.b32.xlu0 %v4303, 96
        %v4415 = vpop.permute.xlu0 %4414
        %v4417 = vsel %vm1828, %v4412, 0
        %v4420 = vsel %vm1828, %v4415, 0
        %4422 = vmatprep.subr.bf16.mxu0 0
        %4423 = vmatpush1.bf16.xpose.msra.mxu0 0
        %4424 = vmatprep.subr.bf16.mxu0 0
        %4425 = vmatpush1.bf16.xpose.msra.mxu0 0
        %4426 = vmatprep.subr.bf16.mxu0 0
        %4427 = vmatpush1.bf16.xpose.msra.mxu0 0
        %4428 = vmatprep.subr.bf16.mxu0 0
        %4429 = vmatpush1.bf16.xpose.msra.mxu0 0
        %4430 = vmatprep.subr.bf16.mxu0 0
        %4431 = vmatpush1.bf16.xpose.msra.mxu0 0
        %4432 = vmatprep.subr.bf16.mxu0 0
        %4433 = vmatpush1.bf16.xpose.msra.mxu0 0
        %4434 = vmatprep.subr.bf16.mxu0 0
        %4435 = vmatpush1.bf16.xpose.msra.mxu0 0
        %4436 = vmatprep.subr.bf16.mxu0 0
        %4437 = vmatpush1.bf16.xpose.msra.mxu0 %v4420
        %4438 = vmatprep.subr.bf16.mxu0 0
        %4439 = vmatpush2.bf16.xpose.msra.mxu0 0
        %4440 = vmatprep.subr.bf16.mxu0 0
        %4441 = vmatpush2.bf16.xpose.msra.mxu0 0
        %4442 = vmatprep.subr.bf16.mxu0 0
        %4443 = vmatpush2.bf16.xpose.msra.mxu0 0
        %4444 = vmatprep.subr.bf16.mxu0 0
        %4445 = vmatpush2.bf16.xpose.msra.mxu0 0
        %4446 = vmatprep.subr.bf16.mxu0 0
        %4447 = vmatpush2.bf16.xpose.msra.mxu0 0
        %4448 = vmatprep.subr.bf16.mxu0 0
        %4449 = vmatpush2.bf16.xpose.msra.mxu0 0
        %4450 = vmatprep.subr.bf16.mxu0 0
        %4451 = vmatpush2.bf16.xpose.msra.mxu0 0
        %4452 = vmatprep.subr.bf16.mxu0 0
        %4453 = vmatpush2.bf16.xpose.msra.mxu0 0
        %4454 = vmatprep.mubr.bf16.mxu0 0
        %4455 = vmatmul.mubr.bf16.gmra.mxu0 %v4417
        %v4456 = vpop.f32.mrf.mxu0
        %v4457 = vadd.f32 0.0, %v4456
        %v4458 = vpop.f32.mrf.mxu0
        %v4459 = vpop.f32.mrf.mxu0
        %v4460 = vpop.f32.mrf.mxu0
        %4461 = vdwg.mxu0
        %v4462 = vsel %vm1875, %v4457, -inf
        %4463 = vmax.xlane.f32.xlu0 %v4462
        %v4464 = vpop.xlane.xlu0 %4463
        %v4465 = vsub.f32 %v4457, %v4464
        %v4466 = vmul.f32 %v4465, 1.442695
        %v4467 = vpow.pop %v4466
        %v4468 = vsel %vm1875, %v4467, 0.0
        %4469 = vadd.xlane.f32.xlu0 %v4468
        %v4470 = vpop.xlane.xlu0 %4469
        %v4471 = vrcp.pop %v4470
        %v4472 = vmul.f32 %v4467, %v4471
        %v4473 = vpack.c.bf16 %v4472, %v4472
        %4475 = vrot.lane.b32.xlu0 %v4304, 96
        %v4476 = vpop.permute.xlu0 %4475
        %v4478 = vsel %vm1875, %v4473, 0
        %v4481 = vsel %vm1891, %v4476, 0
        %4483 = vmatprep.subr.bf16.mxu0 0
        %4484 = vmatpush1.bf16.msra.mxu0 0
        %4485 = vmatprep.subr.bf16.mxu0 0
        %4486 = vmatpush1.bf16.msra.mxu0 0
        %4487 = vmatprep.subr.bf16.mxu0 0
        %4488 = vmatpush1.bf16.msra.mxu0 0
        %4489 = vmatprep.subr.bf16.mxu0 0
        %4490 = vmatpush1.bf16.msra.mxu0 0
        %4491 = vmatprep.subr.bf16.mxu0 0
        %4492 = vmatpush1.bf16.msra.mxu0 0
        %4493 = vmatprep.subr.bf16.mxu0 0
        %4494 = vmatpush1.bf16.msra.mxu0 0
        %4495 = vmatprep.subr.bf16.mxu0 0
        %4496 = vmatpush1.bf16.msra.mxu0 0
        %4497 = vmatprep.subr.bf16.mxu0 0
        %4498 = vmatpush1.bf16.msra.mxu0 %v4481
        %4499 = vmatprep.subr.bf16.mxu0 0
        %4500 = vmatpush2.bf16.msra.mxu0 0
        %4501 = vmatprep.subr.bf16.mxu0 0
        %4502 = vmatpush2.bf16.msra.mxu0 0
        %4503 = vmatprep.subr.bf16.mxu0 0
        %4504 = vmatpush2.bf16.msra.mxu0 0
        %4505 = vmatprep.subr.bf16.mxu0 0
        %4506 = vmatpush2.bf16.msra.mxu0 0
        %4507 = vmatprep.subr.bf16.mxu0 0
        %4508 = vmatpush2.bf16.msra.mxu0 0
        %4509 = vmatprep.subr.bf16.mxu0 0
        %4510 = vmatpush2.bf16.msra.mxu0 0
        %4511 = vmatprep.subr.bf16.mxu0 0
        %4512 = vmatpush2.bf16.msra.mxu0 0
        %4513 = vmatprep.subr.bf16.mxu0 0
        %4514 = vmatpush2.bf16.msra.mxu0 0
        %4515 = vmatprep.mubr.bf16.mxu0 0
        %4516 = vmatmul.mubr.bf16.gmra.mxu0 %v4478
        %v4517 = vpop.f32.mrf.mxu0
        %v4518 = vadd.f32 0.0, %v4517
        %v4519 = vpop.f32.mrf.mxu0
        %v4520 = vpop.f32.mrf.mxu0
        %v4521 = vpop.f32.mrf.mxu0
        %4522 = vdwg.mxu0
        %v4523 = vpack.c.bf16 %v4518, %v4518
        %v4528 = vunpack.c.l.b16 %v4063
        %v4529 = vunpack.c.l.b16 %v4064
        %v4530 = vunpack.c.l.b16 %v4065
        %v4531 = vunpack.c.l.b16 %v4066
        %v4532 = vpack.c.b16 %v4529, %v4528
        %v4533 = vpack.c.b16 %v4531, %v4530
        %v4537 = vsel %vm1828, %v4523, 0
        %4539 = vmatprep.subr.bf16.mxu0 0
        %4540 = vmatpush1.bf16.msra.mxu0 0
        %4541 = vmatprep.subr.bf16.mxu0 0
        %4542 = vmatpush1.bf16.msra.mxu0 0
        %4543 = vmatprep.subr.bf16.mxu0 0
        %4544 = vmatpush1.bf16.msra.mxu0 0
        %4545 = vmatprep.subr.bf16.mxu0 0
        %4546 = vmatpush1.bf16.msra.mxu0 0
        %4547 = vmatprep.subr.bf16.mxu0 0
        %4548 = vmatpush1.bf16.msra.mxu0 0
        %4549 = vmatprep.subr.bf16.mxu0 0
        %4550 = vmatpush1.bf16.msra.mxu0 0
        %4551 = vmatprep.subr.bf16.mxu0 0
        %4552 = vmatpush1.bf16.msra.mxu0 %v4533
        %4553 = vmatprep.subr.bf16.mxu0 0
        %4554 = vmatpush1.bf16.msra.mxu0 %v4532
        %4555 = vmatprep.subr.bf16.mxu0 0
        %4556 = vmatpush2.bf16.msra.mxu0 0
        %4557 = vmatprep.subr.bf16.mxu0 0
        %4558 = vmatpush2.bf16.msra.mxu0 0
        %4559 = vmatprep.subr.bf16.mxu0 0
        %4560 = vmatpush2.bf16.msra.mxu0 0
        %4561 = vmatprep.subr.bf16.mxu0 0
        %4562 = vmatpush2.bf16.msra.mxu0 0
        %4563 = vmatprep.subr.bf16.mxu0 0
        %4564 = vmatpush2.bf16.msra.mxu0 0
        %4565 = vmatprep.subr.bf16.mxu0 0
        %4566 = vmatpush2.bf16.msra.mxu0 0
        %4567 = vmatprep.subr.bf16.mxu0 0
        %4568 = vmatpush2.bf16.msra.mxu0 0
        %4569 = vmatprep.subr.bf16.mxu0 0
        %4570 = vmatpush2.bf16.msra.mxu0 0
        %4571 = vmatprep.mubr.bf16.mxu0 0
        %4572 = vmatmul.mubr.bf16.gmra.mxu0 %v4537
        %v4573 = vpop.f32.mrf.mxu0
        %v4574 = vadd.f32 0.0, %v4573
        %v4575 = vpop.f32.mrf.mxu0
        %v4576 = vpop.f32.mrf.mxu0
        %v4577 = vpop.f32.mrf.mxu0
        %4578 = vdwg.mxu0
        %v4583 = vunpack.c.l.b16 %v4059
        %v4584 = vunpack.c.l.b16 %v4060
        %v4585 = vunpack.c.l.b16 %v4061
        %v4586 = vunpack.c.l.b16 %v4062
        %v4587 = vpack.c.b16 %v4584, %v4583
        %v4588 = vpack.c.b16 %v4586, %v4585
        %v4592 = vsel %vm1828, %v4409, 0
        %4594 = vmatprep.subr.bf16.mxu0 0
        %4595 = vmatpush1.bf16.msra.mxu0 0
        %4596 = vmatprep.subr.bf16.mxu0 0
        %4597 = vmatpush1.bf16.msra.mxu0 0
        %4598 = vmatprep.subr.bf16.mxu0 0
        %4599 = vmatpush1.bf16.msra.mxu0 0
        %4600 = vmatprep.subr.bf16.mxu0 0
        %4601 = vmatpush1.bf16.msra.mxu0 0
        %4602 = vmatprep.subr.bf16.mxu0 0
        %4603 = vmatpush1.bf16.msra.mxu0 0
        %4604 = vmatprep.subr.bf16.mxu0 0
        %4605 = vmatpush1.bf16.msra.mxu0 0
        %4606 = vmatprep.subr.bf16.mxu0 0
        %4607 = vmatpush1.bf16.msra.mxu0 %v4588
        %4608 = vmatprep.subr.bf16.mxu0 0
        %4609 = vmatpush1.bf16.msra.mxu0 %v4587
        %4610 = vmatprep.subr.bf16.mxu0 0
        %4611 = vmatpush2.bf16.msra.mxu0 0
        %4612 = vmatprep.subr.bf16.mxu0 0
        %4613 = vmatpush2.bf16.msra.mxu0 0
        %4614 = vmatprep.subr.bf16.mxu0 0
        %4615 = vmatpush2.bf16.msra.mxu0 0
        %4616 = vmatprep.subr.bf16.mxu0 0
        %4617 = vmatpush2.bf16.msra.mxu0 0
        %4618 = vmatprep.subr.bf16.mxu0 0
        %4619 = vmatpush2.bf16.msra.mxu0 0
        %4620 = vmatprep.subr.bf16.mxu0 0
        %4621 = vmatpush2.bf16.msra.mxu0 0
        %4622 = vmatprep.subr.bf16.mxu0 0
        %4623 = vmatpush2.bf16.msra.mxu0 0
        %4624 = vmatprep.subr.bf16.mxu0 0
        %4625 = vmatpush2.bf16.msra.mxu0 0
        %4626 = vmatprep.mubr.bf16.mxu0 0
        %4627 = vmatmul.mubr.bf16.gmra.mxu0 %v4592
        %v4628 = vpop.f32.mrf.mxu0
        %v4629 = vadd.f32 %v4574, %v4628
        %v4630 = vpop.f32.mrf.mxu0
        %v4631 = vpop.f32.mrf.mxu0
        %v4632 = vpop.f32.mrf.mxu0
        %4633 = vdwg.mxu0
        %4634 = vrot.lane.b32.xlu0 %v4302, 64
        %v4635 = vpop.permute.xlu0 %4634
        %4636 = vrot.lane.b32.xlu0 %v4303, 64
        %v4637 = vpop.permute.xlu0 %4636
        %v4639 = vsel %vm1828, %v4635, 0
        %v4642 = vsel %vm1828, %v4637, 0
        %4644 = vmatprep.subr.bf16.mxu0 0
        %4645 = vmatpush1.bf16.xpose.msra.mxu0 0
        %4646 = vmatprep.subr.bf16.mxu0 0
        %4647 = vmatpush1.bf16.xpose.msra.mxu0 0
        %4648 = vmatprep.subr.bf16.mxu0 0
        %4649 = vmatpush1.bf16.xpose.msra.mxu0 0
        %4650 = vmatprep.subr.bf16.mxu0 0
        %4651 = vmatpush1.bf16.xpose.msra.mxu0 0
        %4652 = vmatprep.subr.bf16.mxu0 0
        %4653 = vmatpush1.bf16.xpose.msra.mxu0 0
        %4654 = vmatprep.subr.bf16.mxu0 0
        %4655 = vmatpush1.bf16.xpose.msra.mxu0 0
        %4656 = vmatprep.subr.bf16.mxu0 0
        %4657 = vmatpush1.bf16.xpose.msra.mxu0 0
        %4658 = vmatprep.subr.bf16.mxu0 0
        %4659 = vmatpush1.bf16.xpose.msra.mxu0 %v4642
        %4660 = vmatprep.subr.bf16.mxu0 0
        %4661 = vmatpush2.bf16.xpose.msra.mxu0 0
        %4662 = vmatprep.subr.bf16.mxu0 0
        %4663 = vmatpush2.bf16.xpose.msra.mxu0 0
        %4664 = vmatprep.subr.bf16.mxu0 0
        %4665 = vmatpush2.bf16.xpose.msra.mxu0 0
        %4666 = vmatprep.subr.bf16.mxu0 0
        %4667 = vmatpush2.bf16.xpose.msra.mxu0 0
        %4668 = vmatprep.subr.bf16.mxu0 0
        %4669 = vmatpush2.bf16.xpose.msra.mxu0 0
        %4670 = vmatprep.subr.bf16.mxu0 0
        %4671 = vmatpush2.bf16.xpose.msra.mxu0 0
        %4672 = vmatprep.subr.bf16.mxu0 0
        %4673 = vmatpush2.bf16.xpose.msra.mxu0 0
        %4674 = vmatprep.subr.bf16.mxu0 0
        %4675 = vmatpush2.bf16.xpose.msra.mxu0 0
        %4676 = vmatprep.mubr.bf16.mxu0 0
        %4677 = vmatmul.mubr.bf16.gmra.mxu0 %v4639
        %v4678 = vpop.f32.mrf.mxu0
        %v4679 = vadd.f32 0.0, %v4678
        %v4680 = vpop.f32.mrf.mxu0
        %v4681 = vpop.f32.mrf.mxu0
        %v4682 = vpop.f32.mrf.mxu0
        %4683 = vdwg.mxu0
        %v4684 = vsel %vm1875, %v4679, -inf
        %4685 = vmax.xlane.f32.xlu0 %v4684
        %v4686 = vpop.xlane.xlu0 %4685
        %v4687 = vsub.f32 %v4679, %v4686
        %v4688 = vmul.f32 %v4687, 1.442695
        %v4689 = vpow.pop %v4688
        %v4690 = vsel %vm1875, %v4689, 0.0
        %4691 = vadd.xlane.f32.xlu0 %v4690
        %v4692 = vpop.xlane.xlu0 %4691
        %v4693 = vrcp.pop %v4692
        %v4694 = vmul.f32 %v4689, %v4693
        %v4695 = vpack.c.bf16 %v4694, %v4694
        %4696 = vrot.lane.b32.xlu0 %v4304, 64
        %v4697 = vpop.permute.xlu0 %4696
        %v4699 = vsel %vm1875, %v4695, 0
        %v4702 = vsel %vm1891, %v4697, 0
        %4704 = vmatprep.subr.bf16.mxu0 0
        %4705 = vmatpush1.bf16.msra.mxu0 0
        %4706 = vmatprep.subr.bf16.mxu0 0
        %4707 = vmatpush1.bf16.msra.mxu0 0
        %4708 = vmatprep.subr.bf16.mxu0 0
        %4709 = vmatpush1.bf16.msra.mxu0 0
        %4710 = vmatprep.subr.bf16.mxu0 0
        %4711 = vmatpush1.bf16.msra.mxu0 0
        %4712 = vmatprep.subr.bf16.mxu0 0
        %4713 = vmatpush1.bf16.msra.mxu0 0
        %4714 = vmatprep.subr.bf16.mxu0 0
        %4715 = vmatpush1.bf16.msra.mxu0 0
        %4716 = vmatprep.subr.bf16.mxu0 0
        %4717 = vmatpush1.bf16.msra.mxu0 0
        %4718 = vmatprep.subr.bf16.mxu0 0
        %4719 = vmatpush1.bf16.msra.mxu0 %v4702
        %4720 = vmatprep.subr.bf16.mxu0 0
        %4721 = vmatpush2.bf16.msra.mxu0 0
        %4722 = vmatprep.subr.bf16.mxu0 0
        %4723 = vmatpush2.bf16.msra.mxu0 0
        %4724 = vmatprep.subr.bf16.mxu0 0
        %4725 = vmatpush2.bf16.msra.mxu0 0
        %4726 = vmatprep.subr.bf16.mxu0 0
        %4727 = vmatpush2.bf16.msra.mxu0 0
        %4728 = vmatprep.subr.bf16.mxu0 0
        %4729 = vmatpush2.bf16.msra.mxu0 0
        %4730 = vmatprep.subr.bf16.mxu0 0
        %4731 = vmatpush2.bf16.msra.mxu0 0
        %4732 = vmatprep.subr.bf16.mxu0 0
        %4733 = vmatpush2.bf16.msra.mxu0 0
        %4734 = vmatprep.subr.bf16.mxu0 0
        %4735 = vmatpush2.bf16.msra.mxu0 0
        %4736 = vmatprep.mubr.bf16.mxu0 0
        %4737 = vmatmul.mubr.bf16.gmra.mxu0 %v4699
        %v4738 = vpop.f32.mrf.mxu0
        %v4739 = vadd.f32 0.0, %v4738
        %v4740 = vpop.f32.mrf.mxu0
        %v4741 = vpop.f32.mrf.mxu0
        %v4742 = vpop.f32.mrf.mxu0
        %4743 = vdwg.mxu0
        %v4744 = vpack.c.bf16 %v4739, %v4739
        %v4749 = vunpack.c.l.b16 %v4067
        %v4750 = vunpack.c.l.b16 %v4068
        %v4751 = vunpack.c.l.b16 %v4069
        %v4752 = vunpack.c.l.b16 %v4070
        %v4753 = vpack.c.b16 %v4750, %v4749
        %v4754 = vpack.c.b16 %v4752, %v4751
        %v4758 = vsel %vm1828, %v4744, 0
        %4760 = vmatprep.subr.bf16.mxu0 0
        %4761 = vmatpush1.bf16.msra.mxu0 0
        %4762 = vmatprep.subr.bf16.mxu0 0
        %4763 = vmatpush1.bf16.msra.mxu0 0
        %4764 = vmatprep.subr.bf16.mxu0 0
        %4765 = vmatpush1.bf16.msra.mxu0 0
        %4766 = vmatprep.subr.bf16.mxu0 0
        %4767 = vmatpush1.bf16.msra.mxu0 0
        %4768 = vmatprep.subr.bf16.mxu0 0
        %4769 = vmatpush1.bf16.msra.mxu0 0
        %4770 = vmatprep.subr.bf16.mxu0 0
        %4771 = vmatpush1.bf16.msra.mxu0 0
        %4772 = vmatprep.subr.bf16.mxu0 0
        %4773 = vmatpush1.bf16.msra.mxu0 %v4754
        %4774 = vmatprep.subr.bf16.mxu0 0
        %4775 = vmatpush1.bf16.msra.mxu0 %v4753
        %4776 = vmatprep.subr.bf16.mxu0 0
        %4777 = vmatpush2.bf16.msra.mxu0 0
        %4778 = vmatprep.subr.bf16.mxu0 0
        %4779 = vmatpush2.bf16.msra.mxu0 0
        %4780 = vmatprep.subr.bf16.mxu0 0
        %4781 = vmatpush2.bf16.msra.mxu0 0
        %4782 = vmatprep.subr.bf16.mxu0 0
        %4783 = vmatpush2.bf16.msra.mxu0 0
        %4784 = vmatprep.subr.bf16.mxu0 0
        %4785 = vmatpush2.bf16.msra.mxu0 0
        %4786 = vmatprep.subr.bf16.mxu0 0
        %4787 = vmatpush2.bf16.msra.mxu0 0
        %4788 = vmatprep.subr.bf16.mxu0 0
        %4789 = vmatpush2.bf16.msra.mxu0 0
        %4790 = vmatprep.subr.bf16.mxu0 0
        %4791 = vmatpush2.bf16.msra.mxu0 0
        %4792 = vmatprep.mubr.bf16.mxu0 0
        %4793 = vmatmul.mubr.bf16.gmra.mxu0 %v4758
        %v4794 = vpop.f32.mrf.mxu0
        %v4795 = vadd.f32 0.0, %v4794
        %v4796 = vpop.f32.mrf.mxu0
        %v4797 = vpop.f32.mrf.mxu0
        %v4798 = vpop.f32.mrf.mxu0
        %4799 = vdwg.mxu0
        %v4800 = vadd.f32 %v4629, %v4795
        %4801 = vrot.lane.b32.xlu0 %v4302, 32
        %v4802 = vpop.permute.xlu0 %4801
        %4803 = vrot.lane.b32.xlu0 %v4303, 32
        %v4804 = vpop.permute.xlu0 %4803
        %v4806 = vsel %vm1828, %v4802, 0
        %v4809 = vsel %vm1828, %v4804, 0
        %4811 = vmatprep.subr.bf16.mxu0 0
        %4812 = vmatpush1.bf16.xpose.msra.mxu0 0
        %4813 = vmatprep.subr.bf16.mxu0 0
        %4814 = vmatpush1.bf16.xpose.msra.mxu0 0
        %4815 = vmatprep.subr.bf16.mxu0 0
        %4816 = vmatpush1.bf16.xpose.msra.mxu0 0
        %4817 = vmatprep.subr.bf16.mxu0 0
        %4818 = vmatpush1.bf16.xpose.msra.mxu0 0
        %4819 = vmatprep.subr.bf16.mxu0 0
        %4820 = vmatpush1.bf16.xpose.msra.mxu0 0
        %4821 = vmatprep.subr.bf16.mxu0 0
        %4822 = vmatpush1.bf16.xpose.msra.mxu0 0
        %4823 = vmatprep.subr.bf16.mxu0 0
        %4824 = vmatpush1.bf16.xpose.msra.mxu0 0
        %4825 = vmatprep.subr.bf16.mxu0 0
        %4826 = vmatpush1.bf16.xpose.msra.mxu0 %v4809
        %4827 = vmatprep.subr.bf16.mxu0 0
        %4828 = vmatpush2.bf16.xpose.msra.mxu0 0
        %4829 = vmatprep.subr.bf16.mxu0 0
        %4830 = vmatpush2.bf16.xpose.msra.mxu0 0
        %4831 = vmatprep.subr.bf16.mxu0 0
        %4832 = vmatpush2.bf16.xpose.msra.mxu0 0
        %4833 = vmatprep.subr.bf16.mxu0 0
        %4834 = vmatpush2.bf16.xpose.msra.mxu0 0
        %4835 = vmatprep.subr.bf16.mxu0 0
        %4836 = vmatpush2.bf16.xpose.msra.mxu0 0
        %4837 = vmatprep.subr.bf16.mxu0 0
        %4838 = vmatpush2.bf16.xpose.msra.mxu0 0
        %4839 = vmatprep.subr.bf16.mxu0 0
        %4840 = vmatpush2.bf16.xpose.msra.mxu0 0
        %4841 = vmatprep.subr.bf16.mxu0 0
        %4842 = vmatpush2.bf16.xpose.msra.mxu0 0
        %4843 = vmatprep.mubr.bf16.mxu0 0
        %4844 = vmatmul.mubr.bf16.gmra.mxu0 %v4806
        %v4845 = vpop.f32.mrf.mxu0
        %v4846 = vadd.f32 0.0, %v4845
        %v4847 = vpop.f32.mrf.mxu0
        %v4848 = vpop.f32.mrf.mxu0
        %v4849 = vpop.f32.mrf.mxu0
        %4850 = vdwg.mxu0
        %v4851 = vsel %vm1875, %v4846, -inf
        %4852 = vmax.xlane.f32.xlu0 %v4851
        %v4853 = vpop.xlane.xlu0 %4852
        %v4854 = vsub.f32 %v4846, %v4853
        %v4855 = vmul.f32 %v4854, 1.442695
        %v4856 = vpow.pop %v4855
        %v4857 = vsel %vm1875, %v4856, 0.0
        %4858 = vadd.xlane.f32.xlu0 %v4857
        %v4859 = vpop.xlane.xlu0 %4858
        %v4860 = vrcp.pop %v4859
        %v4861 = vmul.f32 %v4856, %v4860
        %v4862 = vpack.c.bf16 %v4861, %v4861
        %4863 = vrot.lane.b32.xlu0 %v4304, 32
        %v4864 = vpop.permute.xlu0 %4863
        %v4866 = vsel %vm1875, %v4862, 0
        %v4869 = vsel %vm1891, %v4864, 0
        %4871 = vmatprep.subr.bf16.mxu0 0
        %4872 = vmatpush1.bf16.msra.mxu0 0
        %4873 = vmatprep.subr.bf16.mxu0 0
        %4874 = vmatpush1.bf16.msra.mxu0 0
        %4875 = vmatprep.subr.bf16.mxu0 0
        %4876 = vmatpush1.bf16.msra.mxu0 0
        %4877 = vmatprep.subr.bf16.mxu0 0
        %4878 = vmatpush1.bf16.msra.mxu0 0
        %4879 = vmatprep.subr.bf16.mxu0 0
        %4880 = vmatpush1.bf16.msra.mxu0 0
        %4881 = vmatprep.subr.bf16.mxu0 0
        %4882 = vmatpush1.bf16.msra.mxu0 0
        %4883 = vmatprep.subr.bf16.mxu0 0
        %4884 = vmatpush1.bf16.msra.mxu0 0
        %4885 = vmatprep.subr.bf16.mxu0 0
        %4886 = vmatpush1.bf16.msra.mxu0 %v4869
        %4887 = vmatprep.subr.bf16.mxu0 0
        %4888 = vmatpush2.bf16.msra.mxu0 0
        %4889 = vmatprep.subr.bf16.mxu0 0
        %4890 = vmatpush2.bf16.msra.mxu0 0
        %4891 = vmatprep.subr.bf16.mxu0 0
        %4892 = vmatpush2.bf16.msra.mxu0 0
        %4893 = vmatprep.subr.bf16.mxu0 0
        %4894 = vmatpush2.bf16.msra.mxu0 0
        %4895 = vmatprep.subr.bf16.mxu0 0
        %4896 = vmatpush2.bf16.msra.mxu0 0
        %4897 = vmatprep.subr.bf16.mxu0 0
        %4898 = vmatpush2.bf16.msra.mxu0 0
        %4899 = vmatprep.subr.bf16.mxu0 0
        %4900 = vmatpush2.bf16.msra.mxu0 0
        %4901 = vmatprep.subr.bf16.mxu0 0
        %4902 = vmatpush2.bf16.msra.mxu0 0
        %4903 = vmatprep.mubr.bf16.mxu0 0
        %4904 = vmatmul.mubr.bf16.gmra.mxu0 %v4866
        %v4905 = vpop.f32.mrf.mxu0
        %v4906 = vadd.f32 0.0, %v4905
        %v4907 = vpop.f32.mrf.mxu0
        %v4908 = vpop.f32.mrf.mxu0
        %v4909 = vpop.f32.mrf.mxu0
        %4910 = vdwg.mxu0
        %v4911 = vpack.c.bf16 %v4906, %v4906
        %v4916 = vunpack.c.l.b16 %v4071
        %v4917 = vunpack.c.l.b16 %v4072
        %v4918 = vunpack.c.l.b16 %v4073
        %v4919 = vunpack.c.l.b16 %v4074
        %v4920 = vpack.c.b16 %v4917, %v4916
        %v4921 = vpack.c.b16 %v4919, %v4918
        %v4925 = vsel %vm1828, %v4911, 0
        %4927 = vmatprep.subr.bf16.mxu0 0
        %4928 = vmatpush1.bf16.msra.mxu0 0
        %4929 = vmatprep.subr.bf16.mxu0 0
        %4930 = vmatpush1.bf16.msra.mxu0 0
        %4931 = vmatprep.subr.bf16.mxu0 0
        %4932 = vmatpush1.bf16.msra.mxu0 0
        %4933 = vmatprep.subr.bf16.mxu0 0
        %4934 = vmatpush1.bf16.msra.mxu0 0
        %4935 = vmatprep.subr.bf16.mxu0 0
        %4936 = vmatpush1.bf16.msra.mxu0 0
        %4937 = vmatprep.subr.bf16.mxu0 0
        %4938 = vmatpush1.bf16.msra.mxu0 0
        %4939 = vmatprep.subr.bf16.mxu0 0
        %4940 = vmatpush1.bf16.msra.mxu0 %v4921
        %4941 = vmatprep.subr.bf16.mxu0 0
        %4942 = vmatpush1.bf16.msra.mxu0 %v4920
        %4943 = vmatprep.subr.bf16.mxu0 0
        %4944 = vmatpush2.bf16.msra.mxu0 0
        %4945 = vmatprep.subr.bf16.mxu0 0
        %4946 = vmatpush2.bf16.msra.mxu0 0
        %4947 = vmatprep.subr.bf16.mxu0 0
        %4948 = vmatpush2.bf16.msra.mxu0 0
        %4949 = vmatprep.subr.bf16.mxu0 0
        %4950 = vmatpush2.bf16.msra.mxu0 0
        %4951 = vmatprep.subr.bf16.mxu0 0
        %4952 = vmatpush2.bf16.msra.mxu0 0
        %4953 = vmatprep.subr.bf16.mxu0 0
        %4954 = vmatpush2.bf16.msra.mxu0 0
        %4955 = vmatprep.subr.bf16.mxu0 0
        %4956 = vmatpush2.bf16.msra.mxu0 0
        %4957 = vmatprep.subr.bf16.mxu0 0
        %4958 = vmatpush2.bf16.msra.mxu0 0
        %4959 = vmatprep.mubr.bf16.mxu0 0
        %4960 = vmatmul.mubr.bf16.gmra.mxu0 %v4925
        %v4961 = vpop.f32.mrf.mxu0
        %v4962 = vadd.f32 0.0, %v4961
        %v4963 = vpop.f32.mrf.mxu0
        %v4964 = vpop.f32.mrf.mxu0
        %v4965 = vpop.f32.mrf.mxu0
        %4966 = vdwg.mxu0
        %v4967 = vadd.f32 %v4800, %v4962
        %v4969 = vlaneseq
        %v4970 = vshrl.u32 %v4969, 7
        %v4971 = vsub.s32 0, %v4970
        %v4972 = vrot.slane %v4075, %v4971
        %v4974 = vadd.f32 %v4967, %v4972
        %v4975 = vadd.f32 %v1547, %v4974
        %v4976 = vld [vmem:[#allocation31] sm:$0x1]
        %v4977 = vld [vmem:[#allocation32] sm:$0x1]
        %4978 = vadd.xlane.f32.xlu0 %v4975
        %v4979 = vpop.xlane.xlu0 %4978
        %v4980 = vmul.f32 %v4979, %v2506
        %v4981 = vsub.f32 %v4975, %v4980
        %v4982 = vmul.f32 %v4981, %v4981
        %4983 = vadd.xlane.f32.xlu0 %v4982
        %v4984 = vpop.xlane.xlu0 %4983
        %v4985 = vmul.f32 %v4984, %v2506
        %v4986 = vadd.f32 %v4985, 1e-05
        %v4987 = vrsqrt.pop %v4986
        %v4988 = vmul.f32 %v4981, %v4987
        %v4990 = vlaneseq
        %v4991 = vshrl.u32 %v4990, 7
        %v4992 = vsub.s32 0, %v4991
        %v4993 = vrot.slane %v4976, %v4992
        %v4995 = vmul.f32 %v4988, %v4993
        %v4997 = vlaneseq
        %v4998 = vshrl.u32 %v4997, 7
        %v4999 = vsub.s32 0, %v4998
        %v5000 = vrot.slane %v4977, %v4999
        %v5002 = vadd.f32 %v4995, %v5000
        %v5003 = vld [vmem:[#allocation23] sm:$0xf]
        %v5004 = vld [vmem:[#allocation23 + $0x4] sm:$0xf]
        %v5005 = vld [vmem:[#allocation23 + $0x8] sm:$0xf]
        %v5006 = vld [vmem:[#allocation23 + $0xc] sm:$0xf]
        %v5007 = vld [vmem:[#allocation23 + $0x10] sm:$0xf]
        %v5008 = vld [vmem:[#allocation23 + $0x14] sm:$0xf]
        %v5009 = vld [vmem:[#allocation23 + $0x18] sm:$0xf]
        %v5010 = vld [vmem:[#allocation23 + $0x1c] sm:$0xf]
        %v5011 = vld [vmem:[#allocation23 + $0x20] sm:$0xf]
        %v5012 = vld [vmem:[#allocation23 + $0x24] sm:$0xf]
        %v5013 = vld [vmem:[#allocation23 + $0x28] sm:$0xf]
        %v5014 = vld [vmem:[#allocation23 + $0x2c] sm:$0xf]
        %v5015 = vld [vmem:[#allocation23 + $0x30] sm:$0xf]
        %v5016 = vld [vmem:[#allocation23 + $0x34] sm:$0xf]
        %v5017 = vld [vmem:[#allocation23 + $0x38] sm:$0xf]
        %v5018 = vld [vmem:[#allocation23 + $0x3c] sm:$0xf]
        %v5019 = vld [vmem:[#allocation25] sm:$0x1]
        %v5020 = vld [vmem:[#allocation26] sm:$0xff]
        %v5021 = vld [vmem:[#allocation26 + $0x8] sm:$0xff]
        %v5022 = vld [vmem:[#allocation26 + $0x10] sm:$0xff]
        %v5023 = vld [vmem:[#allocation26 + $0x18] sm:$0xff]
        %v5024 = vld [vmem:[#allocation26 + $0x20] sm:$0xff]
        %v5025 = vld [vmem:[#allocation26 + $0x28] sm:$0xff]
        %v5026 = vld [vmem:[#allocation26 + $0x30] sm:$0xff]
        %v5027 = vld [vmem:[#allocation26 + $0x38] sm:$0xff]
        %v5028 = vld [vmem:[#allocation26 + $0x40] sm:$0xff]
        %v5029 = vld [vmem:[#allocation26 + $0x48] sm:$0xff]
        %v5030 = vld [vmem:[#allocation26 + $0x50] sm:$0xff]
        %v5031 = vld [vmem:[#allocation26 + $0x58] sm:$0xff]
        %v5032 = vld [vmem:[#allocation26 + $0x60] sm:$0xff]
        %v5033 = vld [vmem:[#allocation26 + $0x68] sm:$0xff]
        %v5034 = vld [vmem:[#allocation26 + $0x70] sm:$0xff]
        %v5035 = vld [vmem:[#allocation26 + $0x78] sm:$0xff]
        %v5036 = vld [vmem:[%s45] sm:$0x3]
        %v5037 = vld [vmem:[#allocation28] sm:$0xf]
        %v5038 = vld [vmem:[#allocation28 + $0x4] sm:$0xf]
        %v5039 = vld [vmem:[#allocation28 + $0x8] sm:$0xf]
        %v5040 = vld [vmem:[#allocation28 + $0xc] sm:$0xf]
        %v5041 = vld [vmem:[#allocation28 + $0x10] sm:$0xf]
        %v5042 = vld [vmem:[#allocation28 + $0x14] sm:$0xf]
        %v5043 = vld [vmem:[#allocation28 + $0x18] sm:$0xf]
        %v5044 = vld [vmem:[#allocation28 + $0x1c] sm:$0xf]
        %v5045 = vld [vmem:[#allocation28 + $0x20] sm:$0xf]
        %v5046 = vld [vmem:[#allocation28 + $0x24] sm:$0xf]
        %v5047 = vld [vmem:[#allocation28 + $0x28] sm:$0xf]
        %v5048 = vld [vmem:[#allocation28 + $0x2c] sm:$0xf]
        %v5049 = vld [vmem:[#allocation28 + $0x30] sm:$0xf]
        %v5050 = vld [vmem:[#allocation28 + $0x34] sm:$0xf]
        %v5051 = vld [vmem:[#allocation28 + $0x38] sm:$0xf]
        %v5052 = vld [vmem:[#allocation28 + $0x3c] sm:$0xf]
        %v5053 = vld [vmem:[#allocation29] sm:$0x1]
        %v5054 = vpack.c.bf16 %v5002, %v5002
        %v5056 = vlaneseq
        %v5057 = vshrl.u32 %v5056, 7
        %v5058 = vsub.s32 0, %v5057
        %v5059 = vrot.slane %v5019, %v5058
        %v5077 = vunpack.c.l.b16 %v5003
        %v5078 = vunpack.c.l.b16 %v5004
        %v5079 = vunpack.c.l.b16 %v5005
        %v5080 = vunpack.c.l.b16 %v5006
        %v5081 = vunpack.c.l.b16 %v5007
        %v5082 = vunpack.c.l.b16 %v5008
        %v5083 = vunpack.c.l.b16 %v5009
        %v5084 = vunpack.c.l.b16 %v5010
        %v5085 = vunpack.c.l.b16 %v5011
        %v5086 = vunpack.c.l.b16 %v5012
        %v5087 = vunpack.c.l.b16 %v5013
        %v5088 = vunpack.c.l.b16 %v5014
        %v5089 = vunpack.c.l.b16 %v5015
        %v5090 = vunpack.c.l.b16 %v5016
        %v5091 = vunpack.c.l.b16 %v5017
        %v5092 = vunpack.c.l.b16 %v5018
        %v5093 = vpack.c.b16 %v5078, %v5077
        %v5094 = vpack.c.b16 %v5080, %v5079
        %v5095 = vpack.c.b16 %v5082, %v5081
        %v5096 = vpack.c.b16 %v5084, %v5083
        %v5097 = vpack.c.b16 %v5086, %v5085
        %v5098 = vpack.c.b16 %v5088, %v5087
        %v5099 = vpack.c.b16 %v5090, %v5089
        %v5100 = vpack.c.b16 %v5092, %v5091
        %5109 = vmatprep.subr.bf16.mxu0 0
        %5110 = vmatpush1.bf16.msra.mxu0 %v5100
        %5111 = vmatprep.subr.bf16.mxu0 0
        %5112 = vmatpush1.bf16.msra.mxu0 %v5099
        %5113 = vmatprep.subr.bf16.mxu0 0
        %5114 = vmatpush1.bf16.msra.mxu0 %v5098
        %5115 = vmatprep.subr.bf16.mxu0 0
        %5116 = vmatpush1.bf16.msra.mxu0 %v5097
        %5117 = vmatprep.subr.bf16.mxu0 0
        %5118 = vmatpush1.bf16.msra.mxu0 %v5096
        %5119 = vmatprep.subr.bf16.mxu0 0
        %5120 = vmatpush1.bf16.msra.mxu0 %v5095
        %5121 = vmatprep.subr.bf16.mxu0 0
        %5122 = vmatpush1.bf16.msra.mxu0 %v5094
        %5123 = vmatprep.subr.bf16.mxu0 0
        %5124 = vmatpush1.bf16.msra.mxu0 %v5093
        %5125 = vmatprep.subr.bf16.mxu0 0
        %5126 = vmatpush2.bf16.msra.mxu0 0
        %5127 = vmatprep.subr.bf16.mxu0 0
        %5128 = vmatpush2.bf16.msra.mxu0 0
        %5129 = vmatprep.subr.bf16.mxu0 0
        %5130 = vmatpush2.bf16.msra.mxu0 0
        %5131 = vmatprep.subr.bf16.mxu0 0
        %5132 = vmatpush2.bf16.msra.mxu0 0
        %5133 = vmatprep.subr.bf16.mxu0 0
        %5134 = vmatpush2.bf16.msra.mxu0 0
        %5135 = vmatprep.subr.bf16.mxu0 0
        %5136 = vmatpush2.bf16.msra.mxu0 0
        %5137 = vmatprep.subr.bf16.mxu0 0
        %5138 = vmatpush2.bf16.msra.mxu0 0
        %5139 = vmatprep.subr.bf16.mxu0 0
        %5140 = vmatpush2.bf16.msra.mxu0 0
        %5141 = vmatprep.mubr.bf16.mxu0 0
        %5142 = vmatmul.mubr.bf16.gmra.mxu0 %v5054
        %v5143 = vpop.f32.mrf.mxu0
        %v5144 = vadd.f32 %v5059, %v5143
        %v5145 = vpop.f32.mrf.mxu0
        %v5146 = vpop.f32.mrf.mxu0
        %v5147 = vpop.f32.mrf.mxu0
        %5148 = vdwg.mxu0
        %v5149 = vmul.f32 %v5144, 0.17677669
        %v5150 = vpack.c.bf16 %v4025, %v4025
        %v5152 = vlaneseq
        %v5153 = vshrl.u32 %v5152, 7
        %v5154 = vsub.s32 0, %v5153
        %v5155 = vrot.slane %v5036, %v5154
        %v5156 = vlaneseq
        %v5157 = vshrl.u32 %v5156, 7
        %v5158 = vsub.s32 1, %v5157
        %v5159 = vrot.slane %v5036, %v5158
        %v5178 = vunpack.c.l.b16 %v5020
        %v5179 = vunpack.c.h.b16 %v5020
        %v5180 = vunpack.c.l.b16 %v5021
        %v5181 = vunpack.c.h.b16 %v5021
        %v5182 = vunpack.c.l.b16 %v5022
        %v5183 = vunpack.c.h.b16 %v5022
        %v5184 = vunpack.c.l.b16 %v5023
        %v5185 = vunpack.c.h.b16 %v5023
        %v5186 = vunpack.c.l.b16 %v5024
        %v5187 = vunpack.c.h.b16 %v5024
        %v5188 = vunpack.c.l.b16 %v5025
        %v5189 = vunpack.c.h.b16 %v5025
        %v5190 = vunpack.c.l.b16 %v5026
        %v5191 = vunpack.c.h.b16 %v5026
        %v5192 = vunpack.c.l.b16 %v5027
        %v5193 = vunpack.c.h.b16 %v5027
        %v5194 = vunpack.c.l.b16 %v5028
        %v5195 = vunpack.c.h.b16 %v5028
        %v5196 = vunpack.c.l.b16 %v5029
        %v5197 = vunpack.c.h.b16 %v5029
        %v5198 = vunpack.c.l.b16 %v5030
        %v5199 = vunpack.c.h.b16 %v5030
        %v5200 = vunpack.c.l.b16 %v5031
        %v5201 = vunpack.c.h.b16 %v5031
        %v5202 = vunpack.c.l.b16 %v5032
        %v5203 = vunpack.c.h.b16 %v5032
        %v5204 = vunpack.c.l.b16 %v5033
        %v5205 = vunpack.c.h.b16 %v5033
        %v5206 = vunpack.c.l.b16 %v5034
        %v5207 = vunpack.c.h.b16 %v5034
        %v5208 = vunpack.c.l.b16 %v5035
        %v5209 = vunpack.c.h.b16 %v5035
        %v5210 = vpack.c.b16 %v5180, %v5178
        %v5211 = vpack.c.b16 %v5181, %v5179
        %v5212 = vpack.c.b16 %v5184, %v5182
        %v5213 = vpack.c.b16 %v5185, %v5183
        %v5214 = vpack.c.b16 %v5188, %v5186
        %v5215 = vpack.c.b16 %v5189, %v5187
        %v5216 = vpack.c.b16 %v5192, %v5190
        %v5217 = vpack.c.b16 %v5193, %v5191
        %v5218 = vpack.c.b16 %v5196, %v5194
        %v5219 = vpack.c.b16 %v5197, %v5195
        %v5220 = vpack.c.b16 %v5200, %v5198
        %v5221 = vpack.c.b16 %v5201, %v5199
        %v5222 = vpack.c.b16 %v5204, %v5202
        %v5223 = vpack.c.b16 %v5205, %v5203
        %v5224 = vpack.c.b16 %v5208, %v5206
        %v5225 = vpack.c.b16 %v5209, %v5207
        %5242 = vmatprep.subr.bf16.mxu0 %v5225
        %5243 = vmatpush1.bf16.msra.mxu0 %v5224
        %5244 = vmatprep.subr.bf16.mxu0 %v5223
        %5245 = vmatpush1.bf16.msra.mxu0 %v5222
        %5246 = vmatprep.subr.bf16.mxu0 %v5221
        %5247 = vmatpush1.bf16.msra.mxu0 %v5220
        %5248 = vmatprep.subr.bf16.mxu0 %v5219
        %5249 = vmatpush1.bf16.msra.mxu0 %v5218
        %5250 = vmatprep.subr.bf16.mxu0 %v5217
        %5251 = vmatpush1.bf16.msra.mxu0 %v5216
        %5252 = vmatprep.subr.bf16.mxu0 %v5215
        %5253 = vmatpush1.bf16.msra.mxu0 %v5214
        %5254 = vmatprep.subr.bf16.mxu0 %v5213
        %5255 = vmatpush1.bf16.msra.mxu0 %v5212
        %5256 = vmatprep.subr.bf16.mxu0 %v5211
        %5257 = vmatpush1.bf16.msra.mxu0 %v5210
        %5258 = vmatprep.subr.bf16.mxu0 0
        %5259 = vmatpush2.bf16.msra.mxu0 0
        %5260 = vmatprep.subr.bf16.mxu0 0
        %5261 = vmatpush2.bf16.msra.mxu0 0
        %5262 = vmatprep.subr.bf16.mxu0 0
        %5263 = vmatpush2.bf16.msra.mxu0 0
        %5264 = vmatprep.subr.bf16.mxu0 0
        %5265 = vmatpush2.bf16.msra.mxu0 0
        %5266 = vmatprep.subr.bf16.mxu0 0
        %5267 = vmatpush2.bf16.msra.mxu0 0
        %5268 = vmatprep.subr.bf16.mxu0 0
        %5269 = vmatpush2.bf16.msra.mxu0 0
        %5270 = vmatprep.subr.bf16.mxu0 0
        %5271 = vmatpush2.bf16.msra.mxu0 0
        %5272 = vmatprep.subr.bf16.mxu0 0
        %5273 = vmatpush2.bf16.msra.mxu0 0
        %5274 = vmatprep.mubr.bf16.mxu0 0
        %5275 = vmatmul.mubr.bf16.gmra.mxu0 %v5150
        %v5276 = vpop.f32.mrf.mxu0
        %v5277 = vadd.f32 %v5155, %v5276
        %v5278 = vpop.f32.mrf.mxu0
        %v5279 = vadd.f32 %v5159, %v5278
        %v5280 = vpop.f32.mrf.mxu0
        %v5281 = vpop.f32.mrf.mxu0
        %5282 = vdwg.mxu0
        %v5283 = vpack.c.bf16 %v5149, %v5149
        %v5284 = vpack.c.bf16 %v5277, %v5277
        %v5285 = vpack.c.bf16 %v5279, %v5279
        %v5287 = vsel %vm1828, %v5283, 0
        %v5290 = vsel %vm1828, %v5284, 0
        %5292 = vmatprep.subr.bf16.mxu0 0
        %5293 = vmatpush1.bf16.xpose.msra.mxu0 0
        %5294 = vmatprep.subr.bf16.mxu0 0
        %5295 = vmatpush1.bf16.xpose.msra.mxu0 0
        %5296 = vmatprep.subr.bf16.mxu0 0
        %5297 = vmatpush1.bf16.xpose.msra.mxu0 0
        %5298 = vmatprep.subr.bf16.mxu0 0
        %5299 = vmatpush1.bf16.xpose.msra.mxu0 0
        %5300 = vmatprep.subr.bf16.mxu0 0
        %5301 = vmatpush1.bf16.xpose.msra.mxu0 0
        %5302 = vmatprep.subr.bf16.mxu0 0
        %5303 = vmatpush1.bf16.xpose.msra.mxu0 0
        %5304 = vmatprep.subr.bf16.mxu0 0
        %5305 = vmatpush1.bf16.xpose.msra.mxu0 0
        %5306 = vmatprep.subr.bf16.mxu0 0
        %5307 = vmatpush1.bf16.xpose.msra.mxu0 %v5290
        %5308 = vmatprep.subr.bf16.mxu0 0
        %5309 = vmatpush2.bf16.xpose.msra.mxu0 0
        %5310 = vmatprep.subr.bf16.mxu0 0
        %5311 = vmatpush2.bf16.xpose.msra.mxu0 0
        %5312 = vmatprep.subr.bf16.mxu0 0
        %5313 = vmatpush2.bf16.xpose.msra.mxu0 0
        %5314 = vmatprep.subr.bf16.mxu0 0
        %5315 = vmatpush2.bf16.xpose.msra.mxu0 0
        %5316 = vmatprep.subr.bf16.mxu0 0
        %5317 = vmatpush2.bf16.xpose.msra.mxu0 0
        %5318 = vmatprep.subr.bf16.mxu0 0
        %5319 = vmatpush2.bf16.xpose.msra.mxu0 0
        %5320 = vmatprep.subr.bf16.mxu0 0
        %5321 = vmatpush2.bf16.xpose.msra.mxu0 0
        %5322 = vmatprep.subr.bf16.mxu0 0
        %5323 = vmatpush2.bf16.xpose.msra.mxu0 0
        %5324 = vmatprep.mubr.bf16.mxu0 0
        %5325 = vmatmul.mubr.bf16.gmra.mxu0 %v5287
        %v5326 = vpop.f32.mrf.mxu0
        %v5327 = vadd.f32 0.0, %v5326
        %v5328 = vpop.f32.mrf.mxu0
        %v5329 = vpop.f32.mrf.mxu0
        %v5330 = vpop.f32.mrf.mxu0
        %5331 = vdwg.mxu0
        %v5332 = vsel %vm1875, %v5327, -inf
        %5333 = vmax.xlane.f32.xlu0 %v5332
        %v5334 = vpop.xlane.xlu0 %5333
        %v5335 = vsub.f32 %v5327, %v5334
        %v5336 = vmul.f32 %v5335, 1.442695
        %v5337 = vpow.pop %v5336
        %v5338 = vsel %vm1875, %v5337, 0.0
        %5339 = vadd.xlane.f32.xlu0 %v5338
        %v5340 = vpop.xlane.xlu0 %5339
        %v5341 = vrcp.pop %v5340
        %v5342 = vmul.f32 %v5337, %v5341
        %v5343 = vpack.c.bf16 %v5342, %v5342
        %v5345 = vsel %vm1875, %v5343, 0
        %v5348 = vsel %vm1891, %v5285, 0
        %5350 = vmatprep.subr.bf16.mxu0 0
        %5351 = vmatpush1.bf16.msra.mxu0 0
        %5352 = vmatprep.subr.bf16.mxu0 0
        %5353 = vmatpush1.bf16.msra.mxu0 0
        %5354 = vmatprep.subr.bf16.mxu0 0
        %5355 = vmatpush1.bf16.msra.mxu0 0
        %5356 = vmatprep.subr.bf16.mxu0 0
        %5357 = vmatpush1.bf16.msra.mxu0 0
        %5358 = vmatprep.subr.bf16.mxu0 0
        %5359 = vmatpush1.bf16.msra.mxu0 0
        %5360 = vmatprep.subr.bf16.mxu0 0
        %5361 = vmatpush1.bf16.msra.mxu0 0
        %5362 = vmatprep.subr.bf16.mxu0 0
        %5363 = vmatpush1.bf16.msra.mxu0 0
        %5364 = vmatprep.subr.bf16.mxu0 0
        %5365 = vmatpush1.bf16.msra.mxu0 %v5348
        %5366 = vmatprep.subr.bf16.mxu0 0
        %5367 = vmatpush2.bf16.msra.mxu0 0
        %5368 = vmatprep.subr.bf16.mxu0 0
        %5369 = vmatpush2.bf16.msra.mxu0 0
        %5370 = vmatprep.subr.bf16.mxu0 0
        %5371 = vmatpush2.bf16.msra.mxu0 0
        %5372 = vmatprep.subr.bf16.mxu0 0
        %5373 = vmatpush2.bf16.msra.mxu0 0
        %5374 = vmatprep.subr.bf16.mxu0 0
        %5375 = vmatpush2.bf16.msra.mxu0 0
        %5376 = vmatprep.subr.bf16.mxu0 0
        %5377 = vmatpush2.bf16.msra.mxu0 0
        %5378 = vmatprep.subr.bf16.mxu0 0
        %5379 = vmatpush2.bf16.msra.mxu0 0
        %5380 = vmatprep.subr.bf16.mxu0 0
        %5381 = vmatpush2.bf16.msra.mxu0 0
        %5382 = vmatprep.mubr.bf16.mxu0 0
        %5383 = vmatmul.mubr.bf16.gmra.mxu0 %v5345
        %v5384 = vpop.f32.mrf.mxu0
        %v5385 = vadd.f32 0.0, %v5384
        %v5386 = vpop.f32.mrf.mxu0
        %v5387 = vpop.f32.mrf.mxu0
        %v5388 = vpop.f32.mrf.mxu0
        %5389 = vdwg.mxu0
        %v5390 = vpack.c.bf16 %v5385, %v5385
        %5392 = vrot.lane.b32.xlu0 %v5283, 96
        %v5393 = vpop.permute.xlu0 %5392
        %5395 = vrot.lane.b32.xlu0 %v5284, 96
        %v5396 = vpop.permute.xlu0 %5395
        %v5398 = vsel %vm1828, %v5393, 0
        %v5401 = vsel %vm1828, %v5396, 0
        %5403 = vmatprep.subr.bf16.mxu0 0
        %5404 = vmatpush1.bf16.xpose.msra.mxu0 0
        %5405 = vmatprep.subr.bf16.mxu0 0
        %5406 = vmatpush1.bf16.xpose.msra.mxu0 0
        %5407 = vmatprep.subr.bf16.mxu0 0
        %5408 = vmatpush1.bf16.xpose.msra.mxu0 0
        %5409 = vmatprep.subr.bf16.mxu0 0
        %5410 = vmatpush1.bf16.xpose.msra.mxu0 0
        %5411 = vmatprep.subr.bf16.mxu0 0
        %5412 = vmatpush1.bf16.xpose.msra.mxu0 0
        %5413 = vmatprep.subr.bf16.mxu0 0
        %5414 = vmatpush1.bf16.xpose.msra.mxu0 0
        %5415 = vmatprep.subr.bf16.mxu0 0
        %5416 = vmatpush1.bf16.xpose.msra.mxu0 0
        %5417 = vmatprep.subr.bf16.mxu0 0
        %5418 = vmatpush1.bf16.xpose.msra.mxu0 %v5401
        %5419 = vmatprep.subr.bf16.mxu0 0
        %5420 = vmatpush2.bf16.xpose.msra.mxu0 0
        %5421 = vmatprep.subr.bf16.mxu0 0
        %5422 = vmatpush2.bf16.xpose.msra.mxu0 0
        %5423 = vmatprep.subr.bf16.mxu0 0
        %5424 = vmatpush2.bf16.xpose.msra.mxu0 0
        %5425 = vmatprep.subr.bf16.mxu0 0
        %5426 = vmatpush2.bf16.xpose.msra.mxu0 0
        %5427 = vmatprep.subr.bf16.mxu0 0
        %5428 = vmatpush2.bf16.xpose.msra.mxu0 0
        %5429 = vmatprep.subr.bf16.mxu0 0
        %5430 = vmatpush2.bf16.xpose.msra.mxu0 0
        %5431 = vmatprep.subr.bf16.mxu0 0
        %5432 = vmatpush2.bf16.xpose.msra.mxu0 0
        %5433 = vmatprep.subr.bf16.mxu0 0
        %5434 = vmatpush2.bf16.xpose.msra.mxu0 0
        %5435 = vmatprep.mubr.bf16.mxu0 0
        %5436 = vmatmul.mubr.bf16.gmra.mxu0 %v5398
        %v5437 = vpop.f32.mrf.mxu0
        %v5438 = vadd.f32 0.0, %v5437
        %v5439 = vpop.f32.mrf.mxu0
        %v5440 = vpop.f32.mrf.mxu0
        %v5441 = vpop.f32.mrf.mxu0
        %5442 = vdwg.mxu0
        %v5443 = vsel %vm1875, %v5438, -inf
        %5444 = vmax.xlane.f32.xlu0 %v5443
        %v5445 = vpop.xlane.xlu0 %5444
        %v5446 = vsub.f32 %v5438, %v5445
        %v5447 = vmul.f32 %v5446, 1.442695
        %v5448 = vpow.pop %v5447
        %v5449 = vsel %vm1875, %v5448, 0.0
        %5450 = vadd.xlane.f32.xlu0 %v5449
        %v5451 = vpop.xlane.xlu0 %5450
        %v5452 = vrcp.pop %v5451
        %v5453 = vmul.f32 %v5448, %v5452
        %v5454 = vpack.c.bf16 %v5453, %v5453
        %5456 = vrot.lane.b32.xlu0 %v5285, 96
        %v5457 = vpop.permute.xlu0 %5456
        %v5459 = vsel %vm1875, %v5454, 0
        %v5462 = vsel %vm1891, %v5457, 0
        %5464 = vmatprep.subr.bf16.mxu0 0
        %5465 = vmatpush1.bf16.msra.mxu0 0
        %5466 = vmatprep.subr.bf16.mxu0 0
        %5467 = vmatpush1.bf16.msra.mxu0 0
        %5468 = vmatprep.subr.bf16.mxu0 0
        %5469 = vmatpush1.bf16.msra.mxu0 0
        %5470 = vmatprep.subr.bf16.mxu0 0
        %5471 = vmatpush1.bf16.msra.mxu0 0
        %5472 = vmatprep.subr.bf16.mxu0 0
        %5473 = vmatpush1.bf16.msra.mxu0 0
        %5474 = vmatprep.subr.bf16.mxu0 0
        %5475 = vmatpush1.bf16.msra.mxu0 0
        %5476 = vmatprep.subr.bf16.mxu0 0
        %5477 = vmatpush1.bf16.msra.mxu0 0
        %5478 = vmatprep.subr.bf16.mxu0 0
        %5479 = vmatpush1.bf16.msra.mxu0 %v5462
        %5480 = vmatprep.subr.bf16.mxu0 0
        %5481 = vmatpush2.bf16.msra.mxu0 0
        %5482 = vmatprep.subr.bf16.mxu0 0
        %5483 = vmatpush2.bf16.msra.mxu0 0
        %5484 = vmatprep.subr.bf16.mxu0 0
        %5485 = vmatpush2.bf16.msra.mxu0 0
        %5486 = vmatprep.subr.bf16.mxu0 0
        %5487 = vmatpush2.bf16.msra.mxu0 0
        %5488 = vmatprep.subr.bf16.mxu0 0
        %5489 = vmatpush2.bf16.msra.mxu0 0
        %5490 = vmatprep.subr.bf16.mxu0 0
        %5491 = vmatpush2.bf16.msra.mxu0 0
        %5492 = vmatprep.subr.bf16.mxu0 0
        %5493 = vmatpush2.bf16.msra.mxu0 0
        %5494 = vmatprep.subr.bf16.mxu0 0
        %5495 = vmatpush2.bf16.msra.mxu0 0
        %5496 = vmatprep.mubr.bf16.mxu0 0
        %5497 = vmatmul.mubr.bf16.gmra.mxu0 %v5459
        %v5498 = vpop.f32.mrf.mxu0
        %v5499 = vadd.f32 0.0, %v5498
        %v5500 = vpop.f32.mrf.mxu0
        %v5501 = vpop.f32.mrf.mxu0
        %v5502 = vpop.f32.mrf.mxu0
        %5503 = vdwg.mxu0
        %v5504 = vpack.c.bf16 %v5499, %v5499
        %v5509 = vunpack.c.l.b16 %v5041
        %v5510 = vunpack.c.l.b16 %v5042
        %v5511 = vunpack.c.l.b16 %v5043
        %v5512 = vunpack.c.l.b16 %v5044
        %v5513 = vpack.c.b16 %v5510, %v5509
        %v5514 = vpack.c.b16 %v5512, %v5511
        %v5518 = vsel %vm1828, %v5504, 0
        %5520 = vmatprep.subr.bf16.mxu0 0
        %5521 = vmatpush1.bf16.msra.mxu0 0
        %5522 = vmatprep.subr.bf16.mxu0 0
        %5523 = vmatpush1.bf16.msra.mxu0 0
        %5524 = vmatprep.subr.bf16.mxu0 0
        %5525 = vmatpush1.bf16.msra.mxu0 0
        %5526 = vmatprep.subr.bf16.mxu0 0
        %5527 = vmatpush1.bf16.msra.mxu0 0
        %5528 = vmatprep.subr.bf16.mxu0 0
        %5529 = vmatpush1.bf16.msra.mxu0 0
        %5530 = vmatprep.subr.bf16.mxu0 0
        %5531 = vmatpush1.bf16.msra.mxu0 0
        %5532 = vmatprep.subr.bf16.mxu0 0
        %5533 = vmatpush1.bf16.msra.mxu0 %v5514
        %5534 = vmatprep.subr.bf16.mxu0 0
        %5535 = vmatpush1.bf16.msra.mxu0 %v5513
        %5536 = vmatprep.subr.bf16.mxu0 0
        %5537 = vmatpush2.bf16.msra.mxu0 0
        %5538 = vmatprep.subr.bf16.mxu0 0
        %5539 = vmatpush2.bf16.msra.mxu0 0
        %5540 = vmatprep.subr.bf16.mxu0 0
        %5541 = vmatpush2.bf16.msra.mxu0 0
        %5542 = vmatprep.subr.bf16.mxu0 0
        %5543 = vmatpush2.bf16.msra.mxu0 0
        %5544 = vmatprep.subr.bf16.mxu0 0
        %5545 = vmatpush2.bf16.msra.mxu0 0
        %5546 = vmatprep.subr.bf16.mxu0 0
        %5547 = vmatpush2.bf16.msra.mxu0 0
        %5548 = vmatprep.subr.bf16.mxu0 0
        %5549 = vmatpush2.bf16.msra.mxu0 0
        %5550 = vmatprep.subr.bf16.mxu0 0
        %5551 = vmatpush2.bf16.msra.mxu0 0
        %5552 = vmatprep.mubr.bf16.mxu0 0
        %5553 = vmatmul.mubr.bf16.gmra.mxu0 %v5518
        %v5554 = vpop.f32.mrf.mxu0
        %v5555 = vadd.f32 0.0, %v5554
        %v5556 = vpop.f32.mrf.mxu0
        %v5557 = vpop.f32.mrf.mxu0
        %v5558 = vpop.f32.mrf.mxu0
        %5559 = vdwg.mxu0
        %v5564 = vunpack.c.l.b16 %v5037
        %v5565 = vunpack.c.l.b16 %v5038
        %v5566 = vunpack.c.l.b16 %v5039
        %v5567 = vunpack.c.l.b16 %v5040
        %v5568 = vpack.c.b16 %v5565, %v5564
        %v5569 = vpack.c.b16 %v5567, %v5566
        %v5573 = vsel %vm1828, %v5390, 0
        %5575 = vmatprep.subr.bf16.mxu0 0
        %5576 = vmatpush1.bf16.msra.mxu0 0
        %5577 = vmatprep.subr.bf16.mxu0 0
        %5578 = vmatpush1.bf16.msra.mxu0 0
        %5579 = vmatprep.subr.bf16.mxu0 0
        %5580 = vmatpush1.bf16.msra.mxu0 0
        %5581 = vmatprep.subr.bf16.mxu0 0
        %5582 = vmatpush1.bf16.msra.mxu0 0
        %5583 = vmatprep.subr.bf16.mxu0 0
        %5584 = vmatpush1.bf16.msra.mxu0 0
        %5585 = vmatprep.subr.bf16.mxu0 0
        %5586 = vmatpush1.bf16.msra.mxu0 0
        %5587 = vmatprep.subr.bf16.mxu0 0
        %5588 = vmatpush1.bf16.msra.mxu0 %v5569
        %5589 = vmatprep.subr.bf16.mxu0 0
        %5590 = vmatpush1.bf16.msra.mxu0 %v5568
        %5591 = vmatprep.subr.bf16.mxu0 0
        %5592 = vmatpush2.bf16.msra.mxu0 0
        %5593 = vmatprep.subr.bf16.mxu0 0
        %5594 = vmatpush2.bf16.msra.mxu0 0
        %5595 = vmatprep.subr.bf16.mxu0 0
        %5596 = vmatpush2.bf16.msra.mxu0 0
        %5597 = vmatprep.subr.bf16.mxu0 0
        %5598 = vmatpush2.bf16.msra.mxu0 0
        %5599 = vmatprep.subr.bf16.mxu0 0
        %5600 = vmatpush2.bf16.msra.mxu0 0
        %5601 = vmatprep.subr.bf16.mxu0 0
        %5602 = vmatpush2.bf16.msra.mxu0 0
        %5603 = vmatprep.subr.bf16.mxu0 0
        %5604 = vmatpush2.bf16.msra.mxu0 0
        %5605 = vmatprep.subr.bf16.mxu0 0
        %5606 = vmatpush2.bf16.msra.mxu0 0
        %5607 = vmatprep.mubr.bf16.mxu0 0
        %5608 = vmatmul.mubr.bf16.gmra.mxu0 %v5573
        %v5609 = vpop.f32.mrf.mxu0
        %v5610 = vadd.f32 %v5555, %v5609
        %v5611 = vpop.f32.mrf.mxu0
        %v5612 = vpop.f32.mrf.mxu0
        %v5613 = vpop.f32.mrf.mxu0
        %5614 = vdwg.mxu0
        %5615 = vrot.lane.b32.xlu0 %v5283, 64
        %v5616 = vpop.permute.xlu0 %5615
        %5617 = vrot.lane.b32.xlu0 %v5284, 64
        %v5618 = vpop.permute.xlu0 %5617
        %v5620 = vsel %vm1828, %v5616, 0
        %v5623 = vsel %vm1828, %v5618, 0
        %5625 = vmatprep.subr.bf16.mxu0 0
        %5626 = vmatpush1.bf16.xpose.msra.mxu0 0
        %5627 = vmatprep.subr.bf16.mxu0 0
        %5628 = vmatpush1.bf16.xpose.msra.mxu0 0
        %5629 = vmatprep.subr.bf16.mxu0 0
        %5630 = vmatpush1.bf16.xpose.msra.mxu0 0
        %5631 = vmatprep.subr.bf16.mxu0 0
        %5632 = vmatpush1.bf16.xpose.msra.mxu0 0
        %5633 = vmatprep.subr.bf16.mxu0 0
        %5634 = vmatpush1.bf16.xpose.msra.mxu0 0
        %5635 = vmatprep.subr.bf16.mxu0 0
        %5636 = vmatpush1.bf16.xpose.msra.mxu0 0
        %5637 = vmatprep.subr.bf16.mxu0 0
        %5638 = vmatpush1.bf16.xpose.msra.mxu0 0
        %5639 = vmatprep.subr.bf16.mxu0 0
        %5640 = vmatpush1.bf16.xpose.msra.mxu0 %v5623
        %5641 = vmatprep.subr.bf16.mxu0 0
        %5642 = vmatpush2.bf16.xpose.msra.mxu0 0
        %5643 = vmatprep.subr.bf16.mxu0 0
        %5644 = vmatpush2.bf16.xpose.msra.mxu0 0
        %5645 = vmatprep.subr.bf16.mxu0 0
        %5646 = vmatpush2.bf16.xpose.msra.mxu0 0
        %5647 = vmatprep.subr.bf16.mxu0 0
        %5648 = vmatpush2.bf16.xpose.msra.mxu0 0
        %5649 = vmatprep.subr.bf16.mxu0 0
        %5650 = vmatpush2.bf16.xpose.msra.mxu0 0
        %5651 = vmatprep.subr.bf16.mxu0 0
        %5652 = vmatpush2.bf16.xpose.msra.mxu0 0
        %5653 = vmatprep.subr.bf16.mxu0 0
        %5654 = vmatpush2.bf16.xpose.msra.mxu0 0
        %5655 = vmatprep.subr.bf16.mxu0 0
        %5656 = vmatpush2.bf16.xpose.msra.mxu0 0
        %5657 = vmatprep.mubr.bf16.mxu0 0
        %5658 = vmatmul.mubr.bf16.gmra.mxu0 %v5620
        %v5659 = vpop.f32.mrf.mxu0
        %v5660 = vadd.f32 0.0, %v5659
        %v5661 = vpop.f32.mrf.mxu0
        %v5662 = vpop.f32.mrf.mxu0
        %v5663 = vpop.f32.mrf.mxu0
        %5664 = vdwg.mxu0
        %v5665 = vsel %vm1875, %v5660, -inf
        %5666 = vmax.xlane.f32.xlu0 %v5665
        %v5667 = vpop.xlane.xlu0 %5666
        %v5668 = vsub.f32 %v5660, %v5667
        %v5669 = vmul.f32 %v5668, 1.442695
        %v5670 = vpow.pop %v5669
        %v5671 = vsel %vm1875, %v5670, 0.0
        %5672 = vadd.xlane.f32.xlu0 %v5671
        %v5673 = vpop.xlane.xlu0 %5672
        %v5674 = vrcp.pop %v5673
        %v5675 = vmul.f32 %v5670, %v5674
        %v5676 = vpack.c.bf16 %v5675, %v5675
        %5677 = vrot.lane.b32.xlu0 %v5285, 64
        %v5678 = vpop.permute.xlu0 %5677
        %v5680 = vsel %vm1875, %v5676, 0
        %v5683 = vsel %vm1891, %v5678, 0
        %5685 = vmatprep.subr.bf16.mxu0 0
        %5686 = vmatpush1.bf16.msra.mxu0 0
        %5687 = vmatprep.subr.bf16.mxu0 0
        %5688 = vmatpush1.bf16.msra.mxu0 0
        %5689 = vmatprep.subr.bf16.mxu0 0
        %5690 = vmatpush1.bf16.msra.mxu0 0
        %5691 = vmatprep.subr.bf16.mxu0 0
        %5692 = vmatpush1.bf16.msra.mxu0 0
        %5693 = vmatprep.subr.bf16.mxu0 0
        %5694 = vmatpush1.bf16.msra.mxu0 0
        %5695 = vmatprep.subr.bf16.mxu0 0
        %5696 = vmatpush1.bf16.msra.mxu0 0
        %5697 = vmatprep.subr.bf16.mxu0 0
        %5698 = vmatpush1.bf16.msra.mxu0 0
        %5699 = vmatprep.subr.bf16.mxu0 0
        %5700 = vmatpush1.bf16.msra.mxu0 %v5683
        %5701 = vmatprep.subr.bf16.mxu0 0
        %5702 = vmatpush2.bf16.msra.mxu0 0
        %5703 = vmatprep.subr.bf16.mxu0 0
        %5704 = vmatpush2.bf16.msra.mxu0 0
        %5705 = vmatprep.subr.bf16.mxu0 0
        %5706 = vmatpush2.bf16.msra.mxu0 0
        %5707 = vmatprep.subr.bf16.mxu0 0
        %5708 = vmatpush2.bf16.msra.mxu0 0
        %5709 = vmatprep.subr.bf16.mxu0 0
        %5710 = vmatpush2.bf16.msra.mxu0 0
        %5711 = vmatprep.subr.bf16.mxu0 0
        %5712 = vmatpush2.bf16.msra.mxu0 0
        %5713 = vmatprep.subr.bf16.mxu0 0
        %5714 = vmatpush2.bf16.msra.mxu0 0
        %5715 = vmatprep.subr.bf16.mxu0 0
        %5716 = vmatpush2.bf16.msra.mxu0 0
        %5717 = vmatprep.mubr.bf16.mxu0 0
        %5718 = vmatmul.mubr.bf16.gmra.mxu0 %v5680
        %v5719 = vpop.f32.mrf.mxu0
        %v5720 = vadd.f32 0.0, %v5719
        %v5721 = vpop.f32.mrf.mxu0
        %v5722 = vpop.f32.mrf.mxu0
        %v5723 = vpop.f32.mrf.mxu0
        %5724 = vdwg.mxu0
        %v5725 = vpack.c.bf16 %v5720, %v5720
        %v5730 = vunpack.c.l.b16 %v5045
        %v5731 = vunpack.c.l.b16 %v5046
        %v5732 = vunpack.c.l.b16 %v5047
        %v5733 = vunpack.c.l.b16 %v5048
        %v5734 = vpack.c.b16 %v5731, %v5730
        %v5735 = vpack.c.b16 %v5733, %v5732
        %v5739 = vsel %vm1828, %v5725, 0
        %5741 = vmatprep.subr.bf16.mxu0 0
        %5742 = vmatpush1.bf16.msra.mxu0 0
        %5743 = vmatprep.subr.bf16.mxu0 0
        %5744 = vmatpush1.bf16.msra.mxu0 0
        %5745 = vmatprep.subr.bf16.mxu0 0
        %5746 = vmatpush1.bf16.msra.mxu0 0
        %5747 = vmatprep.subr.bf16.mxu0 0
        %5748 = vmatpush1.bf16.msra.mxu0 0
        %5749 = vmatprep.subr.bf16.mxu0 0
        %5750 = vmatpush1.bf16.msra.mxu0 0
        %5751 = vmatprep.subr.bf16.mxu0 0
        %5752 = vmatpush1.bf16.msra.mxu0 0
        %5753 = vmatprep.subr.bf16.mxu0 0
        %5754 = vmatpush1.bf16.msra.mxu0 %v5735
        %5755 = vmatprep.subr.bf16.mxu0 0
        %5756 = vmatpush1.bf16.msra.mxu0 %v5734
        %5757 = vmatprep.subr.bf16.mxu0 0
        %5758 = vmatpush2.bf16.msra.mxu0 0
        %5759 = vmatprep.subr.bf16.mxu0 0
        %5760 = vmatpush2.bf16.msra.mxu0 0
        %5761 = vmatprep.subr.bf16.mxu0 0
        %5762 = vmatpush2.bf16.msra.mxu0 0
        %5763 = vmatprep.subr.bf16.mxu0 0
        %5764 = vmatpush2.bf16.msra.mxu0 0
        %5765 = vmatprep.subr.bf16.mxu0 0
        %5766 = vmatpush2.bf16.msra.mxu0 0
        %5767 = vmatprep.subr.bf16.mxu0 0
        %5768 = vmatpush2.bf16.msra.mxu0 0
        %5769 = vmatprep.subr.bf16.mxu0 0
        %5770 = vmatpush2.bf16.msra.mxu0 0
        %5771 = vmatprep.subr.bf16.mxu0 0
        %5772 = vmatpush2.bf16.msra.mxu0 0
        %5773 = vmatprep.mubr.bf16.mxu0 0
        %5774 = vmatmul.mubr.bf16.gmra.mxu0 %v5739
        %v5775 = vpop.f32.mrf.mxu0
        %v5776 = vadd.f32 0.0, %v5775
        %v5777 = vpop.f32.mrf.mxu0
        %v5778 = vpop.f32.mrf.mxu0
        %v5779 = vpop.f32.mrf.mxu0
        %5780 = vdwg.mxu0
        %v5781 = vadd.f32 %v5610, %v5776
        %5782 = vrot.lane.b32.xlu0 %v5283, 32
        %v5783 = vpop.permute.xlu0 %5782
        %5784 = vrot.lane.b32.xlu0 %v5284, 32
        %v5785 = vpop.permute.xlu0 %5784
        %v5787 = vsel %vm1828, %v5783, 0
        %v5790 = vsel %vm1828, %v5785, 0
        %5792 = vmatprep.subr.bf16.mxu0 0
        %5793 = vmatpush1.bf16.xpose.msra.mxu0 0
        %5794 = vmatprep.subr.bf16.mxu0 0
        %5795 = vmatpush1.bf16.xpose.msra.mxu0 0
        %5796 = vmatprep.subr.bf16.mxu0 0
        %5797 = vmatpush1.bf16.xpose.msra.mxu0 0
        %5798 = vmatprep.subr.bf16.mxu0 0
        %5799 = vmatpush1.bf16.xpose.msra.mxu0 0
        %5800 = vmatprep.subr.bf16.mxu0 0
        %5801 = vmatpush1.bf16.xpose.msra.mxu0 0
        %5802 = vmatprep.subr.bf16.mxu0 0
        %5803 = vmatpush1.bf16.xpose.msra.mxu0 0
        %5804 = vmatprep.subr.bf16.mxu0 0
        %5805 = vmatpush1.bf16.xpose.msra.mxu0 0
        %5806 = vmatprep.subr.bf16.mxu0 0
        %5807 = vmatpush1.bf16.xpose.msra.mxu0 %v5790
        %5808 = vmatprep.subr.bf16.mxu0 0
        %5809 = vmatpush2.bf16.xpose.msra.mxu0 0
        %5810 = vmatprep.subr.bf16.mxu0 0
        %5811 = vmatpush2.bf16.xpose.msra.mxu0 0
        %5812 = vmatprep.subr.bf16.mxu0 0
        %5813 = vmatpush2.bf16.xpose.msra.mxu0 0
        %5814 = vmatprep.subr.bf16.mxu0 0
        %5815 = vmatpush2.bf16.xpose.msra.mxu0 0
        %5816 = vmatprep.subr.bf16.mxu0 0
        %5817 = vmatpush2.bf16.xpose.msra.mxu0 0
        %5818 = vmatprep.subr.bf16.mxu0 0
        %5819 = vmatpush2.bf16.xpose.msra.mxu0 0
        %5820 = vmatprep.subr.bf16.mxu0 0
        %5821 = vmatpush2.bf16.xpose.msra.mxu0 0
        %5822 = vmatprep.subr.bf16.mxu0 0
        %5823 = vmatpush2.bf16.xpose.msra.mxu0 0
        %5824 = vmatprep.mubr.bf16.mxu0 0
        %5825 = vmatmul.mubr.bf16.gmra.mxu0 %v5787
        %v5826 = vpop.f32.mrf.mxu0
        %v5827 = vadd.f32 0.0, %v5826
        %v5828 = vpop.f32.mrf.mxu0
        %v5829 = vpop.f32.mrf.mxu0
        %v5830 = vpop.f32.mrf.mxu0
        %5831 = vdwg.mxu0
        %v5832 = vsel %vm1875, %v5827, -inf
        %5833 = vmax.xlane.f32.xlu0 %v5832
        %v5834 = vpop.xlane.xlu0 %5833
        %v5835 = vsub.f32 %v5827, %v5834
        %v5836 = vmul.f32 %v5835, 1.442695
        %v5837 = vpow.pop %v5836
        %v5838 = vsel %vm1875, %v5837, 0.0
        %5839 = vadd.xlane.f32.xlu0 %v5838
        %v5840 = vpop.xlane.xlu0 %5839
        %v5841 = vrcp.pop %v5840
        %v5842 = vmul.f32 %v5837, %v5841
        %v5843 = vpack.c.bf16 %v5842, %v5842
        %5844 = vrot.lane.b32.xlu0 %v5285, 32
        %v5845 = vpop.permute.xlu0 %5844
        %v5847 = vsel %vm1875, %v5843, 0
        %v5850 = vsel %vm1891, %v5845, 0
        %5852 = vmatprep.subr.bf16.mxu0 0
        %5853 = vmatpush1.bf16.msra.mxu0 0
        %5854 = vmatprep.subr.bf16.mxu0 0
        %5855 = vmatpush1.bf16.msra.mxu0 0
        %5856 = vmatprep.subr.bf16.mxu0 0
        %5857 = vmatpush1.bf16.msra.mxu0 0
        %5858 = vmatprep.subr.bf16.mxu0 0
        %5859 = vmatpush1.bf16.msra.mxu0 0
        %5860 = vmatprep.subr.bf16.mxu0 0
        %5861 = vmatpush1.bf16.msra.mxu0 0
        %5862 = vmatprep.subr.bf16.mxu0 0
        %5863 = vmatpush1.bf16.msra.mxu0 0
        %5864 = vmatprep.subr.bf16.mxu0 0
        %5865 = vmatpush1.bf16.msra.mxu0 0
        %5866 = vmatprep.subr.bf16.mxu0 0
        %5867 = vmatpush1.bf16.msra.mxu0 %v5850
        %5868 = vmatprep.subr.bf16.mxu0 0
        %5869 = vmatpush2.bf16.msra.mxu0 0
        %5870 = vmatprep.subr.bf16.mxu0 0
        %5871 = vmatpush2.bf16.msra.mxu0 0
        %5872 = vmatprep.subr.bf16.mxu0 0
        %5873 = vmatpush2.bf16.msra.mxu0 0
        %5874 = vmatprep.subr.bf16.mxu0 0
        %5875 = vmatpush2.bf16.msra.mxu0 0
        %5876 = vmatprep.subr.bf16.mxu0 0
        %5877 = vmatpush2.bf16.msra.mxu0 0
        %5878 = vmatprep.subr.bf16.mxu0 0
        %5879 = vmatpush2.bf16.msra.mxu0 0
        %5880 = vmatprep.subr.bf16.mxu0 0
        %5881 = vmatpush2.bf16.msra.mxu0 0
        %5882 = vmatprep.subr.bf16.mxu0 0
        %5883 = vmatpush2.bf16.msra.mxu0 0
        %5884 = vmatprep.mubr.bf16.mxu0 0
        %5885 = vmatmul.mubr.bf16.gmra.mxu0 %v5847
        %v5886 = vpop.f32.mrf.mxu0
        %v5887 = vadd.f32 0.0, %v5886
        %v5888 = vpop.f32.mrf.mxu0
        %v5889 = vpop.f32.mrf.mxu0
        %v5890 = vpop.f32.mrf.mxu0
        %5891 = vdwg.mxu0
        %v5892 = vpack.c.bf16 %v5887, %v5887
        %v5897 = vunpack.c.l.b16 %v5049
        %v5898 = vunpack.c.l.b16 %v5050
        %v5899 = vunpack.c.l.b16 %v5051
        %v5900 = vunpack.c.l.b16 %v5052
        %v5901 = vpack.c.b16 %v5898, %v5897
        %v5902 = vpack.c.b16 %v5900, %v5899
        %v5906 = vsel %vm1828, %v5892, 0
        %5908 = vmatprep.subr.bf16.mxu0 0
        %5909 = vmatpush1.bf16.msra.mxu0 0
        %5910 = vmatprep.subr.bf16.mxu0 0
        %5911 = vmatpush1.bf16.msra.mxu0 0
        %5912 = vmatprep.subr.bf16.mxu0 0
        %5913 = vmatpush1.bf16.msra.mxu0 0
        %5914 = vmatprep.subr.bf16.mxu0 0
        %5915 = vmatpush1.bf16.msra.mxu0 0
        %5916 = vmatprep.subr.bf16.mxu0 0
        %5917 = vmatpush1.bf16.msra.mxu0 0
        %5918 = vmatprep.subr.bf16.mxu0 0
        %5919 = vmatpush1.bf16.msra.mxu0 0
        %5920 = vmatprep.subr.bf16.mxu0 0
        %5921 = vmatpush1.bf16.msra.mxu0 %v5902
        %5922 = vmatprep.subr.bf16.mxu0 0
        %5923 = vmatpush1.bf16.msra.mxu0 %v5901
        %5924 = vmatprep.subr.bf16.mxu0 0
        %5925 = vmatpush2.bf16.msra.mxu0 0
        %5926 = vmatprep.subr.bf16.mxu0 0
        %5927 = vmatpush2.bf16.msra.mxu0 0
        %5928 = vmatprep.subr.bf16.mxu0 0
        %5929 = vmatpush2.bf16.msra.mxu0 0
        %5930 = vmatprep.subr.bf16.mxu0 0
        %5931 = vmatpush2.bf16.msra.mxu0 0
        %5932 = vmatprep.subr.bf16.mxu0 0
        %5933 = vmatpush2.bf16.msra.mxu0 0
        %5934 = vmatprep.subr.bf16.mxu0 0
        %5935 = vmatpush2.bf16.msra.mxu0 0
        %5936 = vmatprep.subr.bf16.mxu0 0
        %5937 = vmatpush2.bf16.msra.mxu0 0
        %5938 = vmatprep.subr.bf16.mxu0 0
        %5939 = vmatpush2.bf16.msra.mxu0 0
        %5940 = vmatprep.mubr.bf16.mxu0 0
        %5941 = vmatmul.mubr.bf16.gmra.mxu0 %v5906
        %v5942 = vpop.f32.mrf.mxu0
        %v5943 = vadd.f32 0.0, %v5942
        %v5944 = vpop.f32.mrf.mxu0
        %v5945 = vpop.f32.mrf.mxu0
        %v5946 = vpop.f32.mrf.mxu0
        %5947 = vdwg.mxu0
        %v5948 = vadd.f32 %v5781, %v5943
        %v5950 = vlaneseq
        %v5951 = vshrl.u32 %v5950, 7
        %v5952 = vsub.s32 0, %v5951
        %v5953 = vrot.slane %v5053, %v5952
        %v5955 = vadd.f32 %v5948, %v5953
        %v5956 = vadd.f32 %v5002, %v5955
        %v5957 = vld [vmem:[#allocation34] sm:$0x1]
        %v5958 = vld [vmem:[#allocation35] sm:$0x1]
        %5959 = vadd.xlane.f32.xlu0 %v5956
        %v5960 = vpop.xlane.xlu0 %5959
        %v5961 = vmul.f32 %v5960, %v2506
        %v5962 = vsub.f32 %v5956, %v5961
        %v5963 = vmul.f32 %v5962, %v5962
        %5964 = vadd.xlane.f32.xlu0 %v5963
        %v5965 = vpop.xlane.xlu0 %5964
        %v5966 = vmul.f32 %v5965, %v2506
        %v5967 = vadd.f32 %v5966, 1e-05
        %v5968 = vrsqrt.pop %v5967
        %v5969 = vmul.f32 %v5962, %v5968
        %v5971 = vlaneseq
        %v5972 = vshrl.u32 %v5971, 7
        %v5973 = vsub.s32 0, %v5972
        %v5974 = vrot.slane %v5957, %v5973
        %v5976 = vmul.f32 %v5969, %v5974
        %v5978 = vlaneseq
        %v5979 = vshrl.u32 %v5978, 7
        %v5980 = vsub.s32 0, %v5979
        %v5981 = vrot.slane %v5958, %v5980
        %v5983 = vadd.f32 %v5976, %v5981
        %v5984 = vld [vmem:[#allocation40] sm:$0xf]
        %v5985 = vld [vmem:[#allocation40 + $0x4] sm:$0xf]
        %v5986 = vld [vmem:[#allocation40 + $0x8] sm:$0xf]
        %v5987 = vld [vmem:[#allocation40 + $0xc] sm:$0xf]
        %v5988 = vld [vmem:[#allocation40 + $0x10] sm:$0xf]
        %v5989 = vld [vmem:[#allocation40 + $0x14] sm:$0xf]
        %v5990 = vld [vmem:[#allocation40 + $0x18] sm:$0xf]
        %v5991 = vld [vmem:[#allocation40 + $0x1c] sm:$0xf]
        %v5992 = vld [vmem:[#allocation40 + $0x20] sm:$0xf]
        %v5993 = vld [vmem:[#allocation40 + $0x24] sm:$0xf]
        %v5994 = vld [vmem:[#allocation40 + $0x28] sm:$0xf]
        %v5995 = vld [vmem:[#allocation40 + $0x2c] sm:$0xf]
        %v5996 = vld [vmem:[#allocation40 + $0x30] sm:$0xf]
        %v5997 = vld [vmem:[#allocation40 + $0x34] sm:$0xf]
        %v5998 = vld [vmem:[#allocation40 + $0x38] sm:$0xf]
        %v5999 = vld [vmem:[#allocation40 + $0x3c] sm:$0xf]
        %v6000 = vld [vmem:[#allocation41] sm:$0x1]
        %v6001 = vld [vmem:[#allocation43] sm:$0xf]
        %v6002 = vld [vmem:[#allocation43 + $0x4] sm:$0xf]
        %v6003 = vld [vmem:[#allocation43 + $0x8] sm:$0xf]
        %v6004 = vld [vmem:[#allocation43 + $0xc] sm:$0xf]
        %v6005 = vld [vmem:[#allocation43 + $0x10] sm:$0xf]
        %v6006 = vld [vmem:[#allocation43 + $0x14] sm:$0xf]
        %v6007 = vld [vmem:[#allocation43 + $0x18] sm:$0xf]
        %v6008 = vld [vmem:[#allocation43 + $0x1c] sm:$0xf]
        %v6009 = vld [vmem:[#allocation43 + $0x20] sm:$0xf]
        %v6010 = vld [vmem:[#allocation43 + $0x24] sm:$0xf]
        %v6011 = vld [vmem:[#allocation43 + $0x28] sm:$0xf]
        %v6012 = vld [vmem:[#allocation43 + $0x2c] sm:$0xf]
        %v6013 = vld [vmem:[#allocation43 + $0x30] sm:$0xf]
        %v6014 = vld [vmem:[#allocation43 + $0x34] sm:$0xf]
        %v6015 = vld [vmem:[#allocation43 + $0x38] sm:$0xf]
        %v6016 = vld [vmem:[#allocation43 + $0x3c] sm:$0xf]
        %v6017 = vld [vmem:[#allocation44] sm:$0x1]
        %v6018 = vpack.c.bf16 %v5983, %v5983
        %v6020 = vlaneseq
        %v6021 = vshrl.u32 %v6020, 7
        %v6022 = vsub.s32 0, %v6021
        %v6023 = vrot.slane %v6000, %v6022
        %v6041 = vunpack.c.l.b16 %v5984
        %v6042 = vunpack.c.l.b16 %v5985
        %v6043 = vunpack.c.l.b16 %v5986
        %v6044 = vunpack.c.l.b16 %v5987
        %v6045 = vunpack.c.l.b16 %v5988
        %v6046 = vunpack.c.l.b16 %v5989
        %v6047 = vunpack.c.l.b16 %v5990
        %v6048 = vunpack.c.l.b16 %v5991
        %v6049 = vunpack.c.l.b16 %v5992
        %v6050 = vunpack.c.l.b16 %v5993
        %v6051 = vunpack.c.l.b16 %v5994
        %v6052 = vunpack.c.l.b16 %v5995
        %v6053 = vunpack.c.l.b16 %v5996
        %v6054 = vunpack.c.l.b16 %v5997
        %v6055 = vunpack.c.l.b16 %v5998
        %v6056 = vunpack.c.l.b16 %v5999
        %v6057 = vpack.c.b16 %v6042, %v6041
        %v6058 = vpack.c.b16 %v6044, %v6043
        %v6059 = vpack.c.b16 %v6046, %v6045
        %v6060 = vpack.c.b16 %v6048, %v6047
        %v6061 = vpack.c.b16 %v6050, %v6049
        %v6062 = vpack.c.b16 %v6052, %v6051
        %v6063 = vpack.c.b16 %v6054, %v6053
        %v6064 = vpack.c.b16 %v6056, %v6055
        %6073 = vmatprep.subr.bf16.mxu0 0
        %6074 = vmatpush1.bf16.msra.mxu0 %v6064
        %6075 = vmatprep.subr.bf16.mxu0 0
        %6076 = vmatpush1.bf16.msra.mxu0 %v6063
        %6077 = vmatprep.subr.bf16.mxu0 0
        %6078 = vmatpush1.bf16.msra.mxu0 %v6062
        %6079 = vmatprep.subr.bf16.mxu0 0
        %6080 = vmatpush1.bf16.msra.mxu0 %v6061
        %6081 = vmatprep.subr.bf16.mxu0 0
        %6082 = vmatpush1.bf16.msra.mxu0 %v6060
        %6083 = vmatprep.subr.bf16.mxu0 0
        %6084 = vmatpush1.bf16.msra.mxu0 %v6059
        %6085 = vmatprep.subr.bf16.mxu0 0
        %6086 = vmatpush1.bf16.msra.mxu0 %v6058
        %6087 = vmatprep.subr.bf16.mxu0 0
        %6088 = vmatpush1.bf16.msra.mxu0 %v6057
        %6089 = vmatprep.subr.bf16.mxu0 0
        %6090 = vmatpush2.bf16.msra.mxu0 0
        %6091 = vmatprep.subr.bf16.mxu0 0
        %6092 = vmatpush2.bf16.msra.mxu0 0
        %6093 = vmatprep.subr.bf16.mxu0 0
        %6094 = vmatpush2.bf16.msra.mxu0 0
        %6095 = vmatprep.subr.bf16.mxu0 0
        %6096 = vmatpush2.bf16.msra.mxu0 0
        %6097 = vmatprep.subr.bf16.mxu0 0
        %6098 = vmatpush2.bf16.msra.mxu0 0
        %6099 = vmatprep.subr.bf16.mxu0 0
        %6100 = vmatpush2.bf16.msra.mxu0 0
        %6101 = vmatprep.subr.bf16.mxu0 0
        %6102 = vmatpush2.bf16.msra.mxu0 0
        %6103 = vmatprep.subr.bf16.mxu0 0
        %6104 = vmatpush2.bf16.msra.mxu0 0
        %6105 = vmatprep.mubr.bf16.mxu0 0
        %6106 = vmatmul.mubr.bf16.gmra.mxu0 %v6018
        %v6107 = vpop.f32.mrf.mxu0
        %v6108 = vadd.f32 %v6023, %v6107
        %v6109 = vpop.f32.mrf.mxu0
        %v6110 = vpop.f32.mrf.mxu0
        %v6111 = vpop.f32.mrf.mxu0
        %6112 = vdwg.mxu0
        %v6113 = vmax.f32 %v6108, 0.0
        %v6114 = vpack.c.bf16 %v6113, %v6113
        %v6116 = vlaneseq
        %v6117 = vshrl.u32 %v6116, 7
        %v6118 = vsub.s32 0, %v6117
        %v6119 = vrot.slane %v6017, %v6118
        %v6137 = vunpack.c.l.b16 %v6001
        %v6138 = vunpack.c.l.b16 %v6002
        %v6139 = vunpack.c.l.b16 %v6003
        %v6140 = vunpack.c.l.b16 %v6004
        %v6141 = vunpack.c.l.b16 %v6005
        %v6142 = vunpack.c.l.b16 %v6006
        %v6143 = vunpack.c.l.b16 %v6007
        %v6144 = vunpack.c.l.b16 %v6008
        %v6145 = vunpack.c.l.b16 %v6009
        %v6146 = vunpack.c.l.b16 %v6010
        %v6147 = vunpack.c.l.b16 %v6011
        %v6148 = vunpack.c.l.b16 %v6012
        %v6149 = vunpack.c.l.b16 %v6013
        %v6150 = vunpack.c.l.b16 %v6014
        %v6151 = vunpack.c.l.b16 %v6015
        %v6152 = vunpack.c.l.b16 %v6016
        %v6153 = vpack.c.b16 %v6138, %v6137
        %v6154 = vpack.c.b16 %v6140, %v6139
        %v6155 = vpack.c.b16 %v6142, %v6141
        %v6156 = vpack.c.b16 %v6144, %v6143
        %v6157 = vpack.c.b16 %v6146, %v6145
        %v6158 = vpack.c.b16 %v6148, %v6147
        %v6159 = vpack.c.b16 %v6150, %v6149
        %v6160 = vpack.c.b16 %v6152, %v6151
        %6169 = vmatprep.subr.bf16.mxu0 0
        %6170 = vmatpush1.bf16.msra.mxu0 %v6160
        %6171 = vmatprep.subr.bf16.mxu0 0
        %6172 = vmatpush1.bf16.msra.mxu0 %v6159
        %6173 = vmatprep.subr.bf16.mxu0 0
        %6174 = vmatpush1.bf16.msra.mxu0 %v6158
        %6175 = vmatprep.subr.bf16.mxu0 0
        %6176 = vmatpush1.bf16.msra.mxu0 %v6157
        %6177 = vmatprep.subr.bf16.mxu0 0
        %6178 = vmatpush1.bf16.msra.mxu0 %v6156
        %6179 = vmatprep.subr.bf16.mxu0 0
        %6180 = vmatpush1.bf16.msra.mxu0 %v6155
        %6181 = vmatprep.subr.bf16.mxu0 0
        %6182 = vmatpush1.bf16.msra.mxu0 %v6154
        %6183 = vmatprep.subr.bf16.mxu0 0
        %6184 = vmatpush1.bf16.msra.mxu0 %v6153
        %6185 = vmatprep.subr.bf16.mxu0 0
        %6186 = vmatpush2.bf16.msra.mxu0 0
        %6187 = vmatprep.subr.bf16.mxu0 0
        %6188 = vmatpush2.bf16.msra.mxu0 0
        %6189 = vmatprep.subr.bf16.mxu0 0
        %6190 = vmatpush2.bf16.msra.mxu0 0
        %6191 = vmatprep.subr.bf16.mxu0 0
        %6192 = vmatpush2.bf16.msra.mxu0 0
        %6193 = vmatprep.subr.bf16.mxu0 0
        %6194 = vmatpush2.bf16.msra.mxu0 0
        %6195 = vmatprep.subr.bf16.mxu0 0
        %6196 = vmatpush2.bf16.msra.mxu0 0
        %6197 = vmatprep.subr.bf16.mxu0 0
        %6198 = vmatpush2.bf16.msra.mxu0 0
        %6199 = vmatprep.subr.bf16.mxu0 0
        %6200 = vmatpush2.bf16.msra.mxu0 0
        %6201 = vmatprep.mubr.bf16.mxu0 0
        %6202 = vmatmul.mubr.bf16.gmra.mxu0 %v6114
        %v6203 = vpop.f32.mrf.mxu0
        %v6204 = vadd.f32 %v6119, %v6203
        %v6205 = vpop.f32.mrf.mxu0
        %v6206 = vpop.f32.mrf.mxu0
        %v6207 = vpop.f32.mrf.mxu0
        %6208 = vdwg.mxu0
        %v6209 = vadd.f32 %v5983, %v6204
        %v6210 = vld [vmem:[#allocation37] sm:$0x1]
        %v6211 = vld [vmem:[#allocation38] sm:$0x1]
        %6212 = vadd.xlane.f32.xlu0 %v6209
        %v6213 = vpop.xlane.xlu0 %6212
        %v6214 = vmul.f32 %v6213, %v2506
        %v6215 = vsub.f32 %v6209, %v6214
        %v6216 = vmul.f32 %v6215, %v6215
        %6217 = vadd.xlane.f32.xlu0 %v6216
        %v6218 = vpop.xlane.xlu0 %6217
        %v6219 = vmul.f32 %v6218, %v2506
        %v6220 = vadd.f32 %v6219, 1e-05
        %v6221 = vrsqrt.pop %v6220
        %v6222 = vmul.f32 %v6215, %v6221
        %v6224 = vlaneseq
        %v6225 = vshrl.u32 %v6224, 7
        %v6226 = vsub.s32 0, %v6225
        %v6227 = vrot.slane %v6210, %v6226
        %v6229 = vmul.f32 %v6222, %v6227
        %v6231 = vlaneseq
        %v6232 = vshrl.u32 %v6231, 7
        %v6233 = vsub.s32 0, %v6232
        %v6234 = vrot.slane %v6211, %v6233
        %v6236 = vadd.f32 %v6229, %v6234
        %s6237 = scalar_lea.vmem [#allocation19], 192
        %v6238 = vld [vmem:[%s6237] sm:$0xff]
        %v6239 = vld [vmem:[%s6237 + $0x8] sm:$0xf]
        %v6240 = vld [vmem:[%s6237 + $0xc] sm:$0xff]
        %v6241 = vld [vmem:[%s6237 + $0x14] sm:$0xf]
        %v6242 = vld [vmem:[%s6237 + $0x18] sm:$0xff]
        %v6243 = vld [vmem:[%s6237 + $0x20] sm:$0xf]
        %v6244 = vld [vmem:[%s6237 + $0x24] sm:$0xff]
        %v6245 = vld [vmem:[%s6237 + $0x2c] sm:$0xf]
        %v6246 = vld [vmem:[%s6237 + $0x30] sm:$0xff]
        %v6247 = vld [vmem:[%s6237 + $0x38] sm:$0xf]
        %v6248 = vld [vmem:[%s6237 + $0x3c] sm:$0xff]
        %v6249 = vld [vmem:[%s6237 + $0x44] sm:$0xf]
        %v6250 = vld [vmem:[%s6237 + $0x48] sm:$0xff]
        %v6251 = vld [vmem:[%s6237 + $0x50] sm:$0xf]
        %v6252 = vld [vmem:[%s6237 + $0x54] sm:$0xff]
        %v6253 = vld [vmem:[%s6237 + $0x5c] sm:$0xf]
        %v6254 = vld [vmem:[%s6237 + $0x60] sm:$0xff]
        %v6255 = vld [vmem:[%s6237 + $0x68] sm:$0xf]
        %v6256 = vld [vmem:[%s6237 + $0x6c] sm:$0xff]
        %v6257 = vld [vmem:[%s6237 + $0x74] sm:$0xf]
        %v6258 = vld [vmem:[%s6237 + $0x78] sm:$0xff]
        %v6259 = vld [vmem:[%s6237 + $0x80] sm:$0xf]
        %v6260 = vld [vmem:[%s6237 + $0x84] sm:$0xff]
        %v6261 = vld [vmem:[%s6237 + $0x8c] sm:$0xf]
        %v6262 = vld [vmem:[%s6237 + $0x90] sm:$0xff]
        %v6263 = vld [vmem:[%s6237 + $0x98] sm:$0xf]
        %v6264 = vld [vmem:[%s6237 + $0x9c] sm:$0xff]
        %v6265 = vld [vmem:[%s6237 + $0xa4] sm:$0xf]
        %v6266 = vld [vmem:[%s6237 + $0xa8] sm:$0xff]
        %v6267 = vld [vmem:[%s6237 + $0xb0] sm:$0xf]
        %v6268 = vld [vmem:[%s6237 + $0xb4] sm:$0xff]
        %v6269 = vld [vmem:[%s6237 + $0xbc] sm:$0xf]
        %s6270 = scalar_lea.vmem %s33, 3
        %v6271 = vld [vmem:[%s6270] sm:$0x7]
        %s6272 = scalar_lea.vmem [#allocation20], 64
        %v6273 = vld [vmem:[%s6272] sm:$0xf]
        %v6274 = vld [vmem:[%s6272 + $0x4] sm:$0xf]
        %v6275 = vld [vmem:[%s6272 + $0x8] sm:$0xf]
        %v6276 = vld [vmem:[%s6272 + $0xc] sm:$0xf]
        %v6277 = vld [vmem:[%s6272 + $0x10] sm:$0xf]
        %v6278 = vld [vmem:[%s6272 + $0x14] sm:$0xf]
        %v6279 = vld [vmem:[%s6272 + $0x18] sm:$0xf]
        %v6280 = vld [vmem:[%s6272 + $0x1c] sm:$0xf]
        %v6281 = vld [vmem:[%s6272 + $0x20] sm:$0xf]
        %v6282 = vld [vmem:[%s6272 + $0x24] sm:$0xf]
        %v6283 = vld [vmem:[%s6272 + $0x28] sm:$0xf]
        %v6284 = vld [vmem:[%s6272 + $0x2c] sm:$0xf]
        %v6285 = vld [vmem:[%s6272 + $0x30] sm:$0xf]
        %v6286 = vld [vmem:[%s6272 + $0x34] sm:$0xf]
        %v6287 = vld [vmem:[%s6272 + $0x38] sm:$0xf]
        %v6288 = vld [vmem:[%s6272 + $0x3c] sm:$0xf]
        %s6289 = scalar_lea.vmem [#allocation22], 1
        %v6290 = vld [vmem:[%s6289] sm:$0x1]
        %v6291 = vpack.c.bf16 %v6236, %v6236
        %v6293 = vlaneseq
        %v6294 = vshrl.u32 %v6293, 7
        %v6295 = vsub.s32 0, %v6294
        %v6296 = vrot.slane %v6271, %v6295
        %v6297 = vlaneseq
        %v6298 = vshrl.u32 %v6297, 7
        %v6299 = vsub.s32 1, %v6298
        %v6300 = vrot.slane %v6271, %v6299
        %v6301 = vlaneseq
        %v6302 = vshrl.u32 %v6301, 7
        %v6303 = vsub.s32 2, %v6302
        %v6304 = vrot.slane %v6271, %v6303
        %v6340 = vunpack.c.l.b16 %v6238
        %v6341 = vunpack.c.h.b16 %v6238
        %v6342 = vunpack.c.l.b16 %v6239
        %v6343 = vunpack.c.l.b16 %v6240
        %v6344 = vunpack.c.h.b16 %v6240
        %v6345 = vunpack.c.l.b16 %v6241
        %v6346 = vunpack.c.l.b16 %v6242
        %v6347 = vunpack.c.h.b16 %v6242
        %v6348 = vunpack.c.l.b16 %v6243
        %v6349 = vunpack.c.l.b16 %v6244
        %v6350 = vunpack.c.h.b16 %v6244
        %v6351 = vunpack.c.l.b16 %v6245
        %v6352 = vunpack.c.l.b16 %v6246
        %v6353 = vunpack.c.h.b16 %v6246
        %v6354 = vunpack.c.l.b16 %v6247
        %v6355 = vunpack.c.l.b16 %v6248
        %v6356 = vunpack.c.h.b16 %v6248
        %v6357 = vunpack.c.l.b16 %v6249
        %v6358 = vunpack.c.l.b16 %v6250
        %v6359 = vunpack.c.h.b16 %v6250
        %v6360 = vunpack.c.l.b16 %v6251
        %v6361 = vunpack.c.l.b16 %v6252
        %v6362 = vunpack.c.h.b16 %v6252
        %v6363 = vunpack.c.l.b16 %v6253
        %v6364 = vunpack.c.l.b16 %v6254
        %v6365 = vunpack.c.h.b16 %v6254
        %v6366 = vunpack.c.l.b16 %v6255
        %v6367 = vunpack.c.l.b16 %v6256
        %v6368 = vunpack.c.h.b16 %v6256
        %v6369 = vunpack.c.l.b16 %v6257
        %v6370 = vunpack.c.l.b16 %v6258
        %v6371 = vunpack.c.h.b16 %v6258
        %v6372 = vunpack.c.l.b16 %v6259
        %v6373 = vunpack.c.l.b16 %v6260
        %v6374 = vunpack.c.h.b16 %v6260
        %v6375 = vunpack.c.l.b16 %v6261
        %v6376 = vunpack.c.l.b16 %v6262
        %v6377 = vunpack.c.h.b16 %v6262
        %v6378 = vunpack.c.l.b16 %v6263
        %v6379 = vunpack.c.l.b16 %v6264
        %v6380 = vunpack.c.h.b16 %v6264
        %v6381 = vunpack.c.l.b16 %v6265
        %v6382 = vunpack.c.l.b16 %v6266
        %v6383 = vunpack.c.h.b16 %v6266
        %v6384 = vunpack.c.l.b16 %v6267
        %v6385 = vunpack.c.l.b16 %v6268
        %v6386 = vunpack.c.h.b16 %v6268
        %v6387 = vunpack.c.l.b16 %v6269
        %v6388 = vpack.c.b16 %v6343, %v6340
        %v6389 = vpack.c.b16 %v6344, %v6341
        %v6390 = vpack.c.b16 %v6345, %v6342
        %v6391 = vpack.c.b16 %v6349, %v6346
        %v6392 = vpack.c.b16 %v6350, %v6347
        %v6393 = vpack.c.b16 %v6351, %v6348
        %v6394 = vpack.c.b16 %v6355, %v6352
        %v6395 = vpack.c.b16 %v6356, %v6353
        %v6396 = vpack.c.b16 %v6357, %v6354
        %v6397 = vpack.c.b16 %v6361, %v6358
        %v6398 = vpack.c.b16 %v6362, %v6359
        %v6399 = vpack.c.b16 %v6363, %v6360
        %v6400 = vpack.c.b16 %v6367, %v6364
        %v6401 = vpack.c.b16 %v6368, %v6365
        %v6402 = vpack.c.b16 %v6369, %v6366
        %v6403 = vpack.c.b16 %v6373, %v6370
        %v6404 = vpack.c.b16 %v6374, %v6371
        %v6405 = vpack.c.b16 %v6375, %v6372
        %v6406 = vpack.c.b16 %v6379, %v6376
        %v6407 = vpack.c.b16 %v6380, %v6377
        %v6408 = vpack.c.b16 %v6381, %v6378
        %v6409 = vpack.c.b16 %v6385, %v6382
        %v6410 = vpack.c.b16 %v6386, %v6383
        %v6411 = vpack.c.b16 %v6387, %v6384
        %6436 = vmatprep.subr.bf16.mxu0 %v6410
        %6437 = vmatpush1.bf16.msra.mxu0 %v6409
        %6438 = vmatprep.subr.bf16.mxu0 %v6407
        %6439 = vmatpush1.bf16.msra.mxu0 %v6406
        %6440 = vmatprep.subr.bf16.mxu0 %v6404
        %6441 = vmatpush1.bf16.msra.mxu0 %v6403
        %6442 = vmatprep.subr.bf16.mxu0 %v6401
        %6443 = vmatpush1.bf16.msra.mxu0 %v6400
        %6444 = vmatprep.subr.bf16.mxu0 %v6398
        %6445 = vmatpush1.bf16.msra.mxu0 %v6397
        %6446 = vmatprep.subr.bf16.mxu0 %v6395
        %6447 = vmatpush1.bf16.msra.mxu0 %v6394
        %6448 = vmatprep.subr.bf16.mxu0 %v6392
        %6449 = vmatpush1.bf16.msra.mxu0 %v6391
        %6450 = vmatprep.subr.bf16.mxu0 %v6389
        %6451 = vmatpush1.bf16.msra.mxu0 %v6388
        %6452 = vmatprep.subr.bf16.mxu0 0
        %6453 = vmatpush2.bf16.msra.mxu0 0
        %6454 = vmatprep.subr.bf16.mxu0 0
        %6455 = vmatpush2.bf16.msra.mxu0 0
        %6456 = vmatprep.subr.bf16.mxu0 0
        %6457 = vmatpush2.bf16.msra.mxu0 0
        %6458 = vmatprep.subr.bf16.mxu0 0
        %6459 = vmatpush2.bf16.msra.mxu0 0
        %6460 = vmatprep.subr.bf16.mxu0 0
        %6461 = vmatpush2.bf16.msra.mxu0 0
        %6462 = vmatprep.subr.bf16.mxu0 0
        %6463 = vmatpush2.bf16.msra.mxu0 0
        %6464 = vmatprep.subr.bf16.mxu0 0
        %6465 = vmatpush2.bf16.msra.mxu0 0
        %6466 = vmatprep.subr.bf16.mxu0 0
        %6467 = vmatpush2.bf16.msra.mxu0 0
        %6468 = vmatprep.mubr.bf16.mxu0 0
        %6469 = vmatmul.mubr.bf16.gmra.mxu0 %v6291
        %v6470 = vpop.f32.mrf.mxu0
        %v6471 = vadd.f32 %v6296, %v6470
        %v6472 = vpop.f32.mrf.mxu0
        %v6473 = vadd.f32 %v6300, %v6472
        %v6474 = vpop.f32.mrf.mxu0
        %v6475 = vpop.f32.mrf.mxu0
        %6476 = vdwg.mxu0
        %6477 = vmatprep.subr.bf16.mxu0 0
        %6478 = vmatpush1.bf16.msra.mxu0 %v6411
        %6479 = vmatprep.subr.bf16.mxu0 0
        %6480 = vmatpush1.bf16.msra.mxu0 %v6408
        %6481 = vmatprep.subr.bf16.mxu0 0
        %6482 = vmatpush1.bf16.msra.mxu0 %v6405
        %6483 = vmatprep.subr.bf16.mxu0 0
        %6484 = vmatpush1.bf16.msra.mxu0 %v6402
        %6485 = vmatprep.subr.bf16.mxu0 0
        %6486 = vmatpush1.bf16.msra.mxu0 %v6399
        %6487 = vmatprep.subr.bf16.mxu0 0
        %6488 = vmatpush1.bf16.msra.mxu0 %v6396
        %6489 = vmatprep.subr.bf16.mxu0 0
        %6490 = vmatpush1.bf16.msra.mxu0 %v6393
        %6491 = vmatprep.subr.bf16.mxu0 0
        %6492 = vmatpush1.bf16.msra.mxu0 %v6390
        %6493 = vmatprep.subr.bf16.mxu0 0
        %6494 = vmatpush2.bf16.msra.mxu0 0
        %6495 = vmatprep.subr.bf16.mxu0 0
        %6496 = vmatpush2.bf16.msra.mxu0 0
        %6497 = vmatprep.subr.bf16.mxu0 0
        %6498 = vmatpush2.bf16.msra.mxu0 0
        %6499 = vmatprep.subr.bf16.mxu0 0
        %6500 = vmatpush2.bf16.msra.mxu0 0
        %6501 = vmatprep.subr.bf16.mxu0 0
        %6502 = vmatpush2.bf16.msra.mxu0 0
        %6503 = vmatprep.subr.bf16.mxu0 0
        %6504 = vmatpush2.bf16.msra.mxu0 0
        %6505 = vmatprep.subr.bf16.mxu0 0
        %6506 = vmatpush2.bf16.msra.mxu0 0
        %6507 = vmatprep.subr.bf16.mxu0 0
        %6508 = vmatpush2.bf16.msra.mxu0 0
        %6509 = vmatprep.mubr.bf16.mxu0 0
        %6510 = vmatmul.mubr.bf16.gmra.mxu0 %v6291
        %v6511 = vpop.f32.mrf.mxu0
        %v6512 = vadd.f32 %v6304, %v6511
        %v6513 = vpop.f32.mrf.mxu0
        %v6514 = vpop.f32.mrf.mxu0
        %v6515 = vpop.f32.mrf.mxu0
        %6516 = vdwg.mxu0
        %v6517 = vmul.f32 %v6471, 0.17677669
        %v6518 = vpack.c.bf16 %v6517, %v6517
        %v6519 = vpack.c.bf16 %v6473, %v6473
        %v6520 = vpack.c.bf16 %v6512, %v6512
        %v6522 = vsel %vm1828, %v6518, 0
        %v6525 = vsel %vm1828, %v6519, 0
        %6527 = vmatprep.subr.bf16.mxu0 0
        %6528 = vmatpush1.bf16.xpose.msra.mxu0 0
        %6529 = vmatprep.subr.bf16.mxu0 0
        %6530 = vmatpush1.bf16.xpose.msra.mxu0 0
        %6531 = vmatprep.subr.bf16.mxu0 0
        %6532 = vmatpush1.bf16.xpose.msra.mxu0 0
        %6533 = vmatprep.subr.bf16.mxu0 0
        %6534 = vmatpush1.bf16.xpose.msra.mxu0 0
        %6535 = vmatprep.subr.bf16.mxu0 0
        %6536 = vmatpush1.bf16.xpose.msra.mxu0 0
        %6537 = vmatprep.subr.bf16.mxu0 0
        %6538 = vmatpush1.bf16.xpose.msra.mxu0 0
        %6539 = vmatprep.subr.bf16.mxu0 0
        %6540 = vmatpush1.bf16.xpose.msra.mxu0 0
        %6541 = vmatprep.subr.bf16.mxu0 0
        %6542 = vmatpush1.bf16.xpose.msra.mxu0 %v6525
        %6543 = vmatprep.subr.bf16.mxu0 0
        %6544 = vmatpush2.bf16.xpose.msra.mxu0 0
        %6545 = vmatprep.subr.bf16.mxu0 0
        %6546 = vmatpush2.bf16.xpose.msra.mxu0 0
        %6547 = vmatprep.subr.bf16.mxu0 0
        %6548 = vmatpush2.bf16.xpose.msra.mxu0 0
        %6549 = vmatprep.subr.bf16.mxu0 0
        %6550 = vmatpush2.bf16.xpose.msra.mxu0 0
        %6551 = vmatprep.subr.bf16.mxu0 0
        %6552 = vmatpush2.bf16.xpose.msra.mxu0 0
        %6553 = vmatprep.subr.bf16.mxu0 0
        %6554 = vmatpush2.bf16.xpose.msra.mxu0 0
        %6555 = vmatprep.subr.bf16.mxu0 0
        %6556 = vmatpush2.bf16.xpose.msra.mxu0 0
        %6557 = vmatprep.subr.bf16.mxu0 0
        %6558 = vmatpush2.bf16.xpose.msra.mxu0 0
        %6559 = vmatprep.mubr.bf16.mxu0 0
        %6560 = vmatmul.mubr.bf16.gmra.mxu0 %v6522
        %v6561 = vpop.f32.mrf.mxu0
        %v6562 = vadd.f32 0.0, %v6561
        %v6563 = vpop.f32.mrf.mxu0
        %v6564 = vpop.f32.mrf.mxu0
        %v6565 = vpop.f32.mrf.mxu0
        %6566 = vdwg.mxu0
        %v6567 = vsel %vm1875, %v6562, -inf
        %6568 = vmax.xlane.f32.xlu0 %v6567
        %v6569 = vpop.xlane.xlu0 %6568
        %v6570 = vsub.f32 %v6562, %v6569
        %v6571 = vmul.f32 %v6570, 1.442695
        %v6572 = vpow.pop %v6571
        %v6573 = vsel %vm1875, %v6572, 0.0
        %6574 = vadd.xlane.f32.xlu0 %v6573
        %v6575 = vpop.xlane.xlu0 %6574
        %v6576 = vrcp.pop %v6575
        %v6577 = vmul.f32 %v6572, %v6576
        %v6578 = vpack.c.bf16 %v6577, %v6577
        %v6580 = vsel %vm1875, %v6578, 0
        %v6583 = vsel %vm1891, %v6520, 0
        %6585 = vmatprep.subr.bf16.mxu0 0
        %6586 = vmatpush1.bf16.msra.mxu0 0
        %6587 = vmatprep.subr.bf16.mxu0 0
        %6588 = vmatpush1.bf16.msra.mxu0 0
        %6589 = vmatprep.subr.bf16.mxu0 0
        %6590 = vmatpush1.bf16.msra.mxu0 0
        %6591 = vmatprep.subr.bf16.mxu0 0
        %6592 = vmatpush1.bf16.msra.mxu0 0
        %6593 = vmatprep.subr.bf16.mxu0 0
        %6594 = vmatpush1.bf16.msra.mxu0 0
        %6595 = vmatprep.subr.bf16.mxu0 0
        %6596 = vmatpush1.bf16.msra.mxu0 0
        %6597 = vmatprep.subr.bf16.mxu0 0
        %6598 = vmatpush1.bf16.msra.mxu0 0
        %6599 = vmatprep.subr.bf16.mxu0 0
        %6600 = vmatpush1.bf16.msra.mxu0 %v6583
        %6601 = vmatprep.subr.bf16.mxu0 0
        %6602 = vmatpush2.bf16.msra.mxu0 0
        %6603 = vmatprep.subr.bf16.mxu0 0
        %6604 = vmatpush2.bf16.msra.mxu0 0
        %6605 = vmatprep.subr.bf16.mxu0 0
        %6606 = vmatpush2.bf16.msra.mxu0 0
        %6607 = vmatprep.subr.bf16.mxu0 0
        %6608 = vmatpush2.bf16.msra.mxu0 0
        %6609 = vmatprep.subr.bf16.mxu0 0
        %6610 = vmatpush2.bf16.msra.mxu0 0
        %6611 = vmatprep.subr.bf16.mxu0 0
        %6612 = vmatpush2.bf16.msra.mxu0 0
        %6613 = vmatprep.subr.bf16.mxu0 0
        %6614 = vmatpush2.bf16.msra.mxu0 0
        %6615 = vmatprep.subr.bf16.mxu0 0
        %6616 = vmatpush2.bf16.msra.mxu0 0
        %6617 = vmatprep.mubr.bf16.mxu0 0
        %6618 = vmatmul.mubr.bf16.gmra.mxu0 %v6580
        %v6619 = vpop.f32.mrf.mxu0
        %v6620 = vadd.f32 0.0, %v6619
        %v6621 = vpop.f32.mrf.mxu0
        %v6622 = vpop.f32.mrf.mxu0
        %v6623 = vpop.f32.mrf.mxu0
        %6624 = vdwg.mxu0
        %v6625 = vpack.c.bf16 %v6620, %v6620
        %6627 = vrot.lane.b32.xlu0 %v6518, 96
        %v6628 = vpop.permute.xlu0 %6627
        %6630 = vrot.lane.b32.xlu0 %v6519, 96
        %v6631 = vpop.permute.xlu0 %6630
        %v6633 = vsel %vm1828, %v6628, 0
        %v6636 = vsel %vm1828, %v6631, 0
        %6638 = vmatprep.subr.bf16.mxu0 0
        %6639 = vmatpush1.bf16.xpose.msra.mxu0 0
        %6640 = vmatprep.subr.bf16.mxu0 0
        %6641 = vmatpush1.bf16.xpose.msra.mxu0 0
        %6642 = vmatprep.subr.bf16.mxu0 0
        %6643 = vmatpush1.bf16.xpose.msra.mxu0 0
        %6644 = vmatprep.subr.bf16.mxu0 0
        %6645 = vmatpush1.bf16.xpose.msra.mxu0 0
        %6646 = vmatprep.subr.bf16.mxu0 0
        %6647 = vmatpush1.bf16.xpose.msra.mxu0 0
        %6648 = vmatprep.subr.bf16.mxu0 0
        %6649 = vmatpush1.bf16.xpose.msra.mxu0 0
        %6650 = vmatprep.subr.bf16.mxu0 0
        %6651 = vmatpush1.bf16.xpose.msra.mxu0 0
        %6652 = vmatprep.subr.bf16.mxu0 0
        %6653 = vmatpush1.bf16.xpose.msra.mxu0 %v6636
        %6654 = vmatprep.subr.bf16.mxu0 0
        %6655 = vmatpush2.bf16.xpose.msra.mxu0 0
        %6656 = vmatprep.subr.bf16.mxu0 0
        %6657 = vmatpush2.bf16.xpose.msra.mxu0 0
        %6658 = vmatprep.subr.bf16.mxu0 0
        %6659 = vmatpush2.bf16.xpose.msra.mxu0 0
        %6660 = vmatprep.subr.bf16.mxu0 0
        %6661 = vmatpush2.bf16.xpose.msra.mxu0 0
        %6662 = vmatprep.subr.bf16.mxu0 0
        %6663 = vmatpush2.bf16.xpose.msra.mxu0 0
        %6664 = vmatprep.subr.bf16.mxu0 0
        %6665 = vmatpush2.bf16.xpose.msra.mxu0 0
        %6666 = vmatprep.subr.bf16.mxu0 0
        %6667 = vmatpush2.bf16.xpose.msra.mxu0 0
        %6668 = vmatprep.subr.bf16.mxu0 0
        %6669 = vmatpush2.bf16.xpose.msra.mxu0 0
        %6670 = vmatprep.mubr.bf16.mxu0 0
        %6671 = vmatmul.mubr.bf16.gmra.mxu0 %v6633
        %v6672 = vpop.f32.mrf.mxu0
        %v6673 = vadd.f32 0.0, %v6672
        %v6674 = vpop.f32.mrf.mxu0
        %v6675 = vpop.f32.mrf.mxu0
        %v6676 = vpop.f32.mrf.mxu0
        %6677 = vdwg.mxu0
        %v6678 = vsel %vm1875, %v6673, -inf
        %6679 = vmax.xlane.f32.xlu0 %v6678
        %v6680 = vpop.xlane.xlu0 %6679
        %v6681 = vsub.f32 %v6673, %v6680
        %v6682 = vmul.f32 %v6681, 1.442695
        %v6683 = vpow.pop %v6682
        %v6684 = vsel %vm1875, %v6683, 0.0
        %6685 = vadd.xlane.f32.xlu0 %v6684
        %v6686 = vpop.xlane.xlu0 %6685
        %v6687 = vrcp.pop %v6686
        %v6688 = vmul.f32 %v6683, %v6687
        %v6689 = vpack.c.bf16 %v6688, %v6688
        %6691 = vrot.lane.b32.xlu0 %v6520, 96
        %v6692 = vpop.permute.xlu0 %6691
        %v6694 = vsel %vm1875, %v6689, 0
        %v6697 = vsel %vm1891, %v6692, 0
        %6699 = vmatprep.subr.bf16.mxu0 0
        %6700 = vmatpush1.bf16.msra.mxu0 0
        %6701 = vmatprep.subr.bf16.mxu0 0
        %6702 = vmatpush1.bf16.msra.mxu0 0
        %6703 = vmatprep.subr.bf16.mxu0 0
        %6704 = vmatpush1.bf16.msra.mxu0 0
        %6705 = vmatprep.subr.bf16.mxu0 0
        %6706 = vmatpush1.bf16.msra.mxu0 0
        %6707 = vmatprep.subr.bf16.mxu0 0
        %6708 = vmatpush1.bf16.msra.mxu0 0
        %6709 = vmatprep.subr.bf16.mxu0 0
        %6710 = vmatpush1.bf16.msra.mxu0 0
        %6711 = vmatprep.subr.bf16.mxu0 0
        %6712 = vmatpush1.bf16.msra.mxu0 0
        %6713 = vmatprep.subr.bf16.mxu0 0
        %6714 = vmatpush1.bf16.msra.mxu0 %v6697
        %6715 = vmatprep.subr.bf16.mxu0 0
        %6716 = vmatpush2.bf16.msra.mxu0 0
        %6717 = vmatprep.subr.bf16.mxu0 0
        %6718 = vmatpush2.bf16.msra.mxu0 0
        %6719 = vmatprep.subr.bf16.mxu0 0
        %6720 = vmatpush2.bf16.msra.mxu0 0
        %6721 = vmatprep.subr.bf16.mxu0 0
        %6722 = vmatpush2.bf16.msra.mxu0 0
        %6723 = vmatprep.subr.bf16.mxu0 0
        %6724 = vmatpush2.bf16.msra.mxu0 0
        %6725 = vmatprep.subr.bf16.mxu0 0
        %6726 = vmatpush2.bf16.msra.mxu0 0
        %6727 = vmatprep.subr.bf16.mxu0 0
        %6728 = vmatpush2.bf16.msra.mxu0 0
        %6729 = vmatprep.subr.bf16.mxu0 0
        %6730 = vmatpush2.bf16.msra.mxu0 0
        %6731 = vmatprep.mubr.bf16.mxu0 0
        %6732 = vmatmul.mubr.bf16.gmra.mxu0 %v6694
        %v6733 = vpop.f32.mrf.mxu0
        %v6734 = vadd.f32 0.0, %v6733
        %v6735 = vpop.f32.mrf.mxu0
        %v6736 = vpop.f32.mrf.mxu0
        %v6737 = vpop.f32.mrf.mxu0
        %6738 = vdwg.mxu0
        %v6739 = vpack.c.bf16 %v6734, %v6734
        %v6744 = vunpack.c.l.b16 %v6277
        %v6745 = vunpack.c.l.b16 %v6278
        %v6746 = vunpack.c.l.b16 %v6279
        %v6747 = vunpack.c.l.b16 %v6280
        %v6748 = vpack.c.b16 %v6745, %v6744
        %v6749 = vpack.c.b16 %v6747, %v6746
        %v6753 = vsel %vm1828, %v6739, 0
        %6755 = vmatprep.subr.bf16.mxu0 0
        %6756 = vmatpush1.bf16.msra.mxu0 0
        %6757 = vmatprep.subr.bf16.mxu0 0
        %6758 = vmatpush1.bf16.msra.mxu0 0
        %6759 = vmatprep.subr.bf16.mxu0 0
        %6760 = vmatpush1.bf16.msra.mxu0 0
        %6761 = vmatprep.subr.bf16.mxu0 0
        %6762 = vmatpush1.bf16.msra.mxu0 0
        %6763 = vmatprep.subr.bf16.mxu0 0
        %6764 = vmatpush1.bf16.msra.mxu0 0
        %6765 = vmatprep.subr.bf16.mxu0 0
        %6766 = vmatpush1.bf16.msra.mxu0 0
        %6767 = vmatprep.subr.bf16.mxu0 0
        %6768 = vmatpush1.bf16.msra.mxu0 %v6749
        %6769 = vmatprep.subr.bf16.mxu0 0
        %6770 = vmatpush1.bf16.msra.mxu0 %v6748
        %6771 = vmatprep.subr.bf16.mxu0 0
        %6772 = vmatpush2.bf16.msra.mxu0 0
        %6773 = vmatprep.subr.bf16.mxu0 0
        %6774 = vmatpush2.bf16.msra.mxu0 0
        %6775 = vmatprep.subr.bf16.mxu0 0
        %6776 = vmatpush2.bf16.msra.mxu0 0
        %6777 = vmatprep.subr.bf16.mxu0 0
        %6778 = vmatpush2.bf16.msra.mxu0 0
        %6779 = vmatprep.subr.bf16.mxu0 0
        %6780 = vmatpush2.bf16.msra.mxu0 0
        %6781 = vmatprep.subr.bf16.mxu0 0
        %6782 = vmatpush2.bf16.msra.mxu0 0
        %6783 = vmatprep.subr.bf16.mxu0 0
        %6784 = vmatpush2.bf16.msra.mxu0 0
        %6785 = vmatprep.subr.bf16.mxu0 0
        %6786 = vmatpush2.bf16.msra.mxu0 0
        %6787 = vmatprep.mubr.bf16.mxu0 0
        %6788 = vmatmul.mubr.bf16.gmra.mxu0 %v6753
        %v6789 = vpop.f32.mrf.mxu0
        %v6790 = vadd.f32 0.0, %v6789
        %v6791 = vpop.f32.mrf.mxu0
        %v6792 = vpop.f32.mrf.mxu0
        %v6793 = vpop.f32.mrf.mxu0
        %6794 = vdwg.mxu0
        %v6799 = vunpack.c.l.b16 %v6273
        %v6800 = vunpack.c.l.b16 %v6274
        %v6801 = vunpack.c.l.b16 %v6275
        %v6802 = vunpack.c.l.b16 %v6276
        %v6803 = vpack.c.b16 %v6800, %v6799
        %v6804 = vpack.c.b16 %v6802, %v6801
        %v6808 = vsel %vm1828, %v6625, 0
        %6810 = vmatprep.subr.bf16.mxu0 0
        %6811 = vmatpush1.bf16.msra.mxu0 0
        %6812 = vmatprep.subr.bf16.mxu0 0
        %6813 = vmatpush1.bf16.msra.mxu0 0
        %6814 = vmatprep.subr.bf16.mxu0 0
        %6815 = vmatpush1.bf16.msra.mxu0 0
        %6816 = vmatprep.subr.bf16.mxu0 0
        %6817 = vmatpush1.bf16.msra.mxu0 0
        %6818 = vmatprep.subr.bf16.mxu0 0
        %6819 = vmatpush1.bf16.msra.mxu0 0
        %6820 = vmatprep.subr.bf16.mxu0 0
        %6821 = vmatpush1.bf16.msra.mxu0 0
        %6822 = vmatprep.subr.bf16.mxu0 0
        %6823 = vmatpush1.bf16.msra.mxu0 %v6804
        %6824 = vmatprep.subr.bf16.mxu0 0
        %6825 = vmatpush1.bf16.msra.mxu0 %v6803
        %6826 = vmatprep.subr.bf16.mxu0 0
        %6827 = vmatpush2.bf16.msra.mxu0 0
        %6828 = vmatprep.subr.bf16.mxu0 0
        %6829 = vmatpush2.bf16.msra.mxu0 0
        %6830 = vmatprep.subr.bf16.mxu0 0
        %6831 = vmatpush2.bf16.msra.mxu0 0
        %6832 = vmatprep.subr.bf16.mxu0 0
        %6833 = vmatpush2.bf16.msra.mxu0 0
        %6834 = vmatprep.subr.bf16.mxu0 0
        %6835 = vmatpush2.bf16.msra.mxu0 0
        %6836 = vmatprep.subr.bf16.mxu0 0
        %6837 = vmatpush2.bf16.msra.mxu0 0
        %6838 = vmatprep.subr.bf16.mxu0 0
        %6839 = vmatpush2.bf16.msra.mxu0 0
        %6840 = vmatprep.subr.bf16.mxu0 0
        %6841 = vmatpush2.bf16.msra.mxu0 0
        %6842 = vmatprep.mubr.bf16.mxu0 0
        %6843 = vmatmul.mubr.bf16.gmra.mxu0 %v6808
        %v6844 = vpop.f32.mrf.mxu0
        %v6845 = vadd.f32 %v6790, %v6844
        %v6846 = vpop.f32.mrf.mxu0
        %v6847 = vpop.f32.mrf.mxu0
        %v6848 = vpop.f32.mrf.mxu0
        %6849 = vdwg.mxu0
        %6850 = vrot.lane.b32.xlu0 %v6518, 64
        %v6851 = vpop.permute.xlu0 %6850
        %6852 = vrot.lane.b32.xlu0 %v6519, 64
        %v6853 = vpop.permute.xlu0 %6852
        %v6855 = vsel %vm1828, %v6851, 0
        %v6858 = vsel %vm1828, %v6853, 0
        %6860 = vmatprep.subr.bf16.mxu0 0
        %6861 = vmatpush1.bf16.xpose.msra.mxu0 0
        %6862 = vmatprep.subr.bf16.mxu0 0
        %6863 = vmatpush1.bf16.xpose.msra.mxu0 0
        %6864 = vmatprep.subr.bf16.mxu0 0
        %6865 = vmatpush1.bf16.xpose.msra.mxu0 0
        %6866 = vmatprep.subr.bf16.mxu0 0
        %6867 = vmatpush1.bf16.xpose.msra.mxu0 0
        %6868 = vmatprep.subr.bf16.mxu0 0
        %6869 = vmatpush1.bf16.xpose.msra.mxu0 0
        %6870 = vmatprep.subr.bf16.mxu0 0
        %6871 = vmatpush1.bf16.xpose.msra.mxu0 0
        %6872 = vmatprep.subr.bf16.mxu0 0
        %6873 = vmatpush1.bf16.xpose.msra.mxu0 0
        %6874 = vmatprep.subr.bf16.mxu0 0
        %6875 = vmatpush1.bf16.xpose.msra.mxu0 %v6858
        %6876 = vmatprep.subr.bf16.mxu0 0
        %6877 = vmatpush2.bf16.xpose.msra.mxu0 0
        %6878 = vmatprep.subr.bf16.mxu0 0
        %6879 = vmatpush2.bf16.xpose.msra.mxu0 0
        %6880 = vmatprep.subr.bf16.mxu0 0
        %6881 = vmatpush2.bf16.xpose.msra.mxu0 0
        %6882 = vmatprep.subr.bf16.mxu0 0
        %6883 = vmatpush2.bf16.xpose.msra.mxu0 0
        %6884 = vmatprep.subr.bf16.mxu0 0
        %6885 = vmatpush2.bf16.xpose.msra.mxu0 0
        %6886 = vmatprep.subr.bf16.mxu0 0
        %6887 = vmatpush2.bf16.xpose.msra.mxu0 0
        %6888 = vmatprep.subr.bf16.mxu0 0
        %6889 = vmatpush2.bf16.xpose.msra.mxu0 0
        %6890 = vmatprep.subr.bf16.mxu0 0
        %6891 = vmatpush2.bf16.xpose.msra.mxu0 0
        %6892 = vmatprep.mubr.bf16.mxu0 0
        %6893 = vmatmul.mubr.bf16.gmra.mxu0 %v6855
        %v6894 = vpop.f32.mrf.mxu0
        %v6895 = vadd.f32 0.0, %v6894
        %v6896 = vpop.f32.mrf.mxu0
        %v6897 = vpop.f32.mrf.mxu0
        %v6898 = vpop.f32.mrf.mxu0
        %6899 = vdwg.mxu0
        %v6900 = vsel %vm1875, %v6895, -inf
        %6901 = vmax.xlane.f32.xlu0 %v6900
        %v6902 = vpop.xlane.xlu0 %6901
        %v6903 = vsub.f32 %v6895, %v6902
        %v6904 = vmul.f32 %v6903, 1.442695
        %v6905 = vpow.pop %v6904
        %v6906 = vsel %vm1875, %v6905, 0.0
        %6907 = vadd.xlane.f32.xlu0 %v6906
        %v6908 = vpop.xlane.xlu0 %6907
        %v6909 = vrcp.pop %v6908
        %v6910 = vmul.f32 %v6905, %v6909
        %v6911 = vpack.c.bf16 %v6910, %v6910
        %6912 = vrot.lane.b32.xlu0 %v6520, 64
        %v6913 = vpop.permute.xlu0 %6912
        %v6915 = vsel %vm1875, %v6911, 0
        %v6918 = vsel %vm1891, %v6913, 0
        %6920 = vmatprep.subr.bf16.mxu0 0
        %6921 = vmatpush1.bf16.msra.mxu0 0
        %6922 = vmatprep.subr.bf16.mxu0 0
        %6923 = vmatpush1.bf16.msra.mxu0 0
        %6924 = vmatprep.subr.bf16.mxu0 0
        %6925 = vmatpush1.bf16.msra.mxu0 0
        %6926 = vmatprep.subr.bf16.mxu0 0
        %6927 = vmatpush1.bf16.msra.mxu0 0
        %6928 = vmatprep.subr.bf16.mxu0 0
        %6929 = vmatpush1.bf16.msra.mxu0 0
        %6930 = vmatprep.subr.bf16.mxu0 0
        %6931 = vmatpush1.bf16.msra.mxu0 0
        %6932 = vmatprep.subr.bf16.mxu0 0
        %6933 = vmatpush1.bf16.msra.mxu0 0
        %6934 = vmatprep.subr.bf16.mxu0 0
        %6935 = vmatpush1.bf16.msra.mxu0 %v6918
        %6936 = vmatprep.subr.bf16.mxu0 0
        %6937 = vmatpush2.bf16.msra.mxu0 0
        %6938 = vmatprep.subr.bf16.mxu0 0
        %6939 = vmatpush2.bf16.msra.mxu0 0
        %6940 = vmatprep.subr.bf16.mxu0 0
        %6941 = vmatpush2.bf16.msra.mxu0 0
        %6942 = vmatprep.subr.bf16.mxu0 0
        %6943 = vmatpush2.bf16.msra.mxu0 0
        %6944 = vmatprep.subr.bf16.mxu0 0
        %6945 = vmatpush2.bf16.msra.mxu0 0
        %6946 = vmatprep.subr.bf16.mxu0 0
        %6947 = vmatpush2.bf16.msra.mxu0 0
        %6948 = vmatprep.subr.bf16.mxu0 0
        %6949 = vmatpush2.bf16.msra.mxu0 0
        %6950 = vmatprep.subr.bf16.mxu0 0
        %6951 = vmatpush2.bf16.msra.mxu0 0
        %6952 = vmatprep.mubr.bf16.mxu0 0
        %6953 = vmatmul.mubr.bf16.gmra.mxu0 %v6915
        %v6954 = vpop.f32.mrf.mxu0
        %v6955 = vadd.f32 0.0, %v6954
        %v6956 = vpop.f32.mrf.mxu0
        %v6957 = vpop.f32.mrf.mxu0
        %v6958 = vpop.f32.mrf.mxu0
        %6959 = vdwg.mxu0
        %v6960 = vpack.c.bf16 %v6955, %v6955
        %v6965 = vunpack.c.l.b16 %v6281
        %v6966 = vunpack.c.l.b16 %v6282
        %v6967 = vunpack.c.l.b16 %v6283
        %v6968 = vunpack.c.l.b16 %v6284
        %v6969 = vpack.c.b16 %v6966, %v6965
        %v6970 = vpack.c.b16 %v6968, %v6967
        %v6974 = vsel %vm1828, %v6960, 0
        %6976 = vmatprep.subr.bf16.mxu0 0
        %6977 = vmatpush1.bf16.msra.mxu0 0
        %6978 = vmatprep.subr.bf16.mxu0 0
        %6979 = vmatpush1.bf16.msra.mxu0 0
        %6980 = vmatprep.subr.bf16.mxu0 0
        %6981 = vmatpush1.bf16.msra.mxu0 0
        %6982 = vmatprep.subr.bf16.mxu0 0
        %6983 = vmatpush1.bf16.msra.mxu0 0
        %6984 = vmatprep.subr.bf16.mxu0 0
        %6985 = vmatpush1.bf16.msra.mxu0 0
        %6986 = vmatprep.subr.bf16.mxu0 0
        %6987 = vmatpush1.bf16.msra.mxu0 0
        %6988 = vmatprep.subr.bf16.mxu0 0
        %6989 = vmatpush1.bf16.msra.mxu0 %v6970
        %6990 = vmatprep.subr.bf16.mxu0 0
        %6991 = vmatpush1.bf16.msra.mxu0 %v6969
        %6992 = vmatprep.subr.bf16.mxu0 0
        %6993 = vmatpush2.bf16.msra.mxu0 0
        %6994 = vmatprep.subr.bf16.mxu0 0
        %6995 = vmatpush2.bf16.msra.mxu0 0
        %6996 = vmatprep.subr.bf16.mxu0 0
        %6997 = vmatpush2.bf16.msra.mxu0 0
        %6998 = vmatprep.subr.bf16.mxu0 0
        %6999 = vmatpush2.bf16.msra.mxu0 0
        %7000 = vmatprep.subr.bf16.mxu0 0
        %7001 = vmatpush2.bf16.msra.mxu0 0
        %7002 = vmatprep.subr.bf16.mxu0 0
        %7003 = vmatpush2.bf16.msra.mxu0 0
        %7004 = vmatprep.subr.bf16.mxu0 0
        %7005 = vmatpush2.bf16.msra.mxu0 0
        %7006 = vmatprep.subr.bf16.mxu0 0
        %7007 = vmatpush2.bf16.msra.mxu0 0
        %7008 = vmatprep.mubr.bf16.mxu0 0
        %7009 = vmatmul.mubr.bf16.gmra.mxu0 %v6974
        %v7010 = vpop.f32.mrf.mxu0
        %v7011 = vadd.f32 0.0, %v7010
        %v7012 = vpop.f32.mrf.mxu0
        %v7013 = vpop.f32.mrf.mxu0
        %v7014 = vpop.f32.mrf.mxu0
        %7015 = vdwg.mxu0
        %v7016 = vadd.f32 %v6845, %v7011
        %7017 = vrot.lane.b32.xlu0 %v6518, 32
        %v7018 = vpop.permute.xlu0 %7017
        %7019 = vrot.lane.b32.xlu0 %v6519, 32
        %v7020 = vpop.permute.xlu0 %7019
        %v7022 = vsel %vm1828, %v7018, 0
        %v7025 = vsel %vm1828, %v7020, 0
        %7027 = vmatprep.subr.bf16.mxu0 0
        %7028 = vmatpush1.bf16.xpose.msra.mxu0 0
        %7029 = vmatprep.subr.bf16.mxu0 0
        %7030 = vmatpush1.bf16.xpose.msra.mxu0 0
        %7031 = vmatprep.subr.bf16.mxu0 0
        %7032 = vmatpush1.bf16.xpose.msra.mxu0 0
        %7033 = vmatprep.subr.bf16.mxu0 0
        %7034 = vmatpush1.bf16.xpose.msra.mxu0 0
        %7035 = vmatprep.subr.bf16.mxu0 0
        %7036 = vmatpush1.bf16.xpose.msra.mxu0 0
        %7037 = vmatprep.subr.bf16.mxu0 0
        %7038 = vmatpush1.bf16.xpose.msra.mxu0 0
        %7039 = vmatprep.subr.bf16.mxu0 0
        %7040 = vmatpush1.bf16.xpose.msra.mxu0 0
        %7041 = vmatprep.subr.bf16.mxu0 0
        %7042 = vmatpush1.bf16.xpose.msra.mxu0 %v7025
        %7043 = vmatprep.subr.bf16.mxu0 0
        %7044 = vmatpush2.bf16.xpose.msra.mxu0 0
        %7045 = vmatprep.subr.bf16.mxu0 0
        %7046 = vmatpush2.bf16.xpose.msra.mxu0 0
        %7047 = vmatprep.subr.bf16.mxu0 0
        %7048 = vmatpush2.bf16.xpose.msra.mxu0 0
        %7049 = vmatprep.subr.bf16.mxu0 0
        %7050 = vmatpush2.bf16.xpose.msra.mxu0 0
        %7051 = vmatprep.subr.bf16.mxu0 0
        %7052 = vmatpush2.bf16.xpose.msra.mxu0 0
        %7053 = vmatprep.subr.bf16.mxu0 0
        %7054 = vmatpush2.bf16.xpose.msra.mxu0 0
        %7055 = vmatprep.subr.bf16.mxu0 0
        %7056 = vmatpush2.bf16.xpose.msra.mxu0 0
        %7057 = vmatprep.subr.bf16.mxu0 0
        %7058 = vmatpush2.bf16.xpose.msra.mxu0 0
        %7059 = vmatprep.mubr.bf16.mxu0 0
        %7060 = vmatmul.mubr.bf16.gmra.mxu0 %v7022
        %v7061 = vpop.f32.mrf.mxu0
        %v7062 = vadd.f32 0.0, %v7061
        %v7063 = vpop.f32.mrf.mxu0
        %v7064 = vpop.f32.mrf.mxu0
        %v7065 = vpop.f32.mrf.mxu0
        %7066 = vdwg.mxu0
        %v7067 = vsel %vm1875, %v7062, -inf
        %7068 = vmax.xlane.f32.xlu0 %v7067
        %v7069 = vpop.xlane.xlu0 %7068
        %v7070 = vsub.f32 %v7062, %v7069
        %v7071 = vmul.f32 %v7070, 1.442695
        %v7072 = vpow.pop %v7071
        %v7073 = vsel %vm1875, %v7072, 0.0
        %7074 = vadd.xlane.f32.xlu0 %v7073
        %v7075 = vpop.xlane.xlu0 %7074
        %v7076 = vrcp.pop %v7075
        %v7077 = vmul.f32 %v7072, %v7076
        %v7078 = vpack.c.bf16 %v7077, %v7077
        %7079 = vrot.lane.b32.xlu0 %v6520, 32
        %v7080 = vpop.permute.xlu0 %7079
        %v7082 = vsel %vm1875, %v7078, 0
        %v7085 = vsel %vm1891, %v7080, 0
        %7087 = vmatprep.subr.bf16.mxu0 0
        %7088 = vmatpush1.bf16.msra.mxu0 0
        %7089 = vmatprep.subr.bf16.mxu0 0
        %7090 = vmatpush1.bf16.msra.mxu0 0
        %7091 = vmatprep.subr.bf16.mxu0 0
        %7092 = vmatpush1.bf16.msra.mxu0 0
        %7093 = vmatprep.subr.bf16.mxu0 0
        %7094 = vmatpush1.bf16.msra.mxu0 0
        %7095 = vmatprep.subr.bf16.mxu0 0
        %7096 = vmatpush1.bf16.msra.mxu0 0
        %7097 = vmatprep.subr.bf16.mxu0 0
        %7098 = vmatpush1.bf16.msra.mxu0 0
        %7099 = vmatprep.subr.bf16.mxu0 0
        %7100 = vmatpush1.bf16.msra.mxu0 0
        %7101 = vmatprep.subr.bf16.mxu0 0
        %7102 = vmatpush1.bf16.msra.mxu0 %v7085
        %7103 = vmatprep.subr.bf16.mxu0 0
        %7104 = vmatpush2.bf16.msra.mxu0 0
        %7105 = vmatprep.subr.bf16.mxu0 0
        %7106 = vmatpush2.bf16.msra.mxu0 0
        %7107 = vmatprep.subr.bf16.mxu0 0
        %7108 = vmatpush2.bf16.msra.mxu0 0
        %7109 = vmatprep.subr.bf16.mxu0 0
        %7110 = vmatpush2.bf16.msra.mxu0 0
        %7111 = vmatprep.subr.bf16.mxu0 0
        %7112 = vmatpush2.bf16.msra.mxu0 0
        %7113 = vmatprep.subr.bf16.mxu0 0
        %7114 = vmatpush2.bf16.msra.mxu0 0
        %7115 = vmatprep.subr.bf16.mxu0 0
        %7116 = vmatpush2.bf16.msra.mxu0 0
        %7117 = vmatprep.subr.bf16.mxu0 0
        %7118 = vmatpush2.bf16.msra.mxu0 0
        %7119 = vmatprep.mubr.bf16.mxu0 0
        %7120 = vmatmul.mubr.bf16.gmra.mxu0 %v7082
        %v7121 = vpop.f32.mrf.mxu0
        %v7122 = vadd.f32 0.0, %v7121
        %v7123 = vpop.f32.mrf.mxu0
        %v7124 = vpop.f32.mrf.mxu0
        %v7125 = vpop.f32.mrf.mxu0
        %7126 = vdwg.mxu0
        %v7127 = vpack.c.bf16 %v7122, %v7122
        %v7132 = vunpack.c.l.b16 %v6285
        %v7133 = vunpack.c.l.b16 %v6286
        %v7134 = vunpack.c.l.b16 %v6287
        %v7135 = vunpack.c.l.b16 %v6288
        %v7136 = vpack.c.b16 %v7133, %v7132
        %v7137 = vpack.c.b16 %v7135, %v7134
        %v7141 = vsel %vm1828, %v7127, 0
        %7143 = vmatprep.subr.bf16.mxu0 0
        %7144 = vmatpush1.bf16.msra.mxu0 0
        %7145 = vmatprep.subr.bf16.mxu0 0
        %7146 = vmatpush1.bf16.msra.mxu0 0
        %7147 = vmatprep.subr.bf16.mxu0 0
        %7148 = vmatpush1.bf16.msra.mxu0 0
        %7149 = vmatprep.subr.bf16.mxu0 0
        %7150 = vmatpush1.bf16.msra.mxu0 0
        %7151 = vmatprep.subr.bf16.mxu0 0
        %7152 = vmatpush1.bf16.msra.mxu0 0
        %7153 = vmatprep.subr.bf16.mxu0 0
        %7154 = vmatpush1.bf16.msra.mxu0 0
        %7155 = vmatprep.subr.bf16.mxu0 0
        %7156 = vmatpush1.bf16.msra.mxu0 %v7137
        %7157 = vmatprep.subr.bf16.mxu0 0
        %7158 = vmatpush1.bf16.msra.mxu0 %v7136
        %7159 = vmatprep.subr.bf16.mxu0 0
        %7160 = vmatpush2.bf16.msra.mxu0 0
        %7161 = vmatprep.subr.bf16.mxu0 0
        %7162 = vmatpush2.bf16.msra.mxu0 0
        %7163 = vmatprep.subr.bf16.mxu0 0
        %7164 = vmatpush2.bf16.msra.mxu0 0
        %7165 = vmatprep.subr.bf16.mxu0 0
        %7166 = vmatpush2.bf16.msra.mxu0 0
        %7167 = vmatprep.subr.bf16.mxu0 0
        %7168 = vmatpush2.bf16.msra.mxu0 0
        %7169 = vmatprep.subr.bf16.mxu0 0
        %7170 = vmatpush2.bf16.msra.mxu0 0
        %7171 = vmatprep.subr.bf16.mxu0 0
        %7172 = vmatpush2.bf16.msra.mxu0 0
        %7173 = vmatprep.subr.bf16.mxu0 0
        %7174 = vmatpush2.bf16.msra.mxu0 0
        %7175 = vmatprep.mubr.bf16.mxu0 0
        %7176 = vmatmul.mubr.bf16.gmra.mxu0 %v7141
        %v7177 = vpop.f32.mrf.mxu0
        %v7178 = vadd.f32 0.0, %v7177
        %v7179 = vpop.f32.mrf.mxu0
        %v7180 = vpop.f32.mrf.mxu0
        %v7181 = vpop.f32.mrf.mxu0
        %7182 = vdwg.mxu0
        %v7183 = vadd.f32 %v7016, %v7178
        %v7185 = vlaneseq
        %v7186 = vshrl.u32 %v7185, 7
        %v7187 = vsub.s32 0, %v7186
        %v7188 = vrot.slane %v6290, %v7187
        %v7190 = vadd.f32 %v7183, %v7188
        %v7191 = vadd.f32 %v6236, %v7190
        %s7192 = scalar_lea.vmem [#allocation31], 1
        %v7193 = vld [vmem:[%s7192] sm:$0x1]
        %s7194 = scalar_lea.vmem [#allocation32], 1
        %v7195 = vld [vmem:[%s7194] sm:$0x1]
        %7196 = vadd.xlane.f32.xlu0 %v7191
        %v7197 = vpop.xlane.xlu0 %7196
        %v7198 = vmul.f32 %v7197, %v2506
        %v7199 = vsub.f32 %v7191, %v7198
        %v7200 = vmul.f32 %v7199, %v7199
        %7201 = vadd.xlane.f32.xlu0 %v7200
        %v7202 = vpop.xlane.xlu0 %7201
        %v7203 = vmul.f32 %v7202, %v2506
        %v7204 = vadd.f32 %v7203, 1e-05
        %v7205 = vrsqrt.pop %v7204
        %v7206 = vmul.f32 %v7199, %v7205
        %v7208 = vlaneseq
        %v7209 = vshrl.u32 %v7208, 7
        %v7210 = vsub.s32 0, %v7209
        %v7211 = vrot.slane %v7193, %v7210
        %v7213 = vmul.f32 %v7206, %v7211
        %v7215 = vlaneseq
        %v7216 = vshrl.u32 %v7215, 7
        %v7217 = vsub.s32 0, %v7216
        %v7218 = vrot.slane %v7195, %v7217
        %v7220 = vadd.f32 %v7213, %v7218
        %s7221 = scalar_lea.vmem [#allocation23], 64
        %v7222 = vld [vmem:[%s7221] sm:$0xf]
        %v7223 = vld [vmem:[%s7221 + $0x4] sm:$0xf]
        %v7224 = vld [vmem:[%s7221 + $0x8] sm:$0xf]
        %v7225 = vld [vmem:[%s7221 + $0xc] sm:$0xf]
        %v7226 = vld [vmem:[%s7221 + $0x10] sm:$0xf]
        %v7227 = vld [vmem:[%s7221 + $0x14] sm:$0xf]
        %v7228 = vld [vmem:[%s7221 + $0x18] sm:$0xf]
        %v7229 = vld [vmem:[%s7221 + $0x1c] sm:$0xf]
        %v7230 = vld [vmem:[%s7221 + $0x20] sm:$0xf]
        %v7231 = vld [vmem:[%s7221 + $0x24] sm:$0xf]
        %v7232 = vld [vmem:[%s7221 + $0x28] sm:$0xf]
        %v7233 = vld [vmem:[%s7221 + $0x2c] sm:$0xf]
        %v7234 = vld [vmem:[%s7221 + $0x30] sm:$0xf]
        %v7235 = vld [vmem:[%s7221 + $0x34] sm:$0xf]
        %v7236 = vld [vmem:[%s7221 + $0x38] sm:$0xf]
        %v7237 = vld [vmem:[%s7221 + $0x3c] sm:$0xf]
        %s7238 = scalar_lea.vmem [#allocation25], 1
        %v7239 = vld [vmem:[%s7238] sm:$0x1]
        %s7240 = scalar_lea.vmem [#allocation26], 128
        %v7241 = vld [vmem:[%s7240] sm:$0xff]
        %v7242 = vld [vmem:[%s7240 + $0x8] sm:$0xff]
        %v7243 = vld [vmem:[%s7240 + $0x10] sm:$0xff]
        %v7244 = vld [vmem:[%s7240 + $0x18] sm:$0xff]
        %v7245 = vld [vmem:[%s7240 + $0x20] sm:$0xff]
        %v7246 = vld [vmem:[%s7240 + $0x28] sm:$0xff]
        %v7247 = vld [vmem:[%s7240 + $0x30] sm:$0xff]
        %v7248 = vld [vmem:[%s7240 + $0x38] sm:$0xff]
        %v7249 = vld [vmem:[%s7240 + $0x40] sm:$0xff]
        %v7250 = vld [vmem:[%s7240 + $0x48] sm:$0xff]
        %v7251 = vld [vmem:[%s7240 + $0x50] sm:$0xff]
        %v7252 = vld [vmem:[%s7240 + $0x58] sm:$0xff]
        %v7253 = vld [vmem:[%s7240 + $0x60] sm:$0xff]
        %v7254 = vld [vmem:[%s7240 + $0x68] sm:$0xff]
        %v7255 = vld [vmem:[%s7240 + $0x70] sm:$0xff]
        %v7256 = vld [vmem:[%s7240 + $0x78] sm:$0xff]
        %s7257 = scalar_lea.vmem %s45, 2
        %v7258 = vld [vmem:[%s7257] sm:$0x3]
        %s7259 = scalar_lea.vmem [#allocation28], 64
        %v7260 = vld [vmem:[%s7259] sm:$0xf]
        %v7261 = vld [vmem:[%s7259 + $0x4] sm:$0xf]
        %v7262 = vld [vmem:[%s7259 + $0x8] sm:$0xf]
        %v7263 = vld [vmem:[%s7259 + $0xc] sm:$0xf]
        %v7264 = vld [vmem:[%s7259 + $0x10] sm:$0xf]
        %v7265 = vld [vmem:[%s7259 + $0x14] sm:$0xf]
        %v7266 = vld [vmem:[%s7259 + $0x18] sm:$0xf]
        %v7267 = vld [vmem:[%s7259 + $0x1c] sm:$0xf]
        %v7268 = vld [vmem:[%s7259 + $0x20] sm:$0xf]
        %v7269 = vld [vmem:[%s7259 + $0x24] sm:$0xf]
        %v7270 = vld [vmem:[%s7259 + $0x28] sm:$0xf]
        %v7271 = vld [vmem:[%s7259 + $0x2c] sm:$0xf]
        %v7272 = vld [vmem:[%s7259 + $0x30] sm:$0xf]
        %v7273 = vld [vmem:[%s7259 + $0x34] sm:$0xf]
        %v7274 = vld [vmem:[%s7259 + $0x38] sm:$0xf]
        %v7275 = vld [vmem:[%s7259 + $0x3c] sm:$0xf]
        %s7276 = scalar_lea.vmem [#allocation29], 1
        %v7277 = vld [vmem:[%s7276] sm:$0x1]
        %v7278 = vpack.c.bf16 %v7220, %v7220
        %v7280 = vlaneseq
        %v7281 = vshrl.u32 %v7280, 7
        %v7282 = vsub.s32 0, %v7281
        %v7283 = vrot.slane %v7239, %v7282
        %v7301 = vunpack.c.l.b16 %v7222
        %v7302 = vunpack.c.l.b16 %v7223
        %v7303 = vunpack.c.l.b16 %v7224
        %v7304 = vunpack.c.l.b16 %v7225
        %v7305 = vunpack.c.l.b16 %v7226
        %v7306 = vunpack.c.l.b16 %v7227
        %v7307 = vunpack.c.l.b16 %v7228
        %v7308 = vunpack.c.l.b16 %v7229
        %v7309 = vunpack.c.l.b16 %v7230
        %v7310 = vunpack.c.l.b16 %v7231
        %v7311 = vunpack.c.l.b16 %v7232
        %v7312 = vunpack.c.l.b16 %v7233
        %v7313 = vunpack.c.l.b16 %v7234
        %v7314 = vunpack.c.l.b16 %v7235
        %v7315 = vunpack.c.l.b16 %v7236
        %v7316 = vunpack.c.l.b16 %v7237
        %v7317 = vpack.c.b16 %v7302, %v7301
        %v7318 = vpack.c.b16 %v7304, %v7303
        %v7319 = vpack.c.b16 %v7306, %v7305
        %v7320 = vpack.c.b16 %v7308, %v7307
        %v7321 = vpack.c.b16 %v7310, %v7309
        %v7322 = vpack.c.b16 %v7312, %v7311
        %v7323 = vpack.c.b16 %v7314, %v7313
        %v7324 = vpack.c.b16 %v7316, %v7315
        %7333 = vmatprep.subr.bf16.mxu0 0
        %7334 = vmatpush1.bf16.msra.mxu0 %v7324
        %7335 = vmatprep.subr.bf16.mxu0 0
        %7336 = vmatpush1.bf16.msra.mxu0 %v7323
        %7337 = vmatprep.subr.bf16.mxu0 0
        %7338 = vmatpush1.bf16.msra.mxu0 %v7322
        %7339 = vmatprep.subr.bf16.mxu0 0
        %7340 = vmatpush1.bf16.msra.mxu0 %v7321
        %7341 = vmatprep.subr.bf16.mxu0 0
        %7342 = vmatpush1.bf16.msra.mxu0 %v7320
        %7343 = vmatprep.subr.bf16.mxu0 0
        %7344 = vmatpush1.bf16.msra.mxu0 %v7319
        %7345 = vmatprep.subr.bf16.mxu0 0
        %7346 = vmatpush1.bf16.msra.mxu0 %v7318
        %7347 = vmatprep.subr.bf16.mxu0 0
        %7348 = vmatpush1.bf16.msra.mxu0 %v7317
        %7349 = vmatprep.subr.bf16.mxu0 0
        %7350 = vmatpush2.bf16.msra.mxu0 0
        %7351 = vmatprep.subr.bf16.mxu0 0
        %7352 = vmatpush2.bf16.msra.mxu0 0
        %7353 = vmatprep.subr.bf16.mxu0 0
        %7354 = vmatpush2.bf16.msra.mxu0 0
        %7355 = vmatprep.subr.bf16.mxu0 0
        %7356 = vmatpush2.bf16.msra.mxu0 0
        %7357 = vmatprep.subr.bf16.mxu0 0
        %7358 = vmatpush2.bf16.msra.mxu0 0
        %7359 = vmatprep.subr.bf16.mxu0 0
        %7360 = vmatpush2.bf16.msra.mxu0 0
        %7361 = vmatprep.subr.bf16.mxu0 0
        %7362 = vmatpush2.bf16.msra.mxu0 0
        %7363 = vmatprep.subr.bf16.mxu0 0
        %7364 = vmatpush2.bf16.msra.mxu0 0
        %7365 = vmatprep.mubr.bf16.mxu0 0
        %7366 = vmatmul.mubr.bf16.gmra.mxu0 %v7278
        %v7367 = vpop.f32.mrf.mxu0
        %v7368 = vadd.f32 %v7283, %v7367
        %v7369 = vpop.f32.mrf.mxu0
        %v7370 = vpop.f32.mrf.mxu0
        %v7371 = vpop.f32.mrf.mxu0
        %7372 = vdwg.mxu0
        %v7373 = vmul.f32 %v7368, 0.17677669
        %v7375 = vlaneseq
        %v7376 = vshrl.u32 %v7375, 7
        %v7377 = vsub.s32 0, %v7376
        %v7378 = vrot.slane %v7258, %v7377
        %v7379 = vlaneseq
        %v7380 = vshrl.u32 %v7379, 7
        %v7381 = vsub.s32 1, %v7380
        %v7382 = vrot.slane %v7258, %v7381
        %v7401 = vunpack.c.l.b16 %v7241
        %v7402 = vunpack.c.h.b16 %v7241
        %v7403 = vunpack.c.l.b16 %v7242
        %v7404 = vunpack.c.h.b16 %v7242
        %v7405 = vunpack.c.l.b16 %v7243
        %v7406 = vunpack.c.h.b16 %v7243
        %v7407 = vunpack.c.l.b16 %v7244
        %v7408 = vunpack.c.h.b16 %v7244
        %v7409 = vunpack.c.l.b16 %v7245
        %v7410 = vunpack.c.h.b16 %v7245
        %v7411 = vunpack.c.l.b16 %v7246
        %v7412 = vunpack.c.h.b16 %v7246
        %v7413 = vunpack.c.l.b16 %v7247
        %v7414 = vunpack.c.h.b16 %v7247
        %v7415 = vunpack.c.l.b16 %v7248
        %v7416 = vunpack.c.h.b16 %v7248
        %v7417 = vunpack.c.l.b16 %v7249
        %v7418 = vunpack.c.h.b16 %v7249
        %v7419 = vunpack.c.l.b16 %v7250
        %v7420 = vunpack.c.h.b16 %v7250
        %v7421 = vunpack.c.l.b16 %v7251
        %v7422 = vunpack.c.h.b16 %v7251
        %v7423 = vunpack.c.l.b16 %v7252
        %v7424 = vunpack.c.h.b16 %v7252
        %v7425 = vunpack.c.l.b16 %v7253
        %v7426 = vunpack.c.h.b16 %v7253
        %v7427 = vunpack.c.l.b16 %v7254
        %v7428 = vunpack.c.h.b16 %v7254
        %v7429 = vunpack.c.l.b16 %v7255
        %v7430 = vunpack.c.h.b16 %v7255
        %v7431 = vunpack.c.l.b16 %v7256
        %v7432 = vunpack.c.h.b16 %v7256
        %v7433 = vpack.c.b16 %v7403, %v7401
        %v7434 = vpack.c.b16 %v7404, %v7402
        %v7435 = vpack.c.b16 %v7407, %v7405
        %v7436 = vpack.c.b16 %v7408, %v7406
        %v7437 = vpack.c.b16 %v7411, %v7409
        %v7438 = vpack.c.b16 %v7412, %v7410
        %v7439 = vpack.c.b16 %v7415, %v7413
        %v7440 = vpack.c.b16 %v7416, %v7414
        %v7441 = vpack.c.b16 %v7419, %v7417
        %v7442 = vpack.c.b16 %v7420, %v7418
        %v7443 = vpack.c.b16 %v7423, %v7421
        %v7444 = vpack.c.b16 %v7424, %v7422
        %v7445 = vpack.c.b16 %v7427, %v7425
        %v7446 = vpack.c.b16 %v7428, %v7426
        %v7447 = vpack.c.b16 %v7431, %v7429
        %v7448 = vpack.c.b16 %v7432, %v7430
        %7465 = vmatprep.subr.bf16.mxu0 %v7448
        %7466 = vmatpush1.bf16.msra.mxu0 %v7447
        %7467 = vmatprep.subr.bf16.mxu0 %v7446
        %7468 = vmatpush1.bf16.msra.mxu0 %v7445
        %7469 = vmatprep.subr.bf16.mxu0 %v7444
        %7470 = vmatpush1.bf16.msra.mxu0 %v7443
        %7471 = vmatprep.subr.bf16.mxu0 %v7442
        %7472 = vmatpush1.bf16.msra.mxu0 %v7441
        %7473 = vmatprep.subr.bf16.mxu0 %v7440
        %7474 = vmatpush1.bf16.msra.mxu0 %v7439
        %7475 = vmatprep.subr.bf16.mxu0 %v7438
        %7476 = vmatpush1.bf16.msra.mxu0 %v7437
        %7477 = vmatprep.subr.bf16.mxu0 %v7436
        %7478 = vmatpush1.bf16.msra.mxu0 %v7435
        %7479 = vmatprep.subr.bf16.mxu0 %v7434
        %7480 = vmatpush1.bf16.msra.mxu0 %v7433
        %7481 = vmatprep.subr.bf16.mxu0 0
        %7482 = vmatpush2.bf16.msra.mxu0 0
        %7483 = vmatprep.subr.bf16.mxu0 0
        %7484 = vmatpush2.bf16.msra.mxu0 0
        %7485 = vmatprep.subr.bf16.mxu0 0
        %7486 = vmatpush2.bf16.msra.mxu0 0
        %7487 = vmatprep.subr.bf16.mxu0 0
        %7488 = vmatpush2.bf16.msra.mxu0 0
        %7489 = vmatprep.subr.bf16.mxu0 0
        %7490 = vmatpush2.bf16.msra.mxu0 0
        %7491 = vmatprep.subr.bf16.mxu0 0
        %7492 = vmatpush2.bf16.msra.mxu0 0
        %7493 = vmatprep.subr.bf16.mxu0 0
        %7494 = vmatpush2.bf16.msra.mxu0 0
        %7495 = vmatprep.subr.bf16.mxu0 0
        %7496 = vmatpush2.bf16.msra.mxu0 0
        %7497 = vmatprep.mubr.bf16.mxu0 0
        %7498 = vmatmul.mubr.bf16.gmra.mxu0 %v5150
        %v7499 = vpop.f32.mrf.mxu0
        %v7500 = vadd.f32 %v7378, %v7499
        %v7501 = vpop.f32.mrf.mxu0
        %v7502 = vadd.f32 %v7382, %v7501
        %v7503 = vpop.f32.mrf.mxu0
        %v7504 = vpop.f32.mrf.mxu0
        %7505 = vdwg.mxu0
        %v7506 = vpack.c.bf16 %v7373, %v7373
        %v7507 = vpack.c.bf16 %v7500, %v7500
        %v7508 = vpack.c.bf16 %v7502, %v7502
        %v7510 = vsel %vm1828, %v7506, 0
        %v7513 = vsel %vm1828, %v7507, 0
        %7515 = vmatprep.subr.bf16.mxu0 0
        %7516 = vmatpush1.bf16.xpose.msra.mxu0 0
        %7517 = vmatprep.subr.bf16.mxu0 0
        %7518 = vmatpush1.bf16.xpose.msra.mxu0 0
        %7519 = vmatprep.subr.bf16.mxu0 0
        %7520 = vmatpush1.bf16.xpose.msra.mxu0 0
        %7521 = vmatprep.subr.bf16.mxu0 0
        %7522 = vmatpush1.bf16.xpose.msra.mxu0 0
        %7523 = vmatprep.subr.bf16.mxu0 0
        %7524 = vmatpush1.bf16.xpose.msra.mxu0 0
        %7525 = vmatprep.subr.bf16.mxu0 0
        %7526 = vmatpush1.bf16.xpose.msra.mxu0 0
        %7527 = vmatprep.subr.bf16.mxu0 0
        %7528 = vmatpush1.bf16.xpose.msra.mxu0 0
        %7529 = vmatprep.subr.bf16.mxu0 0
        %7530 = vmatpush1.bf16.xpose.msra.mxu0 %v7513
        %7531 = vmatprep.subr.bf16.mxu0 0
        %7532 = vmatpush2.bf16.xpose.msra.mxu0 0
        %7533 = vmatprep.subr.bf16.mxu0 0
        %7534 = vmatpush2.bf16.xpose.msra.mxu0 0
        %7535 = vmatprep.subr.bf16.mxu0 0
        %7536 = vmatpush2.bf16.xpose.msra.mxu0 0
        %7537 = vmatprep.subr.bf16.mxu0 0
        %7538 = vmatpush2.bf16.xpose.msra.mxu0 0
        %7539 = vmatprep.subr.bf16.mxu0 0
        %7540 = vmatpush2.bf16.xpose.msra.mxu0 0
        %7541 = vmatprep.subr.bf16.mxu0 0
        %7542 = vmatpush2.bf16.xpose.msra.mxu0 0
        %7543 = vmatprep.subr.bf16.mxu0 0
        %7544 = vmatpush2.bf16.xpose.msra.mxu0 0
        %7545 = vmatprep.subr.bf16.mxu0 0
        %7546 = vmatpush2.bf16.xpose.msra.mxu0 0
        %7547 = vmatprep.mubr.bf16.mxu0 0
        %7548 = vmatmul.mubr.bf16.gmra.mxu0 %v7510
        %v7549 = vpop.f32.mrf.mxu0
        %v7550 = vadd.f32 0.0, %v7549
        %v7551 = vpop.f32.mrf.mxu0
        %v7552 = vpop.f32.mrf.mxu0
        %v7553 = vpop.f32.mrf.mxu0
        %7554 = vdwg.mxu0
        %v7555 = vsel %vm1875, %v7550, -inf
        %7556 = vmax.xlane.f32.xlu0 %v7555
        %v7557 = vpop.xlane.xlu0 %7556
        %v7558 = vsub.f32 %v7550, %v7557
        %v7559 = vmul.f32 %v7558, 1.442695
        %v7560 = vpow.pop %v7559
        %v7561 = vsel %vm1875, %v7560, 0.0
        %7562 = vadd.xlane.f32.xlu0 %v7561
        %v7563 = vpop.xlane.xlu0 %7562
        %v7564 = vrcp.pop %v7563
        %v7565 = vmul.f32 %v7560, %v7564
        %v7566 = vpack.c.bf16 %v7565, %v7565
        %v7568 = vsel %vm1875, %v7566, 0
        %v7571 = vsel %vm1891, %v7508, 0
        %7573 = vmatprep.subr.bf16.mxu0 0
        %7574 = vmatpush1.bf16.msra.mxu0 0
        %7575 = vmatprep.subr.bf16.mxu0 0
        %7576 = vmatpush1.bf16.msra.mxu0 0
        %7577 = vmatprep.subr.bf16.mxu0 0
        %7578 = vmatpush1.bf16.msra.mxu0 0
        %7579 = vmatprep.subr.bf16.mxu0 0
        %7580 = vmatpush1.bf16.msra.mxu0 0
        %7581 = vmatprep.subr.bf16.mxu0 0
        %7582 = vmatpush1.bf16.msra.mxu0 0
        %7583 = vmatprep.subr.bf16.mxu0 0
        %7584 = vmatpush1.bf16.msra.mxu0 0
        %7585 = vmatprep.subr.bf16.mxu0 0
        %7586 = vmatpush1.bf16.msra.mxu0 0
        %7587 = vmatprep.subr.bf16.mxu0 0
        %7588 = vmatpush1.bf16.msra.mxu0 %v7571
        %7589 = vmatprep.subr.bf16.mxu0 0
        %7590 = vmatpush2.bf16.msra.mxu0 0
        %7591 = vmatprep.subr.bf16.mxu0 0
        %7592 = vmatpush2.bf16.msra.mxu0 0
        %7593 = vmatprep.subr.bf16.mxu0 0
        %7594 = vmatpush2.bf16.msra.mxu0 0
        %7595 = vmatprep.subr.bf16.mxu0 0
        %7596 = vmatpush2.bf16.msra.mxu0 0
        %7597 = vmatprep.subr.bf16.mxu0 0
        %7598 = vmatpush2.bf16.msra.mxu0 0
        %7599 = vmatprep.subr.bf16.mxu0 0
        %7600 = vmatpush2.bf16.msra.mxu0 0
        %7601 = vmatprep.subr.bf16.mxu0 0
        %7602 = vmatpush2.bf16.msra.mxu0 0
        %7603 = vmatprep.subr.bf16.mxu0 0
        %7604 = vmatpush2.bf16.msra.mxu0 0
        %7605 = vmatprep.mubr.bf16.mxu0 0
        %7606 = vmatmul.mubr.bf16.gmra.mxu0 %v7568
        %v7607 = vpop.f32.mrf.mxu0
        %v7608 = vadd.f32 0.0, %v7607
        %v7609 = vpop.f32.mrf.mxu0
        %v7610 = vpop.f32.mrf.mxu0
        %v7611 = vpop.f32.mrf.mxu0
        %7612 = vdwg.mxu0
        %v7613 = vpack.c.bf16 %v7608, %v7608
        %7615 = vrot.lane.b32.xlu0 %v7506, 96
        %v7616 = vpop.permute.xlu0 %7615
        %7618 = vrot.lane.b32.xlu0 %v7507, 96
        %v7619 = vpop.permute.xlu0 %7618
        %v7621 = vsel %vm1828, %v7616, 0
        %v7624 = vsel %vm1828, %v7619, 0
        %7626 = vmatprep.subr.bf16.mxu0 0
        %7627 = vmatpush1.bf16.xpose.msra.mxu0 0
        %7628 = vmatprep.subr.bf16.mxu0 0
        %7629 = vmatpush1.bf16.xpose.msra.mxu0 0
        %7630 = vmatprep.subr.bf16.mxu0 0
        %7631 = vmatpush1.bf16.xpose.msra.mxu0 0
        %7632 = vmatprep.subr.bf16.mxu0 0
        %7633 = vmatpush1.bf16.xpose.msra.mxu0 0
        %7634 = vmatprep.subr.bf16.mxu0 0
        %7635 = vmatpush1.bf16.xpose.msra.mxu0 0
        %7636 = vmatprep.subr.bf16.mxu0 0
        %7637 = vmatpush1.bf16.xpose.msra.mxu0 0
        %7638 = vmatprep.subr.bf16.mxu0 0
        %7639 = vmatpush1.bf16.xpose.msra.mxu0 0
        %7640 = vmatprep.subr.bf16.mxu0 0
        %7641 = vmatpush1.bf16.xpose.msra.mxu0 %v7624
        %7642 = vmatprep.subr.bf16.mxu0 0
        %7643 = vmatpush2.bf16.xpose.msra.mxu0 0
        %7644 = vmatprep.subr.bf16.mxu0 0
        %7645 = vmatpush2.bf16.xpose.msra.mxu0 0
        %7646 = vmatprep.subr.bf16.mxu0 0
        %7647 = vmatpush2.bf16.xpose.msra.mxu0 0
        %7648 = vmatprep.subr.bf16.mxu0 0
        %7649 = vmatpush2.bf16.xpose.msra.mxu0 0
        %7650 = vmatprep.subr.bf16.mxu0 0
        %7651 = vmatpush2.bf16.xpose.msra.mxu0 0
        %7652 = vmatprep.subr.bf16.mxu0 0
        %7653 = vmatpush2.bf16.xpose.msra.mxu0 0
        %7654 = vmatprep.subr.bf16.mxu0 0
        %7655 = vmatpush2.bf16.xpose.msra.mxu0 0
        %7656 = vmatprep.subr.bf16.mxu0 0
        %7657 = vmatpush2.bf16.xpose.msra.mxu0 0
        %7658 = vmatprep.mubr.bf16.mxu0 0
        %7659 = vmatmul.mubr.bf16.gmra.mxu0 %v7621
        %v7660 = vpop.f32.mrf.mxu0
        %v7661 = vadd.f32 0.0, %v7660
        %v7662 = vpop.f32.mrf.mxu0
        %v7663 = vpop.f32.mrf.mxu0
        %v7664 = vpop.f32.mrf.mxu0
        %7665 = vdwg.mxu0
        %v7666 = vsel %vm1875, %v7661, -inf
        %7667 = vmax.xlane.f32.xlu0 %v7666
        %v7668 = vpop.xlane.xlu0 %7667
        %v7669 = vsub.f32 %v7661, %v7668
        %v7670 = vmul.f32 %v7669, 1.442695
        %v7671 = vpow.pop %v7670
        %v7672 = vsel %vm1875, %v7671, 0.0
        %7673 = vadd.xlane.f32.xlu0 %v7672
        %v7674 = vpop.xlane.xlu0 %7673
        %v7675 = vrcp.pop %v7674
        %v7676 = vmul.f32 %v7671, %v7675
        %v7677 = vpack.c.bf16 %v7676, %v7676
        %7679 = vrot.lane.b32.xlu0 %v7508, 96
        %v7680 = vpop.permute.xlu0 %7679
        %v7682 = vsel %vm1875, %v7677, 0
        %v7685 = vsel %vm1891, %v7680, 0
        %7687 = vmatprep.subr.bf16.mxu0 0
        %7688 = vmatpush1.bf16.msra.mxu0 0
        %7689 = vmatprep.subr.bf16.mxu0 0
        %7690 = vmatpush1.bf16.msra.mxu0 0
        %7691 = vmatprep.subr.bf16.mxu0 0
        %7692 = vmatpush1.bf16.msra.mxu0 0
        %7693 = vmatprep.subr.bf16.mxu0 0
        %7694 = vmatpush1.bf16.msra.mxu0 0
        %7695 = vmatprep.subr.bf16.mxu0 0
        %7696 = vmatpush1.bf16.msra.mxu0 0
        %7697 = vmatprep.subr.bf16.mxu0 0
        %7698 = vmatpush1.bf16.msra.mxu0 0
        %7699 = vmatprep.subr.bf16.mxu0 0
        %7700 = vmatpush1.bf16.msra.mxu0 0
        %7701 = vmatprep.subr.bf16.mxu0 0
        %7702 = vmatpush1.bf16.msra.mxu0 %v7685
        %7703 = vmatprep.subr.bf16.mxu0 0
        %7704 = vmatpush2.bf16.msra.mxu0 0
        %7705 = vmatprep.subr.bf16.mxu0 0
        %7706 = vmatpush2.bf16.msra.mxu0 0
        %7707 = vmatprep.subr.bf16.mxu0 0
        %7708 = vmatpush2.bf16.msra.mxu0 0
        %7709 = vmatprep.subr.bf16.mxu0 0
        %7710 = vmatpush2.bf16.msra.mxu0 0
        %7711 = vmatprep.subr.bf16.mxu0 0
        %7712 = vmatpush2.bf16.msra.mxu0 0
        %7713 = vmatprep.subr.bf16.mxu0 0
        %7714 = vmatpush2.bf16.msra.mxu0 0
        %7715 = vmatprep.subr.bf16.mxu0 0
        %7716 = vmatpush2.bf16.msra.mxu0 0
        %7717 = vmatprep.subr.bf16.mxu0 0
        %7718 = vmatpush2.bf16.msra.mxu0 0
        %7719 = vmatprep.mubr.bf16.mxu0 0
        %7720 = vmatmul.mubr.bf16.gmra.mxu0 %v7682
        %v7721 = vpop.f32.mrf.mxu0
        %v7722 = vadd.f32 0.0, %v7721
        %v7723 = vpop.f32.mrf.mxu0
        %v7724 = vpop.f32.mrf.mxu0
        %v7725 = vpop.f32.mrf.mxu0
        %7726 = vdwg.mxu0
        %v7727 = vpack.c.bf16 %v7722, %v7722
        %v7732 = vunpack.c.l.b16 %v7264
        %v7733 = vunpack.c.l.b16 %v7265
        %v7734 = vunpack.c.l.b16 %v7266
        %v7735 = vunpack.c.l.b16 %v7267
        %v7736 = vpack.c.b16 %v7733, %v7732
        %v7737 = vpack.c.b16 %v7735, %v7734
        %v7741 = vsel %vm1828, %v7727, 0
        %7743 = vmatprep.subr.bf16.mxu0 0
        %7744 = vmatpush1.bf16.msra.mxu0 0
        %7745 = vmatprep.subr.bf16.mxu0 0
        %7746 = vmatpush1.bf16.msra.mxu0 0
        %7747 = vmatprep.subr.bf16.mxu0 0
        %7748 = vmatpush1.bf16.msra.mxu0 0
        %7749 = vmatprep.subr.bf16.mxu0 0
        %7750 = vmatpush1.bf16.msra.mxu0 0
        %7751 = vmatprep.subr.bf16.mxu0 0
        %7752 = vmatpush1.bf16.msra.mxu0 0
        %7753 = vmatprep.subr.bf16.mxu0 0
        %7754 = vmatpush1.bf16.msra.mxu0 0
        %7755 = vmatprep.subr.bf16.mxu0 0
        %7756 = vmatpush1.bf16.msra.mxu0 %v7737
        %7757 = vmatprep.subr.bf16.mxu0 0
        %7758 = vmatpush1.bf16.msra.mxu0 %v7736
        %7759 = vmatprep.subr.bf16.mxu0 0
        %7760 = vmatpush2.bf16.msra.mxu0 0
        %7761 = vmatprep.subr.bf16.mxu0 0
        %7762 = vmatpush2.bf16.msra.mxu0 0
        %7763 = vmatprep.subr.bf16.mxu0 0
        %7764 = vmatpush2.bf16.msra.mxu0 0
        %7765 = vmatprep.subr.bf16.mxu0 0
        %7766 = vmatpush2.bf16.msra.mxu0 0
        %7767 = vmatprep.subr.bf16.mxu0 0
        %7768 = vmatpush2.bf16.msra.mxu0 0
        %7769 = vmatprep.subr.bf16.mxu0 0
        %7770 = vmatpush2.bf16.msra.mxu0 0
        %7771 = vmatprep.subr.bf16.mxu0 0
        %7772 = vmatpush2.bf16.msra.mxu0 0
        %7773 = vmatprep.subr.bf16.mxu0 0
        %7774 = vmatpush2.bf16.msra.mxu0 0
        %7775 = vmatprep.mubr.bf16.mxu0 0
        %7776 = vmatmul.mubr.bf16.gmra.mxu0 %v7741
        %v7777 = vpop.f32.mrf.mxu0
        %v7778 = vadd.f32 0.0, %v7777
        %v7779 = vpop.f32.mrf.mxu0
        %v7780 = vpop.f32.mrf.mxu0
        %v7781 = vpop.f32.mrf.mxu0
        %7782 = vdwg.mxu0
        %v7787 = vunpack.c.l.b16 %v7260
        %v7788 = vunpack.c.l.b16 %v7261
        %v7789 = vunpack.c.l.b16 %v7262
        %v7790 = vunpack.c.l.b16 %v7263
        %v7791 = vpack.c.b16 %v7788, %v7787
        %v7792 = vpack.c.b16 %v7790, %v7789
        %v7796 = vsel %vm1828, %v7613, 0
        %7798 = vmatprep.subr.bf16.mxu0 0
        %7799 = vmatpush1.bf16.msra.mxu0 0
        %7800 = vmatprep.subr.bf16.mxu0 0
        %7801 = vmatpush1.bf16.msra.mxu0 0
        %7802 = vmatprep.subr.bf16.mxu0 0
        %7803 = vmatpush1.bf16.msra.mxu0 0
        %7804 = vmatprep.subr.bf16.mxu0 0
        %7805 = vmatpush1.bf16.msra.mxu0 0
        %7806 = vmatprep.subr.bf16.mxu0 0
        %7807 = vmatpush1.bf16.msra.mxu0 0
        %7808 = vmatprep.subr.bf16.mxu0 0
        %7809 = vmatpush1.bf16.msra.mxu0 0
        %7810 = vmatprep.subr.bf16.mxu0 0
        %7811 = vmatpush1.bf16.msra.mxu0 %v7792
        %7812 = vmatprep.subr.bf16.mxu0 0
        %7813 = vmatpush1.bf16.msra.mxu0 %v7791
        %7814 = vmatprep.subr.bf16.mxu0 0
        %7815 = vmatpush2.bf16.msra.mxu0 0
        %7816 = vmatprep.subr.bf16.mxu0 0
        %7817 = vmatpush2.bf16.msra.mxu0 0
        %7818 = vmatprep.subr.bf16.mxu0 0
        %7819 = vmatpush2.bf16.msra.mxu0 0
        %7820 = vmatprep.subr.bf16.mxu0 0
        %7821 = vmatpush2.bf16.msra.mxu0 0
        %7822 = vmatprep.subr.bf16.mxu0 0
        %7823 = vmatpush2.bf16.msra.mxu0 0
        %7824 = vmatprep.subr.bf16.mxu0 0
        %7825 = vmatpush2.bf16.msra.mxu0 0
        %7826 = vmatprep.subr.bf16.mxu0 0
        %7827 = vmatpush2.bf16.msra.mxu0 0
        %7828 = vmatprep.subr.bf16.mxu0 0
        %7829 = vmatpush2.bf16.msra.mxu0 0
        %7830 = vmatprep.mubr.bf16.mxu0 0
        %7831 = vmatmul.mubr.bf16.gmra.mxu0 %v7796
        %v7832 = vpop.f32.mrf.mxu0
        %v7833 = vadd.f32 %v7778, %v7832
        %v7834 = vpop.f32.mrf.mxu0
        %v7835 = vpop.f32.mrf.mxu0
        %v7836 = vpop.f32.mrf.mxu0
        %7837 = vdwg.mxu0
        %7838 = vrot.lane.b32.xlu0 %v7506, 64
        %v7839 = vpop.permute.xlu0 %7838
        %7840 = vrot.lane.b32.xlu0 %v7507, 64
        %v7841 = vpop.permute.xlu0 %7840
        %v7843 = vsel %vm1828, %v7839, 0
        %v7846 = vsel %vm1828, %v7841, 0
        %7848 = vmatprep.subr.bf16.mxu0 0
        %7849 = vmatpush1.bf16.xpose.msra.mxu0 0
        %7850 = vmatprep.subr.bf16.mxu0 0
        %7851 = vmatpush1.bf16.xpose.msra.mxu0 0
        %7852 = vmatprep.subr.bf16.mxu0 0
        %7853 = vmatpush1.bf16.xpose.msra.mxu0 0
        %7854 = vmatprep.subr.bf16.mxu0 0
        %7855 = vmatpush1.bf16.xpose.msra.mxu0 0
        %7856 = vmatprep.subr.bf16.mxu0 0
        %7857 = vmatpush1.bf16.xpose.msra.mxu0 0
        %7858 = vmatprep.subr.bf16.mxu0 0
        %7859 = vmatpush1.bf16.xpose.msra.mxu0 0
        %7860 = vmatprep.subr.bf16.mxu0 0
        %7861 = vmatpush1.bf16.xpose.msra.mxu0 0
        %7862 = vmatprep.subr.bf16.mxu0 0
        %7863 = vmatpush1.bf16.xpose.msra.mxu0 %v7846
        %7864 = vmatprep.subr.bf16.mxu0 0
        %7865 = vmatpush2.bf16.xpose.msra.mxu0 0
        %7866 = vmatprep.subr.bf16.mxu0 0
        %7867 = vmatpush2.bf16.xpose.msra.mxu0 0
        %7868 = vmatprep.subr.bf16.mxu0 0
        %7869 = vmatpush2.bf16.xpose.msra.mxu0 0
        %7870 = vmatprep.subr.bf16.mxu0 0
        %7871 = vmatpush2.bf16.xpose.msra.mxu0 0
        %7872 = vmatprep.subr.bf16.mxu0 0
        %7873 = vmatpush2.bf16.xpose.msra.mxu0 0
        %7874 = vmatprep.subr.bf16.mxu0 0
        %7875 = vmatpush2.bf16.xpose.msra.mxu0 0
        %7876 = vmatprep.subr.bf16.mxu0 0
        %7877 = vmatpush2.bf16.xpose.msra.mxu0 0
        %7878 = vmatprep.subr.bf16.mxu0 0
        %7879 = vmatpush2.bf16.xpose.msra.mxu0 0
        %7880 = vmatprep.mubr.bf16.mxu0 0
        %7881 = vmatmul.mubr.bf16.gmra.mxu0 %v7843
        %v7882 = vpop.f32.mrf.mxu0
        %v7883 = vadd.f32 0.0, %v7882
        %v7884 = vpop.f32.mrf.mxu0
        %v7885 = vpop.f32.mrf.mxu0
        %v7886 = vpop.f32.mrf.mxu0
        %7887 = vdwg.mxu0
        %v7888 = vsel %vm1875, %v7883, -inf
        %7889 = vmax.xlane.f32.xlu0 %v7888
        %v7890 = vpop.xlane.xlu0 %7889
        %v7891 = vsub.f32 %v7883, %v7890
        %v7892 = vmul.f32 %v7891, 1.442695
        %v7893 = vpow.pop %v7892
        %v7894 = vsel %vm1875, %v7893, 0.0
        %7895 = vadd.xlane.f32.xlu0 %v7894
        %v7896 = vpop.xlane.xlu0 %7895
        %v7897 = vrcp.pop %v7896
        %v7898 = vmul.f32 %v7893, %v7897
        %v7899 = vpack.c.bf16 %v7898, %v7898
        %7900 = vrot.lane.b32.xlu0 %v7508, 64
        %v7901 = vpop.permute.xlu0 %7900
        %v7903 = vsel %vm1875, %v7899, 0
        %v7906 = vsel %vm1891, %v7901, 0
        %7908 = vmatprep.subr.bf16.mxu0 0
        %7909 = vmatpush1.bf16.msra.mxu0 0
        %7910 = vmatprep.subr.bf16.mxu0 0
        %7911 = vmatpush1.bf16.msra.mxu0 0
        %7912 = vmatprep.subr.bf16.mxu0 0
        %7913 = vmatpush1.bf16.msra.mxu0 0
        %7914 = vmatprep.subr.bf16.mxu0 0
        %7915 = vmatpush1.bf16.msra.mxu0 0
        %7916 = vmatprep.subr.bf16.mxu0 0
        %7917 = vmatpush1.bf16.msra.mxu0 0
        %7918 = vmatprep.subr.bf16.mxu0 0
        %7919 = vmatpush1.bf16.msra.mxu0 0
        %7920 = vmatprep.subr.bf16.mxu0 0
        %7921 = vmatpush1.bf16.msra.mxu0 0
        %7922 = vmatprep.subr.bf16.mxu0 0
        %7923 = vmatpush1.bf16.msra.mxu0 %v7906
        %7924 = vmatprep.subr.bf16.mxu0 0
        %7925 = vmatpush2.bf16.msra.mxu0 0
        %7926 = vmatprep.subr.bf16.mxu0 0
        %7927 = vmatpush2.bf16.msra.mxu0 0
        %7928 = vmatprep.subr.bf16.mxu0 0
        %7929 = vmatpush2.bf16.msra.mxu0 0
        %7930 = vmatprep.subr.bf16.mxu0 0
        %7931 = vmatpush2.bf16.msra.mxu0 0
        %7932 = vmatprep.subr.bf16.mxu0 0
        %7933 = vmatpush2.bf16.msra.mxu0 0
        %7934 = vmatprep.subr.bf16.mxu0 0
        %7935 = vmatpush2.bf16.msra.mxu0 0
        %7936 = vmatprep.subr.bf16.mxu0 0
        %7937 = vmatpush2.bf16.msra.mxu0 0
        %7938 = vmatprep.subr.bf16.mxu0 0
        %7939 = vmatpush2.bf16.msra.mxu0 0
        %7940 = vmatprep.mubr.bf16.mxu0 0
        %7941 = vmatmul.mubr.bf16.gmra.mxu0 %v7903
        %v7942 = vpop.f32.mrf.mxu0
        %v7943 = vadd.f32 0.0, %v7942
        %v7944 = vpop.f32.mrf.mxu0
        %v7945 = vpop.f32.mrf.mxu0
        %v7946 = vpop.f32.mrf.mxu0
        %7947 = vdwg.mxu0
        %v7948 = vpack.c.bf16 %v7943, %v7943
        %v7953 = vunpack.c.l.b16 %v7268
        %v7954 = vunpack.c.l.b16 %v7269
        %v7955 = vunpack.c.l.b16 %v7270
        %v7956 = vunpack.c.l.b16 %v7271
        %v7957 = vpack.c.b16 %v7954, %v7953
        %v7958 = vpack.c.b16 %v7956, %v7955
        %v7962 = vsel %vm1828, %v7948, 0
        %7964 = vmatprep.subr.bf16.mxu0 0
        %7965 = vmatpush1.bf16.msra.mxu0 0
        %7966 = vmatprep.subr.bf16.mxu0 0
        %7967 = vmatpush1.bf16.msra.mxu0 0
        %7968 = vmatprep.subr.bf16.mxu0 0
        %7969 = vmatpush1.bf16.msra.mxu0 0
        %7970 = vmatprep.subr.bf16.mxu0 0
        %7971 = vmatpush1.bf16.msra.mxu0 0
        %7972 = vmatprep.subr.bf16.mxu0 0
        %7973 = vmatpush1.bf16.msra.mxu0 0
        %7974 = vmatprep.subr.bf16.mxu0 0
        %7975 = vmatpush1.bf16.msra.mxu0 0
        %7976 = vmatprep.subr.bf16.mxu0 0
        %7977 = vmatpush1.bf16.msra.mxu0 %v7958
        %7978 = vmatprep.subr.bf16.mxu0 0
        %7979 = vmatpush1.bf16.msra.mxu0 %v7957
        %7980 = vmatprep.subr.bf16.mxu0 0
        %7981 = vmatpush2.bf16.msra.mxu0 0
        %7982 = vmatprep.subr.bf16.mxu0 0
        %7983 = vmatpush2.bf16.msra.mxu0 0
        %7984 = vmatprep.subr.bf16.mxu0 0
        %7985 = vmatpush2.bf16.msra.mxu0 0
        %7986 = vmatprep.subr.bf16.mxu0 0
        %7987 = vmatpush2.bf16.msra.mxu0 0
        %7988 = vmatprep.subr.bf16.mxu0 0
        %7989 = vmatpush2.bf16.msra.mxu0 0
        %7990 = vmatprep.subr.bf16.mxu0 0
        %7991 = vmatpush2.bf16.msra.mxu0 0
        %7992 = vmatprep.subr.bf16.mxu0 0
        %7993 = vmatpush2.bf16.msra.mxu0 0
        %7994 = vmatprep.subr.bf16.mxu0 0
        %7995 = vmatpush2.bf16.msra.mxu0 0
        %7996 = vmatprep.mubr.bf16.mxu0 0
        %7997 = vmatmul.mubr.bf16.gmra.mxu0 %v7962
        %v7998 = vpop.f32.mrf.mxu0
        %v7999 = vadd.f32 0.0, %v7998
        %v8000 = vpop.f32.mrf.mxu0
        %v8001 = vpop.f32.mrf.mxu0
        %v8002 = vpop.f32.mrf.mxu0
        %8003 = vdwg.mxu0
        %v8004 = vadd.f32 %v7833, %v7999
        %8005 = vrot.lane.b32.xlu0 %v7506, 32
        %v8006 = vpop.permute.xlu0 %8005
        %8007 = vrot.lane.b32.xlu0 %v7507, 32
        %v8008 = vpop.permute.xlu0 %8007
        %v8010 = vsel %vm1828, %v8006, 0
        %v8013 = vsel %vm1828, %v8008, 0
        %8015 = vmatprep.subr.bf16.mxu0 0
        %8016 = vmatpush1.bf16.xpose.msra.mxu0 0
        %8017 = vmatprep.subr.bf16.mxu0 0
        %8018 = vmatpush1.bf16.xpose.msra.mxu0 0
        %8019 = vmatprep.subr.bf16.mxu0 0
        %8020 = vmatpush1.bf16.xpose.msra.mxu0 0
        %8021 = vmatprep.subr.bf16.mxu0 0
        %8022 = vmatpush1.bf16.xpose.msra.mxu0 0
        %8023 = vmatprep.subr.bf16.mxu0 0
        %8024 = vmatpush1.bf16.xpose.msra.mxu0 0
        %8025 = vmatprep.subr.bf16.mxu0 0
        %8026 = vmatpush1.bf16.xpose.msra.mxu0 0
        %8027 = vmatprep.subr.bf16.mxu0 0
        %8028 = vmatpush1.bf16.xpose.msra.mxu0 0
        %8029 = vmatprep.subr.bf16.mxu0 0
        %8030 = vmatpush1.bf16.xpose.msra.mxu0 %v8013
        %8031 = vmatprep.subr.bf16.mxu0 0
        %8032 = vmatpush2.bf16.xpose.msra.mxu0 0
        %8033 = vmatprep.subr.bf16.mxu0 0
        %8034 = vmatpush2.bf16.xpose.msra.mxu0 0
        %8035 = vmatprep.subr.bf16.mxu0 0
        %8036 = vmatpush2.bf16.xpose.msra.mxu0 0
        %8037 = vmatprep.subr.bf16.mxu0 0
        %8038 = vmatpush2.bf16.xpose.msra.mxu0 0
        %8039 = vmatprep.subr.bf16.mxu0 0
        %8040 = vmatpush2.bf16.xpose.msra.mxu0 0
        %8041 = vmatprep.subr.bf16.mxu0 0
        %8042 = vmatpush2.bf16.xpose.msra.mxu0 0
        %8043 = vmatprep.subr.bf16.mxu0 0
        %8044 = vmatpush2.bf16.xpose.msra.mxu0 0
        %8045 = vmatprep.subr.bf16.mxu0 0
        %8046 = vmatpush2.bf16.xpose.msra.mxu0 0
        %8047 = vmatprep.mubr.bf16.mxu0 0
        %8048 = vmatmul.mubr.bf16.gmra.mxu0 %v8010
        %v8049 = vpop.f32.mrf.mxu0
        %v8050 = vadd.f32 0.0, %v8049
        %v8051 = vpop.f32.mrf.mxu0
        %v8052 = vpop.f32.mrf.mxu0
        %v8053 = vpop.f32.mrf.mxu0
        %8054 = vdwg.mxu0
        %v8055 = vsel %vm1875, %v8050, -inf
        %8056 = vmax.xlane.f32.xlu0 %v8055
        %v8057 = vpop.xlane.xlu0 %8056
        %v8058 = vsub.f32 %v8050, %v8057
        %v8059 = vmul.f32 %v8058, 1.442695
        %v8060 = vpow.pop %v8059
        %v8061 = vsel %vm1875, %v8060, 0.0
        %8062 = vadd.xlane.f32.xlu0 %v8061
        %v8063 = vpop.xlane.xlu0 %8062
        %v8064 = vrcp.pop %v8063
        %v8065 = vmul.f32 %v8060, %v8064
        %v8066 = vpack.c.bf16 %v8065, %v8065
        %8067 = vrot.lane.b32.xlu0 %v7508, 32
        %v8068 = vpop.permute.xlu0 %8067
        %v8070 = vsel %vm1875, %v8066, 0
        %v8073 = vsel %vm1891, %v8068, 0
        %8075 = vmatprep.subr.bf16.mxu0 0
        %8076 = vmatpush1.bf16.msra.mxu0 0
        %8077 = vmatprep.subr.bf16.mxu0 0
        %8078 = vmatpush1.bf16.msra.mxu0 0
        %8079 = vmatprep.subr.bf16.mxu0 0
        %8080 = vmatpush1.bf16.msra.mxu0 0
        %8081 = vmatprep.subr.bf16.mxu0 0
        %8082 = vmatpush1.bf16.msra.mxu0 0
        %8083 = vmatprep.subr.bf16.mxu0 0
        %8084 = vmatpush1.bf16.msra.mxu0 0
        %8085 = vmatprep.subr.bf16.mxu0 0
        %8086 = vmatpush1.bf16.msra.mxu0 0
        %8087 = vmatprep.subr.bf16.mxu0 0
        %8088 = vmatpush1.bf16.msra.mxu0 0
        %8089 = vmatprep.subr.bf16.mxu0 0
        %8090 = vmatpush1.bf16.msra.mxu0 %v8073
        %8091 = vmatprep.subr.bf16.mxu0 0
        %8092 = vmatpush2.bf16.msra.mxu0 0
        %8093 = vmatprep.subr.bf16.mxu0 0
        %8094 = vmatpush2.bf16.msra.mxu0 0
        %8095 = vmatprep.subr.bf16.mxu0 0
        %8096 = vmatpush2.bf16.msra.mxu0 0
        %8097 = vmatprep.subr.bf16.mxu0 0
        %8098 = vmatpush2.bf16.msra.mxu0 0
        %8099 = vmatprep.subr.bf16.mxu0 0
        %8100 = vmatpush2.bf16.msra.mxu0 0
        %8101 = vmatprep.subr.bf16.mxu0 0
        %8102 = vmatpush2.bf16.msra.mxu0 0
        %8103 = vmatprep.subr.bf16.mxu0 0
        %8104 = vmatpush2.bf16.msra.mxu0 0
        %8105 = vmatprep.subr.bf16.mxu0 0
        %8106 = vmatpush2.bf16.msra.mxu0 0
        %8107 = vmatprep.mubr.bf16.mxu0 0
        %8108 = vmatmul.mubr.bf16.gmra.mxu0 %v8070
        %v8109 = vpop.f32.mrf.mxu0
        %v8110 = vadd.f32 0.0, %v8109
        %v8111 = vpop.f32.mrf.mxu0
        %v8112 = vpop.f32.mrf.mxu0
        %v8113 = vpop.f32.mrf.mxu0
        %8114 = vdwg.mxu0
        %v8115 = vpack.c.bf16 %v8110, %v8110
        %v8120 = vunpack.c.l.b16 %v7272
        %v8121 = vunpack.c.l.b16 %v7273
        %v8122 = vunpack.c.l.b16 %v7274
        %v8123 = vunpack.c.l.b16 %v7275
        %v8124 = vpack.c.b16 %v8121, %v8120
        %v8125 = vpack.c.b16 %v8123, %v8122
        %v8129 = vsel %vm1828, %v8115, 0
        %8131 = vmatprep.subr.bf16.mxu0 0
        %8132 = vmatpush1.bf16.msra.mxu0 0
        %8133 = vmatprep.subr.bf16.mxu0 0
        %8134 = vmatpush1.bf16.msra.mxu0 0
        %8135 = vmatprep.subr.bf16.mxu0 0
        %8136 = vmatpush1.bf16.msra.mxu0 0
        %8137 = vmatprep.subr.bf16.mxu0 0
        %8138 = vmatpush1.bf16.msra.mxu0 0
        %8139 = vmatprep.subr.bf16.mxu0 0
        %8140 = vmatpush1.bf16.msra.mxu0 0
        %8141 = vmatprep.subr.bf16.mxu0 0
        %8142 = vmatpush1.bf16.msra.mxu0 0
        %8143 = vmatprep.subr.bf16.mxu0 0
        %8144 = vmatpush1.bf16.msra.mxu0 %v8125
        %8145 = vmatprep.subr.bf16.mxu0 0
        %8146 = vmatpush1.bf16.msra.mxu0 %v8124
        %8147 = vmatprep.subr.bf16.mxu0 0
        %8148 = vmatpush2.bf16.msra.mxu0 0
        %8149 = vmatprep.subr.bf16.mxu0 0
        %8150 = vmatpush2.bf16.msra.mxu0 0
        %8151 = vmatprep.subr.bf16.mxu0 0
        %8152 = vmatpush2.bf16.msra.mxu0 0
        %8153 = vmatprep.subr.bf16.mxu0 0
        %8154 = vmatpush2.bf16.msra.mxu0 0
        %8155 = vmatprep.subr.bf16.mxu0 0
        %8156 = vmatpush2.bf16.msra.mxu0 0
        %8157 = vmatprep.subr.bf16.mxu0 0
        %8158 = vmatpush2.bf16.msra.mxu0 0
        %8159 = vmatprep.subr.bf16.mxu0 0
        %8160 = vmatpush2.bf16.msra.mxu0 0
        %8161 = vmatprep.subr.bf16.mxu0 0
        %8162 = vmatpush2.bf16.msra.mxu0 0
        %8163 = vmatprep.mubr.bf16.mxu0 0
        %8164 = vmatmul.mubr.bf16.gmra.mxu0 %v8129
        %v8165 = vpop.f32.mrf.mxu0
        %v8166 = vadd.f32 0.0, %v8165
        %v8167 = vpop.f32.mrf.mxu0
        %v8168 = vpop.f32.mrf.mxu0
        %v8169 = vpop.f32.mrf.mxu0
        %8170 = vdwg.mxu0
        %v8171 = vadd.f32 %v8004, %v8166
        %v8173 = vlaneseq
        %v8174 = vshrl.u32 %v8173, 7
        %v8175 = vsub.s32 0, %v8174
        %v8176 = vrot.slane %v7277, %v8175
        %v8178 = vadd.f32 %v8171, %v8176
        %v8179 = vadd.f32 %v7220, %v8178
        %s8180 = scalar_lea.vmem [#allocation34], 1
        %v8181 = vld [vmem:[%s8180] sm:$0x1]
        %s8182 = scalar_lea.vmem [#allocation35], 1
        %v8183 = vld [vmem:[%s8182] sm:$0x1]
        %8184 = vadd.xlane.f32.xlu0 %v8179
        %v8185 = vpop.xlane.xlu0 %8184
        %v8186 = vmul.f32 %v8185, %v2506
        %v8187 = vsub.f32 %v8179, %v8186
        %v8188 = vmul.f32 %v8187, %v8187
        %8189 = vadd.xlane.f32.xlu0 %v8188
        %v8190 = vpop.xlane.xlu0 %8189
        %v8191 = vmul.f32 %v8190, %v2506
        %v8192 = vadd.f32 %v8191, 1e-05
        %v8193 = vrsqrt.pop %v8192
        %v8194 = vmul.f32 %v8187, %v8193
        %v8196 = vlaneseq
        %v8197 = vshrl.u32 %v8196, 7
        %v8198 = vsub.s32 0, %v8197
        %v8199 = vrot.slane %v8181, %v8198
        %v8201 = vmul.f32 %v8194, %v8199
        %v8203 = vlaneseq
        %v8204 = vshrl.u32 %v8203, 7
        %v8205 = vsub.s32 0, %v8204
        %v8206 = vrot.slane %v8183, %v8205
        %v8208 = vadd.f32 %v8201, %v8206
        %s8209 = scalar_lea.vmem [#allocation40], 64
        %v8210 = vld [vmem:[%s8209] sm:$0xf]
        %v8211 = vld [vmem:[%s8209 + $0x4] sm:$0xf]
        %v8212 = vld [vmem:[%s8209 + $0x8] sm:$0xf]
        %v8213 = vld [vmem:[%s8209 + $0xc] sm:$0xf]
        %v8214 = vld [vmem:[%s8209 + $0x10] sm:$0xf]
        %v8215 = vld [vmem:[%s8209 + $0x14] sm:$0xf]
        %v8216 = vld [vmem:[%s8209 + $0x18] sm:$0xf]
        %v8217 = vld [vmem:[%s8209 + $0x1c] sm:$0xf]
        %v8218 = vld [vmem:[%s8209 + $0x20] sm:$0xf]
        %v8219 = vld [vmem:[%s8209 + $0x24] sm:$0xf]
        %v8220 = vld [vmem:[%s8209 + $0x28] sm:$0xf]
        %v8221 = vld [vmem:[%s8209 + $0x2c] sm:$0xf]
        %v8222 = vld [vmem:[%s8209 + $0x30] sm:$0xf]
        %v8223 = vld [vmem:[%s8209 + $0x34] sm:$0xf]
        %v8224 = vld [vmem:[%s8209 + $0x38] sm:$0xf]
        %v8225 = vld [vmem:[%s8209 + $0x3c] sm:$0xf]
        %s8226 = scalar_lea.vmem [#allocation41], 1
        %v8227 = vld [vmem:[%s8226] sm:$0x1]
        %s8228 = scalar_lea.vmem [#allocation43], 64
        %v8229 = vld [vmem:[%s8228] sm:$0xf]
        %v8230 = vld [vmem:[%s8228 + $0x4] sm:$0xf]
        %v8231 = vld [vmem:[%s8228 + $0x8] sm:$0xf]
        %v8232 = vld [vmem:[%s8228 + $0xc] sm:$0xf]
        %v8233 = vld [vmem:[%s8228 + $0x10] sm:$0xf]
        %v8234 = vld [vmem:[%s8228 + $0x14] sm:$0xf]
        %v8235 = vld [vmem:[%s8228 + $0x18] sm:$0xf]
        %v8236 = vld [vmem:[%s8228 + $0x1c] sm:$0xf]
        %v8237 = vld [vmem:[%s8228 + $0x20] sm:$0xf]
        %v8238 = vld [vmem:[%s8228 + $0x24] sm:$0xf]
        %v8239 = vld [vmem:[%s8228 + $0x28] sm:$0xf]
        %v8240 = vld [vmem:[%s8228 + $0x2c] sm:$0xf]
        %v8241 = vld [vmem:[%s8228 + $0x30] sm:$0xf]
        %v8242 = vld [vmem:[%s8228 + $0x34] sm:$0xf]
        %v8243 = vld [vmem:[%s8228 + $0x38] sm:$0xf]
        %v8244 = vld [vmem:[%s8228 + $0x3c] sm:$0xf]
        %s8245 = scalar_lea.vmem [#allocation44], 1
        %v8246 = vld [vmem:[%s8245] sm:$0x1]
        %v8247 = vpack.c.bf16 %v8208, %v8208
        %v8249 = vlaneseq
        %v8250 = vshrl.u32 %v8249, 7
        %v8251 = vsub.s32 0, %v8250
        %v8252 = vrot.slane %v8227, %v8251
        %v8270 = vunpack.c.l.b16 %v8210
        %v8271 = vunpack.c.l.b16 %v8211
        %v8272 = vunpack.c.l.b16 %v8212
        %v8273 = vunpack.c.l.b16 %v8213
        %v8274 = vunpack.c.l.b16 %v8214
        %v8275 = vunpack.c.l.b16 %v8215
        %v8276 = vunpack.c.l.b16 %v8216
        %v8277 = vunpack.c.l.b16 %v8217
        %v8278 = vunpack.c.l.b16 %v8218
        %v8279 = vunpack.c.l.b16 %v8219
        %v8280 = vunpack.c.l.b16 %v8220
        %v8281 = vunpack.c.l.b16 %v8221
        %v8282 = vunpack.c.l.b16 %v8222
        %v8283 = vunpack.c.l.b16 %v8223
        %v8284 = vunpack.c.l.b16 %v8224
        %v8285 = vunpack.c.l.b16 %v8225
        %v8286 = vpack.c.b16 %v8271, %v8270
        %v8287 = vpack.c.b16 %v8273, %v8272
        %v8288 = vpack.c.b16 %v8275, %v8274
        %v8289 = vpack.c.b16 %v8277, %v8276
        %v8290 = vpack.c.b16 %v8279, %v8278
        %v8291 = vpack.c.b16 %v8281, %v8280
        %v8292 = vpack.c.b16 %v8283, %v8282
        %v8293 = vpack.c.b16 %v8285, %v8284
        %8302 = vmatprep.subr.bf16.mxu0 0
        %8303 = vmatpush1.bf16.msra.mxu0 %v8293
        %8304 = vmatprep.subr.bf16.mxu0 0
        %8305 = vmatpush1.bf16.msra.mxu0 %v8292
        %8306 = vmatprep.subr.bf16.mxu0 0
        %8307 = vmatpush1.bf16.msra.mxu0 %v8291
        %8308 = vmatprep.subr.bf16.mxu0 0
        %8309 = vmatpush1.bf16.msra.mxu0 %v8290
        %8310 = vmatprep.subr.bf16.mxu0 0
        %8311 = vmatpush1.bf16.msra.mxu0 %v8289
        %8312 = vmatprep.subr.bf16.mxu0 0
        %8313 = vmatpush1.bf16.msra.mxu0 %v8288
        %8314 = vmatprep.subr.bf16.mxu0 0
        %8315 = vmatpush1.bf16.msra.mxu0 %v8287
        %8316 = vmatprep.subr.bf16.mxu0 0
        %8317 = vmatpush1.bf16.msra.mxu0 %v8286
        %8318 = vmatprep.subr.bf16.mxu0 0
        %8319 = vmatpush2.bf16.msra.mxu0 0
        %8320 = vmatprep.subr.bf16.mxu0 0
        %8321 = vmatpush2.bf16.msra.mxu0 0
        %8322 = vmatprep.subr.bf16.mxu0 0
        %8323 = vmatpush2.bf16.msra.mxu0 0
        %8324 = vmatprep.subr.bf16.mxu0 0
        %8325 = vmatpush2.bf16.msra.mxu0 0
        %8326 = vmatprep.subr.bf16.mxu0 0
        %8327 = vmatpush2.bf16.msra.mxu0 0
        %8328 = vmatprep.subr.bf16.mxu0 0
        %8329 = vmatpush2.bf16.msra.mxu0 0
        %8330 = vmatprep.subr.bf16.mxu0 0
        %8331 = vmatpush2.bf16.msra.mxu0 0
        %8332 = vmatprep.subr.bf16.mxu0 0
        %8333 = vmatpush2.bf16.msra.mxu0 0
        %8334 = vmatprep.mubr.bf16.mxu0 0
        %8335 = vmatmul.mubr.bf16.gmra.mxu0 %v8247
        %v8336 = vpop.f32.mrf.mxu0
        %v8337 = vadd.f32 %v8252, %v8336
        %v8338 = vpop.f32.mrf.mxu0
        %v8339 = vpop.f32.mrf.mxu0
        %v8340 = vpop.f32.mrf.mxu0
        %8341 = vdwg.mxu0
        %v8342 = vmax.f32 %v8337, 0.0
        %v8343 = vpack.c.bf16 %v8342, %v8342
        %v8345 = vlaneseq
        %v8346 = vshrl.u32 %v8345, 7
        %v8347 = vsub.s32 0, %v8346
        %v8348 = vrot.slane %v8246, %v8347
        %v8366 = vunpack.c.l.b16 %v8229
        %v8367 = vunpack.c.l.b16 %v8230
        %v8368 = vunpack.c.l.b16 %v8231
        %v8369 = vunpack.c.l.b16 %v8232
        %v8370 = vunpack.c.l.b16 %v8233
        %v8371 = vunpack.c.l.b16 %v8234
        %v8372 = vunpack.c.l.b16 %v8235
        %v8373 = vunpack.c.l.b16 %v8236
        %v8374 = vunpack.c.l.b16 %v8237
        %v8375 = vunpack.c.l.b16 %v8238
        %v8376 = vunpack.c.l.b16 %v8239
        %v8377 = vunpack.c.l.b16 %v8240
        %v8378 = vunpack.c.l.b16 %v8241
        %v8379 = vunpack.c.l.b16 %v8242
        %v8380 = vunpack.c.l.b16 %v8243
        %v8381 = vunpack.c.l.b16 %v8244
        %v8382 = vpack.c.b16 %v8367, %v8366
        %v8383 = vpack.c.b16 %v8369, %v8368
        %v8384 = vpack.c.b16 %v8371, %v8370
        %v8385 = vpack.c.b16 %v8373, %v8372
        %v8386 = vpack.c.b16 %v8375, %v8374
        %v8387 = vpack.c.b16 %v8377, %v8376
        %v8388 = vpack.c.b16 %v8379, %v8378
        %v8389 = vpack.c.b16 %v8381, %v8380
        %8398 = vmatprep.subr.bf16.mxu0 0
        %8399 = vmatpush1.bf16.msra.mxu0 %v8389
        %8400 = vmatprep.subr.bf16.mxu0 0
        %8401 = vmatpush1.bf16.msra.mxu0 %v8388
        %8402 = vmatprep.subr.bf16.mxu0 0
        %8403 = vmatpush1.bf16.msra.mxu0 %v8387
        %8404 = vmatprep.subr.bf16.mxu0 0
        %8405 = vmatpush1.bf16.msra.mxu0 %v8386
        %8406 = vmatprep.subr.bf16.mxu0 0
        %8407 = vmatpush1.bf16.msra.mxu0 %v8385
        %8408 = vmatprep.subr.bf16.mxu0 0
        %8409 = vmatpush1.bf16.msra.mxu0 %v8384
        %8410 = vmatprep.subr.bf16.mxu0 0
        %8411 = vmatpush1.bf16.msra.mxu0 %v8383
        %8412 = vmatprep.subr.bf16.mxu0 0
        %8413 = vmatpush1.bf16.msra.mxu0 %v8382
        %8414 = vmatprep.subr.bf16.mxu0 0
        %8415 = vmatpush2.bf16.msra.mxu0 0
        %8416 = vmatprep.subr.bf16.mxu0 0
        %8417 = vmatpush2.bf16.msra.mxu0 0
        %8418 = vmatprep.subr.bf16.mxu0 0
        %8419 = vmatpush2.bf16.msra.mxu0 0
        %8420 = vmatprep.subr.bf16.mxu0 0
        %8421 = vmatpush2.bf16.msra.mxu0 0
        %8422 = vmatprep.subr.bf16.mxu0 0
        %8423 = vmatpush2.bf16.msra.mxu0 0
        %8424 = vmatprep.subr.bf16.mxu0 0
        %8425 = vmatpush2.bf16.msra.mxu0 0
        %8426 = vmatprep.subr.bf16.mxu0 0
        %8427 = vmatpush2.bf16.msra.mxu0 0
        %8428 = vmatprep.subr.bf16.mxu0 0
        %8429 = vmatpush2.bf16.msra.mxu0 0
        %8430 = vmatprep.mubr.bf16.mxu0 0
        %8431 = vmatmul.mubr.bf16.gmra.mxu0 %v8343
        %v8432 = vpop.f32.mrf.mxu0
        %v8433 = vadd.f32 %v8348, %v8432
        %v8434 = vpop.f32.mrf.mxu0
        %v8435 = vpop.f32.mrf.mxu0
        %v8436 = vpop.f32.mrf.mxu0
        %8437 = vdwg.mxu0
        %v8438 = vadd.f32 %v8208, %v8433
        %s8439 = scalar_lea.vmem [#allocation37], 1
        %v8440 = vld [vmem:[%s8439] sm:$0x1]
        %s8441 = scalar_lea.vmem [#allocation38], 1
        %v8442 = vld [vmem:[%s8441] sm:$0x1]
        %8443 = vadd.xlane.f32.xlu0 %v8438
        %v8444 = vpop.xlane.xlu0 %8443
        %v8445 = vmul.f32 %v8444, %v2506
        %v8446 = vsub.f32 %v8438, %v8445
        %v8447 = vmul.f32 %v8446, %v8446
        %8448 = vadd.xlane.f32.xlu0 %v8447
        %v8449 = vpop.xlane.xlu0 %8448
        %v8450 = vmul.f32 %v8449, %v2506
        %v8451 = vadd.f32 %v8450, 1e-05
        %v8452 = vrsqrt.pop %v8451
        %v8453 = vmul.f32 %v8446, %v8452
        %v8455 = vlaneseq
        %v8456 = vshrl.u32 %v8455, 7
        %v8457 = vsub.s32 0, %v8456
        %v8458 = vrot.slane %v8440, %v8457
        %v8460 = vmul.f32 %v8453, %v8458
        %v8462 = vlaneseq
        %v8463 = vshrl.u32 %v8462, 7
        %v8464 = vsub.s32 0, %v8463
        %v8465 = vrot.slane %v8442, %v8464
        %v8467 = vadd.f32 %v8460, %v8465
        %v8468 = vpack.c.bf16 %v8467, %v8467
        %v8469 = vld [vmem:[%s71] sm:$0xf]
        %v8470 = vld [vmem:[%s71 + $0x4] sm:$0xf]
        %v8471 = vld [vmem:[%s71 + $0x8] sm:$0xf]
        %v8472 = vld [vmem:[%s71 + $0xc] sm:$0xf]
        %v8473 = vld [vmem:[%s71 + $0x10] sm:$0xf]
        %v8474 = vld [vmem:[%s71 + $0x14] sm:$0xf]
        %v8475 = vld [vmem:[%s71 + $0x18] sm:$0xf]
        %v8476 = vld [vmem:[%s71 + $0x1c] sm:$0xf]
        %v8477 = vld [vmem:[%s71 + $0x20] sm:$0xf]
        %v8478 = vld [vmem:[%s71 + $0x24] sm:$0xf]
        %v8479 = vld [vmem:[%s71 + $0x28] sm:$0xf]
        %v8480 = vld [vmem:[%s71 + $0x2c] sm:$0xf]
        %v8481 = vld [vmem:[%s71 + $0x30] sm:$0xf]
        %v8482 = vld [vmem:[%s71 + $0x34] sm:$0xf]
        %v8483 = vld [vmem:[%s71 + $0x38] sm:$0xf]
        %v8484 = vld [vmem:[%s71 + $0x3c] sm:$0xf]
        %v8485 = vld [vmem:[#allocation2] sm:$0x1]
        %v8487 = vshrl.u32 %v8468, 16
        %v8489 = vrot.slane %v8487, 3
        %v8507 = vunpack.c.l.b16 %v8469
        %v8508 = vunpack.c.l.b16 %v8470
        %v8509 = vunpack.c.l.b16 %v8471
        %v8510 = vunpack.c.l.b16 %v8472
        %v8511 = vunpack.c.l.b16 %v8473
        %v8512 = vunpack.c.l.b16 %v8474
        %v8513 = vunpack.c.l.b16 %v8475
        %v8514 = vunpack.c.l.b16 %v8476
        %v8515 = vunpack.c.l.b16 %v8477
        %v8516 = vunpack.c.l.b16 %v8478
        %v8517 = vunpack.c.l.b16 %v8479
        %v8518 = vunpack.c.l.b16 %v8480
        %v8519 = vunpack.c.l.b16 %v8481
        %v8520 = vunpack.c.l.b16 %v8482
        %v8521 = vunpack.c.l.b16 %v8483
        %v8522 = vunpack.c.l.b16 %v8484
        %v8523 = vpack.c.b16 %v8508, %v8507
        %v8524 = vpack.c.b16 %v8510, %v8509
        %v8525 = vpack.c.b16 %v8512, %v8511
        %v8526 = vpack.c.b16 %v8514, %v8513
        %v8527 = vpack.c.b16 %v8516, %v8515
        %v8528 = vpack.c.b16 %v8518, %v8517
        %v8529 = vpack.c.b16 %v8520, %v8519
        %v8530 = vpack.c.b16 %v8522, %v8521
        %8539 = vmatprep.subr.bf16.mxu0 0
        %8540 = vmatpush1.bf16.msra.mxu0 %v8530
        %8541 = vmatprep.subr.bf16.mxu0 0
        %8542 = vmatpush1.bf16.msra.mxu0 %v8529
        %8543 = vmatprep.subr.bf16.mxu0 0
        %8544 = vmatpush1.bf16.msra.mxu0 %v8528
        %8545 = vmatprep.subr.bf16.mxu0 0
        %8546 = vmatpush1.bf16.msra.mxu0 %v8527
        %8547 = vmatprep.subr.bf16.mxu0 0
        %8548 = vmatpush1.bf16.msra.mxu0 %v8526
        %8549 = vmatprep.subr.bf16.mxu0 0
        %8550 = vmatpush1.bf16.msra.mxu0 %v8525
        %8551 = vmatprep.subr.bf16.mxu0 0
        %8552 = vmatpush1.bf16.msra.mxu0 %v8524
        %8553 = vmatprep.subr.bf16.mxu0 0
        %8554 = vmatpush1.bf16.msra.mxu0 %v8523
        %8555 = vmatprep.subr.bf16.mxu0 0
        %8556 = vmatpush2.bf16.msra.mxu0 0
        %8557 = vmatprep.subr.bf16.mxu0 0
        %8558 = vmatpush2.bf16.msra.mxu0 0
        %8559 = vmatprep.subr.bf16.mxu0 0
        %8560 = vmatpush2.bf16.msra.mxu0 0
        %8561 = vmatprep.subr.bf16.mxu0 0
        %8562 = vmatpush2.bf16.msra.mxu0 0
        %8563 = vmatprep.subr.bf16.mxu0 0
        %8564 = vmatpush2.bf16.msra.mxu0 0
        %8565 = vmatprep.subr.bf16.mxu0 0
        %8566 = vmatpush2.bf16.msra.mxu0 0
        %8567 = vmatprep.subr.bf16.mxu0 0
        %8568 = vmatpush2.bf16.msra.mxu0 0
        %8569 = vmatprep.subr.bf16.mxu0 0
        %8570 = vmatpush2.bf16.msra.mxu0 0
        %8571 = vmatprep.mubr.bf16.mxu0 0
        %8572 = vmatmul.mubr.bf16.gmra.mxu0 %v8489
        %v8573 = vpop.f32.mrf.mxu0
        %v8574 = vadd.f32 %v8485, %v8573
        %v8575 = vpop.f32.mrf.mxu0
        %v8576 = vpop.f32.mrf.mxu0
        %v8577 = vpop.f32.mrf.mxu0
        %8578 = vdwg.mxu0
        %vm8579 = vcmask 0
        %8580 = vst.msk [vmem:[%s1524] sm:$0x1] %vm8579, %v8574
        %p8581 = scmp.lt.s32.totalorder %s103, 1
        %s8582 = scalar_select %p8581, %s103, 1
        %s8583 = scalar_lea.vmem %s75, %s8582
        // Predicated region
        $region281: #{transformer_model.1} parent=167 // pred_check
          %p8584 = pneg %p903
        $region282: #{transformer_model.1} parent=167 // pred_check_branch
          %8586 = sbr.rel (%p8584) target = $region284
        $region283: #{transformer_model.1} parent=167 // pred_region
          _
        $region284: #{transformer_model.1} parent=167 // pred_fallthru
          _
      $region168: #{transformer_model.1} parent=5 // pred_fallthru
        _
      %p8587 = scmp.le.s32.totalorder 2, %s98
      // Predicated region
      $region285: #{transformer_model.1} parent=5 // pred_check
        %p8588 = pneg %p8587
      $region286: #{transformer_model.1} parent=5 // pred_check_branch
        %8590 = sbr.rel (%p8588) target = $region288
      $region287: #{transformer_model.1} parent=5 // pred_region
        %s8591 = ssub.s32 %s98, 2
        // Predicated region
        $region289: #{transformer_model.1} parent=287 // pred_check
          %p8592 = pneg %p909
        $region290: #{transformer_model.1} parent=287 // pred_check_branch
          %8594 = sbr.rel (%p8592) target = $region292
        $region291: #{transformer_model.1} parent=287 // pred_region
          %p8595 = scmp.lt.s32.totalorder %s104, 1
          %s8596 = scalar_select %p8595, %s104, 1
          %s8597 = scalar_lea.vmem %s75, %s8596
        $region292: #{transformer_model.1} parent=287 // pred_fallthru
          _
      $region288: #{transformer_model.1} parent=5 // pred_fallthru
        _
    $region6: #{transformer_model.1} parent=1 // loop_footer
      %s102 = sadd.s32 1, %s98
    $region7: #{transformer_model.1} parent=1 // loop_footer_branch
      %97 = sbr.rel target = $region3
    $region8: #{transformer_model.1} parent=1 // loop_exit
      _
    %8598 = vsyncpa [#allocation4], 1
    %s8599 = scalar_lea.sflag [#allocation4], 1
    %8600 = vsyncpa %s8599, 1
    %8601 = vsyncpa [#allocation6], 1
    %8602 = vsyncpa [#allocation9], 1
    %8603 = vsyncpa [#allocation12], 1
    %8604 = vsyncpa [#allocation15], 1
    %8605 = vsyncpa [#allocation18], 1
    %8606 = vsyncpa [#allocation21], 1
    %8607 = vsyncpa [#allocation24], 1
    %8608 = vsyncpa [#allocation27], 1
    %8609 = vsyncpa [#allocation30], 1
    %8610 = vsyncpa [#allocation33], 1
    %8611 = vsyncpa [#allocation36], 1
    %8612 = vsyncpa [#allocation39], 1
    %8613 = vsyncpa [#allocation42], 1
    %8614 = vsyncpa [#allocation45], 1

</llo_original>
